<compile_context>
chip_gen: v5e
topology: v5e:2x2
jax: 0.10.0
libtpu: 0.0.40
codegen_flags: <defaults>
</compile_context>

<pallas_src>
import functools
from math import floor

import numpy as np
import jax
import jax.numpy as jnp
from jax.experimental import pallas as pl


# ----------------------------------------------------------------------------
# Kernel: the full max_steps loop (CA update + ponder CNN head), lane-dense.
# ----------------------------------------------------------------------------
def _ponder_ca_kernel(
    x0_ref, fire_ref, sel_ref,
    w0e_ref, b0e_ref, w1e_ref,
    wc1e_ref, bc1e_ref, wc2e_ref, bc2e_ref,
    wfce_ref, bfc_ref, wl_ref, bl_ref,
    xs_ref, lam_ref,
    *, S, B, P, Q, C, cos_a, sin_a):
  f32 = jnp.float32
  QC = Q * C
  O1, O2 = 10, 20
  Wv1 = Q - 2                      # valid conv1 output columns
  HP1 = (P - 2) // 2               # rows after pool1
  G1L = Wv1 * O1                   # conv1 / pool1 slab lane width
  Wv2 = (Wv1 // 2) - 2             # valid conv2 output columns
  G2L = Wv2 * O2                   # conv2 slab lane width
  H2v = HP1 - 2                    # valid conv2 output rows
  H2p = ((H2v + 7) // 8) * 8       # 8-aligned conv2 row count
  L = H2v // 2                     # pooled spatial side (== lin_size)

  # ---- lane / sublane shift helpers (zero fill == zero padding) ----------
  def shl(v, k):                   # bring lane l+k to lane l
    z = jnp.zeros(v.shape[:-1] + (k,), f32)
    return jnp.concatenate([v[..., k:], z], axis=-1)

  def shr(v, k):                   # bring lane l-k to lane l
    z = jnp.zeros(v.shape[:-1] + (k,), f32)
    return jnp.concatenate([z, v[..., :v.shape[-1] - k]], axis=-1)

  def row_m1(v):                   # value of row p-1 at row p (zero row on top)
    z = jnp.zeros((v.shape[0], 1, v.shape[2]), f32)
    return jnp.concatenate([z, v[:, :v.shape[1] - 1, :]], axis=1)

  def row_p1(v):                   # value of row p+1 at row p (zero row at bottom)
    z = jnp.zeros((v.shape[0], 1, v.shape[2]), f32)
    return jnp.concatenate([v[:, 1:, :], z], axis=1)

  sel = sel_ref[...]
  w0e, b0e, w1e = w0e_ref[...], b0e_ref[...], w1e_ref[...]
  wc1e, bc1e = wc1e_ref[...], bc1e_ref[...]
  wc2e, bc2e = wc2e_ref[...], bc2e_ref[...]
  wfce, bfc = wfce_ref[...], bfc_ref[...]
  wl, bl = wl_ref[...], bl_ref[...]

  x = x0_ref[...]                  # lane-dense CA state (B, P, Q*C)

  for s in range(S):
    # ---- perception: separable sobel on lane-dense slabs -----------------
    u0, u2 = row_m1(x), row_p1(x)
    rsum = u0 + 2.0 * x + u2                         # [1,2,1] over rows
    rdif = u2 - u0                                   # [-1,0,1] over rows
    y_dx = (shl(rsum, C) - shr(rsum, C)) * 0.125
    y_dy = (shr(rdif, C) + 2.0 * rdif + shl(rdif, C)) * 0.125
    if sin_a == 0.0 and cos_a == 1.0:
      y1, y2 = y_dx, y_dy
    else:
      y1 = cos_a * y_dx - sin_a * y_dy
      y2 = sin_a * y_dx + cos_a * y_dy

    # ---- pre-update alive mask (3x3 max of alpha, broadcast over c) ------
    mrow = jnp.maximum(jnp.maximum(u0, x), u2)
    prep = jnp.maximum(jnp.maximum(shl(mrow, C), mrow), shr(mrow, C))
    pre_b = jnp.dot(prep.reshape(B * P, QC), sel, preferred_element_type=f32)

    # ---- per-pixel MLP (block-diagonal expanded weights, lane-dense) -----
    per = jnp.concatenate([x, y1, y2], axis=-1).reshape(B * P, 3 * QC)
    h = jnp.maximum(jnp.dot(per, w0e, preferred_element_type=f32) + b0e, 0.0)
    dx = jnp.dot(h, w1e, preferred_element_type=f32).reshape(B, P, QC)
    x_new = x + dx * fire_ref[s]

    # ---- post-update alive mask + single state/output write --------------
    mrow2 = jnp.maximum(jnp.maximum(row_m1(x_new), x_new), row_p1(x_new))
    postp = jnp.maximum(jnp.maximum(shl(mrow2, C), mrow2), shr(mrow2, C))
    post_b = jnp.dot(postp.reshape(B * P, QC), sel, preferred_element_type=f32)
    life = ((pre_b > 0.1) & (post_b > 0.1)).astype(f32).reshape(B, P, QC)
    x = x_new * life
    xs_ref[s] = x                                    # lane-dense recorded state

    # ---- ponder CNN head (skipped on last step: lambda := 1 host-side) ---
    if s == S - 1:
      lam_ref[s] = jnp.zeros((B, 1), f32)
      continue

    # conv1 over all P rows (rows >= P-2 are junk, never read downstream)
    rows = [x, row_p1(x), row_p1(row_p1(x))]
    taps = [shl(rows[r], t * C) if t else rows[r]
            for r in range(3) for t in range(3)]
    cin1 = jnp.concatenate(taps, axis=-1).reshape(B * P, 9 * QC)
    c1 = (jnp.dot(cin1, wc1e, preferred_element_type=f32) + bc1e
          ).reshape(B, P, G1L)
    # 2x2 max-pool + relu: rows pairwise; cols kept sparse at even 10-lane groups
    r1 = jnp.concatenate(
        [jnp.maximum(c1[:, 2 * i:2 * i + 1, :], c1[:, 2 * i + 1:2 * i + 2, :])
         for i in range(HP1)], axis=1)
    p1 = jnp.maximum(jnp.maximum(r1, shl(r1, O1)), 0.0)          # (B, HP1, G1L)

    # conv2 on the sparse pooled slab (rows padded to an 8-aligned count)
    p1p = jnp.concatenate(
        [p1, jnp.zeros((B, H2p + 2 - HP1, G1L), f32)], axis=1)
    rows2 = [p1p[:, r:r + H2p, :] for r in range(3)]
    taps2 = [shl(rows2[r], t * 2 * O1) if t else rows2[r]
             for r in range(3) for t in range(3)]
    cin2 = jnp.concatenate(taps2, axis=-1).reshape(B * H2p, 9 * G1L)
    c2 = (jnp.dot(cin2, wc2e, preferred_element_type=f32) + bc2e
          ).reshape(B, H2p, G2L)
    r2 = jnp.concatenate(
        [jnp.maximum(c2[:, 2 * i:2 * i + 1, :], c2[:, 2 * i + 1:2 * i + 2, :])
         for i in range(L)], axis=1)
    p2 = jnp.maximum(jnp.maximum(r2, shl(r2, O2)), 0.0)          # (B, L, G2L)

    # fused CNN fc1 (single matmul) + lambda head
    feat = jnp.concatenate(
        [p2[:, i, 2 * j * O2:2 * j * O2 + O2]
         for i in range(L) for j in range(L)], axis=-1)           # (B, L*L*20)
    hc = jnp.maximum(jnp.dot(feat, wfce, preferred_element_type=f32) + bfc, 0.0)
    z = jnp.sum(hc * wl, axis=-1, keepdims=True) + bl
    lam_ref[s] = jax.nn.sigmoid(z)


# ----------------------------------------------------------------------------
# Model wrapper
# ----------------------------------------------------------------------------
class PonderCAPallas:
  def __init__(self, channel_n=8, fire_rate=0.5, img_size=16,
               hidden_size_evolve=32, hidden_size_ponder=16,
               max_steps=4, seed=0):
    assert channel_n >= 4, "alive mask reads channel 3"
    assert img_size % 8 == 0, "kernel assumes an 8-aligned spatial size"
    self.channel_n = C = channel_n
    self.fire_rate = fire_rate
    self.img_size = img_size
    self.hidden_size_evolve = He = hidden_size_evolve
    self.hidden_size_ponder = Hp = hidden_size_ponder
    self.max_steps = max_steps
    ks = 3
    self.lin_size = L = floor((floor((img_size - (ks - 1)) / 2) - (ks - 1)) / 2)
    assert L >= 1
    F = L * L * 20
    P = Q = img_size
    QC = Q * C

    def uinit(key, shape, fan_in):
      b = 1.0 / np.sqrt(fan_in)
      return np.asarray(jax.random.uniform(key, shape, jnp.float32, -b, b))

    k = jax.random.split(jax.random.PRNGKey(seed), 10)
    # PyTorch-convention synthetic parameters
    w0 = uinit(k[0], (He, 3 * C), 3 * C)                 # fc0.weight
    b0 = uinit(k[1], (He,), 3 * C)                       # fc0.bias
    w1 = np.zeros((C, He), np.float32)                   # fc1.weight (zeroed in __init__)
    wc1 = uinit(k[2], (10, C, 3, 3), C * 9)              # cnn.conv1.weight
    bc1 = uinit(k[3], (10,), C * 9)
    wc2 = uinit(k[4], (20, 10, 3, 3), 10 * 9)            # cnn.conv2.weight
    bc2 = uinit(k[5], (20,), 10 * 9)
    wfc = uinit(k[6], (Hp, F), F)                        # cnn.fc1.weight
    bfc = uinit(k[7], (Hp,), F)
    wl = uinit(k[8], (1, Hp), Hp)                        # lambda_layer.weight
    bl = uinit(k[9], (1,), Hp)

    # ---- lane-dense / block-diagonal expanded parameters -------------------
    eyeQ = np.eye(Q, dtype=np.float32)
    W0t = w0.T                                           # (3C, He)
    w0e = np.vstack([np.kron(eyeQ, W0t[0:C]),
                     np.kron(eyeQ, W0t[C:2 * C]),
                     np.kron(eyeQ, W0t[2 * C:3 * C])])   # (3*QC, Q*He)
    b0e = np.tile(b0, Q).reshape(1, Q * He)
    w1e = np.kron(eyeQ, w1.T)                            # (Q*He, QC)

    Wv1 = Q - 2
    sel1 = np.eye(Q, Wv1, dtype=np.float32)              # valid conv1 columns
    wc1e = np.vstack([np.kron(sel1, wc1[:, :, r, t].T)
                      for r in range(3) for t in range(3)])   # (9*QC, Wv1*10)
    bc1e = np.tile(bc1, Wv1).reshape(1, Wv1 * 10)

    Wv2 = (Wv1 // 2) - 2
    sel2 = np.zeros((Wv1, Wv2), np.float32)
    sel2[2 * np.arange(Wv2), np.arange(Wv2)] = 1.0       # even 10-lane groups
    wc2e = np.vstack([np.kron(sel2, wc2[:, :, r, t].T)
                      for r in range(3) for t in range(3)])   # (9*Wv1*10, Wv2*20)
    bc2e = np.tile(bc2, Wv2).reshape(1, Wv2 * 20)

    # torch flatten order is (c, i, j) -> reorder into (i, j, c) row blocks
    wfce = np.transpose(wfc.reshape(Hp, 20, L, L), (2, 3, 1, 0)).reshape(L * L * 20, Hp)

    # alpha-channel (c == 3) group-broadcast selection matrix
    selm = np.zeros((QC, QC), np.float32)
    selm[(np.arange(QC) // C) * C + 3, np.arange(QC)] = 1.0

    as_f32 = lambda a: jnp.asarray(a, jnp.float32)
    self._params = tuple(as_f32(a) for a in (
        selm, w0e, b0e, w1e, wc1e, bc1e, wc2e, bc2e, wfce,
        bfc.reshape(1, Hp), wl.reshape(1, Hp), bl.reshape(1, 1)))
    self._fwd_cache = {}

  # ------------------------------------------------------------------
  def _build_forward(self, fire_rate, angle, eps):
    S = self.max_steps
    P = Q = self.img_size
    C = self.channel_n
    QC = Q * C
    cos_a = float(np.cos(angle * np.pi / 180.0))
    sin_a = float(np.sin(angle * np.pi / 180.0))
    params = self._params

    def fwd(x, key):
      B = x.shape[0]
      kernel = functools.partial(
          _ponder_ca_kernel, S=S, B=B, P=P, Q=Q, C=C,
          cos_a=cos_a, sin_a=sin_a)
      # Grid collapsed to a single invocation: all operands / outputs are
      # whole-array VMEM blocks (default BlockSpec), weights DMA'd once.
      ca_call = pl.pallas_call(
          kernel,
          out_shape=(jax.ShapeDtypeStruct((S, B, P, QC), jnp.float32),
                     jax.ShapeDtypeStruct((S, B, 1), jnp.float32)),
      )

      k_fire, k_halt = jax.random.split(key)
      # reference convention: the update fires where uniform > fire_rate
      fire = (jax.random.uniform(k_fire, (S, B, P, Q, 1)) > fire_rate)
      fire = jnp.broadcast_to(fire, (S, B, P, Q, C)).astype(jnp.float32)
      fire = fire.reshape(S, B, P, QC)

      # torch (B, W, H, C)  ->  internal lane-dense (B, H, W*C)
      x0 = jnp.transpose(x, (0, 2, 1, 3)).astype(jnp.float32).reshape(B, P, QC)

      xs_ld, lam = ca_call(x0, fire, *params)
      xs = xs_ld.reshape(S, B, P, Q, C)
      xs = jnp.transpose(xs, (0, 1, 3, 2, 4))           # back to torch (S,B,W,H,C)
      lam_all = lam[:, :, 0]                            # (S, B)

      # ---- PonderNet bookkeeping (observer only; does not feed the CA) ----
      un_halted = jnp.ones((B,), jnp.float32)
      halted = jnp.zeros((B,), jnp.int32)
      n_steps = jnp.zeros((B,), jnp.int32)
      p_list, l_list = [], []
      kk = k_halt
      for n in range(1, S + 1):
        n_steps = n_steps + (1 - halted)
        if n == S:
          # TODO(synk): batch_size == 1 returns a 0-d tensor in the reference.
          lambda_n = jnp.ones((B,), jnp.float32)
        else:
          lambda_n = lam_all[n - 1] + eps
        p_n = un_halted * lambda_n + eps
        p_list.append(p_n)
        l_list.append(lambda_n)
        kk, kb = jax.random.split(kk)
        halt = (jax.random.bernoulli(kb, jnp.clip(lambda_n, 0.0, 1.0))
                .astype(jnp.int32)) * (1 - halted)
        halted = halted + halt
        un_halted = un_halted * (1.0 - lambda_n)
      ps = jnp.stack(p_list)
      ps = ps / jnp.sum(ps, axis=0)
      ls = jnp.stack(l_list)
      return xs, ps, ls, n_steps

    return jax.jit(fwd)

  def forward(self, x, key, fire_rate=None, angle=0.0, eps=1e-6):
    """x in PyTorch layout (B, W, H, C); returns (x_steps, p, lambdas, n_steps)."""
    fr = self.fire_rate if fire_rate is None else fire_rate
    cache_key = (float(fr), float(angle), float(eps))
    if cache_key not in self._fwd_cache:
      self._fwd_cache[cache_key] = self._build_forward(*cache_key)
    return self._fwd_cache[cache_key](x, key)


# ----------------------------------------------------------------------------
if __name__ == "__main__":
  B, IMG, C = 2, 16, 8
  MAX_STEPS = 4
  model = PonderCAPallas(channel_n=C, fire_rate=0.5, img_size=IMG,
                         hidden_size_evolve=32, hidden_size_ponder=16,
                         max_steps=MAX_STEPS, seed=0)
  key = jax.random.PRNGKey(0)
  kx, kf = jax.random.split(key)
  x = jax.random.uniform(kx, (B, IMG, IMG, C), jnp.float32)   # torch (B, W, H, C)
  xs, ps, ls, n_steps = model.forward(x, kf)
  jax.block_until_ready((xs, ps, ls, n_steps))
  assert xs.shape == (MAX_STEPS, B, IMG, IMG, C)
  assert ps.shape == (MAX_STEPS, B)
  assert ls.shape == (MAX_STEPS, B)
  assert n_steps.shape == (B,)
  assert bool(jnp.all(jnp.isfinite(xs))) and bool(jnp.all(jnp.isfinite(ps)))
  print("KERNEL_OK")
</pallas_src>

<mosaic_0001>
module attributes {stable_mosaic.version = 11 : i64} {
  func.func @_ponder_ca_kernel(%arg0: memref<2x16x128xf32, #tpu.memory_space<vmem>>, %arg1: memref<4x2x16x128xf32, #tpu.memory_space<vmem>>, %arg2: memref<128x128xf32, #tpu.memory_space<vmem>>, %arg3: memref<384x512xf32, #tpu.memory_space<vmem>>, %arg4: memref<1x512xf32, #tpu.memory_space<vmem>>, %arg5: memref<512x128xf32, #tpu.memory_space<vmem>>, %arg6: memref<1152x140xf32, #tpu.memory_space<vmem>>, %arg7: memref<1x140xf32, #tpu.memory_space<vmem>>, %arg8: memref<1260x100xf32, #tpu.memory_space<vmem>>, %arg9: memref<1x100xf32, #tpu.memory_space<vmem>>, %arg10: memref<80x16xf32, #tpu.memory_space<vmem>>, %arg11: memref<1x16xf32, #tpu.memory_space<vmem>>, %arg12: memref<1x16xf32, #tpu.memory_space<vmem>>, %arg13: memref<1x1xf32, #tpu.memory_space<vmem>>, %arg14: memref<4x2x16x128xf32, #tpu.memory_space<vmem>>, %arg15: memref<4x2x1xf32, #tpu.memory_space<vmem>>) attributes {dimension_semantics = [], scalar_prefetch = 0 : i64, scratch_operands = 0 : i64, tpu.core_type = #tpu.core_type<tc>} {
    %c0 = arith.constant 0 : index
    %c0_0 = arith.constant 0 : index
    %0 = vector.load %arg2[%c0, %c0_0] : memref<128x128xf32, #tpu.memory_space<vmem>>, vector<128x128xf32>
    %c0_1 = arith.constant 0 : index
    %c0_2 = arith.constant 0 : index
    %1 = vector.load %arg3[%c0_1, %c0_2] : memref<384x512xf32, #tpu.memory_space<vmem>>, vector<384x512xf32>
    %c0_3 = arith.constant 0 : index
    %c0_4 = arith.constant 0 : index
    %2 = vector.load %arg4[%c0_3, %c0_4] : memref<1x512xf32, #tpu.memory_space<vmem>>, vector<1x512xf32>
    %c0_5 = arith.constant 0 : index
    %c0_6 = arith.constant 0 : index
    %3 = vector.load %arg5[%c0_5, %c0_6] : memref<512x128xf32, #tpu.memory_space<vmem>>, vector<512x128xf32>
    %c0_7 = arith.constant 0 : index
    %c0_8 = arith.constant 0 : index
    %4 = vector.load %arg6[%c0_7, %c0_8] : memref<1152x140xf32, #tpu.memory_space<vmem>>, vector<1152x140xf32>
    %c0_9 = arith.constant 0 : index
    %c0_10 = arith.constant 0 : index
    %5 = vector.load %arg7[%c0_9, %c0_10] : memref<1x140xf32, #tpu.memory_space<vmem>>, vector<1x140xf32>
    %c0_11 = arith.constant 0 : index
    %c0_12 = arith.constant 0 : index
    %6 = vector.load %arg8[%c0_11, %c0_12] : memref<1260x100xf32, #tpu.memory_space<vmem>>, vector<1260x100xf32>
    %c0_13 = arith.constant 0 : index
    %c0_14 = arith.constant 0 : index
    %7 = vector.load %arg9[%c0_13, %c0_14] : memref<1x100xf32, #tpu.memory_space<vmem>>, vector<1x100xf32>
    %c0_15 = arith.constant 0 : index
    %c0_16 = arith.constant 0 : index
    %8 = vector.load %arg10[%c0_15, %c0_16] : memref<80x16xf32, #tpu.memory_space<vmem>>, vector<80x16xf32>
    %c0_17 = arith.constant 0 : index
    %c0_18 = arith.constant 0 : index
    %9 = vector.load %arg11[%c0_17, %c0_18] : memref<1x16xf32, #tpu.memory_space<vmem>>, vector<1x16xf32>
    %c0_19 = arith.constant 0 : index
    %c0_20 = arith.constant 0 : index
    %10 = vector.load %arg12[%c0_19, %c0_20] : memref<1x16xf32, #tpu.memory_space<vmem>>, vector<1x16xf32>
    %c0_21 = arith.constant 0 : index
    %c0_22 = arith.constant 0 : index
    %11 = vector.load %arg13[%c0_21, %c0_22] : memref<1x1xf32, #tpu.memory_space<vmem>>, vector<1x1xf32>
    %c0_23 = arith.constant 0 : index
    %c0_24 = arith.constant 0 : index
    %c0_25 = arith.constant 0 : index
    %12 = vector.load %arg0[%c0_23, %c0_24, %c0_25] : memref<2x16x128xf32, #tpu.memory_space<vmem>>, vector<2x16x128xf32>
    %cst = arith.constant 0.000000e+00 : f32
    %13 = vector.broadcast %cst : f32 to vector<2x1x128xf32>
    %14 = vector.extract_strided_slice %12 {offsets = [0, 0, 0], sizes = [2, 15, 128], strides = [1, 1, 1]} : vector<2x16x128xf32> to vector<2x15x128xf32>
    %15 = tpu.concatenate %13, %14 in 1 : vector<2x1x128xf32>, vector<2x15x128xf32> -> vector<2x16x128xf32>
    %cst_26 = arith.constant 0.000000e+00 : f32
    %16 = vector.broadcast %cst_26 : f32 to vector<2x1x128xf32>
    %17 = vector.extract_strided_slice %12 {offsets = [0, 1, 0], sizes = [2, 15, 128], strides = [1, 1, 1]} : vector<2x16x128xf32> to vector<2x15x128xf32>
    %18 = tpu.concatenate %17, %16 in 1 : vector<2x15x128xf32>, vector<2x1x128xf32> -> vector<2x16x128xf32>
    %cst_27 = arith.constant 2.000000e+00 : f32
    %19 = vector.broadcast %cst_27 : f32 to vector<2x16x128xf32>
    %20 = arith.mulf %19, %12 : vector<2x16x128xf32>
    %21 = arith.addf %15, %20 : vector<2x16x128xf32>
    %22 = arith.addf %21, %18 : vector<2x16x128xf32>
    %23 = arith.subf %18, %15 : vector<2x16x128xf32>
    %cst_28 = arith.constant 0.000000e+00 : f32
    %24 = vector.broadcast %cst_28 : f32 to vector<2x16x8xf32>
    %25 = vector.extract_strided_slice %22 {offsets = [0, 0, 8], sizes = [2, 16, 120], strides = [1, 1, 1]} : vector<2x16x128xf32> to vector<2x16x120xf32>
    %26 = tpu.concatenate %25, %24 in 2 : vector<2x16x120xf32>, vector<2x16x8xf32> -> vector<2x16x128xf32>
    %cst_29 = arith.constant 0.000000e+00 : f32
    %27 = vector.broadcast %cst_29 : f32 to vector<2x16x8xf32>
    %28 = vector.extract_strided_slice %22 {offsets = [0, 0, 0], sizes = [2, 16, 120], strides = [1, 1, 1]} : vector<2x16x128xf32> to vector<2x16x120xf32>
    %29 = tpu.concatenate %27, %28 in 2 : vector<2x16x8xf32>, vector<2x16x120xf32> -> vector<2x16x128xf32>
    %30 = arith.subf %26, %29 : vector<2x16x128xf32>
    %cst_30 = arith.constant 1.250000e-01 : f32
    %31 = vector.broadcast %cst_30 : f32 to vector<2x16x128xf32>
    %32 = arith.mulf %30, %31 : vector<2x16x128xf32>
    %cst_31 = arith.constant 0.000000e+00 : f32
    %33 = vector.broadcast %cst_31 : f32 to vector<2x16x8xf32>
    %34 = vector.extract_strided_slice %23 {offsets = [0, 0, 0], sizes = [2, 16, 120], strides = [1, 1, 1]} : vector<2x16x128xf32> to vector<2x16x120xf32>
    %35 = tpu.concatenate %33, %34 in 2 : vector<2x16x8xf32>, vector<2x16x120xf32> -> vector<2x16x128xf32>
    %cst_32 = arith.constant 2.000000e+00 : f32
    %36 = vector.broadcast %cst_32 : f32 to vector<2x16x128xf32>
    %37 = arith.mulf %36, %23 : vector<2x16x128xf32>
    %38 = arith.addf %35, %37 : vector<2x16x128xf32>
    %cst_33 = arith.constant 0.000000e+00 : f32
    %39 = vector.broadcast %cst_33 : f32 to vector<2x16x8xf32>
    %40 = vector.extract_strided_slice %23 {offsets = [0, 0, 8], sizes = [2, 16, 120], strides = [1, 1, 1]} : vector<2x16x128xf32> to vector<2x16x120xf32>
    %41 = tpu.concatenate %40, %39 in 2 : vector<2x16x120xf32>, vector<2x16x8xf32> -> vector<2x16x128xf32>
    %42 = arith.addf %38, %41 : vector<2x16x128xf32>
    %cst_34 = arith.constant 1.250000e-01 : f32
    %43 = vector.broadcast %cst_34 : f32 to vector<2x16x128xf32>
    %44 = arith.mulf %42, %43 : vector<2x16x128xf32>
    %45 = arith.maximumf %15, %12 : vector<2x16x128xf32>
    %46 = arith.maximumf %45, %18 : vector<2x16x128xf32>
    %cst_35 = arith.constant 0.000000e+00 : f32
    %47 = vector.broadcast %cst_35 : f32 to vector<2x16x8xf32>
    %48 = vector.extract_strided_slice %46 {offsets = [0, 0, 8], sizes = [2, 16, 120], strides = [1, 1, 1]} : vector<2x16x128xf32> to vector<2x16x120xf32>
    %49 = tpu.concatenate %48, %47 in 2 : vector<2x16x120xf32>, vector<2x16x8xf32> -> vector<2x16x128xf32>
    %50 = arith.maximumf %49, %46 : vector<2x16x128xf32>
    %cst_36 = arith.constant 0.000000e+00 : f32
    %51 = vector.broadcast %cst_36 : f32 to vector<2x16x8xf32>
    %52 = vector.extract_strided_slice %46 {offsets = [0, 0, 0], sizes = [2, 16, 120], strides = [1, 1, 1]} : vector<2x16x128xf32> to vector<2x16x120xf32>
    %53 = tpu.concatenate %51, %52 in 2 : vector<2x16x8xf32>, vector<2x16x120xf32> -> vector<2x16x128xf32>
    %54 = arith.maximumf %50, %53 : vector<2x16x128xf32>
    %55 = vector.shape_cast %54 : vector<2x16x128xf32> to vector<32x128xf32>
    %cst_37 = arith.constant dense<0.000000e+00> : vector<32x128xf32>
    %56 = tpu.matmul %55, %0, %cst_37 {dimension_numbers = #tpu.dot_dimension_numbers<[1], [0], [0], [1], [0, 0, 1, 1], [], []>} : vector<32x128xf32>, vector<128x128xf32>, vector<32x128xf32> -> vector<32x128xf32>
    %57 = tpu.concatenate %12, %32, %44 in 2 : vector<2x16x128xf32>, vector<2x16x128xf32>, vector<2x16x128xf32> -> vector<2x16x384xf32>
    %58 = vector.shape_cast %57 : vector<2x16x384xf32> to vector<32x384xf32>
    %cst_38 = arith.constant dense<0.000000e+00> : vector<32x512xf32>
    %59 = tpu.matmul %58, %1, %cst_38 {dimension_numbers = #tpu.dot_dimension_numbers<[1], [0], [0], [1], [0, 0, 1, 1], [], []>} : vector<32x384xf32>, vector<384x512xf32>, vector<32x512xf32> -> vector<32x512xf32>
    %60 = vector.broadcast %2 : vector<1x512xf32> to vector<32x512xf32>
    %61 = arith.addf %59, %60 : vector<32x512xf32>
    %cst_39 = arith.constant 0.000000e+00 : f32
    %62 = vector.broadcast %cst_39 : f32 to vector<32x512xf32>
    %63 = arith.maximumf %61, %62 : vector<32x512xf32>
    %cst_40 = arith.constant dense<0.000000e+00> : vector<32x128xf32>
    %64 = tpu.matmul %63, %3, %cst_40 {dimension_numbers = #tpu.dot_dimension_numbers<[1], [0], [0], [1], [0, 0, 1, 1], [], []>} : vector<32x512xf32>, vector<512x128xf32>, vector<32x128xf32> -> vector<32x128xf32>
    %65 = vector.shape_cast %64 : vector<32x128xf32> to vector<2x16x128xf32>
    %c0_41 = arith.constant 0 : index
    %c0_42 = arith.constant 0 : index
    %c0_43 = arith.constant 0 : index
    %c0_44 = arith.constant 0 : index
    %66 = vector.load %arg1[%c0_41, %c0_42, %c0_43, %c0_44] : memref<4x2x16x128xf32, #tpu.memory_space<vmem>>, vector<1x2x16x128xf32>
    %67 = vector.shape_cast %66 : vector<1x2x16x128xf32> to vector<2x16x128xf32>
    %68 = arith.mulf %65, %67 : vector<2x16x128xf32>
    %69 = arith.addf %12, %68 : vector<2x16x128xf32>
    %cst_45 = arith.constant 0.000000e+00 : f32
    %70 = vector.broadcast %cst_45 : f32 to vector<2x1x128xf32>
    %71 = vector.extract_strided_slice %69 {offsets = [0, 0, 0], sizes = [2, 15, 128], strides = [1, 1, 1]} : vector<2x16x128xf32> to vector<2x15x128xf32>
    %72 = tpu.concatenate %70, %71 in 1 : vector<2x1x128xf32>, vector<2x15x128xf32> -> vector<2x16x128xf32>
    %73 = arith.maximumf %72, %69 : vector<2x16x128xf32>
    %cst_46 = arith.constant 0.000000e+00 : f32
    %74 = vector.broadcast %cst_46 : f32 to vector<2x1x128xf32>
    %75 = vector.extract_strided_slice %69 {offsets = [0, 1, 0], sizes = [2, 15, 128], strides = [1, 1, 1]} : vector<2x16x128xf32> to vector<2x15x128xf32>
    %76 = tpu.concatenate %75, %74 in 1 : vector<2x15x128xf32>, vector<2x1x128xf32> -> vector<2x16x128xf32>
    %77 = arith.maximumf %73, %76 : vector<2x16x128xf32>
    %cst_47 = arith.constant 0.000000e+00 : f32
    %78 = vector.broadcast %cst_47 : f32 to vector<2x16x8xf32>
    %79 = vector.extract_strided_slice %77 {offsets = [0, 0, 8], sizes = [2, 16, 120], strides = [1, 1, 1]} : vector<2x16x128xf32> to vector<2x16x120xf32>
    %80 = tpu.concatenate %79, %78 in 2 : vector<2x16x120xf32>, vector<2x16x8xf32> -> vector<2x16x128xf32>
    %81 = arith.maximumf %80, %77 : vector<2x16x128xf32>
    %cst_48 = arith.constant 0.000000e+00 : f32
    %82 = vector.broadcast %cst_48 : f32 to vector<2x16x8xf32>
    %83 = vector.extract_strided_slice %77 {offsets = [0, 0, 0], sizes = [2, 16, 120], strides = [1, 1, 1]} : vector<2x16x128xf32> to vector<2x16x120xf32>
    %84 = tpu.concatenate %82, %83 in 2 : vector<2x16x8xf32>, vector<2x16x120xf32> -> vector<2x16x128xf32>
    %85 = arith.maximumf %81, %84 : vector<2x16x128xf32>
    %86 = vector.shape_cast %85 : vector<2x16x128xf32> to vector<32x128xf32>
    %cst_49 = arith.constant dense<0.000000e+00> : vector<32x128xf32>
    %87 = tpu.matmul %86, %0, %cst_49 {dimension_numbers = #tpu.dot_dimension_numbers<[1], [0], [0], [1], [0, 0, 1, 1], [], []>} : vector<32x128xf32>, vector<128x128xf32>, vector<32x128xf32> -> vector<32x128xf32>
    %cst_50 = arith.constant 1.000000e-01 : f32
    %88 = vector.broadcast %cst_50 : f32 to vector<32x128xf32>
    %89 = arith.cmpf ogt, %56, %88 : vector<32x128xf32>
    %cst_51 = arith.constant 1.000000e-01 : f32
    %90 = vector.broadcast %cst_51 : f32 to vector<32x128xf32>
    %91 = arith.cmpf ogt, %87, %90 : vector<32x128xf32>
    %92 = arith.andi %89, %91 : vector<32x128xi1>
    %93 = arith.extui %92 : vector<32x128xi1> to vector<32x128xi32>
    %94 = arith.sitofp %93 : vector<32x128xi32> to vector<32x128xf32>
    %95 = vector.shape_cast %94 : vector<32x128xf32> to vector<2x16x128xf32>
    %96 = arith.mulf %69, %95 : vector<2x16x128xf32>
    %c0_52 = arith.constant 0 : index
    %c0_53 = arith.constant 0 : index
    %c0_54 = arith.constant 0 : index
    %c0_55 = arith.constant 0 : index
    %97 = vector.load %arg14[%c0_52, %c0_53, %c0_54, %c0_55] : memref<4x2x16x128xf32, #tpu.memory_space<vmem>>, vector<1x2x16x128xf32>
    %98 = vector.shape_cast %97 : vector<1x2x16x128xf32> to vector<2x16x128xf32>
    %99 = vector.shape_cast %96 : vector<2x16x128xf32> to vector<1x2x16x128xf32>
    tpu.vector_store %arg14[%c0_52, %c0_53, %c0_54, %c0_55], %99 {strides = array<i32>} : memref<4x2x16x128xf32, #tpu.memory_space<vmem>>, vector<1x2x16x128xf32>,
    %cst_56 = arith.constant 0.000000e+00 : f32
    %100 = vector.broadcast %cst_56 : f32 to vector<2x1x128xf32>
    %101 = vector.extract_strided_slice %96 {offsets = [0, 1, 0], sizes = [2, 15, 128], strides = [1, 1, 1]} : vector<2x16x128xf32> to vector<2x15x128xf32>
    %102 = tpu.concatenate %101, %100 in 1 : vector<2x15x128xf32>, vector<2x1x128xf32> -> vector<2x16x128xf32>
    %cst_57 = arith.constant 0.000000e+00 : f32
    %103 = vector.broadcast %cst_57 : f32 to vector<2x1x128xf32>
    %104 = vector.extract_strided_slice %96 {offsets = [0, 1, 0], sizes = [2, 15, 128], strides = [1, 1, 1]} : vector<2x16x128xf32> to vector<2x15x128xf32>
    %105 = tpu.concatenate %104, %103 in 1 : vector<2x15x128xf32>, vector<2x1x128xf32> -> vector<2x16x128xf32>
    %cst_58 = arith.constant 0.000000e+00 : f32
    %106 = vector.broadcast %cst_58 : f32 to vector<2x1x128xf32>
    %107 = vector.extract_strided_slice %105 {offsets = [0, 1, 0], sizes = [2, 15, 128], strides = [1, 1, 1]} : vector<2x16x128xf32> to vector<2x15x128xf32>
    %108 = tpu.concatenate %107, %106 in 1 : vector<2x15x128xf32>, vector<2x1x128xf32> -> vector<2x16x128xf32>
    %cst_59 = arith.constant 0.000000e+00 : f32
    %109 = vector.broadcast %cst_59 : f32 to vector<2x16x8xf32>
    %110 = vector.extract_strided_slice %96 {offsets = [0, 0, 8], sizes = [2, 16, 120], strides = [1, 1, 1]} : vector<2x16x128xf32> to vector<2x16x120xf32>
    %111 = tpu.concatenate %110, %109 in 2 : vector<2x16x120xf32>, vector<2x16x8xf32> -> vector<2x16x128xf32>
    %cst_60 = arith.constant 0.000000e+00 : f32
    %112 = vector.broadcast %cst_60 : f32 to vector<2x16x16xf32>
    %113 = vector.extract_strided_slice %96 {offsets = [0, 0, 16], sizes = [2, 16, 112], strides = [1, 1, 1]} : vector<2x16x128xf32> to vector<2x16x112xf32>
    %114 = tpu.concatenate %113, %112 in 2 : vector<2x16x112xf32>, vector<2x16x16xf32> -> vector<2x16x128xf32>
    %cst_61 = arith.constant 0.000000e+00 : f32
    %115 = vector.broadcast %cst_61 : f32 to vector<2x16x8xf32>
    %116 = vector.extract_strided_slice %102 {offsets = [0, 0, 8], sizes = [2, 16, 120], strides = [1, 1, 1]} : vector<2x16x128xf32> to vector<2x16x120xf32>
    %117 = tpu.concatenate %116, %115 in 2 : vector<2x16x120xf32>, vector<2x16x8xf32> -> vector<2x16x128xf32>
    %cst_62 = arith.constant 0.000000e+00 : f32
    %118 = vector.broadcast %cst_62 : f32 to vector<2x16x16xf32>
    %119 = vector.extract_strided_slice %102 {offsets = [0, 0, 16], sizes = [2, 16, 112], strides = [1, 1, 1]} : vector<2x16x128xf32> to vector<2x16x112xf32>
    %120 = tpu.concatenate %119, %118 in 2 : vector<2x16x112xf32>, vector<2x16x16xf32> -> vector<2x16x128xf32>
    %cst_63 = arith.constant 0.000000e+00 : f32
    %121 = vector.broadcast %cst_63 : f32 to vector<2x16x8xf32>
    %122 = vector.extract_strided_slice %108 {offsets = [0, 0, 8], sizes = [2, 16, 120], strides = [1, 1, 1]} : vector<2x16x128xf32> to vector<2x16x120xf32>
    %123 = tpu.concatenate %122, %121 in 2 : vector<2x16x120xf32>, vector<2x16x8xf32> -> vector<2x16x128xf32>
    %cst_64 = arith.constant 0.000000e+00 : f32
    %124 = vector.broadcast %cst_64 : f32 to vector<2x16x16xf32>
    %125 = vector.extract_strided_slice %108 {offsets = [0, 0, 16], sizes = [2, 16, 112], strides = [1, 1, 1]} : vector<2x16x128xf32> to vector<2x16x112xf32>
    %126 = tpu.concatenate %125, %124 in 2 : vector<2x16x112xf32>, vector<2x16x16xf32> -> vector<2x16x128xf32>
    %127 = tpu.concatenate %96, %111, %114, %102, %117, %120, %108, %123, %126 in 2 : vector<2x16x128xf32>, vector<2x16x128xf32>, vector<2x16x128xf32>, vector<2x16x128xf32>, vector<2x16x128xf32>, vector<2x16x128xf32>, vector<2x16x128xf32>, vector<2x16x128xf32>, vector<2x16x128xf32> -> vector<2x16x1152xf32>
    %128 = vector.shape_cast %127 : vector<2x16x1152xf32> to vector<32x1152xf32>
    %cst_65 = arith.constant dense<0.000000e+00> : vector<32x140xf32>
    %129 = tpu.matmul %128, %4, %cst_65 {dimension_numbers = #tpu.dot_dimension_numbers<[1], [0], [0], [1], [0, 0, 1, 1], [], []>} : vector<32x1152xf32>, vector<1152x140xf32>, vector<32x140xf32> -> vector<32x140xf32>
    %130 = vector.broadcast %5 : vector<1x140xf32> to vector<32x140xf32>
    %131 = arith.addf %129, %130 : vector<32x140xf32>
    %132 = vector.shape_cast %131 : vector<32x140xf32> to vector<2x16x140xf32>
    %133 = vector.extract_strided_slice %132 {offsets = [0, 0, 0], sizes = [2, 1, 140], strides = [1, 1, 1]} : vector<2x16x140xf32> to vector<2x1x140xf32>
    %134 = vector.extract_strided_slice %132 {offsets = [0, 1, 0], sizes = [2, 1, 140], strides = [1, 1, 1]} : vector<2x16x140xf32> to vector<2x1x140xf32>
    %135 = arith.maximumf %133, %134 : vector<2x1x140xf32>
    %136 = vector.extract_strided_slice %132 {offsets = [0, 2, 0], sizes = [2, 1, 140], strides = [1, 1, 1]} : vector<2x16x140xf32> to vector<2x1x140xf32>
    %137 = vector.extract_strided_slice %132 {offsets = [0, 3, 0], sizes = [2, 1, 140], strides = [1, 1, 1]} : vector<2x16x140xf32> to vector<2x1x140xf32>
    %138 = arith.maximumf %136, %137 : vector<2x1x140xf32>
    %139 = vector.extract_strided_slice %132 {offsets = [0, 4, 0], sizes = [2, 1, 140], strides = [1, 1, 1]} : vector<2x16x140xf32> to vector<2x1x140xf32>
    %140 = vector.extract_strided_slice %132 {offsets = [0, 5, 0], sizes = [2, 1, 140], strides = [1, 1, 1]} : vector<2x16x140xf32> to vector<2x1x140xf32>
    %141 = arith.maximumf %139, %140 : vector<2x1x140xf32>
    %142 = vector.extract_strided_slice %132 {offsets = [0, 6, 0], sizes = [2, 1, 140], strides = [1, 1, 1]} : vector<2x16x140xf32> to vector<2x1x140xf32>
    %143 = vector.extract_strided_slice %132 {offsets = [0, 7, 0], sizes = [2, 1, 140], strides = [1, 1, 1]} : vector<2x16x140xf32> to vector<2x1x140xf32>
    %144 = arith.maximumf %142, %143 : vector<2x1x140xf32>
    %145 = vector.extract_strided_slice %132 {offsets = [0, 8, 0], sizes = [2, 1, 140], strides = [1, 1, 1]} : vector<2x16x140xf32> to vector<2x1x140xf32>
    %146 = vector.extract_strided_slice %132 {offsets = [0, 9, 0], sizes = [2, 1, 140], strides = [1, 1, 1]} : vector<2x16x140xf32> to vector<2x1x140xf32>
    %147 = arith.maximumf %145, %146 : vector<2x1x140xf32>
    %148 = vector.extract_strided_slice %132 {offsets = [0, 10, 0], sizes = [2, 1, 140], strides = [1, 1, 1]} : vector<2x16x140xf32> to vector<2x1x140xf32>
    %149 = vector.extract_strided_slice %132 {offsets = [0, 11, 0], sizes = [2, 1, 140], strides = [1, 1, 1]} : vector<2x16x140xf32> to vector<2x1x140xf32>
    %150 = arith.maximumf %148, %149 : vector<2x1x140xf32>
    %151 = vector.extract_strided_slice %132 {offsets = [0, 12, 0], sizes = [2, 1, 140], strides = [1, 1, 1]} : vector<2x16x140xf32> to vector<2x1x140xf32>
    %152 = vector.extract_strided_slice %132 {offsets = [0, 13, 0], sizes = [2, 1, 140], strides = [1, 1, 1]} : vector<2x16x140xf32> to vector<2x1x140xf32>
    %153 = arith.maximumf %151, %152 : vector<2x1x140xf32>
    %154 = tpu.concatenate %135, %138, %141, %144, %147, %150, %153 in 1 : vector<2x1x140xf32>, vector<2x1x140xf32>, vector<2x1x140xf32>, vector<2x1x140xf32>, vector<2x1x140xf32>, vector<2x1x140xf32>, vector<2x1x140xf32> -> vector<2x7x140xf32>
    %cst_66 = arith.constant 0.000000e+00 : f32
    %155 = vector.broadcast %cst_66 : f32 to vector<2x7x10xf32>
    %156 = vector.extract_strided_slice %154 {offsets = [0, 0, 10], sizes = [2, 7, 130], strides = [1, 1, 1]} : vector<2x7x140xf32> to vector<2x7x130xf32>
    %157 = tpu.concatenate %156, %155 in 2 : vector<2x7x130xf32>, vector<2x7x10xf32> -> vector<2x7x140xf32>
    %158 = arith.maximumf %154, %157 : vector<2x7x140xf32>
    %cst_67 = arith.constant 0.000000e+00 : f32
    %159 = vector.broadcast %cst_67 : f32 to vector<2x7x140xf32>
    %160 = arith.maximumf %158, %159 : vector<2x7x140xf32>
    %cst_68 = arith.constant 0.000000e+00 : f32
    %161 = vector.broadcast %cst_68 : f32 to vector<2x3x140xf32>
    %162 = tpu.concatenate %160, %161 in 1 : vector<2x7x140xf32>, vector<2x3x140xf32> -> vector<2x10x140xf32>
    %163 = vector.extract_strided_slice %162 {offsets = [0, 0, 0], sizes = [2, 8, 140], strides = [1, 1, 1]} : vector<2x10x140xf32> to vector<2x8x140xf32>
    %164 = vector.extract_strided_slice %162 {offsets = [0, 1, 0], sizes = [2, 8, 140], strides = [1, 1, 1]} : vector<2x10x140xf32> to vector<2x8x140xf32>
    %165 = vector.extract_strided_slice %162 {offsets = [0, 2, 0], sizes = [2, 8, 140], strides = [1, 1, 1]} : vector<2x10x140xf32> to vector<2x8x140xf32>
    %cst_69 = arith.constant 0.000000e+00 : f32
    %166 = vector.broadcast %cst_69 : f32 to vector<2x8x20xf32>
    %167 = vector.extract_strided_slice %163 {offsets = [0, 0, 20], sizes = [2, 8, 120], strides = [1, 1, 1]} : vector<2x8x140xf32> to vector<2x8x120xf32>
    %168 = tpu.concatenate %167, %166 in 2 : vector<2x8x120xf32>, vector<2x8x20xf32> -> vector<2x8x140xf32>
    %cst_70 = arith.constant 0.000000e+00 : f32
    %169 = vector.broadcast %cst_70 : f32 to vector<2x8x40xf32>
    %170 = vector.extract_strided_slice %163 {offsets = [0, 0, 40], sizes = [2, 8, 100], strides = [1, 1, 1]} : vector<2x8x140xf32> to vector<2x8x100xf32>
    %171 = tpu.concatenate %170, %169 in 2 : vector<2x8x100xf32>, vector<2x8x40xf32> -> vector<2x8x140xf32>
    %cst_71 = arith.constant 0.000000e+00 : f32
    %172 = vector.broadcast %cst_71 : f32 to vector<2x8x20xf32>
    %173 = vector.extract_strided_slice %164 {offsets = [0, 0, 20], sizes = [2, 8, 120], strides = [1, 1, 1]} : vector<2x8x140xf32> to vector<2x8x120xf32>
    %174 = tpu.concatenate %173, %172 in 2 : vector<2x8x120xf32>, vector<2x8x20xf32> -> vector<2x8x140xf32>
    %cst_72 = arith.constant 0.000000e+00 : f32
    %175 = vector.broadcast %cst_72 : f32 to vector<2x8x40xf32>
    %176 = vector.extract_strided_slice %164 {offsets = [0, 0, 40], sizes = [2, 8, 100], strides = [1, 1, 1]} : vector<2x8x140xf32> to vector<2x8x100xf32>
    %177 = tpu.concatenate %176, %175 in 2 : vector<2x8x100xf32>, vector<2x8x40xf32> -> vector<2x8x140xf32>
    %cst_73 = arith.constant 0.000000e+00 : f32
    %178 = vector.broadcast %cst_73 : f32 to vector<2x8x20xf32>
    %179 = vector.extract_strided_slice %165 {offsets = [0, 0, 20], sizes = [2, 8, 120], strides = [1, 1, 1]} : vector<2x8x140xf32> to vector<2x8x120xf32>
    %180 = tpu.concatenate %179, %178 in 2 : vector<2x8x120xf32>, vector<2x8x20xf32> -> vector<2x8x140xf32>
    %cst_74 = arith.constant 0.000000e+00 : f32
    %181 = vector.broadcast %cst_74 : f32 to vector<2x8x40xf32>
    %182 = vector.extract_strided_slice %165 {offsets = [0, 0, 40], sizes = [2, 8, 100], strides = [1, 1, 1]} : vector<2x8x140xf32> to vector<2x8x100xf32>
    %183 = tpu.concatenate %182, %181 in 2 : vector<2x8x100xf32>, vector<2x8x40xf32> -> vector<2x8x140xf32>
    %184 = tpu.concatenate %163, %168, %171, %164, %174, %177, %165, %180, %183 in 2 : vector<2x8x140xf32>, vector<2x8x140xf32>, vector<2x8x140xf32>, vector<2x8x140xf32>, vector<2x8x140xf32>, vector<2x8x140xf32>, vector<2x8x140xf32>, vector<2x8x140xf32>, vector<2x8x140xf32> -> vector<2x8x1260xf32>
    %185 = vector.shape_cast %184 : vector<2x8x1260xf32> to vector<16x1260xf32>
    %cst_75 = arith.constant dense<0.000000e+00> : vector<16x100xf32>
    %186 = tpu.matmul %185, %6, %cst_75 {dimension_numbers = #tpu.dot_dimension_numbers<[1], [0], [0], [1], [0, 0, 1, 1], [], []>} : vector<16x1260xf32>, vector<1260x100xf32>, vector<16x100xf32> -> vector<16x100xf32>
    %187 = vector.broadcast %7 : vector<1x100xf32> to vector<16x100xf32>
    %188 = arith.addf %186, %187 : vector<16x100xf32>
    %189 = vector.shape_cast %188 : vector<16x100xf32> to vector<2x8x100xf32>
    %190 = vector.extract_strided_slice %189 {offsets = [0, 0, 0], sizes = [2, 1, 100], strides = [1, 1, 1]} : vector<2x8x100xf32> to vector<2x1x100xf32>
    %191 = vector.extract_strided_slice %189 {offsets = [0, 1, 0], sizes = [2, 1, 100], strides = [1, 1, 1]} : vector<2x8x100xf32> to vector<2x1x100xf32>
    %192 = arith.maximumf %190, %191 : vector<2x1x100xf32>
    %193 = vector.extract_strided_slice %189 {offsets = [0, 2, 0], sizes = [2, 1, 100], strides = [1, 1, 1]} : vector<2x8x100xf32> to vector<2x1x100xf32>
    %194 = vector.extract_strided_slice %189 {offsets = [0, 3, 0], sizes = [2, 1, 100], strides = [1, 1, 1]} : vector<2x8x100xf32> to vector<2x1x100xf32>
    %195 = arith.maximumf %193, %194 : vector<2x1x100xf32>
    %196 = tpu.concatenate %192, %195 in 1 : vector<2x1x100xf32>, vector<2x1x100xf32> -> vector<2x2x100xf32>
    %cst_76 = arith.constant 0.000000e+00 : f32
    %197 = vector.broadcast %cst_76 : f32 to vector<2x2x20xf32>
    %198 = vector.extract_strided_slice %196 {offsets = [0, 0, 20], sizes = [2, 2, 80], strides = [1, 1, 1]} : vector<2x2x100xf32> to vector<2x2x80xf32>
    %199 = tpu.concatenate %198, %197 in 2 : vector<2x2x80xf32>, vector<2x2x20xf32> -> vector<2x2x100xf32>
    %200 = arith.maximumf %196, %199 : vector<2x2x100xf32>
    %cst_77 = arith.constant 0.000000e+00 : f32
    %201 = vector.broadcast %cst_77 : f32 to vector<2x2x100xf32>
    %202 = arith.maximumf %200, %201 : vector<2x2x100xf32>
    %203 = vector.extract_strided_slice %202 {offsets = [0, 0, 0], sizes = [2, 1, 20], strides = [1, 1, 1]} : vector<2x2x100xf32> to vector<2x1x20xf32>
    %204 = vector.shape_cast %203 : vector<2x1x20xf32> to vector<2x20xf32>
    %205 = vector.extract_strided_slice %202 {offsets = [0, 0, 40], sizes = [2, 1, 20], strides = [1, 1, 1]} : vector<2x2x100xf32> to vector<2x1x20xf32>
    %206 = vector.shape_cast %205 : vector<2x1x20xf32> to vector<2x20xf32>
    %207 = vector.extract_strided_slice %202 {offsets = [0, 1, 0], sizes = [2, 1, 20], strides = [1, 1, 1]} : vector<2x2x100xf32> to vector<2x1x20xf32>
    %208 = vector.shape_cast %207 : vector<2x1x20xf32> to vector<2x20xf32>
    %209 = vector.extract_strided_slice %202 {offsets = [0, 1, 40], sizes = [2, 1, 20], strides = [1, 1, 1]} : vector<2x2x100xf32> to vector<2x1x20xf32>
    %210 = vector.shape_cast %209 : vector<2x1x20xf32> to vector<2x20xf32>
    %211 = tpu.concatenate %204, %206, %208, %210 in 1 : vector<2x20xf32>, vector<2x20xf32>, vector<2x20xf32>, vector<2x20xf32> -> vector<2x80xf32>
    %cst_78 = arith.constant dense<0.000000e+00> : vector<2x16xf32>
    %212 = tpu.matmul %211, %8, %cst_78 {dimension_numbers = #tpu.dot_dimension_numbers<[1], [0], [0], [1], [0, 0, 1, 1], [], []>} : vector<2x80xf32>, vector<80x16xf32>, vector<2x16xf32> -> vector<2x16xf32>
    %213 = vector.broadcast %9 : vector<1x16xf32> to vector<2x16xf32>
    %214 = arith.addf %212, %213 : vector<2x16xf32>
    %cst_79 = arith.constant 0.000000e+00 : f32
    %215 = vector.broadcast %cst_79 : f32 to vector<2x16xf32>
    %216 = arith.maximumf %214, %215 : vector<2x16xf32>
    %217 = vector.broadcast %10 : vector<1x16xf32> to vector<2x16xf32>
    %218 = arith.mulf %216, %217 : vector<2x16xf32>
    %cst_80 = arith.constant dense<0.000000e+00> : vector<2xf32>
    %219 = vector.multi_reduction <add>, %218, %cst_80 [1] : vector<2x16xf32> to vector<2xf32>
    %220 = vector.shape_cast %219 : vector<2xf32> to vector<2x1xf32>
    %221 = vector.broadcast %11 : vector<1x1xf32> to vector<2x1xf32>
    %222 = arith.addf %220, %221 : vector<2x1xf32>
    %223 = arith.negf %222 : vector<2x1xf32>
    %224 = math.exp %223 : vector<2x1xf32>
    %cst_81 = arith.constant 1.000000e+00 : f32
    %225 = vector.broadcast %cst_81 : f32 to vector<2x1xf32>
    %226 = arith.addf %225, %224 : vector<2x1xf32>
    %227 = arith.divf %225, %226 : vector<2x1xf32>
    %c0_82 = arith.constant 0 : index
    %c0_83 = arith.constant 0 : index
    %c0_84 = arith.constant 0 : index
    %228 = vector.load %arg15[%c0_82, %c0_83, %c0_84] : memref<4x2x1xf32, #tpu.memory_space<vmem>>, vector<1x2x1xf32>
    %229 = vector.shape_cast %228 : vector<1x2x1xf32> to vector<2x1xf32>
    %230 = vector.shape_cast %227 : vector<2x1xf32> to vector<1x2x1xf32>
    tpu.vector_store %arg15[%c0_82, %c0_83, %c0_84], %230 {strides = array<i32>} : memref<4x2x1xf32, #tpu.memory_space<vmem>>, vector<1x2x1xf32>,
    %cst_85 = arith.constant 0.000000e+00 : f32
    %231 = vector.broadcast %cst_85 : f32 to vector<2x1x128xf32>
    %232 = vector.extract_strided_slice %96 {offsets = [0, 0, 0], sizes = [2, 15, 128], strides = [1, 1, 1]} : vector<2x16x128xf32> to vector<2x15x128xf32>
    %233 = tpu.concatenate %231, %232 in 1 : vector<2x1x128xf32>, vector<2x15x128xf32> -> vector<2x16x128xf32>
    %cst_86 = arith.constant 0.000000e+00 : f32
    %234 = vector.broadcast %cst_86 : f32 to vector<2x1x128xf32>
    %235 = vector.extract_strided_slice %96 {offsets = [0, 1, 0], sizes = [2, 15, 128], strides = [1, 1, 1]} : vector<2x16x128xf32> to vector<2x15x128xf32>
    %236 = tpu.concatenate %235, %234 in 1 : vector<2x15x128xf32>, vector<2x1x128xf32> -> vector<2x16x128xf32>
    %cst_87 = arith.constant 2.000000e+00 : f32
    %237 = vector.broadcast %cst_87 : f32 to vector<2x16x128xf32>
    %238 = arith.mulf %237, %96 : vector<2x16x128xf32>
    %239 = arith.addf %233, %238 : vector<2x16x128xf32>
    %240 = arith.addf %239, %236 : vector<2x16x128xf32>
    %241 = arith.subf %236, %233 : vector<2x16x128xf32>
    %cst_88 = arith.constant 0.000000e+00 : f32
    %242 = vector.broadcast %cst_88 : f32 to vector<2x16x8xf32>
    %243 = vector.extract_strided_slice %240 {offsets = [0, 0, 8], sizes = [2, 16, 120], strides = [1, 1, 1]} : vector<2x16x128xf32> to vector<2x16x120xf32>
    %244 = tpu.concatenate %243, %242 in 2 : vector<2x16x120xf32>, vector<2x16x8xf32> -> vector<2x16x128xf32>
    %cst_89 = arith.constant 0.000000e+00 : f32
    %245 = vector.broadcast %cst_89 : f32 to vector<2x16x8xf32>
    %246 = vector.extract_strided_slice %240 {offsets = [0, 0, 0], sizes = [2, 16, 120], strides = [1, 1, 1]} : vector<2x16x128xf32> to vector<2x16x120xf32>
    %247 = tpu.concatenate %245, %246 in 2 : vector<2x16x8xf32>, vector<2x16x120xf32> -> vector<2x16x128xf32>
    %248 = arith.subf %244, %247 : vector<2x16x128xf32>
    %cst_90 = arith.constant 1.250000e-01 : f32
    %249 = vector.broadcast %cst_90 : f32 to vector<2x16x128xf32>
    %250 = arith.mulf %248, %249 : vector<2x16x128xf32>
    %cst_91 = arith.constant 0.000000e+00 : f32
    %251 = vector.broadcast %cst_91 : f32 to vector<2x16x8xf32>
    %252 = vector.extract_strided_slice %241 {offsets = [0, 0, 0], sizes = [2, 16, 120], strides = [1, 1, 1]} : vector<2x16x128xf32> to vector<2x16x120xf32>
    %253 = tpu.concatenate %251, %252 in 2 : vector<2x16x8xf32>, vector<2x16x120xf32> -> vector<2x16x128xf32>
    %cst_92 = arith.constant 2.000000e+00 : f32
    %254 = vector.broadcast %cst_92 : f32 to vector<2x16x128xf32>
    %255 = arith.mulf %254, %241 : vector<2x16x128xf32>
    %256 = arith.addf %253, %255 : vector<2x16x128xf32>
    %cst_93 = arith.constant 0.000000e+00 : f32
    %257 = vector.broadcast %cst_93 : f32 to vector<2x16x8xf32>
    %258 = vector.extract_strided_slice %241 {offsets = [0, 0, 8], sizes = [2, 16, 120], strides = [1, 1, 1]} : vector<2x16x128xf32> to vector<2x16x120xf32>
    %259 = tpu.concatenate %258, %257 in 2 : vector<2x16x120xf32>, vector<2x16x8xf32> -> vector<2x16x128xf32>
    %260 = arith.addf %256, %259 : vector<2x16x128xf32>
    %cst_94 = arith.constant 1.250000e-01 : f32
    %261 = vector.broadcast %cst_94 : f32 to vector<2x16x128xf32>
    %262 = arith.mulf %260, %261 : vector<2x16x128xf32>
    %263 = arith.maximumf %233, %96 : vector<2x16x128xf32>
    %264 = arith.maximumf %263, %236 : vector<2x16x128xf32>
    %cst_95 = arith.constant 0.000000e+00 : f32
    %265 = vector.broadcast %cst_95 : f32 to vector<2x16x8xf32>
    %266 = vector.extract_strided_slice %264 {offsets = [0, 0, 8], sizes = [2, 16, 120], strides = [1, 1, 1]} : vector<2x16x128xf32> to vector<2x16x120xf32>
    %267 = tpu.concatenate %266, %265 in 2 : vector<2x16x120xf32>, vector<2x16x8xf32> -> vector<2x16x128xf32>
    %268 = arith.maximumf %267, %264 : vector<2x16x128xf32>
    %cst_96 = arith.constant 0.000000e+00 : f32
    %269 = vector.broadcast %cst_96 : f32 to vector<2x16x8xf32>
    %270 = vector.extract_strided_slice %264 {offsets = [0, 0, 0], sizes = [2, 16, 120], strides = [1, 1, 1]} : vector<2x16x128xf32> to vector<2x16x120xf32>
    %271 = tpu.concatenate %269, %270 in 2 : vector<2x16x8xf32>, vector<2x16x120xf32> -> vector<2x16x128xf32>
    %272 = arith.maximumf %268, %271 : vector<2x16x128xf32>
    %273 = vector.shape_cast %272 : vector<2x16x128xf32> to vector<32x128xf32>
    %cst_97 = arith.constant dense<0.000000e+00> : vector<32x128xf32>
    %274 = tpu.matmul %273, %0, %cst_97 {dimension_numbers = #tpu.dot_dimension_numbers<[1], [0], [0], [1], [0, 0, 1, 1], [], []>} : vector<32x128xf32>, vector<128x128xf32>, vector<32x128xf32> -> vector<32x128xf32>
    %275 = tpu.concatenate %96, %250, %262 in 2 : vector<2x16x128xf32>, vector<2x16x128xf32>, vector<2x16x128xf32> -> vector<2x16x384xf32>
    %276 = vector.shape_cast %275 : vector<2x16x384xf32> to vector<32x384xf32>
    %cst_98 = arith.constant dense<0.000000e+00> : vector<32x512xf32>
    %277 = tpu.matmul %276, %1, %cst_98 {dimension_numbers = #tpu.dot_dimension_numbers<[1], [0], [0], [1], [0, 0, 1, 1], [], []>} : vector<32x384xf32>, vector<384x512xf32>, vector<32x512xf32> -> vector<32x512xf32>
    %278 = vector.broadcast %2 : vector<1x512xf32> to vector<32x512xf32>
    %279 = arith.addf %277, %278 : vector<32x512xf32>
    %cst_99 = arith.constant 0.000000e+00 : f32
    %280 = vector.broadcast %cst_99 : f32 to vector<32x512xf32>
    %281 = arith.maximumf %279, %280 : vector<32x512xf32>
    %cst_100 = arith.constant dense<0.000000e+00> : vector<32x128xf32>
    %282 = tpu.matmul %281, %3, %cst_100 {dimension_numbers = #tpu.dot_dimension_numbers<[1], [0], [0], [1], [0, 0, 1, 1], [], []>} : vector<32x512xf32>, vector<512x128xf32>, vector<32x128xf32> -> vector<32x128xf32>
    %283 = vector.shape_cast %282 : vector<32x128xf32> to vector<2x16x128xf32>
    %c1 = arith.constant 1 : index
    %c0_101 = arith.constant 0 : index
    %c0_102 = arith.constant 0 : index
    %c0_103 = arith.constant 0 : index
    %284 = vector.load %arg1[%c1, %c0_101, %c0_102, %c0_103] : memref<4x2x16x128xf32, #tpu.memory_space<vmem>>, vector<1x2x16x128xf32>
    %285 = vector.shape_cast %284 : vector<1x2x16x128xf32> to vector<2x16x128xf32>
    %286 = arith.mulf %283, %285 : vector<2x16x128xf32>
    %287 = arith.addf %96, %286 : vector<2x16x128xf32>
    %cst_104 = arith.constant 0.000000e+00 : f32
    %288 = vector.broadcast %cst_104 : f32 to vector<2x1x128xf32>
    %289 = vector.extract_strided_slice %287 {offsets = [0, 0, 0], sizes = [2, 15, 128], strides = [1, 1, 1]} : vector<2x16x128xf32> to vector<2x15x128xf32>
    %290 = tpu.concatenate %288, %289 in 1 : vector<2x1x128xf32>, vector<2x15x128xf32> -> vector<2x16x128xf32>
    %291 = arith.maximumf %290, %287 : vector<2x16x128xf32>
    %cst_105 = arith.constant 0.000000e+00 : f32
    %292 = vector.broadcast %cst_105 : f32 to vector<2x1x128xf32>
    %293 = vector.extract_strided_slice %287 {offsets = [0, 1, 0], sizes = [2, 15, 128], strides = [1, 1, 1]} : vector<2x16x128xf32> to vector<2x15x128xf32>
    %294 = tpu.concatenate %293, %292 in 1 : vector<2x15x128xf32>, vector<2x1x128xf32> -> vector<2x16x128xf32>
    %295 = arith.maximumf %291, %294 : vector<2x16x128xf32>
    %cst_106 = arith.constant 0.000000e+00 : f32
    %296 = vector.broadcast %cst_106 : f32 to vector<2x16x8xf32>
    %297 = vector.extract_strided_slice %295 {offsets = [0, 0, 8], sizes = [2, 16, 120], strides = [1, 1, 1]} : vector<2x16x128xf32> to vector<2x16x120xf32>
    %298 = tpu.concatenate %297, %296 in 2 : vector<2x16x120xf32>, vector<2x16x8xf32> -> vector<2x16x128xf32>
    %299 = arith.maximumf %298, %295 : vector<2x16x128xf32>
    %cst_107 = arith.constant 0.000000e+00 : f32
    %300 = vector.broadcast %cst_107 : f32 to vector<2x16x8xf32>
    %301 = vector.extract_strided_slice %295 {offsets = [0, 0, 0], sizes = [2, 16, 120], strides = [1, 1, 1]} : vector<2x16x128xf32> to vector<2x16x120xf32>
    %302 = tpu.concatenate %300, %301 in 2 : vector<2x16x8xf32>, vector<2x16x120xf32> -> vector<2x16x128xf32>
    %303 = arith.maximumf %299, %302 : vector<2x16x128xf32>
    %304 = vector.shape_cast %303 : vector<2x16x128xf32> to vector<32x128xf32>
    %cst_108 = arith.constant dense<0.000000e+00> : vector<32x128xf32>
    %305 = tpu.matmul %304, %0, %cst_108 {dimension_numbers = #tpu.dot_dimension_numbers<[1], [0], [0], [1], [0, 0, 1, 1], [], []>} : vector<32x128xf32>, vector<128x128xf32>, vector<32x128xf32> -> vector<32x128xf32>
    %cst_109 = arith.constant 1.000000e-01 : f32
    %306 = vector.broadcast %cst_109 : f32 to vector<32x128xf32>
    %307 = arith.cmpf ogt, %274, %306 : vector<32x128xf32>
    %cst_110 = arith.constant 1.000000e-01 : f32
    %308 = vector.broadcast %cst_110 : f32 to vector<32x128xf32>
    %309 = arith.cmpf ogt, %305, %308 : vector<32x128xf32>
    %310 = arith.andi %307, %309 : vector<32x128xi1>
    %311 = arith.extui %310 : vector<32x128xi1> to vector<32x128xi32>
    %312 = arith.sitofp %311 : vector<32x128xi32> to vector<32x128xf32>
    %313 = vector.shape_cast %312 : vector<32x128xf32> to vector<2x16x128xf32>
    %314 = arith.mulf %287, %313 : vector<2x16x128xf32>
    %c1_111 = arith.constant 1 : index
    %c0_112 = arith.constant 0 : index
    %c0_113 = arith.constant 0 : index
    %c0_114 = arith.constant 0 : index
    %315 = vector.load %arg14[%c1_111, %c0_112, %c0_113, %c0_114] : memref<4x2x16x128xf32, #tpu.memory_space<vmem>>, vector<1x2x16x128xf32>
    %316 = vector.shape_cast %315 : vector<1x2x16x128xf32> to vector<2x16x128xf32>
    %317 = vector.shape_cast %314 : vector<2x16x128xf32> to vector<1x2x16x128xf32>
    tpu.vector_store %arg14[%c1_111, %c0_112, %c0_113, %c0_114], %317 {strides = array<i32>} : memref<4x2x16x128xf32, #tpu.memory_space<vmem>>, vector<1x2x16x128xf32>,
    %cst_115 = arith.constant 0.000000e+00 : f32
    %318 = vector.broadcast %cst_115 : f32 to vector<2x1x128xf32>
    %319 = vector.extract_strided_slice %314 {offsets = [0, 1, 0], sizes = [2, 15, 128], strides = [1, 1, 1]} : vector<2x16x128xf32> to vector<2x15x128xf32>
    %320 = tpu.concatenate %319, %318 in 1 : vector<2x15x128xf32>, vector<2x1x128xf32> -> vector<2x16x128xf32>
    %cst_116 = arith.constant 0.000000e+00 : f32
    %321 = vector.broadcast %cst_116 : f32 to vector<2x1x128xf32>
    %322 = vector.extract_strided_slice %314 {offsets = [0, 1, 0], sizes = [2, 15, 128], strides = [1, 1, 1]} : vector<2x16x128xf32> to vector<2x15x128xf32>
    %323 = tpu.concatenate %322, %321 in 1 : vector<2x15x128xf32>, vector<2x1x128xf32> -> vector<2x16x128xf32>
    %cst_117 = arith.constant 0.000000e+00 : f32
    %324 = vector.broadcast %cst_117 : f32 to vector<2x1x128xf32>
    %325 = vector.extract_strided_slice %323 {offsets = [0, 1, 0], sizes = [2, 15, 128], strides = [1, 1, 1]} : vector<2x16x128xf32> to vector<2x15x128xf32>
    %326 = tpu.concatenate %325, %324 in 1 : vector<2x15x128xf32>, vector<2x1x128xf32> -> vector<2x16x128xf32>
    %cst_118 = arith.constant 0.000000e+00 : f32
    %327 = vector.broadcast %cst_118 : f32 to vector<2x16x8xf32>
    %328 = vector.extract_strided_slice %314 {offsets = [0, 0, 8], sizes = [2, 16, 120], strides = [1, 1, 1]} : vector<2x16x128xf32> to vector<2x16x120xf32>
    %329 = tpu.concatenate %328, %327 in 2 : vector<2x16x120xf32>, vector<2x16x8xf32> -> vector<2x16x128xf32>
    %cst_119 = arith.constant 0.000000e+00 : f32
    %330 = vector.broadcast %cst_119 : f32 to vector<2x16x16xf32>
    %331 = vector.extract_strided_slice %314 {offsets = [0, 0, 16], sizes = [2, 16, 112], strides = [1, 1, 1]} : vector<2x16x128xf32> to vector<2x16x112xf32>
    %332 = tpu.concatenate %331, %330 in 2 : vector<2x16x112xf32>, vector<2x16x16xf32> -> vector<2x16x128xf32>
    %cst_120 = arith.constant 0.000000e+00 : f32
    %333 = vector.broadcast %cst_120 : f32 to vector<2x16x8xf32>
    %334 = vector.extract_strided_slice %320 {offsets = [0, 0, 8], sizes = [2, 16, 120], strides = [1, 1, 1]} : vector<2x16x128xf32> to vector<2x16x120xf32>
    %335 = tpu.concatenate %334, %333 in 2 : vector<2x16x120xf32>, vector<2x16x8xf32> -> vector<2x16x128xf32>
    %cst_121 = arith.constant 0.000000e+00 : f32
    %336 = vector.broadcast %cst_121 : f32 to vector<2x16x16xf32>
    %337 = vector.extract_strided_slice %320 {offsets = [0, 0, 16], sizes = [2, 16, 112], strides = [1, 1, 1]} : vector<2x16x128xf32> to vector<2x16x112xf32>
    %338 = tpu.concatenate %337, %336 in 2 : vector<2x16x112xf32>, vector<2x16x16xf32> -> vector<2x16x128xf32>
    %cst_122 = arith.constant 0.000000e+00 : f32
    %339 = vector.broadcast %cst_122 : f32 to vector<2x16x8xf32>
    %340 = vector.extract_strided_slice %326 {offsets = [0, 0, 8], sizes = [2, 16, 120], strides = [1, 1, 1]} : vector<2x16x128xf32> to vector<2x16x120xf32>
    %341 = tpu.concatenate %340, %339 in 2 : vector<2x16x120xf32>, vector<2x16x8xf32> -> vector<2x16x128xf32>
    %cst_123 = arith.constant 0.000000e+00 : f32
    %342 = vector.broadcast %cst_123 : f32 to vector<2x16x16xf32>
    %343 = vector.extract_strided_slice %326 {offsets = [0, 0, 16], sizes = [2, 16, 112], strides = [1, 1, 1]} : vector<2x16x128xf32> to vector<2x16x112xf32>
    %344 = tpu.concatenate %343, %342 in 2 : vector<2x16x112xf32>, vector<2x16x16xf32> -> vector<2x16x128xf32>
    %345 = tpu.concatenate %314, %329, %332, %320, %335, %338, %326, %341, %344 in 2 : vector<2x16x128xf32>, vector<2x16x128xf32>, vector<2x16x128xf32>, vector<2x16x128xf32>, vector<2x16x128xf32>, vector<2x16x128xf32>, vector<2x16x128xf32>, vector<2x16x128xf32>, vector<2x16x128xf32> -> vector<2x16x1152xf32>
    %346 = vector.shape_cast %345 : vector<2x16x1152xf32> to vector<32x1152xf32>
    %cst_124 = arith.constant dense<0.000000e+00> : vector<32x140xf32>
    %347 = tpu.matmul %346, %4, %cst_124 {dimension_numbers = #tpu.dot_dimension_numbers<[1], [0], [0], [1], [0, 0, 1, 1], [], []>} : vector<32x1152xf32>, vector<1152x140xf32>, vector<32x140xf32> -> vector<32x140xf32>
    %348 = vector.broadcast %5 : vector<1x140xf32> to vector<32x140xf32>
    %349 = arith.addf %347, %348 : vector<32x140xf32>
    %350 = vector.shape_cast %349 : vector<32x140xf32> to vector<2x16x140xf32>
    %351 = vector.extract_strided_slice %350 {offsets = [0, 0, 0], sizes = [2, 1, 140], strides = [1, 1, 1]} : vector<2x16x140xf32> to vector<2x1x140xf32>
    %352 = vector.extract_strided_slice %350 {offsets = [0, 1, 0], sizes = [2, 1, 140], strides = [1, 1, 1]} : vector<2x16x140xf32> to vector<2x1x140xf32>
    %353 = arith.maximumf %351, %352 : vector<2x1x140xf32>
    %354 = vector.extract_strided_slice %350 {offsets = [0, 2, 0], sizes = [2, 1, 140], strides = [1, 1, 1]} : vector<2x16x140xf32> to vector<2x1x140xf32>
    %355 = vector.extract_strided_slice %350 {offsets = [0, 3, 0], sizes = [2, 1, 140], strides = [1, 1, 1]} : vector<2x16x140xf32> to vector<2x1x140xf32>
    %356 = arith.maximumf %354, %355 : vector<2x1x140xf32>
    %357 = vector.extract_strided_slice %350 {offsets = [0, 4, 0], sizes = [2, 1, 140], strides = [1, 1, 1]} : vector<2x16x140xf32> to vector<2x1x140xf32>
    %358 = vector.extract_strided_slice %350 {offsets = [0, 5, 0], sizes = [2, 1, 140], strides = [1, 1, 1]} : vector<2x16x140xf32> to vector<2x1x140xf32>
    %359 = arith.maximumf %357, %358 : vector<2x1x140xf32>
    %360 = vector.extract_strided_slice %350 {offsets = [0, 6, 0], sizes = [2, 1, 140], strides = [1, 1, 1]} : vector<2x16x140xf32> to vector<2x1x140xf32>
    %361 = vector.extract_strided_slice %350 {offsets = [0, 7, 0], sizes = [2, 1, 140], strides = [1, 1, 1]} : vector<2x16x140xf32> to vector<2x1x140xf32>
    %362 = arith.maximumf %360, %361 : vector<2x1x140xf32>
    %363 = vector.extract_strided_slice %350 {offsets = [0, 8, 0], sizes = [2, 1, 140], strides = [1, 1, 1]} : vector<2x16x140xf32> to vector<2x1x140xf32>
    %364 = vector.extract_strided_slice %350 {offsets = [0, 9, 0], sizes = [2, 1, 140], strides = [1, 1, 1]} : vector<2x16x140xf32> to vector<2x1x140xf32>
    %365 = arith.maximumf %363, %364 : vector<2x1x140xf32>
    %366 = vector.extract_strided_slice %350 {offsets = [0, 10, 0], sizes = [2, 1, 140], strides = [1, 1, 1]} : vector<2x16x140xf32> to vector<2x1x140xf32>
    %367 = vector.extract_strided_slice %350 {offsets = [0, 11, 0], sizes = [2, 1, 140], strides = [1, 1, 1]} : vector<2x16x140xf32> to vector<2x1x140xf32>
    %368 = arith.maximumf %366, %367 : vector<2x1x140xf32>
    %369 = vector.extract_strided_slice %350 {offsets = [0, 12, 0], sizes = [2, 1, 140], strides = [1, 1, 1]} : vector<2x16x140xf32> to vector<2x1x140xf32>
    %370 = vector.extract_strided_slice %350 {offsets = [0, 13, 0], sizes = [2, 1, 140], strides = [1, 1, 1]} : vector<2x16x140xf32> to vector<2x1x140xf32>
    %371 = arith.maximumf %369, %370 : vector<2x1x140xf32>
    %372 = tpu.concatenate %353, %356, %359, %362, %365, %368, %371 in 1 : vector<2x1x140xf32>, vector<2x1x140xf32>, vector<2x1x140xf32>, vector<2x1x140xf32>, vector<2x1x140xf32>, vector<2x1x140xf32>, vector<2x1x140xf32> -> vector<2x7x140xf32>
    %cst_125 = arith.constant 0.000000e+00 : f32
    %373 = vector.broadcast %cst_125 : f32 to vector<2x7x10xf32>
    %374 = vector.extract_strided_slice %372 {offsets = [0, 0, 10], sizes = [2, 7, 130], strides = [1, 1, 1]} : vector<2x7x140xf32> to vector<2x7x130xf32>
    %375 = tpu.concatenate %374, %373 in 2 : vector<2x7x130xf32>, vector<2x7x10xf32> -> vector<2x7x140xf32>
    %376 = arith.maximumf %372, %375 : vector<2x7x140xf32>
    %cst_126 = arith.constant 0.000000e+00 : f32
    %377 = vector.broadcast %cst_126 : f32 to vector<2x7x140xf32>
    %378 = arith.maximumf %376, %377 : vector<2x7x140xf32>
    %cst_127 = arith.constant 0.000000e+00 : f32
    %379 = vector.broadcast %cst_127 : f32 to vector<2x3x140xf32>
    %380 = tpu.concatenate %378, %379 in 1 : vector<2x7x140xf32>, vector<2x3x140xf32> -> vector<2x10x140xf32>
    %381 = vector.extract_strided_slice %380 {offsets = [0, 0, 0], sizes = [2, 8, 140], strides = [1, 1, 1]} : vector<2x10x140xf32> to vector<2x8x140xf32>
    %382 = vector.extract_strided_slice %380 {offsets = [0, 1, 0], sizes = [2, 8, 140], strides = [1, 1, 1]} : vector<2x10x140xf32> to vector<2x8x140xf32>
    %383 = vector.extract_strided_slice %380 {offsets = [0, 2, 0], sizes = [2, 8, 140], strides = [1, 1, 1]} : vector<2x10x140xf32> to vector<2x8x140xf32>
    %cst_128 = arith.constant 0.000000e+00 : f32
    %384 = vector.broadcast %cst_128 : f32 to vector<2x8x20xf32>
    %385 = vector.extract_strided_slice %381 {offsets = [0, 0, 20], sizes = [2, 8, 120], strides = [1, 1, 1]} : vector<2x8x140xf32> to vector<2x8x120xf32>
    %386 = tpu.concatenate %385, %384 in 2 : vector<2x8x120xf32>, vector<2x8x20xf32> -> vector<2x8x140xf32>
    %cst_129 = arith.constant 0.000000e+00 : f32
    %387 = vector.broadcast %cst_129 : f32 to vector<2x8x40xf32>
    %388 = vector.extract_strided_slice %381 {offsets = [0, 0, 40], sizes = [2, 8, 100], strides = [1, 1, 1]} : vector<2x8x140xf32> to vector<2x8x100xf32>
    %389 = tpu.concatenate %388, %387 in 2 : vector<2x8x100xf32>, vector<2x8x40xf32> -> vector<2x8x140xf32>
    %cst_130 = arith.constant 0.000000e+00 : f32
    %390 = vector.broadcast %cst_130 : f32 to vector<2x8x20xf32>
    %391 = vector.extract_strided_slice %382 {offsets = [0, 0, 20], sizes = [2, 8, 120], strides = [1, 1, 1]} : vector<2x8x140xf32> to vector<2x8x120xf32>
    %392 = tpu.concatenate %391, %390 in 2 : vector<2x8x120xf32>, vector<2x8x20xf32> -> vector<2x8x140xf32>
    %cst_131 = arith.constant 0.000000e+00 : f32
    %393 = vector.broadcast %cst_131 : f32 to vector<2x8x40xf32>
    %394 = vector.extract_strided_slice %382 {offsets = [0, 0, 40], sizes = [2, 8, 100], strides = [1, 1, 1]} : vector<2x8x140xf32> to vector<2x8x100xf32>
    %395 = tpu.concatenate %394, %393 in 2 : vector<2x8x100xf32>, vector<2x8x40xf32> -> vector<2x8x140xf32>
    %cst_132 = arith.constant 0.000000e+00 : f32
    %396 = vector.broadcast %cst_132 : f32 to vector<2x8x20xf32>
    %397 = vector.extract_strided_slice %383 {offsets = [0, 0, 20], sizes = [2, 8, 120], strides = [1, 1, 1]} : vector<2x8x140xf32> to vector<2x8x120xf32>
    %398 = tpu.concatenate %397, %396 in 2 : vector<2x8x120xf32>, vector<2x8x20xf32> -> vector<2x8x140xf32>
    %cst_133 = arith.constant 0.000000e+00 : f32
    %399 = vector.broadcast %cst_133 : f32 to vector<2x8x40xf32>
    %400 = vector.extract_strided_slice %383 {offsets = [0, 0, 40], sizes = [2, 8, 100], strides = [1, 1, 1]} : vector<2x8x140xf32> to vector<2x8x100xf32>
    %401 = tpu.concatenate %400, %399 in 2 : vector<2x8x100xf32>, vector<2x8x40xf32> -> vector<2x8x140xf32>
    %402 = tpu.concatenate %381, %386, %389, %382, %392, %395, %383, %398, %401 in 2 : vector<2x8x140xf32>, vector<2x8x140xf32>, vector<2x8x140xf32>, vector<2x8x140xf32>, vector<2x8x140xf32>, vector<2x8x140xf32>, vector<2x8x140xf32>, vector<2x8x140xf32>, vector<2x8x140xf32> -> vector<2x8x1260xf32>
    %403 = vector.shape_cast %402 : vector<2x8x1260xf32> to vector<16x1260xf32>
    %cst_134 = arith.constant dense<0.000000e+00> : vector<16x100xf32>
    %404 = tpu.matmul %403, %6, %cst_134 {dimension_numbers = #tpu.dot_dimension_numbers<[1], [0], [0], [1], [0, 0, 1, 1], [], []>} : vector<16x1260xf32>, vector<1260x100xf32>, vector<16x100xf32> -> vector<16x100xf32>
    %405 = vector.broadcast %7 : vector<1x100xf32> to vector<16x100xf32>
    %406 = arith.addf %404, %405 : vector<16x100xf32>
    %407 = vector.shape_cast %406 : vector<16x100xf32> to vector<2x8x100xf32>
    %408 = vector.extract_strided_slice %407 {offsets = [0, 0, 0], sizes = [2, 1, 100], strides = [1, 1, 1]} : vector<2x8x100xf32> to vector<2x1x100xf32>
    %409 = vector.extract_strided_slice %407 {offsets = [0, 1, 0], sizes = [2, 1, 100], strides = [1, 1, 1]} : vector<2x8x100xf32> to vector<2x1x100xf32>
    %410 = arith.maximumf %408, %409 : vector<2x1x100xf32>
    %411 = vector.extract_strided_slice %407 {offsets = [0, 2, 0], sizes = [2, 1, 100], strides = [1, 1, 1]} : vector<2x8x100xf32> to vector<2x1x100xf32>
    %412 = vector.extract_strided_slice %407 {offsets = [0, 3, 0], sizes = [2, 1, 100], strides = [1, 1, 1]} : vector<2x8x100xf32> to vector<2x1x100xf32>
    %413 = arith.maximumf %411, %412 : vector<2x1x100xf32>
    %414 = tpu.concatenate %410, %413 in 1 : vector<2x1x100xf32>, vector<2x1x100xf32> -> vector<2x2x100xf32>
    %cst_135 = arith.constant 0.000000e+00 : f32
    %415 = vector.broadcast %cst_135 : f32 to vector<2x2x20xf32>
    %416 = vector.extract_strided_slice %414 {offsets = [0, 0, 20], sizes = [2, 2, 80], strides = [1, 1, 1]} : vector<2x2x100xf32> to vector<2x2x80xf32>
    %417 = tpu.concatenate %416, %415 in 2 : vector<2x2x80xf32>, vector<2x2x20xf32> -> vector<2x2x100xf32>
    %418 = arith.maximumf %414, %417 : vector<2x2x100xf32>
    %cst_136 = arith.constant 0.000000e+00 : f32
    %419 = vector.broadcast %cst_136 : f32 to vector<2x2x100xf32>
    %420 = arith.maximumf %418, %419 : vector<2x2x100xf32>
    %421 = vector.extract_strided_slice %420 {offsets = [0, 0, 0], sizes = [2, 1, 20], strides = [1, 1, 1]} : vector<2x2x100xf32> to vector<2x1x20xf32>
    %422 = vector.shape_cast %421 : vector<2x1x20xf32> to vector<2x20xf32>
    %423 = vector.extract_strided_slice %420 {offsets = [0, 0, 40], sizes = [2, 1, 20], strides = [1, 1, 1]} : vector<2x2x100xf32> to vector<2x1x20xf32>
    %424 = vector.shape_cast %423 : vector<2x1x20xf32> to vector<2x20xf32>
    %425 = vector.extract_strided_slice %420 {offsets = [0, 1, 0], sizes = [2, 1, 20], strides = [1, 1, 1]} : vector<2x2x100xf32> to vector<2x1x20xf32>
    %426 = vector.shape_cast %425 : vector<2x1x20xf32> to vector<2x20xf32>
    %427 = vector.extract_strided_slice %420 {offsets = [0, 1, 40], sizes = [2, 1, 20], strides = [1, 1, 1]} : vector<2x2x100xf32> to vector<2x1x20xf32>
    %428 = vector.shape_cast %427 : vector<2x1x20xf32> to vector<2x20xf32>
    %429 = tpu.concatenate %422, %424, %426, %428 in 1 : vector<2x20xf32>, vector<2x20xf32>, vector<2x20xf32>, vector<2x20xf32> -> vector<2x80xf32>
    %cst_137 = arith.constant dense<0.000000e+00> : vector<2x16xf32>
    %430 = tpu.matmul %429, %8, %cst_137 {dimension_numbers = #tpu.dot_dimension_numbers<[1], [0], [0], [1], [0, 0, 1, 1], [], []>} : vector<2x80xf32>, vector<80x16xf32>, vector<2x16xf32> -> vector<2x16xf32>
    %431 = vector.broadcast %9 : vector<1x16xf32> to vector<2x16xf32>
    %432 = arith.addf %430, %431 : vector<2x16xf32>
    %cst_138 = arith.constant 0.000000e+00 : f32
    %433 = vector.broadcast %cst_138 : f32 to vector<2x16xf32>
    %434 = arith.maximumf %432, %433 : vector<2x16xf32>
    %435 = vector.broadcast %10 : vector<1x16xf32> to vector<2x16xf32>
    %436 = arith.mulf %434, %435 : vector<2x16xf32>
    %cst_139 = arith.constant dense<0.000000e+00> : vector<2xf32>
    %437 = vector.multi_reduction <add>, %436, %cst_139 [1] : vector<2x16xf32> to vector<2xf32>
    %438 = vector.shape_cast %437 : vector<2xf32> to vector<2x1xf32>
    %439 = vector.broadcast %11 : vector<1x1xf32> to vector<2x1xf32>
    %440 = arith.addf %438, %439 : vector<2x1xf32>
    %441 = arith.negf %440 : vector<2x1xf32>
    %442 = math.exp %441 : vector<2x1xf32>
    %cst_140 = arith.constant 1.000000e+00 : f32
    %443 = vector.broadcast %cst_140 : f32 to vector<2x1xf32>
    %444 = arith.addf %443, %442 : vector<2x1xf32>
    %445 = arith.divf %443, %444 : vector<2x1xf32>
    %c1_141 = arith.constant 1 : index
    %c0_142 = arith.constant 0 : index
    %c0_143 = arith.constant 0 : index
    %446 = vector.load %arg15[%c1_141, %c0_142, %c0_143] : memref<4x2x1xf32, #tpu.memory_space<vmem>>, vector<1x2x1xf32>
    %447 = vector.shape_cast %446 : vector<1x2x1xf32> to vector<2x1xf32>
    %448 = vector.shape_cast %445 : vector<2x1xf32> to vector<1x2x1xf32>
    tpu.vector_store %arg15[%c1_141, %c0_142, %c0_143], %448 {strides = array<i32>} : memref<4x2x1xf32, #tpu.memory_space<vmem>>, vector<1x2x1xf32>,
    %cst_144 = arith.constant 0.000000e+00 : f32
    %449 = vector.broadcast %cst_144 : f32 to vector<2x1x128xf32>
    %450 = vector.extract_strided_slice %314 {offsets = [0, 0, 0], sizes = [2, 15, 128], strides = [1, 1, 1]} : vector<2x16x128xf32> to vector<2x15x128xf32>
    %451 = tpu.concatenate %449, %450 in 1 : vector<2x1x128xf32>, vector<2x15x128xf32> -> vector<2x16x128xf32>
    %cst_145 = arith.constant 0.000000e+00 : f32
    %452 = vector.broadcast %cst_145 : f32 to vector<2x1x128xf32>
    %453 = vector.extract_strided_slice %314 {offsets = [0, 1, 0], sizes = [2, 15, 128], strides = [1, 1, 1]} : vector<2x16x128xf32> to vector<2x15x128xf32>
    %454 = tpu.concatenate %453, %452 in 1 : vector<2x15x128xf32>, vector<2x1x128xf32> -> vector<2x16x128xf32>
    %cst_146 = arith.constant 2.000000e+00 : f32
    %455 = vector.broadcast %cst_146 : f32 to vector<2x16x128xf32>
    %456 = arith.mulf %455, %314 : vector<2x16x128xf32>
    %457 = arith.addf %451, %456 : vector<2x16x128xf32>
    %458 = arith.addf %457, %454 : vector<2x16x128xf32>
    %459 = arith.subf %454, %451 : vector<2x16x128xf32>
    %cst_147 = arith.constant 0.000000e+00 : f32
    %460 = vector.broadcast %cst_147 : f32 to vector<2x16x8xf32>
    %461 = vector.extract_strided_slice %458 {offsets = [0, 0, 8], sizes = [2, 16, 120], strides = [1, 1, 1]} : vector<2x16x128xf32> to vector<2x16x120xf32>
    %462 = tpu.concatenate %461, %460 in 2 : vector<2x16x120xf32>, vector<2x16x8xf32> -> vector<2x16x128xf32>
    %cst_148 = arith.constant 0.000000e+00 : f32
    %463 = vector.broadcast %cst_148 : f32 to vector<2x16x8xf32>
    %464 = vector.extract_strided_slice %458 {offsets = [0, 0, 0], sizes = [2, 16, 120], strides = [1, 1, 1]} : vector<2x16x128xf32> to vector<2x16x120xf32>
    %465 = tpu.concatenate %463, %464 in 2 : vector<2x16x8xf32>, vector<2x16x120xf32> -> vector<2x16x128xf32>
    %466 = arith.subf %462, %465 : vector<2x16x128xf32>
    %cst_149 = arith.constant 1.250000e-01 : f32
    %467 = vector.broadcast %cst_149 : f32 to vector<2x16x128xf32>
    %468 = arith.mulf %466, %467 : vector<2x16x128xf32>
    %cst_150 = arith.constant 0.000000e+00 : f32
    %469 = vector.broadcast %cst_150 : f32 to vector<2x16x8xf32>
    %470 = vector.extract_strided_slice %459 {offsets = [0, 0, 0], sizes = [2, 16, 120], strides = [1, 1, 1]} : vector<2x16x128xf32> to vector<2x16x120xf32>
    %471 = tpu.concatenate %469, %470 in 2 : vector<2x16x8xf32>, vector<2x16x120xf32> -> vector<2x16x128xf32>
    %cst_151 = arith.constant 2.000000e+00 : f32
    %472 = vector.broadcast %cst_151 : f32 to vector<2x16x128xf32>
    %473 = arith.mulf %472, %459 : vector<2x16x128xf32>
    %474 = arith.addf %471, %473 : vector<2x16x128xf32>
    %cst_152 = arith.constant 0.000000e+00 : f32
    %475 = vector.broadcast %cst_152 : f32 to vector<2x16x8xf32>
    %476 = vector.extract_strided_slice %459 {offsets = [0, 0, 8], sizes = [2, 16, 120], strides = [1, 1, 1]} : vector<2x16x128xf32> to vector<2x16x120xf32>
    %477 = tpu.concatenate %476, %475 in 2 : vector<2x16x120xf32>, vector<2x16x8xf32> -> vector<2x16x128xf32>
    %478 = arith.addf %474, %477 : vector<2x16x128xf32>
    %cst_153 = arith.constant 1.250000e-01 : f32
    %479 = vector.broadcast %cst_153 : f32 to vector<2x16x128xf32>
    %480 = arith.mulf %478, %479 : vector<2x16x128xf32>
    %481 = arith.maximumf %451, %314 : vector<2x16x128xf32>
    %482 = arith.maximumf %481, %454 : vector<2x16x128xf32>
    %cst_154 = arith.constant 0.000000e+00 : f32
    %483 = vector.broadcast %cst_154 : f32 to vector<2x16x8xf32>
    %484 = vector.extract_strided_slice %482 {offsets = [0, 0, 8], sizes = [2, 16, 120], strides = [1, 1, 1]} : vector<2x16x128xf32> to vector<2x16x120xf32>
    %485 = tpu.concatenate %484, %483 in 2 : vector<2x16x120xf32>, vector<2x16x8xf32> -> vector<2x16x128xf32>
    %486 = arith.maximumf %485, %482 : vector<2x16x128xf32>
    %cst_155 = arith.constant 0.000000e+00 : f32
    %487 = vector.broadcast %cst_155 : f32 to vector<2x16x8xf32>
    %488 = vector.extract_strided_slice %482 {offsets = [0, 0, 0], sizes = [2, 16, 120], strides = [1, 1, 1]} : vector<2x16x128xf32> to vector<2x16x120xf32>
    %489 = tpu.concatenate %487, %488 in 2 : vector<2x16x8xf32>, vector<2x16x120xf32> -> vector<2x16x128xf32>
    %490 = arith.maximumf %486, %489 : vector<2x16x128xf32>
    %491 = vector.shape_cast %490 : vector<2x16x128xf32> to vector<32x128xf32>
    %cst_156 = arith.constant dense<0.000000e+00> : vector<32x128xf32>
    %492 = tpu.matmul %491, %0, %cst_156 {dimension_numbers = #tpu.dot_dimension_numbers<[1], [0], [0], [1], [0, 0, 1, 1], [], []>} : vector<32x128xf32>, vector<128x128xf32>, vector<32x128xf32> -> vector<32x128xf32>
    %493 = tpu.concatenate %314, %468, %480 in 2 : vector<2x16x128xf32>, vector<2x16x128xf32>, vector<2x16x128xf32> -> vector<2x16x384xf32>
    %494 = vector.shape_cast %493 : vector<2x16x384xf32> to vector<32x384xf32>
    %cst_157 = arith.constant dense<0.000000e+00> : vector<32x512xf32>
    %495 = tpu.matmul %494, %1, %cst_157 {dimension_numbers = #tpu.dot_dimension_numbers<[1], [0], [0], [1], [0, 0, 1, 1], [], []>} : vector<32x384xf32>, vector<384x512xf32>, vector<32x512xf32> -> vector<32x512xf32>
    %496 = vector.broadcast %2 : vector<1x512xf32> to vector<32x512xf32>
    %497 = arith.addf %495, %496 : vector<32x512xf32>
    %cst_158 = arith.constant 0.000000e+00 : f32
    %498 = vector.broadcast %cst_158 : f32 to vector<32x512xf32>
    %499 = arith.maximumf %497, %498 : vector<32x512xf32>
    %cst_159 = arith.constant dense<0.000000e+00> : vector<32x128xf32>
    %500 = tpu.matmul %499, %3, %cst_159 {dimension_numbers = #tpu.dot_dimension_numbers<[1], [0], [0], [1], [0, 0, 1, 1], [], []>} : vector<32x512xf32>, vector<512x128xf32>, vector<32x128xf32> -> vector<32x128xf32>
    %501 = vector.shape_cast %500 : vector<32x128xf32> to vector<2x16x128xf32>
    %c2 = arith.constant 2 : index
    %c0_160 = arith.constant 0 : index
    %c0_161 = arith.constant 0 : index
    %c0_162 = arith.constant 0 : index
    %502 = vector.load %arg1[%c2, %c0_160, %c0_161, %c0_162] : memref<4x2x16x128xf32, #tpu.memory_space<vmem>>, vector<1x2x16x128xf32>
    %503 = vector.shape_cast %502 : vector<1x2x16x128xf32> to vector<2x16x128xf32>
    %504 = arith.mulf %501, %503 : vector<2x16x128xf32>
    %505 = arith.addf %314, %504 : vector<2x16x128xf32>
    %cst_163 = arith.constant 0.000000e+00 : f32
    %506 = vector.broadcast %cst_163 : f32 to vector<2x1x128xf32>
    %507 = vector.extract_strided_slice %505 {offsets = [0, 0, 0], sizes = [2, 15, 128], strides = [1, 1, 1]} : vector<2x16x128xf32> to vector<2x15x128xf32>
    %508 = tpu.concatenate %506, %507 in 1 : vector<2x1x128xf32>, vector<2x15x128xf32> -> vector<2x16x128xf32>
    %509 = arith.maximumf %508, %505 : vector<2x16x128xf32>
    %cst_164 = arith.constant 0.000000e+00 : f32
    %510 = vector.broadcast %cst_164 : f32 to vector<2x1x128xf32>
    %511 = vector.extract_strided_slice %505 {offsets = [0, 1, 0], sizes = [2, 15, 128], strides = [1, 1, 1]} : vector<2x16x128xf32> to vector<2x15x128xf32>
    %512 = tpu.concatenate %511, %510 in 1 : vector<2x15x128xf32>, vector<2x1x128xf32> -> vector<2x16x128xf32>
    %513 = arith.maximumf %509, %512 : vector<2x16x128xf32>
    %cst_165 = arith.constant 0.000000e+00 : f32
    %514 = vector.broadcast %cst_165 : f32 to vector<2x16x8xf32>
    %515 = vector.extract_strided_slice %513 {offsets = [0, 0, 8], sizes = [2, 16, 120], strides = [1, 1, 1]} : vector<2x16x128xf32> to vector<2x16x120xf32>
    %516 = tpu.concatenate %515, %514 in 2 : vector<2x16x120xf32>, vector<2x16x8xf32> -> vector<2x16x128xf32>
    %517 = arith.maximumf %516, %513 : vector<2x16x128xf32>
    %cst_166 = arith.constant 0.000000e+00 : f32
    %518 = vector.broadcast %cst_166 : f32 to vector<2x16x8xf32>
    %519 = vector.extract_strided_slice %513 {offsets = [0, 0, 0], sizes = [2, 16, 120], strides = [1, 1, 1]} : vector<2x16x128xf32> to vector<2x16x120xf32>
    %520 = tpu.concatenate %518, %519 in 2 : vector<2x16x8xf32>, vector<2x16x120xf32> -> vector<2x16x128xf32>
    %521 = arith.maximumf %517, %520 : vector<2x16x128xf32>
    %522 = vector.shape_cast %521 : vector<2x16x128xf32> to vector<32x128xf32>
    %cst_167 = arith.constant dense<0.000000e+00> : vector<32x128xf32>
    %523 = tpu.matmul %522, %0, %cst_167 {dimension_numbers = #tpu.dot_dimension_numbers<[1], [0], [0], [1], [0, 0, 1, 1], [], []>} : vector<32x128xf32>, vector<128x128xf32>, vector<32x128xf32> -> vector<32x128xf32>
    %cst_168 = arith.constant 1.000000e-01 : f32
    %524 = vector.broadcast %cst_168 : f32 to vector<32x128xf32>
    %525 = arith.cmpf ogt, %492, %524 : vector<32x128xf32>
    %cst_169 = arith.constant 1.000000e-01 : f32
    %526 = vector.broadcast %cst_169 : f32 to vector<32x128xf32>
    %527 = arith.cmpf ogt, %523, %526 : vector<32x128xf32>
    %528 = arith.andi %525, %527 : vector<32x128xi1>
    %529 = arith.extui %528 : vector<32x128xi1> to vector<32x128xi32>
    %530 = arith.sitofp %529 : vector<32x128xi32> to vector<32x128xf32>
    %531 = vector.shape_cast %530 : vector<32x128xf32> to vector<2x16x128xf32>
    %532 = arith.mulf %505, %531 : vector<2x16x128xf32>
    %c2_170 = arith.constant 2 : index
    %c0_171 = arith.constant 0 : index
    %c0_172 = arith.constant 0 : index
    %c0_173 = arith.constant 0 : index
    %533 = vector.load %arg14[%c2_170, %c0_171, %c0_172, %c0_173] : memref<4x2x16x128xf32, #tpu.memory_space<vmem>>, vector<1x2x16x128xf32>
    %534 = vector.shape_cast %533 : vector<1x2x16x128xf32> to vector<2x16x128xf32>
    %535 = vector.shape_cast %532 : vector<2x16x128xf32> to vector<1x2x16x128xf32>
    tpu.vector_store %arg14[%c2_170, %c0_171, %c0_172, %c0_173], %535 {strides = array<i32>} : memref<4x2x16x128xf32, #tpu.memory_space<vmem>>, vector<1x2x16x128xf32>,
    %cst_174 = arith.constant 0.000000e+00 : f32
    %536 = vector.broadcast %cst_174 : f32 to vector<2x1x128xf32>
    %537 = vector.extract_strided_slice %532 {offsets = [0, 1, 0], sizes = [2, 15, 128], strides = [1, 1, 1]} : vector<2x16x128xf32> to vector<2x15x128xf32>
    %538 = tpu.concatenate %537, %536 in 1 : vector<2x15x128xf32>, vector<2x1x128xf32> -> vector<2x16x128xf32>
    %cst_175 = arith.constant 0.000000e+00 : f32
    %539 = vector.broadcast %cst_175 : f32 to vector<2x1x128xf32>
    %540 = vector.extract_strided_slice %532 {offsets = [0, 1, 0], sizes = [2, 15, 128], strides = [1, 1, 1]} : vector<2x16x128xf32> to vector<2x15x128xf32>
    %541 = tpu.concatenate %540, %539 in 1 : vector<2x15x128xf32>, vector<2x1x128xf32> -> vector<2x16x128xf32>
    %cst_176 = arith.constant 0.000000e+00 : f32
    %542 = vector.broadcast %cst_176 : f32 to vector<2x1x128xf32>
    %543 = vector.extract_strided_slice %541 {offsets = [0, 1, 0], sizes = [2, 15, 128], strides = [1, 1, 1]} : vector<2x16x128xf32> to vector<2x15x128xf32>
    %544 = tpu.concatenate %543, %542 in 1 : vector<2x15x128xf32>, vector<2x1x128xf32> -> vector<2x16x128xf32>
    %cst_177 = arith.constant 0.000000e+00 : f32
    %545 = vector.broadcast %cst_177 : f32 to vector<2x16x8xf32>
    %546 = vector.extract_strided_slice %532 {offsets = [0, 0, 8], sizes = [2, 16, 120], strides = [1, 1, 1]} : vector<2x16x128xf32> to vector<2x16x120xf32>
    %547 = tpu.concatenate %546, %545 in 2 : vector<2x16x120xf32>, vector<2x16x8xf32> -> vector<2x16x128xf32>
    %cst_178 = arith.constant 0.000000e+00 : f32
    %548 = vector.broadcast %cst_178 : f32 to vector<2x16x16xf32>
    %549 = vector.extract_strided_slice %532 {offsets = [0, 0, 16], sizes = [2, 16, 112], strides = [1, 1, 1]} : vector<2x16x128xf32> to vector<2x16x112xf32>
    %550 = tpu.concatenate %549, %548 in 2 : vector<2x16x112xf32>, vector<2x16x16xf32> -> vector<2x16x128xf32>
    %cst_179 = arith.constant 0.000000e+00 : f32
    %551 = vector.broadcast %cst_179 : f32 to vector<2x16x8xf32>
    %552 = vector.extract_strided_slice %538 {offsets = [0, 0, 8], sizes = [2, 16, 120], strides = [1, 1, 1]} : vector<2x16x128xf32> to vector<2x16x120xf32>
    %553 = tpu.concatenate %552, %551 in 2 : vector<2x16x120xf32>, vector<2x16x8xf32> -> vector<2x16x128xf32>
    %cst_180 = arith.constant 0.000000e+00 : f32
    %554 = vector.broadcast %cst_180 : f32 to vector<2x16x16xf32>
    %555 = vector.extract_strided_slice %538 {offsets = [0, 0, 16], sizes = [2, 16, 112], strides = [1, 1, 1]} : vector<2x16x128xf32> to vector<2x16x112xf32>
    %556 = tpu.concatenate %555, %554 in 2 : vector<2x16x112xf32>, vector<2x16x16xf32> -> vector<2x16x128xf32>
    %cst_181 = arith.constant 0.000000e+00 : f32
    %557 = vector.broadcast %cst_181 : f32 to vector<2x16x8xf32>
    %558 = vector.extract_strided_slice %544 {offsets = [0, 0, 8], sizes = [2, 16, 120], strides = [1, 1, 1]} : vector<2x16x128xf32> to vector<2x16x120xf32>
    %559 = tpu.concatenate %558, %557 in 2 : vector<2x16x120xf32>, vector<2x16x8xf32> -> vector<2x16x128xf32>
    %cst_182 = arith.constant 0.000000e+00 : f32
    %560 = vector.broadcast %cst_182 : f32 to vector<2x16x16xf32>
    %561 = vector.extract_strided_slice %544 {offsets = [0, 0, 16], sizes = [2, 16, 112], strides = [1, 1, 1]} : vector<2x16x128xf32> to vector<2x16x112xf32>
    %562 = tpu.concatenate %561, %560 in 2 : vector<2x16x112xf32>, vector<2x16x16xf32> -> vector<2x16x128xf32>
    %563 = tpu.concatenate %532, %547, %550, %538, %553, %556, %544, %559, %562 in 2 : vector<2x16x128xf32>, vector<2x16x128xf32>, vector<2x16x128xf32>, vector<2x16x128xf32>, vector<2x16x128xf32>, vector<2x16x128xf32>, vector<2x16x128xf32>, vector<2x16x128xf32>, vector<2x16x128xf32> -> vector<2x16x1152xf32>
    %564 = vector.shape_cast %563 : vector<2x16x1152xf32> to vector<32x1152xf32>
    %cst_183 = arith.constant dense<0.000000e+00> : vector<32x140xf32>
    %565 = tpu.matmul %564, %4, %cst_183 {dimension_numbers = #tpu.dot_dimension_numbers<[1], [0], [0], [1], [0, 0, 1, 1], [], []>} : vector<32x1152xf32>, vector<1152x140xf32>, vector<32x140xf32> -> vector<32x140xf32>
    %566 = vector.broadcast %5 : vector<1x140xf32> to vector<32x140xf32>
    %567 = arith.addf %565, %566 : vector<32x140xf32>
    %568 = vector.shape_cast %567 : vector<32x140xf32> to vector<2x16x140xf32>
    %569 = vector.extract_strided_slice %568 {offsets = [0, 0, 0], sizes = [2, 1, 140], strides = [1, 1, 1]} : vector<2x16x140xf32> to vector<2x1x140xf32>
    %570 = vector.extract_strided_slice %568 {offsets = [0, 1, 0], sizes = [2, 1, 140], strides = [1, 1, 1]} : vector<2x16x140xf32> to vector<2x1x140xf32>
    %571 = arith.maximumf %569, %570 : vector<2x1x140xf32>
    %572 = vector.extract_strided_slice %568 {offsets = [0, 2, 0], sizes = [2, 1, 140], strides = [1, 1, 1]} : vector<2x16x140xf32> to vector<2x1x140xf32>
    %573 = vector.extract_strided_slice %568 {offsets = [0, 3, 0], sizes = [2, 1, 140], strides = [1, 1, 1]} : vector<2x16x140xf32> to vector<2x1x140xf32>
    %574 = arith.maximumf %572, %573 : vector<2x1x140xf32>
    %575 = vector.extract_strided_slice %568 {offsets = [0, 4, 0], sizes = [2, 1, 140], strides = [1, 1, 1]} : vector<2x16x140xf32> to vector<2x1x140xf32>
    %576 = vector.extract_strided_slice %568 {offsets = [0, 5, 0], sizes = [2, 1, 140], strides = [1, 1, 1]} : vector<2x16x140xf32> to vector<2x1x140xf32>
    %577 = arith.maximumf %575, %576 : vector<2x1x140xf32>
    %578 = vector.extract_strided_slice %568 {offsets = [0, 6, 0], sizes = [2, 1, 140], strides = [1, 1, 1]} : vector<2x16x140xf32> to vector<2x1x140xf32>
    %579 = vector.extract_strided_slice %568 {offsets = [0, 7, 0], sizes = [2, 1, 140], strides = [1, 1, 1]} : vector<2x16x140xf32> to vector<2x1x140xf32>
    %580 = arith.maximumf %578, %579 : vector<2x1x140xf32>
    %581 = vector.extract_strided_slice %568 {offsets = [0, 8, 0], sizes = [2, 1, 140], strides = [1, 1, 1]} : vector<2x16x140xf32> to vector<2x1x140xf32>
    %582 = vector.extract_strided_slice %568 {offsets = [0, 9, 0], sizes = [2, 1, 140], strides = [1, 1, 1]} : vector<2x16x140xf32> to vector<2x1x140xf32>
    %583 = arith.maximumf %581, %582 : vector<2x1x140xf32>
    %584 = vector.extract_strided_slice %568 {offsets = [0, 10, 0], sizes = [2, 1, 140], strides = [1, 1, 1]} : vector<2x16x140xf32> to vector<2x1x140xf32>
    %585 = vector.extract_strided_slice %568 {offsets = [0, 11, 0], sizes = [2, 1, 140], strides = [1, 1, 1]} : vector<2x16x140xf32> to vector<2x1x140xf32>
    %586 = arith.maximumf %584, %585 : vector<2x1x140xf32>
    %587 = vector.extract_strided_slice %568 {offsets = [0, 12, 0], sizes = [2, 1, 140], strides = [1, 1, 1]} : vector<2x16x140xf32> to vector<2x1x140xf32>
    %588 = vector.extract_strided_slice %568 {offsets = [0, 13, 0], sizes = [2, 1, 140], strides = [1, 1, 1]} : vector<2x16x140xf32> to vector<2x1x140xf32>
    %589 = arith.maximumf %587, %588 : vector<2x1x140xf32>
    %590 = tpu.concatenate %571, %574, %577, %580, %583, %586, %589 in 1 : vector<2x1x140xf32>, vector<2x1x140xf32>, vector<2x1x140xf32>, vector<2x1x140xf32>, vector<2x1x140xf32>, vector<2x1x140xf32>, vector<2x1x140xf32> -> vector<2x7x140xf32>
    %cst_184 = arith.constant 0.000000e+00 : f32
    %591 = vector.broadcast %cst_184 : f32 to vector<2x7x10xf32>
    %592 = vector.extract_strided_slice %590 {offsets = [0, 0, 10], sizes = [2, 7, 130], strides = [1, 1, 1]} : vector<2x7x140xf32> to vector<2x7x130xf32>
    %593 = tpu.concatenate %592, %591 in 2 : vector<2x7x130xf32>, vector<2x7x10xf32> -> vector<2x7x140xf32>
    %594 = arith.maximumf %590, %593 : vector<2x7x140xf32>
    %cst_185 = arith.constant 0.000000e+00 : f32
    %595 = vector.broadcast %cst_185 : f32 to vector<2x7x140xf32>
    %596 = arith.maximumf %594, %595 : vector<2x7x140xf32>
    %cst_186 = arith.constant 0.000000e+00 : f32
    %597 = vector.broadcast %cst_186 : f32 to vector<2x3x140xf32>
    %598 = tpu.concatenate %596, %597 in 1 : vector<2x7x140xf32>, vector<2x3x140xf32> -> vector<2x10x140xf32>
    %599 = vector.extract_strided_slice %598 {offsets = [0, 0, 0], sizes = [2, 8, 140], strides = [1, 1, 1]} : vector<2x10x140xf32> to vector<2x8x140xf32>
    %600 = vector.extract_strided_slice %598 {offsets = [0, 1, 0], sizes = [2, 8, 140], strides = [1, 1, 1]} : vector<2x10x140xf32> to vector<2x8x140xf32>
    %601 = vector.extract_strided_slice %598 {offsets = [0, 2, 0], sizes = [2, 8, 140], strides = [1, 1, 1]} : vector<2x10x140xf32> to vector<2x8x140xf32>
    %cst_187 = arith.constant 0.000000e+00 : f32
    %602 = vector.broadcast %cst_187 : f32 to vector<2x8x20xf32>
    %603 = vector.extract_strided_slice %599 {offsets = [0, 0, 20], sizes = [2, 8, 120], strides = [1, 1, 1]} : vector<2x8x140xf32> to vector<2x8x120xf32>
    %604 = tpu.concatenate %603, %602 in 2 : vector<2x8x120xf32>, vector<2x8x20xf32> -> vector<2x8x140xf32>
    %cst_188 = arith.constant 0.000000e+00 : f32
    %605 = vector.broadcast %cst_188 : f32 to vector<2x8x40xf32>
    %606 = vector.extract_strided_slice %599 {offsets = [0, 0, 40], sizes = [2, 8, 100], strides = [1, 1, 1]} : vector<2x8x140xf32> to vector<2x8x100xf32>
    %607 = tpu.concatenate %606, %605 in 2 : vector<2x8x100xf32>, vector<2x8x40xf32> -> vector<2x8x140xf32>
    %cst_189 = arith.constant 0.000000e+00 : f32
    %608 = vector.broadcast %cst_189 : f32 to vector<2x8x20xf32>
    %609 = vector.extract_strided_slice %600 {offsets = [0, 0, 20], sizes = [2, 8, 120], strides = [1, 1, 1]} : vector<2x8x140xf32> to vector<2x8x120xf32>
    %610 = tpu.concatenate %609, %608 in 2 : vector<2x8x120xf32>, vector<2x8x20xf32> -> vector<2x8x140xf32>
    %cst_190 = arith.constant 0.000000e+00 : f32
    %611 = vector.broadcast %cst_190 : f32 to vector<2x8x40xf32>
    %612 = vector.extract_strided_slice %600 {offsets = [0, 0, 40], sizes = [2, 8, 100], strides = [1, 1, 1]} : vector<2x8x140xf32> to vector<2x8x100xf32>
    %613 = tpu.concatenate %612, %611 in 2 : vector<2x8x100xf32>, vector<2x8x40xf32> -> vector<2x8x140xf32>
    %cst_191 = arith.constant 0.000000e+00 : f32
    %614 = vector.broadcast %cst_191 : f32 to vector<2x8x20xf32>
    %615 = vector.extract_strided_slice %601 {offsets = [0, 0, 20], sizes = [2, 8, 120], strides = [1, 1, 1]} : vector<2x8x140xf32> to vector<2x8x120xf32>
    %616 = tpu.concatenate %615, %614 in 2 : vector<2x8x120xf32>, vector<2x8x20xf32> -> vector<2x8x140xf32>
    %cst_192 = arith.constant 0.000000e+00 : f32
    %617 = vector.broadcast %cst_192 : f32 to vector<2x8x40xf32>
    %618 = vector.extract_strided_slice %601 {offsets = [0, 0, 40], sizes = [2, 8, 100], strides = [1, 1, 1]} : vector<2x8x140xf32> to vector<2x8x100xf32>
    %619 = tpu.concatenate %618, %617 in 2 : vector<2x8x100xf32>, vector<2x8x40xf32> -> vector<2x8x140xf32>
    %620 = tpu.concatenate %599, %604, %607, %600, %610, %613, %601, %616, %619 in 2 : vector<2x8x140xf32>, vector<2x8x140xf32>, vector<2x8x140xf32>, vector<2x8x140xf32>, vector<2x8x140xf32>, vector<2x8x140xf32>, vector<2x8x140xf32>, vector<2x8x140xf32>, vector<2x8x140xf32> -> vector<2x8x1260xf32>
    %621 = vector.shape_cast %620 : vector<2x8x1260xf32> to vector<16x1260xf32>
    %cst_193 = arith.constant dense<0.000000e+00> : vector<16x100xf32>
    %622 = tpu.matmul %621, %6, %cst_193 {dimension_numbers = #tpu.dot_dimension_numbers<[1], [0], [0], [1], [0, 0, 1, 1], [], []>} : vector<16x1260xf32>, vector<1260x100xf32>, vector<16x100xf32> -> vector<16x100xf32>
    %623 = vector.broadcast %7 : vector<1x100xf32> to vector<16x100xf32>
    %624 = arith.addf %622, %623 : vector<16x100xf32>
    %625 = vector.shape_cast %624 : vector<16x100xf32> to vector<2x8x100xf32>
    %626 = vector.extract_strided_slice %625 {offsets = [0, 0, 0], sizes = [2, 1, 100], strides = [1, 1, 1]} : vector<2x8x100xf32> to vector<2x1x100xf32>
    %627 = vector.extract_strided_slice %625 {offsets = [0, 1, 0], sizes = [2, 1, 100], strides = [1, 1, 1]} : vector<2x8x100xf32> to vector<2x1x100xf32>
    %628 = arith.maximumf %626, %627 : vector<2x1x100xf32>
    %629 = vector.extract_strided_slice %625 {offsets = [0, 2, 0], sizes = [2, 1, 100], strides = [1, 1, 1]} : vector<2x8x100xf32> to vector<2x1x100xf32>
    %630 = vector.extract_strided_slice %625 {offsets = [0, 3, 0], sizes = [2, 1, 100], strides = [1, 1, 1]} : vector<2x8x100xf32> to vector<2x1x100xf32>
    %631 = arith.maximumf %629, %630 : vector<2x1x100xf32>
    %632 = tpu.concatenate %628, %631 in 1 : vector<2x1x100xf32>, vector<2x1x100xf32> -> vector<2x2x100xf32>
    %cst_194 = arith.constant 0.000000e+00 : f32
    %633 = vector.broadcast %cst_194 : f32 to vector<2x2x20xf32>
    %634 = vector.extract_strided_slice %632 {offsets = [0, 0, 20], sizes = [2, 2, 80], strides = [1, 1, 1]} : vector<2x2x100xf32> to vector<2x2x80xf32>
    %635 = tpu.concatenate %634, %633 in 2 : vector<2x2x80xf32>, vector<2x2x20xf32> -> vector<2x2x100xf32>
    %636 = arith.maximumf %632, %635 : vector<2x2x100xf32>
    %cst_195 = arith.constant 0.000000e+00 : f32
    %637 = vector.broadcast %cst_195 : f32 to vector<2x2x100xf32>
    %638 = arith.maximumf %636, %637 : vector<2x2x100xf32>
    %639 = vector.extract_strided_slice %638 {offsets = [0, 0, 0], sizes = [2, 1, 20], strides = [1, 1, 1]} : vector<2x2x100xf32> to vector<2x1x20xf32>
    %640 = vector.shape_cast %639 : vector<2x1x20xf32> to vector<2x20xf32>
    %641 = vector.extract_strided_slice %638 {offsets = [0, 0, 40], sizes = [2, 1, 20], strides = [1, 1, 1]} : vector<2x2x100xf32> to vector<2x1x20xf32>
    %642 = vector.shape_cast %641 : vector<2x1x20xf32> to vector<2x20xf32>
    %643 = vector.extract_strided_slice %638 {offsets = [0, 1, 0], sizes = [2, 1, 20], strides = [1, 1, 1]} : vector<2x2x100xf32> to vector<2x1x20xf32>
    %644 = vector.shape_cast %643 : vector<2x1x20xf32> to vector<2x20xf32>
    %645 = vector.extract_strided_slice %638 {offsets = [0, 1, 40], sizes = [2, 1, 20], strides = [1, 1, 1]} : vector<2x2x100xf32> to vector<2x1x20xf32>
    %646 = vector.shape_cast %645 : vector<2x1x20xf32> to vector<2x20xf32>
    %647 = tpu.concatenate %640, %642, %644, %646 in 1 : vector<2x20xf32>, vector<2x20xf32>, vector<2x20xf32>, vector<2x20xf32> -> vector<2x80xf32>
    %cst_196 = arith.constant dense<0.000000e+00> : vector<2x16xf32>
    %648 = tpu.matmul %647, %8, %cst_196 {dimension_numbers = #tpu.dot_dimension_numbers<[1], [0], [0], [1], [0, 0, 1, 1], [], []>} : vector<2x80xf32>, vector<80x16xf32>, vector<2x16xf32> -> vector<2x16xf32>
    %649 = vector.broadcast %9 : vector<1x16xf32> to vector<2x16xf32>
    %650 = arith.addf %648, %649 : vector<2x16xf32>
    %cst_197 = arith.constant 0.000000e+00 : f32
    %651 = vector.broadcast %cst_197 : f32 to vector<2x16xf32>
    %652 = arith.maximumf %650, %651 : vector<2x16xf32>
    %653 = vector.broadcast %10 : vector<1x16xf32> to vector<2x16xf32>
    %654 = arith.mulf %652, %653 : vector<2x16xf32>
    %cst_198 = arith.constant dense<0.000000e+00> : vector<2xf32>
    %655 = vector.multi_reduction <add>, %654, %cst_198 [1] : vector<2x16xf32> to vector<2xf32>
    %656 = vector.shape_cast %655 : vector<2xf32> to vector<2x1xf32>
    %657 = vector.broadcast %11 : vector<1x1xf32> to vector<2x1xf32>
    %658 = arith.addf %656, %657 : vector<2x1xf32>
    %659 = arith.negf %658 : vector<2x1xf32>
    %660 = math.exp %659 : vector<2x1xf32>
    %cst_199 = arith.constant 1.000000e+00 : f32
    %661 = vector.broadcast %cst_199 : f32 to vector<2x1xf32>
    %662 = arith.addf %661, %660 : vector<2x1xf32>
    %663 = arith.divf %661, %662 : vector<2x1xf32>
    %c2_200 = arith.constant 2 : index
    %c0_201 = arith.constant 0 : index
    %c0_202 = arith.constant 0 : index
    %664 = vector.load %arg15[%c2_200, %c0_201, %c0_202] : memref<4x2x1xf32, #tpu.memory_space<vmem>>, vector<1x2x1xf32>
    %665 = vector.shape_cast %664 : vector<1x2x1xf32> to vector<2x1xf32>
    %666 = vector.shape_cast %663 : vector<2x1xf32> to vector<1x2x1xf32>
    tpu.vector_store %arg15[%c2_200, %c0_201, %c0_202], %666 {strides = array<i32>} : memref<4x2x1xf32, #tpu.memory_space<vmem>>, vector<1x2x1xf32>,
    %cst_203 = arith.constant 0.000000e+00 : f32
    %667 = vector.broadcast %cst_203 : f32 to vector<2x1x128xf32>
    %668 = vector.extract_strided_slice %532 {offsets = [0, 0, 0], sizes = [2, 15, 128], strides = [1, 1, 1]} : vector<2x16x128xf32> to vector<2x15x128xf32>
    %669 = tpu.concatenate %667, %668 in 1 : vector<2x1x128xf32>, vector<2x15x128xf32> -> vector<2x16x128xf32>
    %cst_204 = arith.constant 0.000000e+00 : f32
    %670 = vector.broadcast %cst_204 : f32 to vector<2x1x128xf32>
    %671 = vector.extract_strided_slice %532 {offsets = [0, 1, 0], sizes = [2, 15, 128], strides = [1, 1, 1]} : vector<2x16x128xf32> to vector<2x15x128xf32>
    %672 = tpu.concatenate %671, %670 in 1 : vector<2x15x128xf32>, vector<2x1x128xf32> -> vector<2x16x128xf32>
    %cst_205 = arith.constant 2.000000e+00 : f32
    %673 = vector.broadcast %cst_205 : f32 to vector<2x16x128xf32>
    %674 = arith.mulf %673, %532 : vector<2x16x128xf32>
    %675 = arith.addf %669, %674 : vector<2x16x128xf32>
    %676 = arith.addf %675, %672 : vector<2x16x128xf32>
    %677 = arith.subf %672, %669 : vector<2x16x128xf32>
    %cst_206 = arith.constant 0.000000e+00 : f32
    %678 = vector.broadcast %cst_206 : f32 to vector<2x16x8xf32>
    %679 = vector.extract_strided_slice %676 {offsets = [0, 0, 8], sizes = [2, 16, 120], strides = [1, 1, 1]} : vector<2x16x128xf32> to vector<2x16x120xf32>
    %680 = tpu.concatenate %679, %678 in 2 : vector<2x16x120xf32>, vector<2x16x8xf32> -> vector<2x16x128xf32>
    %cst_207 = arith.constant 0.000000e+00 : f32
    %681 = vector.broadcast %cst_207 : f32 to vector<2x16x8xf32>
    %682 = vector.extract_strided_slice %676 {offsets = [0, 0, 0], sizes = [2, 16, 120], strides = [1, 1, 1]} : vector<2x16x128xf32> to vector<2x16x120xf32>
    %683 = tpu.concatenate %681, %682 in 2 : vector<2x16x8xf32>, vector<2x16x120xf32> -> vector<2x16x128xf32>
    %684 = arith.subf %680, %683 : vector<2x16x128xf32>
    %cst_208 = arith.constant 1.250000e-01 : f32
    %685 = vector.broadcast %cst_208 : f32 to vector<2x16x128xf32>
    %686 = arith.mulf %684, %685 : vector<2x16x128xf32>
    %cst_209 = arith.constant 0.000000e+00 : f32
    %687 = vector.broadcast %cst_209 : f32 to vector<2x16x8xf32>
    %688 = vector.extract_strided_slice %677 {offsets = [0, 0, 0], sizes = [2, 16, 120], strides = [1, 1, 1]} : vector<2x16x128xf32> to vector<2x16x120xf32>
    %689 = tpu.concatenate %687, %688 in 2 : vector<2x16x8xf32>, vector<2x16x120xf32> -> vector<2x16x128xf32>
    %cst_210 = arith.constant 2.000000e+00 : f32
    %690 = vector.broadcast %cst_210 : f32 to vector<2x16x128xf32>
    %691 = arith.mulf %690, %677 : vector<2x16x128xf32>
    %692 = arith.addf %689, %691 : vector<2x16x128xf32>
    %cst_211 = arith.constant 0.000000e+00 : f32
    %693 = vector.broadcast %cst_211 : f32 to vector<2x16x8xf32>
    %694 = vector.extract_strided_slice %677 {offsets = [0, 0, 8], sizes = [2, 16, 120], strides = [1, 1, 1]} : vector<2x16x128xf32> to vector<2x16x120xf32>
    %695 = tpu.concatenate %694, %693 in 2 : vector<2x16x120xf32>, vector<2x16x8xf32> -> vector<2x16x128xf32>
    %696 = arith.addf %692, %695 : vector<2x16x128xf32>
    %cst_212 = arith.constant 1.250000e-01 : f32
    %697 = vector.broadcast %cst_212 : f32 to vector<2x16x128xf32>
    %698 = arith.mulf %696, %697 : vector<2x16x128xf32>
    %699 = arith.maximumf %669, %532 : vector<2x16x128xf32>
    %700 = arith.maximumf %699, %672 : vector<2x16x128xf32>
    %cst_213 = arith.constant 0.000000e+00 : f32
    %701 = vector.broadcast %cst_213 : f32 to vector<2x16x8xf32>
    %702 = vector.extract_strided_slice %700 {offsets = [0, 0, 8], sizes = [2, 16, 120], strides = [1, 1, 1]} : vector<2x16x128xf32> to vector<2x16x120xf32>
    %703 = tpu.concatenate %702, %701 in 2 : vector<2x16x120xf32>, vector<2x16x8xf32> -> vector<2x16x128xf32>
    %704 = arith.maximumf %703, %700 : vector<2x16x128xf32>
    %cst_214 = arith.constant 0.000000e+00 : f32
    %705 = vector.broadcast %cst_214 : f32 to vector<2x16x8xf32>
    %706 = vector.extract_strided_slice %700 {offsets = [0, 0, 0], sizes = [2, 16, 120], strides = [1, 1, 1]} : vector<2x16x128xf32> to vector<2x16x120xf32>
    %707 = tpu.concatenate %705, %706 in 2 : vector<2x16x8xf32>, vector<2x16x120xf32> -> vector<2x16x128xf32>
    %708 = arith.maximumf %704, %707 : vector<2x16x128xf32>
    %709 = vector.shape_cast %708 : vector<2x16x128xf32> to vector<32x128xf32>
    %cst_215 = arith.constant dense<0.000000e+00> : vector<32x128xf32>
    %710 = tpu.matmul %709, %0, %cst_215 {dimension_numbers = #tpu.dot_dimension_numbers<[1], [0], [0], [1], [0, 0, 1, 1], [], []>} : vector<32x128xf32>, vector<128x128xf32>, vector<32x128xf32> -> vector<32x128xf32>
    %711 = tpu.concatenate %532, %686, %698 in 2 : vector<2x16x128xf32>, vector<2x16x128xf32>, vector<2x16x128xf32> -> vector<2x16x384xf32>
    %712 = vector.shape_cast %711 : vector<2x16x384xf32> to vector<32x384xf32>
    %cst_216 = arith.constant dense<0.000000e+00> : vector<32x512xf32>
    %713 = tpu.matmul %712, %1, %cst_216 {dimension_numbers = #tpu.dot_dimension_numbers<[1], [0], [0], [1], [0, 0, 1, 1], [], []>} : vector<32x384xf32>, vector<384x512xf32>, vector<32x512xf32> -> vector<32x512xf32>
    %714 = vector.broadcast %2 : vector<1x512xf32> to vector<32x512xf32>
    %715 = arith.addf %713, %714 : vector<32x512xf32>
    %cst_217 = arith.constant 0.000000e+00 : f32
    %716 = vector.broadcast %cst_217 : f32 to vector<32x512xf32>
    %717 = arith.maximumf %715, %716 : vector<32x512xf32>
    %cst_218 = arith.constant dense<0.000000e+00> : vector<32x128xf32>
    %718 = tpu.matmul %717, %3, %cst_218 {dimension_numbers = #tpu.dot_dimension_numbers<[1], [0], [0], [1], [0, 0, 1, 1], [], []>} : vector<32x512xf32>, vector<512x128xf32>, vector<32x128xf32> -> vector<32x128xf32>
    %719 = vector.shape_cast %718 : vector<32x128xf32> to vector<2x16x128xf32>
    %c3 = arith.constant 3 : index
    %c0_219 = arith.constant 0 : index
    %c0_220 = arith.constant 0 : index
    %c0_221 = arith.constant 0 : index
    %720 = vector.load %arg1[%c3, %c0_219, %c0_220, %c0_221] : memref<4x2x16x128xf32, #tpu.memory_space<vmem>>, vector<1x2x16x128xf32>
    %721 = vector.shape_cast %720 : vector<1x2x16x128xf32> to vector<2x16x128xf32>
    %722 = arith.mulf %719, %721 : vector<2x16x128xf32>
    %723 = arith.addf %532, %722 : vector<2x16x128xf32>
    %cst_222 = arith.constant 0.000000e+00 : f32
    %724 = vector.broadcast %cst_222 : f32 to vector<2x1x128xf32>
    %725 = vector.extract_strided_slice %723 {offsets = [0, 0, 0], sizes = [2, 15, 128], strides = [1, 1, 1]} : vector<2x16x128xf32> to vector<2x15x128xf32>
    %726 = tpu.concatenate %724, %725 in 1 : vector<2x1x128xf32>, vector<2x15x128xf32> -> vector<2x16x128xf32>
    %727 = arith.maximumf %726, %723 : vector<2x16x128xf32>
    %cst_223 = arith.constant 0.000000e+00 : f32
    %728 = vector.broadcast %cst_223 : f32 to vector<2x1x128xf32>
    %729 = vector.extract_strided_slice %723 {offsets = [0, 1, 0], sizes = [2, 15, 128], strides = [1, 1, 1]} : vector<2x16x128xf32> to vector<2x15x128xf32>
    %730 = tpu.concatenate %729, %728 in 1 : vector<2x15x128xf32>, vector<2x1x128xf32> -> vector<2x16x128xf32>
    %731 = arith.maximumf %727, %730 : vector<2x16x128xf32>
    %cst_224 = arith.constant 0.000000e+00 : f32
    %732 = vector.broadcast %cst_224 : f32 to vector<2x16x8xf32>
    %733 = vector.extract_strided_slice %731 {offsets = [0, 0, 8], sizes = [2, 16, 120], strides = [1, 1, 1]} : vector<2x16x128xf32> to vector<2x16x120xf32>
    %734 = tpu.concatenate %733, %732 in 2 : vector<2x16x120xf32>, vector<2x16x8xf32> -> vector<2x16x128xf32>
    %735 = arith.maximumf %734, %731 : vector<2x16x128xf32>
    %cst_225 = arith.constant 0.000000e+00 : f32
    %736 = vector.broadcast %cst_225 : f32 to vector<2x16x8xf32>
    %737 = vector.extract_strided_slice %731 {offsets = [0, 0, 0], sizes = [2, 16, 120], strides = [1, 1, 1]} : vector<2x16x128xf32> to vector<2x16x120xf32>
    %738 = tpu.concatenate %736, %737 in 2 : vector<2x16x8xf32>, vector<2x16x120xf32> -> vector<2x16x128xf32>
    %739 = arith.maximumf %735, %738 : vector<2x16x128xf32>
    %740 = vector.shape_cast %739 : vector<2x16x128xf32> to vector<32x128xf32>
    %cst_226 = arith.constant dense<0.000000e+00> : vector<32x128xf32>
    %741 = tpu.matmul %740, %0, %cst_226 {dimension_numbers = #tpu.dot_dimension_numbers<[1], [0], [0], [1], [0, 0, 1, 1], [], []>} : vector<32x128xf32>, vector<128x128xf32>, vector<32x128xf32> -> vector<32x128xf32>
    %cst_227 = arith.constant 1.000000e-01 : f32
    %742 = vector.broadcast %cst_227 : f32 to vector<32x128xf32>
    %743 = arith.cmpf ogt, %710, %742 : vector<32x128xf32>
    %cst_228 = arith.constant 1.000000e-01 : f32
    %744 = vector.broadcast %cst_228 : f32 to vector<32x128xf32>
    %745 = arith.cmpf ogt, %741, %744 : vector<32x128xf32>
    %746 = arith.andi %743, %745 : vector<32x128xi1>
    %747 = arith.extui %746 : vector<32x128xi1> to vector<32x128xi32>
    %748 = arith.sitofp %747 : vector<32x128xi32> to vector<32x128xf32>
    %749 = vector.shape_cast %748 : vector<32x128xf32> to vector<2x16x128xf32>
    %750 = arith.mulf %723, %749 : vector<2x16x128xf32>
    %c3_229 = arith.constant 3 : index
    %c0_230 = arith.constant 0 : index
    %c0_231 = arith.constant 0 : index
    %c0_232 = arith.constant 0 : index
    %751 = vector.load %arg14[%c3_229, %c0_230, %c0_231, %c0_232] : memref<4x2x16x128xf32, #tpu.memory_space<vmem>>, vector<1x2x16x128xf32>
    %752 = vector.shape_cast %751 : vector<1x2x16x128xf32> to vector<2x16x128xf32>
    %753 = vector.shape_cast %750 : vector<2x16x128xf32> to vector<1x2x16x128xf32>
    tpu.vector_store %arg14[%c3_229, %c0_230, %c0_231, %c0_232], %753 {strides = array<i32>} : memref<4x2x16x128xf32, #tpu.memory_space<vmem>>, vector<1x2x16x128xf32>,
    %cst_233 = arith.constant 0.000000e+00 : f32
    %754 = vector.broadcast %cst_233 : f32 to vector<2x1xf32>
    %c3_234 = arith.constant 3 : index
    %c0_235 = arith.constant 0 : index
    %c0_236 = arith.constant 0 : index
    %755 = vector.load %arg15[%c3_234, %c0_235, %c0_236] : memref<4x2x1xf32, #tpu.memory_space<vmem>>, vector<1x2x1xf32>
    %756 = vector.shape_cast %755 : vector<1x2x1xf32> to vector<2x1xf32>
    %757 = vector.shape_cast %754 : vector<2x1xf32> to vector<1x2x1xf32>
    tpu.vector_store %arg15[%c3_234, %c0_235, %c0_236], %757 {strides = array<i32>} : memref<4x2x1xf32, #tpu.memory_space<vmem>>, vector<1x2x1xf32>,
    return
  }
}

</mosaic_0001>

<llo_original>
// kernel: fwd.1
$region0: #{fwd.1}
  #allocation0 [shape = 'u32[]', space=smem, size = 0x4, offset = 0x4, fixed_abs, tag = 'smem constant byte address 0x4 - core index']
  #allocation1 [shape = 'u32[72,128]{1,0:T(1,128)}', space=vmem, size = 0x9000, scoped, tag = 'internal scratch']
  #allocation2 [shape = 'f32[1,1]{1,0:T(1,128)S(1)}', space=vmem, size = 0x200, scoped, tag = 'scoped memory for fwd.1']
  %s0 = inlined_call_operand.vmem [shape: f32[2,16,128], index: 0, kind: input, shape index: {}]
  %s1 = inlined_call_operand.vmem [shape: f32[4,2,16,128], index: 1, kind: input, shape index: {}]
  %s2 = inlined_call_operand.vmem [shape: f32[128,128], index: 2, kind: input, shape index: {}]
  %s3 = inlined_call_operand.hbm [shape: f32[384,512], index: 3, kind: input, shape index: {}]
  %s4 = inlined_call_operand.vmem [shape: f32[1,512], index: 4, kind: input, shape index: {}]
  %s5 = inlined_call_operand.vmem [shape: f32[512,128], index: 5, kind: input, shape index: {}]
  %s6 = inlined_call_operand.vmem [shape: f32[1152,140], index: 6, kind: input, shape index: {}]
  %s7 = inlined_call_operand.vmem [shape: f32[1,140], index: 7, kind: input, shape index: {}]
  %s8 = inlined_call_operand.hbm [shape: f32[1260,100], index: 8, kind: input, shape index: {}]
  %s9 = inlined_call_operand.vmem [shape: f32[1,100], index: 9, kind: input, shape index: {}]
  %s10 = inlined_call_operand.vmem [shape: f32[80,16], index: 10, kind: input, shape index: {}]
  %s11 = inlined_call_operand.vmem [shape: f32[1,16], index: 11, kind: input, shape index: {}]
  %s12 = inlined_call_operand.vmem [shape: f32[1,16], index: 12, kind: input, shape index: {}]
  %s13 = inlined_call_operand.<no memory space> [shape: f32[1,1], index: 13, kind: input, shape index: {}]
  %s14 = inlined_call_operand.vmem [shape: f32[4,2,16,128], index: 14, kind: output, shape index: {0}]
  %s15 = inlined_call_operand.vmem [shape: f32[4,2,1], index: 15, kind: output, shape index: {1}]
  %16 = xla_tuple %s14, %s15
  %s17 = sld [smem:[#allocation0]]
  $region82: #{fwd.1} parent=0
    _
  %s19 = ssub.s32 1, %s17
  %s20 = scalar_select 0, %s19, %s17
  %v21 = vstv %s13
  %22 = vst [vmem:[#allocation2] sm:$0x1] %v21
  $region1: #{fwd.1} parent=0
    #allocation3 [shape = 'u8[786432]{0}', space=vmem, size = 0xc0000, scoped, tag = 'input window, operand 3, single buffered']
    #allocation4 [shape = 's32[1]{0}', space=sflag, size = 0x4, scoped, tag = 'scoped memory for fwd.1']
    #allocation5 [shape = 'u8[647168]{0}', space=vmem, size = 0x9e000, scoped, tag = 'input window, operand 8, single buffered']
    #allocation6 [shape = 's32[1]{0}', space=sflag, size = 0x4, scoped, tag = 'scoped memory for fwd.1']
    %23 = vsyncpa [#allocation4], 0
    %24 = vsyncpa [#allocation6], 0
    // Predicated region
    $region2: #{fwd.1} parent=1 // pred_check
      _
    $region3: #{fwd.1} parent=1 // pred_check_branch
      %26 = sbr.rel (0) target = $region5
    $region4: #{fwd.1} parent=1 // pred_region
      _
    $region5: #{fwd.1} parent=1 // pred_fallthru
      _
    // Predicated region
    $region6: #{fwd.1} parent=1 // pred_check
      _
    $region7: #{fwd.1} parent=1 // pred_check_branch
      %28 = sbr.rel (0) target = $region9
    $region8: #{fwd.1} parent=1 // pred_region
      _
    $region9: #{fwd.1} parent=1 // pred_fallthru
      _
    // Predicated region
    $region10: #{fwd.1} parent=1 // pred_check
      _
    $region11: #{fwd.1} parent=1 // pred_check_branch
      %30 = sbr.rel (0) target = $region13
    $region12: #{fwd.1} parent=1 // pred_region
      _
    $region13: #{fwd.1} parent=1 // pred_fallthru
      _
    // Predicated region
    $region14: #{fwd.1} parent=1 // pred_check
      _
    $region15: #{fwd.1} parent=1 // pred_check_branch
      %32 = sbr.rel (0) target = $region17
    $region16: #{fwd.1} parent=1 // pred_region
      %34 = vsyncadd [#allocation4], 0
      %s35 = sshll.u32 %s3, 4
      %s36 = int_to_ptr.hbm [resolvable:$true] %s35
      %s37 = sshll.u32 [#allocation3], 4
      %s38 = int_to_ptr.vmem [resolvable:$true] %s37
      %43 = dma.hbm_to_vmem [thread:$0]  %s36, 24576, %s38, [#allocation4], 512, 512, 32
    $region17: #{fwd.1} parent=1 // pred_fallthru
      _
    // Predicated region
    $region18: #{fwd.1} parent=1 // pred_check
      _
    $region19: #{fwd.1} parent=1 // pred_check_branch
      %45 = sbr.rel (0) target = $region21
    $region20: #{fwd.1} parent=1 // pred_region
      _
    $region21: #{fwd.1} parent=1 // pred_fallthru
      _
    // Predicated region
    $region22: #{fwd.1} parent=1 // pred_check
      _
    $region23: #{fwd.1} parent=1 // pred_check_branch
      %47 = sbr.rel (0) target = $region25
    $region24: #{fwd.1} parent=1 // pred_region
      _
    $region25: #{fwd.1} parent=1 // pred_fallthru
      _
    // Predicated region
    $region26: #{fwd.1} parent=1 // pred_check
      _
    $region27: #{fwd.1} parent=1 // pred_check_branch
      %49 = sbr.rel (0) target = $region29
    $region28: #{fwd.1} parent=1 // pred_region
      _
    $region29: #{fwd.1} parent=1 // pred_fallthru
      _
    // Predicated region
    $region30: #{fwd.1} parent=1 // pred_check
      _
    $region31: #{fwd.1} parent=1 // pred_check_branch
      %51 = sbr.rel (0) target = $region33
    $region32: #{fwd.1} parent=1 // pred_region
      _
    $region33: #{fwd.1} parent=1 // pred_fallthru
      _
    // Predicated region
    $region34: #{fwd.1} parent=1 // pred_check
      _
    $region35: #{fwd.1} parent=1 // pred_check_branch
      %53 = sbr.rel (0) target = $region37
    $region36: #{fwd.1} parent=1 // pred_region
      %55 = vsyncadd [#allocation6], 0
      %s56 = sshll.u32 %s8, 4
      %s57 = int_to_ptr.hbm [resolvable:$true] %s56
      %s58 = sshll.u32 [#allocation5], 4
      %s59 = int_to_ptr.vmem [resolvable:$true] %s58
      %64 = dma.hbm_to_vmem [thread:$0]  %s57, 20224, %s59, [#allocation6], 128, 128, 8
    $region37: #{fwd.1} parent=1 // pred_fallthru
      _
    // Predicated region
    $region38: #{fwd.1} parent=1 // pred_check
      _
    $region39: #{fwd.1} parent=1 // pred_check_branch
      %66 = sbr.rel (0) target = $region41
    $region40: #{fwd.1} parent=1 // pred_region
      _
    $region41: #{fwd.1} parent=1 // pred_fallthru
      _
    // Predicated region
    $region42: #{fwd.1} parent=1 // pred_check
      _
    $region43: #{fwd.1} parent=1 // pred_check_branch
      %68 = sbr.rel (0) target = $region45
    $region44: #{fwd.1} parent=1 // pred_region
      _
    $region45: #{fwd.1} parent=1 // pred_fallthru
      _
    // Predicated region
    $region46: #{fwd.1} parent=1 // pred_check
      _
    $region47: #{fwd.1} parent=1 // pred_check_branch
      %70 = sbr.rel (0) target = $region49
    $region48: #{fwd.1} parent=1 // pred_region
      _
    $region49: #{fwd.1} parent=1 // pred_fallthru
      _
    // Predicated region
    $region50: #{fwd.1} parent=1 // pred_check
      _
    $region51: #{fwd.1} parent=1 // pred_check_branch
      %72 = sbr.rel (0) target = $region53
    $region52: #{fwd.1} parent=1 // pred_region
      _
    $region53: #{fwd.1} parent=1 // pred_fallthru
      _
    // Predicated region
    $region54: #{fwd.1} parent=1 // pred_check
      _
    $region55: #{fwd.1} parent=1 // pred_check_branch
      %74 = sbr.rel (0) target = $region57
    $region56: #{fwd.1} parent=1 // pred_region
      _
    $region57: #{fwd.1} parent=1 // pred_fallthru
      _
    // Predicated region
    $region58: #{fwd.1} parent=1 // pred_check
      _
    $region59: #{fwd.1} parent=1 // pred_check_branch
      %76 = sbr.rel (0) target = $region61
    $region60: #{fwd.1} parent=1 // pred_region
      %78 = dma.done [#allocation4], 24576
    $region61: #{fwd.1} parent=1 // pred_fallthru
      _
    // Predicated region
    $region62: #{fwd.1} parent=1 // pred_check
      _
    $region63: #{fwd.1} parent=1 // pred_check_branch
      %80 = sbr.rel (0) target = $region65
    $region64: #{fwd.1} parent=1 // pred_region
      %82 = dma.done [#allocation6], 20224
    $region65: #{fwd.1} parent=1 // pred_fallthru
      _
    %v83 = vld [vmem:[%s2] sm:$0xff]
    %v84 = vld [vmem:[%s2 + $0x8] sm:$0xff]
    %v85 = vld [vmem:[%s2 + $0x10] sm:$0xff]
    %v86 = vld [vmem:[%s2 + $0x18] sm:$0xff]
    %v87 = vld [vmem:[%s2 + $0x20] sm:$0xff]
    %v88 = vld [vmem:[%s2 + $0x28] sm:$0xff]
    %v89 = vld [vmem:[%s2 + $0x30] sm:$0xff]
    %v90 = vld [vmem:[%s2 + $0x38] sm:$0xff]
    %v91 = vld [vmem:[%s2 + $0x40] sm:$0xff]
    %v92 = vld [vmem:[%s2 + $0x48] sm:$0xff]
    %v93 = vld [vmem:[%s2 + $0x50] sm:$0xff]
    %v94 = vld [vmem:[%s2 + $0x58] sm:$0xff]
    %v95 = vld [vmem:[%s2 + $0x60] sm:$0xff]
    %v96 = vld [vmem:[%s2 + $0x68] sm:$0xff]
    %v97 = vld [vmem:[%s2 + $0x70] sm:$0xff]
    %v98 = vld [vmem:[%s2 + $0x78] sm:$0xff]
    %v99 = vld [vmem:[#allocation3] sm:$0xff]
    %v100 = vld [vmem:[#allocation3 + $0x8] sm:$0xff]
    %v101 = vld [vmem:[#allocation3 + $0x10] sm:$0xff]
    %v102 = vld [vmem:[#allocation3 + $0x18] sm:$0xff]
    %v103 = vld [vmem:[#allocation3 + $0x20] sm:$0xff]
    %v104 = vld [vmem:[#allocation3 + $0x28] sm:$0xff]
    %v105 = vld [vmem:[#allocation3 + $0x30] sm:$0xff]
    %v106 = vld [vmem:[#allocation3 + $0x38] sm:$0xff]
    %v107 = vld [vmem:[#allocation3 + $0x40] sm:$0xff]
    %v108 = vld [vmem:[#allocation3 + $0x48] sm:$0xff]
    %v109 = vld [vmem:[#allocation3 + $0x50] sm:$0xff]
    %v110 = vld [vmem:[#allocation3 + $0x58] sm:$0xff]
    %v111 = vld [vmem:[#allocation3 + $0x60] sm:$0xff]
    %v112 = vld [vmem:[#allocation3 + $0x68] sm:$0xff]
    %v113 = vld [vmem:[#allocation3 + $0x70] sm:$0xff]
    %v114 = vld [vmem:[#allocation3 + $0x78] sm:$0xff]
    %v115 = vld [vmem:[#allocation3 + $0x80] sm:$0xff]
    %v116 = vld [vmem:[#allocation3 + $0x88] sm:$0xff]
    %v117 = vld [vmem:[#allocation3 + $0x90] sm:$0xff]
    %v118 = vld [vmem:[#allocation3 + $0x98] sm:$0xff]
    %v119 = vld [vmem:[#allocation3 + $0xa0] sm:$0xff]
    %v120 = vld [vmem:[#allocation3 + $0xa8] sm:$0xff]
    %v121 = vld [vmem:[#allocation3 + $0xb0] sm:$0xff]
    %v122 = vld [vmem:[#allocation3 + $0xb8] sm:$0xff]
    %v123 = vld [vmem:[#allocation3 + $0xc0] sm:$0xff]
    %v124 = vld [vmem:[#allocation3 + $0xc8] sm:$0xff]
    %v125 = vld [vmem:[#allocation3 + $0xd0] sm:$0xff]
    %v126 = vld [vmem:[#allocation3 + $0xd8] sm:$0xff]
    %v127 = vld [vmem:[#allocation3 + $0xe0] sm:$0xff]
    %v128 = vld [vmem:[#allocation3 + $0xe8] sm:$0xff]
    %v129 = vld [vmem:[#allocation3 + $0xf0] sm:$0xff]
    %v130 = vld [vmem:[#allocation3 + $0xf8] sm:$0xff]
    %v131 = vld [vmem:[#allocation3 + $0x100] sm:$0xff]
    %v132 = vld [vmem:[#allocation3 + $0x108] sm:$0xff]
    %v133 = vld [vmem:[#allocation3 + $0x110] sm:$0xff]
    %v134 = vld [vmem:[#allocation3 + $0x118] sm:$0xff]
    %v135 = vld [vmem:[#allocation3 + $0x120] sm:$0xff]
    %v136 = vld [vmem:[#allocation3 + $0x128] sm:$0xff]
    %v137 = vld [vmem:[#allocation3 + $0x130] sm:$0xff]
    %v138 = vld [vmem:[#allocation3 + $0x138] sm:$0xff]
    %v139 = vld [vmem:[#allocation3 + $0x140] sm:$0xff]
    %v140 = vld [vmem:[#allocation3 + $0x148] sm:$0xff]
    %v141 = vld [vmem:[#allocation3 + $0x150] sm:$0xff]
    %v142 = vld [vmem:[#allocation3 + $0x158] sm:$0xff]
    %v143 = vld [vmem:[#allocation3 + $0x160] sm:$0xff]
    %v144 = vld [vmem:[#allocation3 + $0x168] sm:$0xff]
    %v145 = vld [vmem:[#allocation3 + $0x170] sm:$0xff]
    %v146 = vld [vmem:[#allocation3 + $0x178] sm:$0xff]
    %v147 = vld [vmem:[#allocation3 + $0x180] sm:$0xff]
    %v148 = vld [vmem:[#allocation3 + $0x188] sm:$0xff]
    %v149 = vld [vmem:[#allocation3 + $0x190] sm:$0xff]
    %v150 = vld [vmem:[#allocation3 + $0x198] sm:$0xff]
    %v151 = vld [vmem:[#allocation3 + $0x1a0] sm:$0xff]
    %v152 = vld [vmem:[#allocation3 + $0x1a8] sm:$0xff]
    %v153 = vld [vmem:[#allocation3 + $0x1b0] sm:$0xff]
    %v154 = vld [vmem:[#allocation3 + $0x1b8] sm:$0xff]
    %v155 = vld [vmem:[#allocation3 + $0x1c0] sm:$0xff]
    %v156 = vld [vmem:[#allocation3 + $0x1c8] sm:$0xff]
    %v157 = vld [vmem:[#allocation3 + $0x1d0] sm:$0xff]
    %v158 = vld [vmem:[#allocation3 + $0x1d8] sm:$0xff]
    %v159 = vld [vmem:[#allocation3 + $0x1e0] sm:$0xff]
    %v160 = vld [vmem:[#allocation3 + $0x1e8] sm:$0xff]
    %v161 = vld [vmem:[#allocation3 + $0x1f0] sm:$0xff]
    %v162 = vld [vmem:[#allocation3 + $0x1f8] sm:$0xff]
    %v163 = vld [vmem:[#allocation3 + $0x200] sm:$0xff]
    %v164 = vld [vmem:[#allocation3 + $0x208] sm:$0xff]
    %v165 = vld [vmem:[#allocation3 + $0x210] sm:$0xff]
    %v166 = vld [vmem:[#allocation3 + $0x218] sm:$0xff]
    %v167 = vld [vmem:[#allocation3 + $0x220] sm:$0xff]
    %v168 = vld [vmem:[#allocation3 + $0x228] sm:$0xff]
    %v169 = vld [vmem:[#allocation3 + $0x230] sm:$0xff]
    %v170 = vld [vmem:[#allocation3 + $0x238] sm:$0xff]
    %v171 = vld [vmem:[#allocation3 + $0x240] sm:$0xff]
    %v172 = vld [vmem:[#allocation3 + $0x248] sm:$0xff]
    %v173 = vld [vmem:[#allocation3 + $0x250] sm:$0xff]
    %v174 = vld [vmem:[#allocation3 + $0x258] sm:$0xff]
    %v175 = vld [vmem:[#allocation3 + $0x260] sm:$0xff]
    %v176 = vld [vmem:[#allocation3 + $0x268] sm:$0xff]
    %v177 = vld [vmem:[#allocation3 + $0x270] sm:$0xff]
    %v178 = vld [vmem:[#allocation3 + $0x278] sm:$0xff]
    %v179 = vld [vmem:[#allocation3 + $0x280] sm:$0xff]
    %v180 = vld [vmem:[#allocation3 + $0x288] sm:$0xff]
    %v181 = vld [vmem:[#allocation3 + $0x290] sm:$0xff]
    %v182 = vld [vmem:[#allocation3 + $0x298] sm:$0xff]
    %v183 = vld [vmem:[#allocation3 + $0x2a0] sm:$0xff]
    %v184 = vld [vmem:[#allocation3 + $0x2a8] sm:$0xff]
    %v185 = vld [vmem:[#allocation3 + $0x2b0] sm:$0xff]
    %v186 = vld [vmem:[#allocation3 + $0x2b8] sm:$0xff]
    %v187 = vld [vmem:[#allocation3 + $0x2c0] sm:$0xff]
    %v188 = vld [vmem:[#allocation3 + $0x2c8] sm:$0xff]
    %v189 = vld [vmem:[#allocation3 + $0x2d0] sm:$0xff]
    %v190 = vld [vmem:[#allocation3 + $0x2d8] sm:$0xff]
    %v191 = vld [vmem:[#allocation3 + $0x2e0] sm:$0xff]
    %v192 = vld [vmem:[#allocation3 + $0x2e8] sm:$0xff]
    %v193 = vld [vmem:[#allocation3 + $0x2f0] sm:$0xff]
    %v194 = vld [vmem:[#allocation3 + $0x2f8] sm:$0xff]
    %v195 = vld [vmem:[#allocation3 + $0x300] sm:$0xff]
    %v196 = vld [vmem:[#allocation3 + $0x308] sm:$0xff]
    %v197 = vld [vmem:[#allocation3 + $0x310] sm:$0xff]
    %v198 = vld [vmem:[#allocation3 + $0x318] sm:$0xff]
    %v199 = vld [vmem:[#allocation3 + $0x320] sm:$0xff]
    %v200 = vld [vmem:[#allocation3 + $0x328] sm:$0xff]
    %v201 = vld [vmem:[#allocation3 + $0x330] sm:$0xff]
    %v202 = vld [vmem:[#allocation3 + $0x338] sm:$0xff]
    %v203 = vld [vmem:[#allocation3 + $0x340] sm:$0xff]
    %v204 = vld [vmem:[#allocation3 + $0x348] sm:$0xff]
    %v205 = vld [vmem:[#allocation3 + $0x350] sm:$0xff]
    %v206 = vld [vmem:[#allocation3 + $0x358] sm:$0xff]
    %v207 = vld [vmem:[#allocation3 + $0x360] sm:$0xff]
    %v208 = vld [vmem:[#allocation3 + $0x368] sm:$0xff]
    %v209 = vld [vmem:[#allocation3 + $0x370] sm:$0xff]
    %v210 = vld [vmem:[#allocation3 + $0x378] sm:$0xff]
    %v211 = vld [vmem:[#allocation3 + $0x380] sm:$0xff]
    %v212 = vld [vmem:[#allocation3 + $0x388] sm:$0xff]
    %v213 = vld [vmem:[#allocation3 + $0x390] sm:$0xff]
    %v214 = vld [vmem:[#allocation3 + $0x398] sm:$0xff]
    %v215 = vld [vmem:[#allocation3 + $0x3a0] sm:$0xff]
    %v216 = vld [vmem:[#allocation3 + $0x3a8] sm:$0xff]
    %v217 = vld [vmem:[#allocation3 + $0x3b0] sm:$0xff]
    %v218 = vld [vmem:[#allocation3 + $0x3b8] sm:$0xff]
    %v219 = vld [vmem:[#allocation3 + $0x3c0] sm:$0xff]
    %v220 = vld [vmem:[#allocation3 + $0x3c8] sm:$0xff]
    %v221 = vld [vmem:[#allocation3 + $0x3d0] sm:$0xff]
    %v222 = vld [vmem:[#allocation3 + $0x3d8] sm:$0xff]
    %v223 = vld [vmem:[#allocation3 + $0x3e0] sm:$0xff]
    %v224 = vld [vmem:[#allocation3 + $0x3e8] sm:$0xff]
    %v225 = vld [vmem:[#allocation3 + $0x3f0] sm:$0xff]
    %v226 = vld [vmem:[#allocation3 + $0x3f8] sm:$0xff]
    %v227 = vld [vmem:[#allocation3 + $0x400] sm:$0xff]
    %v228 = vld [vmem:[#allocation3 + $0x408] sm:$0xff]
    %v229 = vld [vmem:[#allocation3 + $0x410] sm:$0xff]
    %v230 = vld [vmem:[#allocation3 + $0x418] sm:$0xff]
    %v231 = vld [vmem:[#allocation3 + $0x420] sm:$0xff]
    %v232 = vld [vmem:[#allocation3 + $0x428] sm:$0xff]
    %v233 = vld [vmem:[#allocation3 + $0x430] sm:$0xff]
    %v234 = vld [vmem:[#allocation3 + $0x438] sm:$0xff]
    %v235 = vld [vmem:[#allocation3 + $0x440] sm:$0xff]
    %v236 = vld [vmem:[#allocation3 + $0x448] sm:$0xff]
    %v237 = vld [vmem:[#allocation3 + $0x450] sm:$0xff]
    %v238 = vld [vmem:[#allocation3 + $0x458] sm:$0xff]
    %v239 = vld [vmem:[#allocation3 + $0x460] sm:$0xff]
    %v240 = vld [vmem:[#allocation3 + $0x468] sm:$0xff]
    %v241 = vld [vmem:[#allocation3 + $0x470] sm:$0xff]
    %v242 = vld [vmem:[#allocation3 + $0x478] sm:$0xff]
    %v243 = vld [vmem:[#allocation3 + $0x480] sm:$0xff]
    %v244 = vld [vmem:[#allocation3 + $0x488] sm:$0xff]
    %v245 = vld [vmem:[#allocation3 + $0x490] sm:$0xff]
    %v246 = vld [vmem:[#allocation3 + $0x498] sm:$0xff]
    %v247 = vld [vmem:[#allocation3 + $0x4a0] sm:$0xff]
    %v248 = vld [vmem:[#allocation3 + $0x4a8] sm:$0xff]
    %v249 = vld [vmem:[#allocation3 + $0x4b0] sm:$0xff]
    %v250 = vld [vmem:[#allocation3 + $0x4b8] sm:$0xff]
    %v251 = vld [vmem:[#allocation3 + $0x4c0] sm:$0xff]
    %v252 = vld [vmem:[#allocation3 + $0x4c8] sm:$0xff]
    %v253 = vld [vmem:[#allocation3 + $0x4d0] sm:$0xff]
    %v254 = vld [vmem:[#allocation3 + $0x4d8] sm:$0xff]
    %v255 = vld [vmem:[#allocation3 + $0x4e0] sm:$0xff]
    %v256 = vld [vmem:[#allocation3 + $0x4e8] sm:$0xff]
    %v257 = vld [vmem:[#allocation3 + $0x4f0] sm:$0xff]
    %v258 = vld [vmem:[#allocation3 + $0x4f8] sm:$0xff]
    %v259 = vld [vmem:[#allocation3 + $0x500] sm:$0xff]
    %v260 = vld [vmem:[#allocation3 + $0x508] sm:$0xff]
    %v261 = vld [vmem:[#allocation3 + $0x510] sm:$0xff]
    %v262 = vld [vmem:[#allocation3 + $0x518] sm:$0xff]
    %v263 = vld [vmem:[#allocation3 + $0x520] sm:$0xff]
    %v264 = vld [vmem:[#allocation3 + $0x528] sm:$0xff]
    %v265 = vld [vmem:[#allocation3 + $0x530] sm:$0xff]
    %v266 = vld [vmem:[#allocation3 + $0x538] sm:$0xff]
    %v267 = vld [vmem:[#allocation3 + $0x540] sm:$0xff]
    %v268 = vld [vmem:[#allocation3 + $0x548] sm:$0xff]
    %v269 = vld [vmem:[#allocation3 + $0x550] sm:$0xff]
    %v270 = vld [vmem:[#allocation3 + $0x558] sm:$0xff]
    %v271 = vld [vmem:[#allocation3 + $0x560] sm:$0xff]
    %v272 = vld [vmem:[#allocation3 + $0x568] sm:$0xff]
    %v273 = vld [vmem:[#allocation3 + $0x570] sm:$0xff]
    %v274 = vld [vmem:[#allocation3 + $0x578] sm:$0xff]
    %v275 = vld [vmem:[#allocation3 + $0x580] sm:$0xff]
    %v276 = vld [vmem:[#allocation3 + $0x588] sm:$0xff]
    %v277 = vld [vmem:[#allocation3 + $0x590] sm:$0xff]
    %v278 = vld [vmem:[#allocation3 + $0x598] sm:$0xff]
    %v279 = vld [vmem:[#allocation3 + $0x5a0] sm:$0xff]
    %v280 = vld [vmem:[#allocation3 + $0x5a8] sm:$0xff]
    %v281 = vld [vmem:[#allocation3 + $0x5b0] sm:$0xff]
    %v282 = vld [vmem:[#allocation3 + $0x5b8] sm:$0xff]
    %v283 = vld [vmem:[#allocation3 + $0x5c0] sm:$0xff]
    %v284 = vld [vmem:[#allocation3 + $0x5c8] sm:$0xff]
    %v285 = vld [vmem:[#allocation3 + $0x5d0] sm:$0xff]
    %v286 = vld [vmem:[#allocation3 + $0x5d8] sm:$0xff]
    %v287 = vld [vmem:[#allocation3 + $0x5e0] sm:$0xff]
    %v288 = vld [vmem:[#allocation3 + $0x5e8] sm:$0xff]
    %v289 = vld [vmem:[#allocation3 + $0x5f0] sm:$0xff]
    %v290 = vld [vmem:[#allocation3 + $0x5f8] sm:$0xff]
    %v291 = vld [vmem:[%s4] sm:$0xf]
    %v292 = vld [vmem:[%s5] sm:$0xff]
    %v293 = vld [vmem:[%s5 + $0x8] sm:$0xff]
    %v294 = vld [vmem:[%s5 + $0x10] sm:$0xff]
    %v295 = vld [vmem:[%s5 + $0x18] sm:$0xff]
    %v296 = vld [vmem:[%s5 + $0x20] sm:$0xff]
    %v297 = vld [vmem:[%s5 + $0x28] sm:$0xff]
    %v298 = vld [vmem:[%s5 + $0x30] sm:$0xff]
    %v299 = vld [vmem:[%s5 + $0x38] sm:$0xff]
    %v300 = vld [vmem:[%s5 + $0x40] sm:$0xff]
    %v301 = vld [vmem:[%s5 + $0x48] sm:$0xff]
    %v302 = vld [vmem:[%s5 + $0x50] sm:$0xff]
    %v303 = vld [vmem:[%s5 + $0x58] sm:$0xff]
    %v304 = vld [vmem:[%s5 + $0x60] sm:$0xff]
    %v305 = vld [vmem:[%s5 + $0x68] sm:$0xff]
    %v306 = vld [vmem:[%s5 + $0x70] sm:$0xff]
    %v307 = vld [vmem:[%s5 + $0x78] sm:$0xff]
    %v308 = vld [vmem:[%s5 + $0x80] sm:$0xff]
    %v309 = vld [vmem:[%s5 + $0x88] sm:$0xff]
    %v310 = vld [vmem:[%s5 + $0x90] sm:$0xff]
    %v311 = vld [vmem:[%s5 + $0x98] sm:$0xff]
    %v312 = vld [vmem:[%s5 + $0xa0] sm:$0xff]
    %v313 = vld [vmem:[%s5 + $0xa8] sm:$0xff]
    %v314 = vld [vmem:[%s5 + $0xb0] sm:$0xff]
    %v315 = vld [vmem:[%s5 + $0xb8] sm:$0xff]
    %v316 = vld [vmem:[%s5 + $0xc0] sm:$0xff]
    %v317 = vld [vmem:[%s5 + $0xc8] sm:$0xff]
    %v318 = vld [vmem:[%s5 + $0xd0] sm:$0xff]
    %v319 = vld [vmem:[%s5 + $0xd8] sm:$0xff]
    %v320 = vld [vmem:[%s5 + $0xe0] sm:$0xff]
    %v321 = vld [vmem:[%s5 + $0xe8] sm:$0xff]
    %v322 = vld [vmem:[%s5 + $0xf0] sm:$0xff]
    %v323 = vld [vmem:[%s5 + $0xf8] sm:$0xff]
    %v324 = vld [vmem:[%s5 + $0x100] sm:$0xff]
    %v325 = vld [vmem:[%s5 + $0x108] sm:$0xff]
    %v326 = vld [vmem:[%s5 + $0x110] sm:$0xff]
    %v327 = vld [vmem:[%s5 + $0x118] sm:$0xff]
    %v328 = vld [vmem:[%s5 + $0x120] sm:$0xff]
    %v329 = vld [vmem:[%s5 + $0x128] sm:$0xff]
    %v330 = vld [vmem:[%s5 + $0x130] sm:$0xff]
    %v331 = vld [vmem:[%s5 + $0x138] sm:$0xff]
    %v332 = vld [vmem:[%s5 + $0x140] sm:$0xff]
    %v333 = vld [vmem:[%s5 + $0x148] sm:$0xff]
    %v334 = vld [vmem:[%s5 + $0x150] sm:$0xff]
    %v335 = vld [vmem:[%s5 + $0x158] sm:$0xff]
    %v336 = vld [vmem:[%s5 + $0x160] sm:$0xff]
    %v337 = vld [vmem:[%s5 + $0x168] sm:$0xff]
    %v338 = vld [vmem:[%s5 + $0x170] sm:$0xff]
    %v339 = vld [vmem:[%s5 + $0x178] sm:$0xff]
    %v340 = vld [vmem:[%s5 + $0x180] sm:$0xff]
    %v341 = vld [vmem:[%s5 + $0x188] sm:$0xff]
    %v342 = vld [vmem:[%s5 + $0x190] sm:$0xff]
    %v343 = vld [vmem:[%s5 + $0x198] sm:$0xff]
    %v344 = vld [vmem:[%s5 + $0x1a0] sm:$0xff]
    %v345 = vld [vmem:[%s5 + $0x1a8] sm:$0xff]
    %v346 = vld [vmem:[%s5 + $0x1b0] sm:$0xff]
    %v347 = vld [vmem:[%s5 + $0x1b8] sm:$0xff]
    %v348 = vld [vmem:[%s5 + $0x1c0] sm:$0xff]
    %v349 = vld [vmem:[%s5 + $0x1c8] sm:$0xff]
    %v350 = vld [vmem:[%s5 + $0x1d0] sm:$0xff]
    %v351 = vld [vmem:[%s5 + $0x1d8] sm:$0xff]
    %v352 = vld [vmem:[%s5 + $0x1e0] sm:$0xff]
    %v353 = vld [vmem:[%s5 + $0x1e8] sm:$0xff]
    %v354 = vld [vmem:[%s5 + $0x1f0] sm:$0xff]
    %v355 = vld [vmem:[%s5 + $0x1f8] sm:$0xff]
    %v356 = vld [vmem:[%s6] sm:$0xff]
    %v357 = vld [vmem:[%s6 + $0x8] sm:$0xff]
    %v358 = vld [vmem:[%s6 + $0x10] sm:$0xff]
    %v359 = vld [vmem:[%s6 + $0x18] sm:$0xff]
    %v360 = vld [vmem:[%s6 + $0x20] sm:$0xff]
    %v361 = vld [vmem:[%s6 + $0x28] sm:$0xff]
    %v362 = vld [vmem:[%s6 + $0x30] sm:$0xff]
    %v363 = vld [vmem:[%s6 + $0x38] sm:$0xff]
    %v364 = vld [vmem:[%s6 + $0x40] sm:$0xff]
    %v365 = vld [vmem:[%s6 + $0x48] sm:$0xff]
    %v366 = vld [vmem:[%s6 + $0x50] sm:$0xff]
    %v367 = vld [vmem:[%s6 + $0x58] sm:$0xff]
    %v368 = vld [vmem:[%s6 + $0x60] sm:$0xff]
    %v369 = vld [vmem:[%s6 + $0x68] sm:$0xff]
    %v370 = vld [vmem:[%s6 + $0x70] sm:$0xff]
    %v371 = vld [vmem:[%s6 + $0x78] sm:$0xff]
    %v372 = vld [vmem:[%s6 + $0x80] sm:$0xff]
    %v373 = vld [vmem:[%s6 + $0x88] sm:$0xff]
    %v374 = vld [vmem:[%s6 + $0x90] sm:$0xff]
    %v375 = vld [vmem:[%s6 + $0x98] sm:$0xff]
    %v376 = vld [vmem:[%s6 + $0xa0] sm:$0xff]
    %v377 = vld [vmem:[%s6 + $0xa8] sm:$0xff]
    %v378 = vld [vmem:[%s6 + $0xb0] sm:$0xff]
    %v379 = vld [vmem:[%s6 + $0xb8] sm:$0xff]
    %v380 = vld [vmem:[%s6 + $0xc0] sm:$0xff]
    %v381 = vld [vmem:[%s6 + $0xc8] sm:$0xff]
    %v382 = vld [vmem:[%s6 + $0xd0] sm:$0xff]
    %v383 = vld [vmem:[%s6 + $0xd8] sm:$0xff]
    %v384 = vld [vmem:[%s6 + $0xe0] sm:$0xff]
    %v385 = vld [vmem:[%s6 + $0xe8] sm:$0xff]
    %v386 = vld [vmem:[%s6 + $0xf0] sm:$0xff]
    %v387 = vld [vmem:[%s6 + $0xf8] sm:$0xff]
    %v388 = vld [vmem:[%s6 + $0x100] sm:$0xff]
    %v389 = vld [vmem:[%s6 + $0x108] sm:$0xff]
    %v390 = vld [vmem:[%s6 + $0x110] sm:$0xff]
    %v391 = vld [vmem:[%s6 + $0x118] sm:$0xff]
    %v392 = vld [vmem:[%s6 + $0x120] sm:$0xff]
    %v393 = vld [vmem:[%s6 + $0x128] sm:$0xff]
    %v394 = vld [vmem:[%s6 + $0x130] sm:$0xff]
    %v395 = vld [vmem:[%s6 + $0x138] sm:$0xff]
    %v396 = vld [vmem:[%s6 + $0x140] sm:$0xff]
    %v397 = vld [vmem:[%s6 + $0x148] sm:$0xff]
    %v398 = vld [vmem:[%s6 + $0x150] sm:$0xff]
    %v399 = vld [vmem:[%s6 + $0x158] sm:$0xff]
    %v400 = vld [vmem:[%s6 + $0x160] sm:$0xff]
    %v401 = vld [vmem:[%s6 + $0x168] sm:$0xff]
    %v402 = vld [vmem:[%s6 + $0x170] sm:$0xff]
    %v403 = vld [vmem:[%s6 + $0x178] sm:$0xff]
    %v404 = vld [vmem:[%s6 + $0x180] sm:$0xff]
    %v405 = vld [vmem:[%s6 + $0x188] sm:$0xff]
    %v406 = vld [vmem:[%s6 + $0x190] sm:$0xff]
    %v407 = vld [vmem:[%s6 + $0x198] sm:$0xff]
    %v408 = vld [vmem:[%s6 + $0x1a0] sm:$0xff]
    %v409 = vld [vmem:[%s6 + $0x1a8] sm:$0xff]
    %v410 = vld [vmem:[%s6 + $0x1b0] sm:$0xff]
    %v411 = vld [vmem:[%s6 + $0x1b8] sm:$0xff]
    %v412 = vld [vmem:[%s6 + $0x1c0] sm:$0xff]
    %v413 = vld [vmem:[%s6 + $0x1c8] sm:$0xff]
    %v414 = vld [vmem:[%s6 + $0x1d0] sm:$0xff]
    %v415 = vld [vmem:[%s6 + $0x1d8] sm:$0xff]
    %v416 = vld [vmem:[%s6 + $0x1e0] sm:$0xff]
    %v417 = vld [vmem:[%s6 + $0x1e8] sm:$0xff]
    %v418 = vld [vmem:[%s6 + $0x1f0] sm:$0xff]
    %v419 = vld [vmem:[%s6 + $0x1f8] sm:$0xff]
    %v420 = vld [vmem:[%s6 + $0x200] sm:$0xff]
    %v421 = vld [vmem:[%s6 + $0x208] sm:$0xff]
    %v422 = vld [vmem:[%s6 + $0x210] sm:$0xff]
    %v423 = vld [vmem:[%s6 + $0x218] sm:$0xff]
    %v424 = vld [vmem:[%s6 + $0x220] sm:$0xff]
    %v425 = vld [vmem:[%s6 + $0x228] sm:$0xff]
    %v426 = vld [vmem:[%s6 + $0x230] sm:$0xff]
    %v427 = vld [vmem:[%s6 + $0x238] sm:$0xff]
    %v428 = vld [vmem:[%s6 + $0x240] sm:$0xff]
    %v429 = vld [vmem:[%s6 + $0x248] sm:$0xff]
    %v430 = vld [vmem:[%s6 + $0x250] sm:$0xff]
    %v431 = vld [vmem:[%s6 + $0x258] sm:$0xff]
    %v432 = vld [vmem:[%s6 + $0x260] sm:$0xff]
    %v433 = vld [vmem:[%s6 + $0x268] sm:$0xff]
    %v434 = vld [vmem:[%s6 + $0x270] sm:$0xff]
    %v435 = vld [vmem:[%s6 + $0x278] sm:$0xff]
    %v436 = vld [vmem:[%s6 + $0x280] sm:$0xff]
    %v437 = vld [vmem:[%s6 + $0x288] sm:$0xff]
    %v438 = vld [vmem:[%s6 + $0x290] sm:$0xff]
    %v439 = vld [vmem:[%s6 + $0x298] sm:$0xff]
    %v440 = vld [vmem:[%s6 + $0x2a0] sm:$0xff]
    %v441 = vld [vmem:[%s6 + $0x2a8] sm:$0xff]
    %v442 = vld [vmem:[%s6 + $0x2b0] sm:$0xff]
    %v443 = vld [vmem:[%s6 + $0x2b8] sm:$0xff]
    %v444 = vld [vmem:[%s6 + $0x2c0] sm:$0xff]
    %v445 = vld [vmem:[%s6 + $0x2c8] sm:$0xff]
    %v446 = vld [vmem:[%s6 + $0x2d0] sm:$0xff]
    %v447 = vld [vmem:[%s6 + $0x2d8] sm:$0xff]
    %v448 = vld [vmem:[%s6 + $0x2e0] sm:$0xff]
    %v449 = vld [vmem:[%s6 + $0x2e8] sm:$0xff]
    %v450 = vld [vmem:[%s6 + $0x2f0] sm:$0xff]
    %v451 = vld [vmem:[%s6 + $0x2f8] sm:$0xff]
    %v452 = vld [vmem:[%s6 + $0x300] sm:$0xff]
    %v453 = vld [vmem:[%s6 + $0x308] sm:$0xff]
    %v454 = vld [vmem:[%s6 + $0x310] sm:$0xff]
    %v455 = vld [vmem:[%s6 + $0x318] sm:$0xff]
    %v456 = vld [vmem:[%s6 + $0x320] sm:$0xff]
    %v457 = vld [vmem:[%s6 + $0x328] sm:$0xff]
    %v458 = vld [vmem:[%s6 + $0x330] sm:$0xff]
    %v459 = vld [vmem:[%s6 + $0x338] sm:$0xff]
    %v460 = vld [vmem:[%s6 + $0x340] sm:$0xff]
    %v461 = vld [vmem:[%s6 + $0x348] sm:$0xff]
    %v462 = vld [vmem:[%s6 + $0x350] sm:$0xff]
    %v463 = vld [vmem:[%s6 + $0x358] sm:$0xff]
    %v464 = vld [vmem:[%s6 + $0x360] sm:$0xff]
    %v465 = vld [vmem:[%s6 + $0x368] sm:$0xff]
    %v466 = vld [vmem:[%s6 + $0x370] sm:$0xff]
    %v467 = vld [vmem:[%s6 + $0x378] sm:$0xff]
    %v468 = vld [vmem:[%s6 + $0x380] sm:$0xff]
    %v469 = vld [vmem:[%s6 + $0x388] sm:$0xff]
    %v470 = vld [vmem:[%s6 + $0x390] sm:$0xff]
    %v471 = vld [vmem:[%s6 + $0x398] sm:$0xff]
    %v472 = vld [vmem:[%s6 + $0x3a0] sm:$0xff]
    %v473 = vld [vmem:[%s6 + $0x3a8] sm:$0xff]
    %v474 = vld [vmem:[%s6 + $0x3b0] sm:$0xff]
    %v475 = vld [vmem:[%s6 + $0x3b8] sm:$0xff]
    %v476 = vld [vmem:[%s6 + $0x3c0] sm:$0xff]
    %v477 = vld [vmem:[%s6 + $0x3c8] sm:$0xff]
    %v478 = vld [vmem:[%s6 + $0x3d0] sm:$0xff]
    %v479 = vld [vmem:[%s6 + $0x3d8] sm:$0xff]
    %v480 = vld [vmem:[%s6 + $0x3e0] sm:$0xff]
    %v481 = vld [vmem:[%s6 + $0x3e8] sm:$0xff]
    %v482 = vld [vmem:[%s6 + $0x3f0] sm:$0xff]
    %v483 = vld [vmem:[%s6 + $0x3f8] sm:$0xff]
    %v484 = vld [vmem:[%s6 + $0x400] sm:$0xff]
    %v485 = vld [vmem:[%s6 + $0x408] sm:$0xff]
    %v486 = vld [vmem:[%s6 + $0x410] sm:$0xff]
    %v487 = vld [vmem:[%s6 + $0x418] sm:$0xff]
    %v488 = vld [vmem:[%s6 + $0x420] sm:$0xff]
    %v489 = vld [vmem:[%s6 + $0x428] sm:$0xff]
    %v490 = vld [vmem:[%s6 + $0x430] sm:$0xff]
    %v491 = vld [vmem:[%s6 + $0x438] sm:$0xff]
    %v492 = vld [vmem:[%s6 + $0x440] sm:$0xff]
    %v493 = vld [vmem:[%s6 + $0x448] sm:$0xff]
    %v494 = vld [vmem:[%s6 + $0x450] sm:$0xff]
    %v495 = vld [vmem:[%s6 + $0x458] sm:$0xff]
    %v496 = vld [vmem:[%s6 + $0x460] sm:$0xff]
    %v497 = vld [vmem:[%s6 + $0x468] sm:$0xff]
    %v498 = vld [vmem:[%s6 + $0x470] sm:$0xff]
    %v499 = vld [vmem:[%s6 + $0x478] sm:$0xff]
    %v500 = vld [vmem:[%s6 + $0x480] sm:$0xff]
    %v501 = vld [vmem:[%s6 + $0x488] sm:$0xff]
    %v502 = vld [vmem:[%s6 + $0x490] sm:$0xff]
    %v503 = vld [vmem:[%s6 + $0x498] sm:$0xff]
    %v504 = vld [vmem:[%s6 + $0x4a0] sm:$0xff]
    %v505 = vld [vmem:[%s6 + $0x4a8] sm:$0xff]
    %v506 = vld [vmem:[%s6 + $0x4b0] sm:$0xff]
    %v507 = vld [vmem:[%s6 + $0x4b8] sm:$0xff]
    %v508 = vld [vmem:[%s6 + $0x4c0] sm:$0xff]
    %v509 = vld [vmem:[%s6 + $0x4c8] sm:$0xff]
    %v510 = vld [vmem:[%s6 + $0x4d0] sm:$0xff]
    %v511 = vld [vmem:[%s6 + $0x4d8] sm:$0xff]
    %v512 = vld [vmem:[%s6 + $0x4e0] sm:$0xff]
    %v513 = vld [vmem:[%s6 + $0x4e8] sm:$0xff]
    %v514 = vld [vmem:[%s6 + $0x4f0] sm:$0xff]
    %v515 = vld [vmem:[%s6 + $0x4f8] sm:$0xff]
    %v516 = vld [vmem:[%s6 + $0x500] sm:$0xff]
    %v517 = vld [vmem:[%s6 + $0x508] sm:$0xff]
    %v518 = vld [vmem:[%s6 + $0x510] sm:$0xff]
    %v519 = vld [vmem:[%s6 + $0x518] sm:$0xff]
    %v520 = vld [vmem:[%s6 + $0x520] sm:$0xff]
    %v521 = vld [vmem:[%s6 + $0x528] sm:$0xff]
    %v522 = vld [vmem:[%s6 + $0x530] sm:$0xff]
    %v523 = vld [vmem:[%s6 + $0x538] sm:$0xff]
    %v524 = vld [vmem:[%s6 + $0x540] sm:$0xff]
    %v525 = vld [vmem:[%s6 + $0x548] sm:$0xff]
    %v526 = vld [vmem:[%s6 + $0x550] sm:$0xff]
    %v527 = vld [vmem:[%s6 + $0x558] sm:$0xff]
    %v528 = vld [vmem:[%s6 + $0x560] sm:$0xff]
    %v529 = vld [vmem:[%s6 + $0x568] sm:$0xff]
    %v530 = vld [vmem:[%s6 + $0x570] sm:$0xff]
    %v531 = vld [vmem:[%s6 + $0x578] sm:$0xff]
    %v532 = vld [vmem:[%s6 + $0x580] sm:$0xff]
    %v533 = vld [vmem:[%s6 + $0x588] sm:$0xff]
    %v534 = vld [vmem:[%s6 + $0x590] sm:$0xff]
    %v535 = vld [vmem:[%s6 + $0x598] sm:$0xff]
    %v536 = vld [vmem:[%s6 + $0x5a0] sm:$0xff]
    %v537 = vld [vmem:[%s6 + $0x5a8] sm:$0xff]
    %v538 = vld [vmem:[%s6 + $0x5b0] sm:$0xff]
    %v539 = vld [vmem:[%s6 + $0x5b8] sm:$0xff]
    %v540 = vld [vmem:[%s6 + $0x5c0] sm:$0xff]
    %v541 = vld [vmem:[%s6 + $0x5c8] sm:$0xff]
    %v542 = vld [vmem:[%s6 + $0x5d0] sm:$0xff]
    %v543 = vld [vmem:[%s6 + $0x5d8] sm:$0xff]
    %v544 = vld [vmem:[%s6 + $0x5e0] sm:$0xff]
    %v545 = vld [vmem:[%s6 + $0x5e8] sm:$0xff]
    %v546 = vld [vmem:[%s6 + $0x5f0] sm:$0xff]
    %v547 = vld [vmem:[%s6 + $0x5f8] sm:$0xff]
    %v548 = vld [vmem:[%s6 + $0x600] sm:$0xff]
    %v549 = vld [vmem:[%s6 + $0x608] sm:$0xff]
    %v550 = vld [vmem:[%s6 + $0x610] sm:$0xff]
    %v551 = vld [vmem:[%s6 + $0x618] sm:$0xff]
    %v552 = vld [vmem:[%s6 + $0x620] sm:$0xff]
    %v553 = vld [vmem:[%s6 + $0x628] sm:$0xff]
    %v554 = vld [vmem:[%s6 + $0x630] sm:$0xff]
    %v555 = vld [vmem:[%s6 + $0x638] sm:$0xff]
    %v556 = vld [vmem:[%s6 + $0x640] sm:$0xff]
    %v557 = vld [vmem:[%s6 + $0x648] sm:$0xff]
    %v558 = vld [vmem:[%s6 + $0x650] sm:$0xff]
    %v559 = vld [vmem:[%s6 + $0x658] sm:$0xff]
    %v560 = vld [vmem:[%s6 + $0x660] sm:$0xff]
    %v561 = vld [vmem:[%s6 + $0x668] sm:$0xff]
    %v562 = vld [vmem:[%s6 + $0x670] sm:$0xff]
    %v563 = vld [vmem:[%s6 + $0x678] sm:$0xff]
    %v564 = vld [vmem:[%s6 + $0x680] sm:$0xff]
    %v565 = vld [vmem:[%s6 + $0x688] sm:$0xff]
    %v566 = vld [vmem:[%s6 + $0x690] sm:$0xff]
    %v567 = vld [vmem:[%s6 + $0x698] sm:$0xff]
    %v568 = vld [vmem:[%s6 + $0x6a0] sm:$0xff]
    %v569 = vld [vmem:[%s6 + $0x6a8] sm:$0xff]
    %v570 = vld [vmem:[%s6 + $0x6b0] sm:$0xff]
    %v571 = vld [vmem:[%s6 + $0x6b8] sm:$0xff]
    %v572 = vld [vmem:[%s6 + $0x6c0] sm:$0xff]
    %v573 = vld [vmem:[%s6 + $0x6c8] sm:$0xff]
    %v574 = vld [vmem:[%s6 + $0x6d0] sm:$0xff]
    %v575 = vld [vmem:[%s6 + $0x6d8] sm:$0xff]
    %v576 = vld [vmem:[%s6 + $0x6e0] sm:$0xff]
    %v577 = vld [vmem:[%s6 + $0x6e8] sm:$0xff]
    %v578 = vld [vmem:[%s6 + $0x6f0] sm:$0xff]
    %v579 = vld [vmem:[%s6 + $0x6f8] sm:$0xff]
    %v580 = vld [vmem:[%s6 + $0x700] sm:$0xff]
    %v581 = vld [vmem:[%s6 + $0x708] sm:$0xff]
    %v582 = vld [vmem:[%s6 + $0x710] sm:$0xff]
    %v583 = vld [vmem:[%s6 + $0x718] sm:$0xff]
    %v584 = vld [vmem:[%s6 + $0x720] sm:$0xff]
    %v585 = vld [vmem:[%s6 + $0x728] sm:$0xff]
    %v586 = vld [vmem:[%s6 + $0x730] sm:$0xff]
    %v587 = vld [vmem:[%s6 + $0x738] sm:$0xff]
    %v588 = vld [vmem:[%s6 + $0x740] sm:$0xff]
    %v589 = vld [vmem:[%s6 + $0x748] sm:$0xff]
    %v590 = vld [vmem:[%s6 + $0x750] sm:$0xff]
    %v591 = vld [vmem:[%s6 + $0x758] sm:$0xff]
    %v592 = vld [vmem:[%s6 + $0x760] sm:$0xff]
    %v593 = vld [vmem:[%s6 + $0x768] sm:$0xff]
    %v594 = vld [vmem:[%s6 + $0x770] sm:$0xff]
    %v595 = vld [vmem:[%s6 + $0x778] sm:$0xff]
    %v596 = vld [vmem:[%s6 + $0x780] sm:$0xff]
    %v597 = vld [vmem:[%s6 + $0x788] sm:$0xff]
    %v598 = vld [vmem:[%s6 + $0x790] sm:$0xff]
    %v599 = vld [vmem:[%s6 + $0x798] sm:$0xff]
    %v600 = vld [vmem:[%s6 + $0x7a0] sm:$0xff]
    %v601 = vld [vmem:[%s6 + $0x7a8] sm:$0xff]
    %v602 = vld [vmem:[%s6 + $0x7b0] sm:$0xff]
    %v603 = vld [vmem:[%s6 + $0x7b8] sm:$0xff]
    %v604 = vld [vmem:[%s6 + $0x7c0] sm:$0xff]
    %v605 = vld [vmem:[%s6 + $0x7c8] sm:$0xff]
    %v606 = vld [vmem:[%s6 + $0x7d0] sm:$0xff]
    %v607 = vld [vmem:[%s6 + $0x7d8] sm:$0xff]
    %v608 = vld [vmem:[%s6 + $0x7e0] sm:$0xff]
    %v609 = vld [vmem:[%s6 + $0x7e8] sm:$0xff]
    %v610 = vld [vmem:[%s6 + $0x7f0] sm:$0xff]
    %v611 = vld [vmem:[%s6 + $0x7f8] sm:$0xff]
    %v612 = vld [vmem:[%s6 + $0x800] sm:$0xff]
    %v613 = vld [vmem:[%s6 + $0x808] sm:$0xff]
    %v614 = vld [vmem:[%s6 + $0x810] sm:$0xff]
    %v615 = vld [vmem:[%s6 + $0x818] sm:$0xff]
    %v616 = vld [vmem:[%s6 + $0x820] sm:$0xff]
    %v617 = vld [vmem:[%s6 + $0x828] sm:$0xff]
    %v618 = vld [vmem:[%s6 + $0x830] sm:$0xff]
    %v619 = vld [vmem:[%s6 + $0x838] sm:$0xff]
    %v620 = vld [vmem:[%s6 + $0x840] sm:$0xff]
    %v621 = vld [vmem:[%s6 + $0x848] sm:$0xff]
    %v622 = vld [vmem:[%s6 + $0x850] sm:$0xff]
    %v623 = vld [vmem:[%s6 + $0x858] sm:$0xff]
    %v624 = vld [vmem:[%s6 + $0x860] sm:$0xff]
    %v625 = vld [vmem:[%s6 + $0x868] sm:$0xff]
    %v626 = vld [vmem:[%s6 + $0x870] sm:$0xff]
    %v627 = vld [vmem:[%s6 + $0x878] sm:$0xff]
    %v628 = vld [vmem:[%s6 + $0x880] sm:$0xff]
    %v629 = vld [vmem:[%s6 + $0x888] sm:$0xff]
    %v630 = vld [vmem:[%s6 + $0x890] sm:$0xff]
    %v631 = vld [vmem:[%s6 + $0x898] sm:$0xff]
    %v632 = vld [vmem:[%s6 + $0x8a0] sm:$0xff]
    %v633 = vld [vmem:[%s6 + $0x8a8] sm:$0xff]
    %v634 = vld [vmem:[%s6 + $0x8b0] sm:$0xff]
    %v635 = vld [vmem:[%s6 + $0x8b8] sm:$0xff]
    %v636 = vld [vmem:[%s6 + $0x8c0] sm:$0xff]
    %v637 = vld [vmem:[%s6 + $0x8c8] sm:$0xff]
    %v638 = vld [vmem:[%s6 + $0x8d0] sm:$0xff]
    %v639 = vld [vmem:[%s6 + $0x8d8] sm:$0xff]
    %v640 = vld [vmem:[%s6 + $0x8e0] sm:$0xff]
    %v641 = vld [vmem:[%s6 + $0x8e8] sm:$0xff]
    %v642 = vld [vmem:[%s6 + $0x8f0] sm:$0xff]
    %v643 = vld [vmem:[%s6 + $0x8f8] sm:$0xff]
    %v644 = vld [vmem:[%s7] sm:$0x3]
    %v645 = vld [vmem:[#allocation5] sm:$0xff]
    %v646 = vld [vmem:[#allocation5 + $0x8] sm:$0xff]
    %v647 = vld [vmem:[#allocation5 + $0x10] sm:$0xff]
    %v648 = vld [vmem:[#allocation5 + $0x18] sm:$0xff]
    %v649 = vld [vmem:[#allocation5 + $0x20] sm:$0xff]
    %v650 = vld [vmem:[#allocation5 + $0x28] sm:$0xff]
    %v651 = vld [vmem:[#allocation5 + $0x30] sm:$0xff]
    %v652 = vld [vmem:[#allocation5 + $0x38] sm:$0xff]
    %v653 = vld [vmem:[#allocation5 + $0x40] sm:$0xff]
    %v654 = vld [vmem:[#allocation5 + $0x48] sm:$0xff]
    %v655 = vld [vmem:[#allocation5 + $0x50] sm:$0xff]
    %v656 = vld [vmem:[#allocation5 + $0x58] sm:$0xff]
    %v657 = vld [vmem:[#allocation5 + $0x60] sm:$0xff]
    %v658 = vld [vmem:[#allocation5 + $0x68] sm:$0xff]
    %v659 = vld [vmem:[#allocation5 + $0x70] sm:$0xff]
    %v660 = vld [vmem:[#allocation5 + $0x78] sm:$0xff]
    %v661 = vld [vmem:[#allocation5 + $0x80] sm:$0xff]
    %v662 = vld [vmem:[#allocation5 + $0x88] sm:$0xff]
    %v663 = vld [vmem:[#allocation5 + $0x90] sm:$0xff]
    %v664 = vld [vmem:[#allocation5 + $0x98] sm:$0xff]
    %v665 = vld [vmem:[#allocation5 + $0xa0] sm:$0xff]
    %v666 = vld [vmem:[#allocation5 + $0xa8] sm:$0xff]
    %v667 = vld [vmem:[#allocation5 + $0xb0] sm:$0xff]
    %v668 = vld [vmem:[#allocation5 + $0xb8] sm:$0xff]
    %v669 = vld [vmem:[#allocation5 + $0xc0] sm:$0xff]
    %v670 = vld [vmem:[#allocation5 + $0xc8] sm:$0xff]
    %v671 = vld [vmem:[#allocation5 + $0xd0] sm:$0xff]
    %v672 = vld [vmem:[#allocation5 + $0xd8] sm:$0xff]
    %v673 = vld [vmem:[#allocation5 + $0xe0] sm:$0xff]
    %v674 = vld [vmem:[#allocation5 + $0xe8] sm:$0xff]
    %v675 = vld [vmem:[#allocation5 + $0xf0] sm:$0xff]
    %v676 = vld [vmem:[#allocation5 + $0xf8] sm:$0xff]
    %v677 = vld [vmem:[#allocation5 + $0x100] sm:$0xff]
    %v678 = vld [vmem:[#allocation5 + $0x108] sm:$0xff]
    %v679 = vld [vmem:[#allocation5 + $0x110] sm:$0xff]
    %v680 = vld [vmem:[#allocation5 + $0x118] sm:$0xff]
    %v681 = vld [vmem:[#allocation5 + $0x120] sm:$0xff]
    %v682 = vld [vmem:[#allocation5 + $0x128] sm:$0xff]
    %v683 = vld [vmem:[#allocation5 + $0x130] sm:$0xff]
    %v684 = vld [vmem:[#allocation5 + $0x138] sm:$0xff]
    %v685 = vld [vmem:[#allocation5 + $0x140] sm:$0xff]
    %v686 = vld [vmem:[#allocation5 + $0x148] sm:$0xff]
    %v687 = vld [vmem:[#allocation5 + $0x150] sm:$0xff]
    %v688 = vld [vmem:[#allocation5 + $0x158] sm:$0xff]
    %v689 = vld [vmem:[#allocation5 + $0x160] sm:$0xff]
    %v690 = vld [vmem:[#allocation5 + $0x168] sm:$0xff]
    %v691 = vld [vmem:[#allocation5 + $0x170] sm:$0xff]
    %v692 = vld [vmem:[#allocation5 + $0x178] sm:$0xff]
    %v693 = vld [vmem:[#allocation5 + $0x180] sm:$0xff]
    %v694 = vld [vmem:[#allocation5 + $0x188] sm:$0xff]
    %v695 = vld [vmem:[#allocation5 + $0x190] sm:$0xff]
    %v696 = vld [vmem:[#allocation5 + $0x198] sm:$0xff]
    %v697 = vld [vmem:[#allocation5 + $0x1a0] sm:$0xff]
    %v698 = vld [vmem:[#allocation5 + $0x1a8] sm:$0xff]
    %v699 = vld [vmem:[#allocation5 + $0x1b0] sm:$0xff]
    %v700 = vld [vmem:[#allocation5 + $0x1b8] sm:$0xff]
    %v701 = vld [vmem:[#allocation5 + $0x1c0] sm:$0xff]
    %v702 = vld [vmem:[#allocation5 + $0x1c8] sm:$0xff]
    %v703 = vld [vmem:[#allocation5 + $0x1d0] sm:$0xff]
    %v704 = vld [vmem:[#allocation5 + $0x1d8] sm:$0xff]
    %v705 = vld [vmem:[#allocation5 + $0x1e0] sm:$0xff]
    %v706 = vld [vmem:[#allocation5 + $0x1e8] sm:$0xff]
    %v707 = vld [vmem:[#allocation5 + $0x1f0] sm:$0xff]
    %v708 = vld [vmem:[#allocation5 + $0x1f8] sm:$0xff]
    %v709 = vld [vmem:[#allocation5 + $0x200] sm:$0xff]
    %v710 = vld [vmem:[#allocation5 + $0x208] sm:$0xff]
    %v711 = vld [vmem:[#allocation5 + $0x210] sm:$0xff]
    %v712 = vld [vmem:[#allocation5 + $0x218] sm:$0xff]
    %v713 = vld [vmem:[#allocation5 + $0x220] sm:$0xff]
    %v714 = vld [vmem:[#allocation5 + $0x228] sm:$0xff]
    %v715 = vld [vmem:[#allocation5 + $0x230] sm:$0xff]
    %v716 = vld [vmem:[#allocation5 + $0x238] sm:$0xff]
    %v717 = vld [vmem:[#allocation5 + $0x240] sm:$0xff]
    %v718 = vld [vmem:[#allocation5 + $0x248] sm:$0xff]
    %v719 = vld [vmem:[#allocation5 + $0x250] sm:$0xff]
    %v720 = vld [vmem:[#allocation5 + $0x258] sm:$0xff]
    %v721 = vld [vmem:[#allocation5 + $0x260] sm:$0xff]
    %v722 = vld [vmem:[#allocation5 + $0x268] sm:$0xff]
    %v723 = vld [vmem:[#allocation5 + $0x270] sm:$0xff]
    %v724 = vld [vmem:[#allocation5 + $0x278] sm:$0xff]
    %v725 = vld [vmem:[#allocation5 + $0x280] sm:$0xff]
    %v726 = vld [vmem:[#allocation5 + $0x288] sm:$0xff]
    %v727 = vld [vmem:[#allocation5 + $0x290] sm:$0xff]
    %v728 = vld [vmem:[#allocation5 + $0x298] sm:$0xff]
    %v729 = vld [vmem:[#allocation5 + $0x2a0] sm:$0xff]
    %v730 = vld [vmem:[#allocation5 + $0x2a8] sm:$0xff]
    %v731 = vld [vmem:[#allocation5 + $0x2b0] sm:$0xff]
    %v732 = vld [vmem:[#allocation5 + $0x2b8] sm:$0xff]
    %v733 = vld [vmem:[#allocation5 + $0x2c0] sm:$0xff]
    %v734 = vld [vmem:[#allocation5 + $0x2c8] sm:$0xff]
    %v735 = vld [vmem:[#allocation5 + $0x2d0] sm:$0xff]
    %v736 = vld [vmem:[#allocation5 + $0x2d8] sm:$0xff]
    %v737 = vld [vmem:[#allocation5 + $0x2e0] sm:$0xff]
    %v738 = vld [vmem:[#allocation5 + $0x2e8] sm:$0xff]
    %v739 = vld [vmem:[#allocation5 + $0x2f0] sm:$0xff]
    %v740 = vld [vmem:[#allocation5 + $0x2f8] sm:$0xff]
    %v741 = vld [vmem:[#allocation5 + $0x300] sm:$0xff]
    %v742 = vld [vmem:[#allocation5 + $0x308] sm:$0xff]
    %v743 = vld [vmem:[#allocation5 + $0x310] sm:$0xff]
    %v744 = vld [vmem:[#allocation5 + $0x318] sm:$0xff]
    %v745 = vld [vmem:[#allocation5 + $0x320] sm:$0xff]
    %v746 = vld [vmem:[#allocation5 + $0x328] sm:$0xff]
    %v747 = vld [vmem:[#allocation5 + $0x330] sm:$0xff]
    %v748 = vld [vmem:[#allocation5 + $0x338] sm:$0xff]
    %v749 = vld [vmem:[#allocation5 + $0x340] sm:$0xff]
    %v750 = vld [vmem:[#allocation5 + $0x348] sm:$0xff]
    %v751 = vld [vmem:[#allocation5 + $0x350] sm:$0xff]
    %v752 = vld [vmem:[#allocation5 + $0x358] sm:$0xff]
    %v753 = vld [vmem:[#allocation5 + $0x360] sm:$0xff]
    %v754 = vld [vmem:[#allocation5 + $0x368] sm:$0xff]
    %v755 = vld [vmem:[#allocation5 + $0x370] sm:$0xff]
    %v756 = vld [vmem:[#allocation5 + $0x378] sm:$0xff]
    %v757 = vld [vmem:[#allocation5 + $0x380] sm:$0xff]
    %v758 = vld [vmem:[#allocation5 + $0x388] sm:$0xff]
    %v759 = vld [vmem:[#allocation5 + $0x390] sm:$0xff]
    %v760 = vld [vmem:[#allocation5 + $0x398] sm:$0xff]
    %v761 = vld [vmem:[#allocation5 + $0x3a0] sm:$0xff]
    %v762 = vld [vmem:[#allocation5 + $0x3a8] sm:$0xff]
    %v763 = vld [vmem:[#allocation5 + $0x3b0] sm:$0xff]
    %v764 = vld [vmem:[#allocation5 + $0x3b8] sm:$0xff]
    %v765 = vld [vmem:[#allocation5 + $0x3c0] sm:$0xff]
    %v766 = vld [vmem:[#allocation5 + $0x3c8] sm:$0xff]
    %v767 = vld [vmem:[#allocation5 + $0x3d0] sm:$0xff]
    %v768 = vld [vmem:[#allocation5 + $0x3d8] sm:$0xff]
    %v769 = vld [vmem:[#allocation5 + $0x3e0] sm:$0xff]
    %v770 = vld [vmem:[#allocation5 + $0x3e8] sm:$0xff]
    %v771 = vld [vmem:[#allocation5 + $0x3f0] sm:$0xff]
    %v772 = vld [vmem:[#allocation5 + $0x3f8] sm:$0xff]
    %v773 = vld [vmem:[#allocation5 + $0x400] sm:$0xff]
    %v774 = vld [vmem:[#allocation5 + $0x408] sm:$0xff]
    %v775 = vld [vmem:[#allocation5 + $0x410] sm:$0xff]
    %v776 = vld [vmem:[#allocation5 + $0x418] sm:$0xff]
    %v777 = vld [vmem:[#allocation5 + $0x420] sm:$0xff]
    %v778 = vld [vmem:[#allocation5 + $0x428] sm:$0xff]
    %v779 = vld [vmem:[#allocation5 + $0x430] sm:$0xff]
    %v780 = vld [vmem:[#allocation5 + $0x438] sm:$0xff]
    %v781 = vld [vmem:[#allocation5 + $0x440] sm:$0xff]
    %v782 = vld [vmem:[#allocation5 + $0x448] sm:$0xff]
    %v783 = vld [vmem:[#allocation5 + $0x450] sm:$0xff]
    %v784 = vld [vmem:[#allocation5 + $0x458] sm:$0xff]
    %v785 = vld [vmem:[#allocation5 + $0x460] sm:$0xff]
    %v786 = vld [vmem:[#allocation5 + $0x468] sm:$0xff]
    %v787 = vld [vmem:[#allocation5 + $0x470] sm:$0xff]
    %v788 = vld [vmem:[#allocation5 + $0x478] sm:$0xff]
    %v789 = vld [vmem:[#allocation5 + $0x480] sm:$0xff]
    %v790 = vld [vmem:[#allocation5 + $0x488] sm:$0xff]
    %v791 = vld [vmem:[#allocation5 + $0x490] sm:$0xff]
    %v792 = vld [vmem:[#allocation5 + $0x498] sm:$0xff]
    %v793 = vld [vmem:[#allocation5 + $0x4a0] sm:$0xff]
    %v794 = vld [vmem:[#allocation5 + $0x4a8] sm:$0xff]
    %v795 = vld [vmem:[#allocation5 + $0x4b0] sm:$0xff]
    %v796 = vld [vmem:[#allocation5 + $0x4b8] sm:$0xff]
    %v797 = vld [vmem:[#allocation5 + $0x4c0] sm:$0xff]
    %v798 = vld [vmem:[#allocation5 + $0x4c8] sm:$0xff]
    %v799 = vld [vmem:[#allocation5 + $0x4d0] sm:$0xff]
    %v800 = vld [vmem:[#allocation5 + $0x4d8] sm:$0xff]
    %v801 = vld [vmem:[#allocation5 + $0x4e0] sm:$0xff]
    %v802 = vld [vmem:[#allocation5 + $0x4e8] sm:$0xf]
    %v803 = vld [vmem:[%s9] sm:$0x1]
    %v804 = vld [vmem:[%s10] sm:$0xff]
    %v805 = vld [vmem:[%s10 + $0x8] sm:$0xff]
    %v806 = vld [vmem:[%s10 + $0x10] sm:$0xff]
    %v807 = vld [vmem:[%s10 + $0x18] sm:$0xff]
    %v808 = vld [vmem:[%s10 + $0x20] sm:$0xff]
    %v809 = vld [vmem:[%s10 + $0x28] sm:$0xff]
    %v810 = vld [vmem:[%s10 + $0x30] sm:$0xff]
    %v811 = vld [vmem:[%s10 + $0x38] sm:$0xff]
    %v812 = vld [vmem:[%s10 + $0x40] sm:$0xff]
    %v813 = vld [vmem:[%s10 + $0x48] sm:$0xff]
    %v814 = vld [vmem:[%s11] sm:$0x1]
    %v815 = vld [vmem:[%s12] sm:$0x1]
    %v816 = vld [vmem:[#allocation2] sm:$0x1]
    %v817 = vld [vmem:[%s0] sm:$0xff]
    %v818 = vld [vmem:[%s0 + $0x8] sm:$0xff]
    %v819 = vld [vmem:[%s0 + $0x10] sm:$0xff]
    %v820 = vld [vmem:[%s0 + $0x18] sm:$0xff]
    %vm825 = vcmask 1040384
    %v826 = vrot.slane %v817, 7
    %v827 = vrot.slane %v818, 7
    %v828 = vsel %vm825, %v826, %v827
    %v829 = vrot.slane %v819, 7
    %v830 = vrot.slane %v820, 7
    %v831 = vsel %vm825, %v829, %v830
    %v836 = vsel %vm825, 0.0, %v826
    %v837 = vsel %vm825, 0.0, %v829
    %vm838 = vcmask 1046528
    %v839 = vrot.slane %v817, 1
    %v840 = vrot.slane %v818, 1
    %v841 = vsel %vm838, %v839, %v840
    %v842 = vrot.slane %v819, 1
    %v843 = vrot.slane %v820, 1
    %v844 = vsel %vm838, %v842, %v843
    %v849 = vsel %vm838, %v840, 0.0
    %v850 = vsel %vm838, %v843, 0.0
    %v851 = vmul.f32 %v817, 2.0
    %v852 = vmul.f32 %v818, 2.0
    %v853 = vmul.f32 %v819, 2.0
    %v854 = vmul.f32 %v820, 2.0
    %v855 = vadd.f32 %v836, %v851
    %v856 = vadd.f32 %v828, %v852
    %v857 = vadd.f32 %v837, %v853
    %v858 = vadd.f32 %v831, %v854
    %v859 = vadd.f32 %v855, %v841
    %v860 = vadd.f32 %v856, %v849
    %v861 = vadd.f32 %v857, %v844
    %v862 = vadd.f32 %v858, %v850
    %v863 = vsub.f32 %v841, %v836
    %v864 = vsub.f32 %v849, %v828
    %v865 = vsub.f32 %v844, %v837
    %v866 = vsub.f32 %v850, %v831
    %871 = vrot.lane.b32.xlu0 %v859, 120
    %v872 = vpop.permute.xlu0 %871
    %873 = vrot.lane.b32.xlu0 %v860, 120
    %v874 = vpop.permute.xlu0 %873
    %875 = vrot.lane.b32.xlu0 %v861, 120
    %v876 = vpop.permute.xlu0 %875
    %877 = vrot.lane.b32.xlu0 %v862, 120
    %v878 = vpop.permute.xlu0 %877
    %vm883 = vcmask 982016
    %v884 = vsel %vm883, %v872, 0.0
    %v885 = vsel %vm883, %v874, 0.0
    %v886 = vsel %vm883, %v876, 0.0
    %v887 = vsel %vm883, %v878, 0.0
    %888 = vrot.lane.b32.xlu0 %v859, 8
    %v889 = vpop.permute.xlu0 %888
    %890 = vrot.lane.b32.xlu0 %v860, 8
    %v891 = vpop.permute.xlu0 %890
    %892 = vrot.lane.b32.xlu0 %v861, 8
    %v893 = vpop.permute.xlu0 %892
    %894 = vrot.lane.b32.xlu0 %v862, 8
    %v895 = vpop.permute.xlu0 %894
    %vm900 = vcmask 64512
    %v901 = vsel %vm900, 0.0, %v889
    %v902 = vsel %vm900, 0.0, %v891
    %v903 = vsel %vm900, 0.0, %v893
    %v904 = vsel %vm900, 0.0, %v895
    %v905 = vsub.f32 %v884, %v901
    %v906 = vsub.f32 %v885, %v902
    %v907 = vsub.f32 %v886, %v903
    %v908 = vsub.f32 %v887, %v904
    %v909 = vmul.f32 %v905, 0.125
    %v910 = vmul.f32 %v906, 0.125
    %v911 = vmul.f32 %v907, 0.125
    %v912 = vmul.f32 %v908, 0.125
    %917 = vrot.lane.b32.xlu0 %v863, 8
    %v918 = vpop.permute.xlu0 %917
    %919 = vrot.lane.b32.xlu0 %v864, 8
    %v920 = vpop.permute.xlu0 %919
    %921 = vrot.lane.b32.xlu0 %v865, 8
    %v922 = vpop.permute.xlu0 %921
    %923 = vrot.lane.b32.xlu0 %v866, 8
    %v924 = vpop.permute.xlu0 %923
    %v929 = vsel %vm900, 0.0, %v918
    %v930 = vsel %vm900, 0.0, %v920
    %v931 = vsel %vm900, 0.0, %v922
    %v932 = vsel %vm900, 0.0, %v924
    %v933 = vmul.f32 %v863, 2.0
    %v934 = vmul.f32 %v864, 2.0
    %v935 = vmul.f32 %v865, 2.0
    %v936 = vmul.f32 %v866, 2.0
    %v937 = vadd.f32 %v929, %v933
    %v938 = vadd.f32 %v930, %v934
    %v939 = vadd.f32 %v931, %v935
    %v940 = vadd.f32 %v932, %v936
    %941 = vrot.lane.b32.xlu0 %v863, 120
    %v942 = vpop.permute.xlu0 %941
    %943 = vrot.lane.b32.xlu0 %v864, 120
    %v944 = vpop.permute.xlu0 %943
    %945 = vrot.lane.b32.xlu0 %v865, 120
    %v946 = vpop.permute.xlu0 %945
    %947 = vrot.lane.b32.xlu0 %v866, 120
    %v948 = vpop.permute.xlu0 %947
    %v953 = vsel %vm883, %v942, 0.0
    %v954 = vsel %vm883, %v944, 0.0
    %v955 = vsel %vm883, %v946, 0.0
    %v956 = vsel %vm883, %v948, 0.0
    %v957 = vadd.f32 %v937, %v953
    %v958 = vadd.f32 %v938, %v954
    %v959 = vadd.f32 %v939, %v955
    %v960 = vadd.f32 %v940, %v956
    %v961 = vmul.f32 %v957, 0.125
    %v962 = vmul.f32 %v958, 0.125
    %v963 = vmul.f32 %v959, 0.125
    %v964 = vmul.f32 %v960, 0.125
    %v965 = vmax.f32 %v836, %v817
    %v966 = vmax.f32 %v828, %v818
    %v967 = vmax.f32 %v837, %v819
    %v968 = vmax.f32 %v831, %v820
    %v969 = vmax.f32 %v965, %v841
    %v970 = vmax.f32 %v966, %v849
    %v971 = vmax.f32 %v967, %v844
    %v972 = vmax.f32 %v968, %v850
    %977 = vrot.lane.b32.xlu0 %v969, 120
    %v978 = vpop.permute.xlu0 %977
    %979 = vrot.lane.b32.xlu0 %v970, 120
    %v980 = vpop.permute.xlu0 %979
    %981 = vrot.lane.b32.xlu0 %v971, 120
    %v982 = vpop.permute.xlu0 %981
    %983 = vrot.lane.b32.xlu0 %v972, 120
    %v984 = vpop.permute.xlu0 %983
    %v989 = vsel %vm883, %v978, 0.0
    %v990 = vsel %vm883, %v980, 0.0
    %v991 = vsel %vm883, %v982, 0.0
    %v992 = vsel %vm883, %v984, 0.0
    %v993 = vmax.f32 %v989, %v969
    %v994 = vmax.f32 %v990, %v970
    %v995 = vmax.f32 %v991, %v971
    %v996 = vmax.f32 %v992, %v972
    %997 = vrot.lane.b32.xlu0 %v969, 8
    %v998 = vpop.permute.xlu0 %997
    %999 = vrot.lane.b32.xlu0 %v970, 8
    %v1000 = vpop.permute.xlu0 %999
    %1001 = vrot.lane.b32.xlu0 %v971, 8
    %v1002 = vpop.permute.xlu0 %1001
    %1003 = vrot.lane.b32.xlu0 %v972, 8
    %v1004 = vpop.permute.xlu0 %1003
    %v1009 = vsel %vm900, 0.0, %v998
    %v1010 = vsel %vm900, 0.0, %v1000
    %v1011 = vsel %vm900, 0.0, %v1002
    %v1012 = vsel %vm900, 0.0, %v1004
    %v1013 = vmax.f32 %v993, %v1009
    %v1014 = vmax.f32 %v994, %v1010
    %v1015 = vmax.f32 %v995, %v1011
    %v1016 = vmax.f32 %v996, %v1012
    %1017 = vmatpush.msra.mxu0 %v98
    %1018 = vmatpush.msra.mxu0 %v97
    %1019 = vmatpush.msra.mxu0 %v96
    %1020 = vmatpush.msra.mxu0 %v95
    %1021 = vmatpush.msra.mxu0 %v94
    %1022 = vmatpush.msra.mxu0 %v93
    %1023 = vmatpush.msra.mxu0 %v92
    %1024 = vmatpush.msra.mxu0 %v91
    %1025 = vmatpush.msra.mxu0 %v90
    %1026 = vmatpush.msra.mxu0 %v89
    %1027 = vmatpush.msra.mxu0 %v88
    %1028 = vmatpush.msra.mxu0 %v87
    %1029 = vmatpush.msra.mxu0 %v86
    %1030 = vmatpush.msra.mxu0 %v85
    %1031 = vmatpush.msra.mxu0 %v84
    %1032 = vmatpush.msra.mxu0 %v83
    %1033 = vmatmul.f32.gmra.mxu0 %v1013
    %v1034 = vpop.f32.mrf.mxu0
    %v1035 = vadd.f32 0.0, %v1034
    %1036 = vmatmul.f32.gmra.mxu0 %v1014
    %v1037 = vpop.f32.mrf.mxu0
    %v1038 = vadd.f32 0.0, %v1037
    %1039 = vmatmul.f32.gmra.mxu0 %v1015
    %v1040 = vpop.f32.mrf.mxu0
    %v1041 = vadd.f32 0.0, %v1040
    %1042 = vmatmul.f32.gmra.mxu0 %v1016
    %v1043 = vpop.f32.mrf.mxu0
    %v1044 = vadd.f32 0.0, %v1043
    %1045 = vdwg.mxu0
    %v1047 = vperm.slane %v291, 0
    %v1048 = vperm.slane %v291, 1
    %v1049 = vperm.slane %v291, 2
    %v1050 = vperm.slane %v291, 3
    %1055 = vmatpush.msra.mxu0 %v159
    %1056 = vmatpush.msra.mxu0 %v155
    %1057 = vmatpush.msra.mxu0 %v151
    %1058 = vmatpush.msra.mxu0 %v147
    %1059 = vmatpush.msra.mxu0 %v143
    %1060 = vmatpush.msra.mxu0 %v139
    %1061 = vmatpush.msra.mxu0 %v135
    %1062 = vmatpush.msra.mxu0 %v131
    %1063 = vmatpush.msra.mxu0 %v127
    %1064 = vmatpush.msra.mxu0 %v123
    %1065 = vmatpush.msra.mxu0 %v119
    %1066 = vmatpush.msra.mxu0 %v115
    %1067 = vmatpush.msra.mxu0 %v111
    %1068 = vmatpush.msra.mxu0 %v107
    %1069 = vmatpush.msra.mxu0 %v103
    %1070 = vmatpush.msra.mxu0 %v99
    %1071 = vmatmul.f32.gmra.mxu0 %v817
    %v1072 = vpop.f32.mrf.mxu0
    %v1073 = vadd.f32 %v1047, %v1072
    %1074 = vmatmul.f32.gmra.mxu0 %v818
    %v1075 = vpop.f32.mrf.mxu0
    %v1076 = vadd.f32 %v1047, %v1075
    %1077 = vmatmul.f32.gmra.mxu0 %v819
    %v1078 = vpop.f32.mrf.mxu0
    %v1079 = vadd.f32 %v1047, %v1078
    %1080 = vmatmul.f32.gmra.mxu0 %v820
    %v1081 = vpop.f32.mrf.mxu0
    %v1082 = vadd.f32 %v1047, %v1081
    %1083 = vdwg.mxu0
    %1084 = vmatpush.msra.mxu0 %v223
    %1085 = vmatpush.msra.mxu0 %v219
    %1086 = vmatpush.msra.mxu0 %v215
    %1087 = vmatpush.msra.mxu0 %v211
    %1088 = vmatpush.msra.mxu0 %v207
    %1089 = vmatpush.msra.mxu0 %v203
    %1090 = vmatpush.msra.mxu0 %v199
    %1091 = vmatpush.msra.mxu0 %v195
    %1092 = vmatpush.msra.mxu0 %v191
    %1093 = vmatpush.msra.mxu0 %v187
    %1094 = vmatpush.msra.mxu0 %v183
    %1095 = vmatpush.msra.mxu0 %v179
    %1096 = vmatpush.msra.mxu0 %v175
    %1097 = vmatpush.msra.mxu0 %v171
    %1098 = vmatpush.msra.mxu0 %v167
    %1099 = vmatpush.msra.mxu0 %v163
    %1100 = vmatmul.f32.gmra.mxu0 %v909
    %v1101 = vpop.f32.mrf.mxu0
    %v1102 = vadd.f32 %v1073, %v1101
    %1103 = vmatmul.f32.gmra.mxu0 %v910
    %v1104 = vpop.f32.mrf.mxu0
    %v1105 = vadd.f32 %v1076, %v1104
    %1106 = vmatmul.f32.gmra.mxu0 %v911
    %v1107 = vpop.f32.mrf.mxu0
    %v1108 = vadd.f32 %v1079, %v1107
    %1109 = vmatmul.f32.gmra.mxu0 %v912
    %v1110 = vpop.f32.mrf.mxu0
    %v1111 = vadd.f32 %v1082, %v1110
    %1112 = vdwg.mxu0
    %1113 = vmatpush.msra.mxu0 %v287
    %1114 = vmatpush.msra.mxu0 %v283
    %1115 = vmatpush.msra.mxu0 %v279
    %1116 = vmatpush.msra.mxu0 %v275
    %1117 = vmatpush.msra.mxu0 %v271
    %1118 = vmatpush.msra.mxu0 %v267
    %1119 = vmatpush.msra.mxu0 %v263
    %1120 = vmatpush.msra.mxu0 %v259
    %1121 = vmatpush.msra.mxu0 %v255
    %1122 = vmatpush.msra.mxu0 %v251
    %1123 = vmatpush.msra.mxu0 %v247
    %1124 = vmatpush.msra.mxu0 %v243
    %1125 = vmatpush.msra.mxu0 %v239
    %1126 = vmatpush.msra.mxu0 %v235
    %1127 = vmatpush.msra.mxu0 %v231
    %1128 = vmatpush.msra.mxu0 %v227
    %1129 = vmatmul.f32.gmra.mxu0 %v961
    %v1130 = vpop.f32.mrf.mxu0
    %v1131 = vadd.f32 %v1102, %v1130
    %1132 = vmatmul.f32.gmra.mxu0 %v962
    %v1133 = vpop.f32.mrf.mxu0
    %v1134 = vadd.f32 %v1105, %v1133
    %1135 = vmatmul.f32.gmra.mxu0 %v963
    %v1136 = vpop.f32.mrf.mxu0
    %v1137 = vadd.f32 %v1108, %v1136
    %1138 = vmatmul.f32.gmra.mxu0 %v964
    %v1139 = vpop.f32.mrf.mxu0
    %v1140 = vadd.f32 %v1111, %v1139
    %1141 = vdwg.mxu0
    %1142 = vmatpush.msra.mxu0 %v160
    %1143 = vmatpush.msra.mxu0 %v156
    %1144 = vmatpush.msra.mxu0 %v152
    %1145 = vmatpush.msra.mxu0 %v148
    %1146 = vmatpush.msra.mxu0 %v144
    %1147 = vmatpush.msra.mxu0 %v140
    %1148 = vmatpush.msra.mxu0 %v136
    %1149 = vmatpush.msra.mxu0 %v132
    %1150 = vmatpush.msra.mxu0 %v128
    %1151 = vmatpush.msra.mxu0 %v124
    %1152 = vmatpush.msra.mxu0 %v120
    %1153 = vmatpush.msra.mxu0 %v116
    %1154 = vmatpush.msra.mxu0 %v112
    %1155 = vmatpush.msra.mxu0 %v108
    %1156 = vmatpush.msra.mxu0 %v104
    %1157 = vmatpush.msra.mxu0 %v100
    %1158 = vmatmul.f32.gmra.mxu0 %v817
    %v1159 = vpop.f32.mrf.mxu0
    %v1160 = vadd.f32 %v1048, %v1159
    %1161 = vmatmul.f32.gmra.mxu0 %v818
    %v1162 = vpop.f32.mrf.mxu0
    %v1163 = vadd.f32 %v1048, %v1162
    %1164 = vmatmul.f32.gmra.mxu0 %v819
    %v1165 = vpop.f32.mrf.mxu0
    %v1166 = vadd.f32 %v1048, %v1165
    %1167 = vmatmul.f32.gmra.mxu0 %v820
    %v1168 = vpop.f32.mrf.mxu0
    %v1169 = vadd.f32 %v1048, %v1168
    %1170 = vdwg.mxu0
    %1171 = vmatpush.msra.mxu0 %v224
    %1172 = vmatpush.msra.mxu0 %v220
    %1173 = vmatpush.msra.mxu0 %v216
    %1174 = vmatpush.msra.mxu0 %v212
    %1175 = vmatpush.msra.mxu0 %v208
    %1176 = vmatpush.msra.mxu0 %v204
    %1177 = vmatpush.msra.mxu0 %v200
    %1178 = vmatpush.msra.mxu0 %v196
    %1179 = vmatpush.msra.mxu0 %v192
    %1180 = vmatpush.msra.mxu0 %v188
    %1181 = vmatpush.msra.mxu0 %v184
    %1182 = vmatpush.msra.mxu0 %v180
    %1183 = vmatpush.msra.mxu0 %v176
    %1184 = vmatpush.msra.mxu0 %v172
    %1185 = vmatpush.msra.mxu0 %v168
    %1186 = vmatpush.msra.mxu0 %v164
    %1187 = vmatmul.f32.gmra.mxu0 %v909
    %v1188 = vpop.f32.mrf.mxu0
    %v1189 = vadd.f32 %v1160, %v1188
    %1190 = vmatmul.f32.gmra.mxu0 %v910
    %v1191 = vpop.f32.mrf.mxu0
    %v1192 = vadd.f32 %v1163, %v1191
    %1193 = vmatmul.f32.gmra.mxu0 %v911
    %v1194 = vpop.f32.mrf.mxu0
    %v1195 = vadd.f32 %v1166, %v1194
    %1196 = vmatmul.f32.gmra.mxu0 %v912
    %v1197 = vpop.f32.mrf.mxu0
    %v1198 = vadd.f32 %v1169, %v1197
    %1199 = vdwg.mxu0
    %1200 = vmatpush.msra.mxu0 %v288
    %1201 = vmatpush.msra.mxu0 %v284
    %1202 = vmatpush.msra.mxu0 %v280
    %1203 = vmatpush.msra.mxu0 %v276
    %1204 = vmatpush.msra.mxu0 %v272
    %1205 = vmatpush.msra.mxu0 %v268
    %1206 = vmatpush.msra.mxu0 %v264
    %1207 = vmatpush.msra.mxu0 %v260
    %1208 = vmatpush.msra.mxu0 %v256
    %1209 = vmatpush.msra.mxu0 %v252
    %1210 = vmatpush.msra.mxu0 %v248
    %1211 = vmatpush.msra.mxu0 %v244
    %1212 = vmatpush.msra.mxu0 %v240
    %1213 = vmatpush.msra.mxu0 %v236
    %1214 = vmatpush.msra.mxu0 %v232
    %1215 = vmatpush.msra.mxu0 %v228
    %1216 = vmatmul.f32.gmra.mxu0 %v961
    %v1217 = vpop.f32.mrf.mxu0
    %v1218 = vadd.f32 %v1189, %v1217
    %1219 = vmatmul.f32.gmra.mxu0 %v962
    %v1220 = vpop.f32.mrf.mxu0
    %v1221 = vadd.f32 %v1192, %v1220
    %1222 = vmatmul.f32.gmra.mxu0 %v963
    %v1223 = vpop.f32.mrf.mxu0
    %v1224 = vadd.f32 %v1195, %v1223
    %1225 = vmatmul.f32.gmra.mxu0 %v964
    %v1226 = vpop.f32.mrf.mxu0
    %v1227 = vadd.f32 %v1198, %v1226
    %1228 = vdwg.mxu0
    %1229 = vmatpush.msra.mxu0 %v161
    %1230 = vmatpush.msra.mxu0 %v157
    %1231 = vmatpush.msra.mxu0 %v153
    %1232 = vmatpush.msra.mxu0 %v149
    %1233 = vmatpush.msra.mxu0 %v145
    %1234 = vmatpush.msra.mxu0 %v141
    %1235 = vmatpush.msra.mxu0 %v137
    %1236 = vmatpush.msra.mxu0 %v133
    %1237 = vmatpush.msra.mxu0 %v129
    %1238 = vmatpush.msra.mxu0 %v125
    %1239 = vmatpush.msra.mxu0 %v121
    %1240 = vmatpush.msra.mxu0 %v117
    %1241 = vmatpush.msra.mxu0 %v113
    %1242 = vmatpush.msra.mxu0 %v109
    %1243 = vmatpush.msra.mxu0 %v105
    %1244 = vmatpush.msra.mxu0 %v101
    %1245 = vmatmul.f32.gmra.mxu0 %v817
    %v1246 = vpop.f32.mrf.mxu0
    %v1247 = vadd.f32 %v1049, %v1246
    %1248 = vmatmul.f32.gmra.mxu0 %v818
    %v1249 = vpop.f32.mrf.mxu0
    %v1250 = vadd.f32 %v1049, %v1249
    %1251 = vmatmul.f32.gmra.mxu0 %v819
    %v1252 = vpop.f32.mrf.mxu0
    %v1253 = vadd.f32 %v1049, %v1252
    %1254 = vmatmul.f32.gmra.mxu0 %v820
    %v1255 = vpop.f32.mrf.mxu0
    %v1256 = vadd.f32 %v1049, %v1255
    %1257 = vdwg.mxu0
    %1258 = vmatpush.msra.mxu0 %v225
    %1259 = vmatpush.msra.mxu0 %v221
    %1260 = vmatpush.msra.mxu0 %v217
    %1261 = vmatpush.msra.mxu0 %v213
    %1262 = vmatpush.msra.mxu0 %v209
    %1263 = vmatpush.msra.mxu0 %v205
    %1264 = vmatpush.msra.mxu0 %v201
    %1265 = vmatpush.msra.mxu0 %v197
    %1266 = vmatpush.msra.mxu0 %v193
    %1267 = vmatpush.msra.mxu0 %v189
    %1268 = vmatpush.msra.mxu0 %v185
    %1269 = vmatpush.msra.mxu0 %v181
    %1270 = vmatpush.msra.mxu0 %v177
    %1271 = vmatpush.msra.mxu0 %v173
    %1272 = vmatpush.msra.mxu0 %v169
    %1273 = vmatpush.msra.mxu0 %v165
    %1274 = vmatmul.f32.gmra.mxu0 %v909
    %v1275 = vpop.f32.mrf.mxu0
    %v1276 = vadd.f32 %v1247, %v1275
    %1277 = vmatmul.f32.gmra.mxu0 %v910
    %v1278 = vpop.f32.mrf.mxu0
    %v1279 = vadd.f32 %v1250, %v1278
    %1280 = vmatmul.f32.gmra.mxu0 %v911
    %v1281 = vpop.f32.mrf.mxu0
    %v1282 = vadd.f32 %v1253, %v1281
    %1283 = vmatmul.f32.gmra.mxu0 %v912
    %v1284 = vpop.f32.mrf.mxu0
    %v1285 = vadd.f32 %v1256, %v1284
    %1286 = vdwg.mxu0
    %1287 = vmatpush.msra.mxu0 %v289
    %1288 = vmatpush.msra.mxu0 %v285
    %1289 = vmatpush.msra.mxu0 %v281
    %1290 = vmatpush.msra.mxu0 %v277
    %1291 = vmatpush.msra.mxu0 %v273
    %1292 = vmatpush.msra.mxu0 %v269
    %1293 = vmatpush.msra.mxu0 %v265
    %1294 = vmatpush.msra.mxu0 %v261
    %1295 = vmatpush.msra.mxu0 %v257
    %1296 = vmatpush.msra.mxu0 %v253
    %1297 = vmatpush.msra.mxu0 %v249
    %1298 = vmatpush.msra.mxu0 %v245
    %1299 = vmatpush.msra.mxu0 %v241
    %1300 = vmatpush.msra.mxu0 %v237
    %1301 = vmatpush.msra.mxu0 %v233
    %1302 = vmatpush.msra.mxu0 %v229
    %1303 = vmatmul.f32.gmra.mxu0 %v961
    %v1304 = vpop.f32.mrf.mxu0
    %v1305 = vadd.f32 %v1276, %v1304
    %1306 = vmatmul.f32.gmra.mxu0 %v962
    %v1307 = vpop.f32.mrf.mxu0
    %v1308 = vadd.f32 %v1279, %v1307
    %1309 = vmatmul.f32.gmra.mxu0 %v963
    %v1310 = vpop.f32.mrf.mxu0
    %v1311 = vadd.f32 %v1282, %v1310
    %1312 = vmatmul.f32.gmra.mxu0 %v964
    %v1313 = vpop.f32.mrf.mxu0
    %v1314 = vadd.f32 %v1285, %v1313
    %1315 = vdwg.mxu0
    %1316 = vmatpush.msra.mxu0 %v162
    %1317 = vmatpush.msra.mxu0 %v158
    %1318 = vmatpush.msra.mxu0 %v154
    %1319 = vmatpush.msra.mxu0 %v150
    %1320 = vmatpush.msra.mxu0 %v146
    %1321 = vmatpush.msra.mxu0 %v142
    %1322 = vmatpush.msra.mxu0 %v138
    %1323 = vmatpush.msra.mxu0 %v134
    %1324 = vmatpush.msra.mxu0 %v130
    %1325 = vmatpush.msra.mxu0 %v126
    %1326 = vmatpush.msra.mxu0 %v122
    %1327 = vmatpush.msra.mxu0 %v118
    %1328 = vmatpush.msra.mxu0 %v114
    %1329 = vmatpush.msra.mxu0 %v110
    %1330 = vmatpush.msra.mxu0 %v106
    %1331 = vmatpush.msra.mxu0 %v102
    %1332 = vmatmul.f32.gmra.mxu0 %v817
    %v1333 = vpop.f32.mrf.mxu0
    %v1334 = vadd.f32 %v1050, %v1333
    %1335 = vmatmul.f32.gmra.mxu0 %v818
    %v1336 = vpop.f32.mrf.mxu0
    %v1337 = vadd.f32 %v1050, %v1336
    %1338 = vmatmul.f32.gmra.mxu0 %v819
    %v1339 = vpop.f32.mrf.mxu0
    %v1340 = vadd.f32 %v1050, %v1339
    %1341 = vmatmul.f32.gmra.mxu0 %v820
    %v1342 = vpop.f32.mrf.mxu0
    %v1343 = vadd.f32 %v1050, %v1342
    %1344 = vdwg.mxu0
    %1345 = vmatpush.msra.mxu0 %v226
    %1346 = vmatpush.msra.mxu0 %v222
    %1347 = vmatpush.msra.mxu0 %v218
    %1348 = vmatpush.msra.mxu0 %v214
    %1349 = vmatpush.msra.mxu0 %v210
    %1350 = vmatpush.msra.mxu0 %v206
    %1351 = vmatpush.msra.mxu0 %v202
    %1352 = vmatpush.msra.mxu0 %v198
    %1353 = vmatpush.msra.mxu0 %v194
    %1354 = vmatpush.msra.mxu0 %v190
    %1355 = vmatpush.msra.mxu0 %v186
    %1356 = vmatpush.msra.mxu0 %v182
    %1357 = vmatpush.msra.mxu0 %v178
    %1358 = vmatpush.msra.mxu0 %v174
    %1359 = vmatpush.msra.mxu0 %v170
    %1360 = vmatpush.msra.mxu0 %v166
    %1361 = vmatmul.f32.gmra.mxu0 %v909
    %v1362 = vpop.f32.mrf.mxu0
    %v1363 = vadd.f32 %v1334, %v1362
    %1364 = vmatmul.f32.gmra.mxu0 %v910
    %v1365 = vpop.f32.mrf.mxu0
    %v1366 = vadd.f32 %v1337, %v1365
    %1367 = vmatmul.f32.gmra.mxu0 %v911
    %v1368 = vpop.f32.mrf.mxu0
    %v1369 = vadd.f32 %v1340, %v1368
    %1370 = vmatmul.f32.gmra.mxu0 %v912
    %v1371 = vpop.f32.mrf.mxu0
    %v1372 = vadd.f32 %v1343, %v1371
    %1373 = vdwg.mxu0
    %1374 = vmatpush.msra.mxu0 %v290
    %1375 = vmatpush.msra.mxu0 %v286
    %1376 = vmatpush.msra.mxu0 %v282
    %1377 = vmatpush.msra.mxu0 %v278
    %1378 = vmatpush.msra.mxu0 %v274
    %1379 = vmatpush.msra.mxu0 %v270
    %1380 = vmatpush.msra.mxu0 %v266
    %1381 = vmatpush.msra.mxu0 %v262
    %1382 = vmatpush.msra.mxu0 %v258
    %1383 = vmatpush.msra.mxu0 %v254
    %1384 = vmatpush.msra.mxu0 %v250
    %1385 = vmatpush.msra.mxu0 %v246
    %1386 = vmatpush.msra.mxu0 %v242
    %1387 = vmatpush.msra.mxu0 %v238
    %1388 = vmatpush.msra.mxu0 %v234
    %1389 = vmatpush.msra.mxu0 %v230
    %1390 = vmatmul.f32.gmra.mxu0 %v961
    %v1391 = vpop.f32.mrf.mxu0
    %v1392 = vadd.f32 %v1363, %v1391
    %1393 = vmatmul.f32.gmra.mxu0 %v962
    %v1394 = vpop.f32.mrf.mxu0
    %v1395 = vadd.f32 %v1366, %v1394
    %1396 = vmatmul.f32.gmra.mxu0 %v963
    %v1397 = vpop.f32.mrf.mxu0
    %v1398 = vadd.f32 %v1369, %v1397
    %1399 = vmatmul.f32.gmra.mxu0 %v964
    %v1400 = vpop.f32.mrf.mxu0
    %v1401 = vadd.f32 %v1372, %v1400
    %1402 = vdwg.mxu0
    %v1403 = vmax.f32 %v1131, 0.0
    %v1404 = vmax.f32 %v1218, 0.0
    %v1405 = vmax.f32 %v1305, 0.0
    %v1406 = vmax.f32 %v1392, 0.0
    %v1407 = vmax.f32 %v1134, 0.0
    %v1408 = vmax.f32 %v1221, 0.0
    %v1409 = vmax.f32 %v1308, 0.0
    %v1410 = vmax.f32 %v1395, 0.0
    %v1411 = vmax.f32 %v1137, 0.0
    %v1412 = vmax.f32 %v1224, 0.0
    %v1413 = vmax.f32 %v1311, 0.0
    %v1414 = vmax.f32 %v1398, 0.0
    %v1415 = vmax.f32 %v1140, 0.0
    %v1416 = vmax.f32 %v1227, 0.0
    %v1417 = vmax.f32 %v1314, 0.0
    %v1418 = vmax.f32 %v1401, 0.0
    %1419 = vmatpush.msra.mxu0 %v307
    %1420 = vmatpush.msra.mxu0 %v306
    %1421 = vmatpush.msra.mxu0 %v305
    %1422 = vmatpush.msra.mxu0 %v304
    %1423 = vmatpush.msra.mxu0 %v303
    %1424 = vmatpush.msra.mxu0 %v302
    %1425 = vmatpush.msra.mxu0 %v301
    %1426 = vmatpush.msra.mxu0 %v300
    %1427 = vmatpush.msra.mxu0 %v299
    %1428 = vmatpush.msra.mxu0 %v298
    %1429 = vmatpush.msra.mxu0 %v297
    %1430 = vmatpush.msra.mxu0 %v296
    %1431 = vmatpush.msra.mxu0 %v295
    %1432 = vmatpush.msra.mxu0 %v294
    %1433 = vmatpush.msra.mxu0 %v293
    %1434 = vmatpush.msra.mxu0 %v292
    %1435 = vmatmul.f32.gmra.mxu0 %v1403
    %v1436 = vpop.f32.mrf.mxu0
    %v1437 = vadd.f32 0.0, %v1436
    %1438 = vmatmul.f32.gmra.mxu0 %v1407
    %v1439 = vpop.f32.mrf.mxu0
    %v1440 = vadd.f32 0.0, %v1439
    %1441 = vmatmul.f32.gmra.mxu0 %v1411
    %v1442 = vpop.f32.mrf.mxu0
    %v1443 = vadd.f32 0.0, %v1442
    %1444 = vmatmul.f32.gmra.mxu0 %v1415
    %v1445 = vpop.f32.mrf.mxu0
    %v1446 = vadd.f32 0.0, %v1445
    %1447 = vdwg.mxu0
    %1448 = vmatpush.msra.mxu0 %v323
    %1449 = vmatpush.msra.mxu0 %v322
    %1450 = vmatpush.msra.mxu0 %v321
    %1451 = vmatpush.msra.mxu0 %v320
    %1452 = vmatpush.msra.mxu0 %v319
    %1453 = vmatpush.msra.mxu0 %v318
    %1454 = vmatpush.msra.mxu0 %v317
    %1455 = vmatpush.msra.mxu0 %v316
    %1456 = vmatpush.msra.mxu0 %v315
    %1457 = vmatpush.msra.mxu0 %v314
    %1458 = vmatpush.msra.mxu0 %v313
    %1459 = vmatpush.msra.mxu0 %v312
    %1460 = vmatpush.msra.mxu0 %v311
    %1461 = vmatpush.msra.mxu0 %v310
    %1462 = vmatpush.msra.mxu0 %v309
    %1463 = vmatpush.msra.mxu0 %v308
    %1464 = vmatmul.f32.gmra.mxu0 %v1404
    %v1465 = vpop.f32.mrf.mxu0
    %v1466 = vadd.f32 %v1437, %v1465
    %1467 = vmatmul.f32.gmra.mxu0 %v1408
    %v1468 = vpop.f32.mrf.mxu0
    %v1469 = vadd.f32 %v1440, %v1468
    %1470 = vmatmul.f32.gmra.mxu0 %v1412
    %v1471 = vpop.f32.mrf.mxu0
    %v1472 = vadd.f32 %v1443, %v1471
    %1473 = vmatmul.f32.gmra.mxu0 %v1416
    %v1474 = vpop.f32.mrf.mxu0
    %v1475 = vadd.f32 %v1446, %v1474
    %1476 = vdwg.mxu0
    %1477 = vmatpush.msra.mxu0 %v339
    %1478 = vmatpush.msra.mxu0 %v338
    %1479 = vmatpush.msra.mxu0 %v337
    %1480 = vmatpush.msra.mxu0 %v336
    %1481 = vmatpush.msra.mxu0 %v335
    %1482 = vmatpush.msra.mxu0 %v334
    %1483 = vmatpush.msra.mxu0 %v333
    %1484 = vmatpush.msra.mxu0 %v332
    %1485 = vmatpush.msra.mxu0 %v331
    %1486 = vmatpush.msra.mxu0 %v330
    %1487 = vmatpush.msra.mxu0 %v329
    %1488 = vmatpush.msra.mxu0 %v328
    %1489 = vmatpush.msra.mxu0 %v327
    %1490 = vmatpush.msra.mxu0 %v326
    %1491 = vmatpush.msra.mxu0 %v325
    %1492 = vmatpush.msra.mxu0 %v324
    %1493 = vmatmul.f32.gmra.mxu0 %v1405
    %v1494 = vpop.f32.mrf.mxu0
    %v1495 = vadd.f32 %v1466, %v1494
    %1496 = vmatmul.f32.gmra.mxu0 %v1409
    %v1497 = vpop.f32.mrf.mxu0
    %v1498 = vadd.f32 %v1469, %v1497
    %1499 = vmatmul.f32.gmra.mxu0 %v1413
    %v1500 = vpop.f32.mrf.mxu0
    %v1501 = vadd.f32 %v1472, %v1500
    %1502 = vmatmul.f32.gmra.mxu0 %v1417
    %v1503 = vpop.f32.mrf.mxu0
    %v1504 = vadd.f32 %v1475, %v1503
    %1505 = vdwg.mxu0
    %1506 = vmatpush.msra.mxu0 %v355
    %1507 = vmatpush.msra.mxu0 %v354
    %1508 = vmatpush.msra.mxu0 %v353
    %1509 = vmatpush.msra.mxu0 %v352
    %1510 = vmatpush.msra.mxu0 %v351
    %1511 = vmatpush.msra.mxu0 %v350
    %1512 = vmatpush.msra.mxu0 %v349
    %1513 = vmatpush.msra.mxu0 %v348
    %1514 = vmatpush.msra.mxu0 %v347
    %1515 = vmatpush.msra.mxu0 %v346
    %1516 = vmatpush.msra.mxu0 %v345
    %1517 = vmatpush.msra.mxu0 %v344
    %1518 = vmatpush.msra.mxu0 %v343
    %1519 = vmatpush.msra.mxu0 %v342
    %1520 = vmatpush.msra.mxu0 %v341
    %1521 = vmatpush.msra.mxu0 %v340
    %1522 = vmatmul.f32.gmra.mxu0 %v1406
    %v1523 = vpop.f32.mrf.mxu0
    %v1524 = vadd.f32 %v1495, %v1523
    %1525 = vmatmul.f32.gmra.mxu0 %v1410
    %v1526 = vpop.f32.mrf.mxu0
    %v1527 = vadd.f32 %v1498, %v1526
    %1528 = vmatmul.f32.gmra.mxu0 %v1414
    %v1529 = vpop.f32.mrf.mxu0
    %v1530 = vadd.f32 %v1501, %v1529
    %1531 = vmatmul.f32.gmra.mxu0 %v1418
    %v1532 = vpop.f32.mrf.mxu0
    %v1533 = vadd.f32 %v1504, %v1532
    %1534 = vdwg.mxu0
    %v1535 = vld [vmem:[%s1] sm:$0xff]
    %v1536 = vld [vmem:[%s1 + $0x8] sm:$0xff]
    %v1537 = vld [vmem:[%s1 + $0x10] sm:$0xff]
    %v1538 = vld [vmem:[%s1 + $0x18] sm:$0xff]
    %v1539 = vmul.f32 %v1524, %v1535
    %v1540 = vmul.f32 %v1527, %v1536
    %v1541 = vmul.f32 %v1530, %v1537
    %v1542 = vmul.f32 %v1533, %v1538
    %v1543 = vadd.f32 %v817, %v1539
    %v1544 = vadd.f32 %v818, %v1540
    %v1545 = vadd.f32 %v819, %v1541
    %v1546 = vadd.f32 %v820, %v1542
    %v1551 = vrot.slane %v1543, 7
    %v1552 = vrot.slane %v1544, 7
    %v1553 = vsel %vm825, %v1551, %v1552
    %v1554 = vrot.slane %v1545, 7
    %v1555 = vrot.slane %v1546, 7
    %v1556 = vsel %vm825, %v1554, %v1555
    %v1561 = vsel %vm825, 0.0, %v1551
    %v1562 = vsel %vm825, 0.0, %v1554
    %v1563 = vmax.f32 %v1561, %v1543
    %v1564 = vmax.f32 %v1553, %v1544
    %v1565 = vmax.f32 %v1562, %v1545
    %v1566 = vmax.f32 %v1556, %v1546
    %v1567 = vrot.slane %v1543, 1
    %v1568 = vrot.slane %v1544, 1
    %v1569 = vsel %vm838, %v1567, %v1568
    %v1570 = vrot.slane %v1545, 1
    %v1571 = vrot.slane %v1546, 1
    %v1572 = vsel %vm838, %v1570, %v1571
    %v1577 = vsel %vm838, %v1568, 0.0
    %v1578 = vsel %vm838, %v1571, 0.0
    %v1579 = vmax.f32 %v1563, %v1569
    %v1580 = vmax.f32 %v1564, %v1577
    %v1581 = vmax.f32 %v1565, %v1572
    %v1582 = vmax.f32 %v1566, %v1578
    %1587 = vrot.lane.b32.xlu0 %v1579, 120
    %v1588 = vpop.permute.xlu0 %1587
    %1589 = vrot.lane.b32.xlu0 %v1580, 120
    %v1590 = vpop.permute.xlu0 %1589
    %1591 = vrot.lane.b32.xlu0 %v1581, 120
    %v1592 = vpop.permute.xlu0 %1591
    %1593 = vrot.lane.b32.xlu0 %v1582, 120
    %v1594 = vpop.permute.xlu0 %1593
    %v1599 = vsel %vm883, %v1588, 0.0
    %v1600 = vsel %vm883, %v1590, 0.0
    %v1601 = vsel %vm883, %v1592, 0.0
    %v1602 = vsel %vm883, %v1594, 0.0
    %v1603 = vmax.f32 %v1599, %v1579
    %v1604 = vmax.f32 %v1600, %v1580
    %v1605 = vmax.f32 %v1601, %v1581
    %v1606 = vmax.f32 %v1602, %v1582
    %1607 = vrot.lane.b32.xlu0 %v1579, 8
    %v1608 = vpop.permute.xlu0 %1607
    %1609 = vrot.lane.b32.xlu0 %v1580, 8
    %v1610 = vpop.permute.xlu0 %1609
    %1611 = vrot.lane.b32.xlu0 %v1581, 8
    %v1612 = vpop.permute.xlu0 %1611
    %1613 = vrot.lane.b32.xlu0 %v1582, 8
    %v1614 = vpop.permute.xlu0 %1613
    %v1619 = vsel %vm900, 0.0, %v1608
    %v1620 = vsel %vm900, 0.0, %v1610
    %v1621 = vsel %vm900, 0.0, %v1612
    %v1622 = vsel %vm900, 0.0, %v1614
    %v1623 = vmax.f32 %v1603, %v1619
    %v1624 = vmax.f32 %v1604, %v1620
    %v1625 = vmax.f32 %v1605, %v1621
    %v1626 = vmax.f32 %v1606, %v1622
    %1627 = vmatpush.msra.mxu0 %v98
    %1628 = vmatpush.msra.mxu0 %v97
    %1629 = vmatpush.msra.mxu0 %v96
    %1630 = vmatpush.msra.mxu0 %v95
    %1631 = vmatpush.msra.mxu0 %v94
    %1632 = vmatpush.msra.mxu0 %v93
    %1633 = vmatpush.msra.mxu0 %v92
    %1634 = vmatpush.msra.mxu0 %v91
    %1635 = vmatpush.msra.mxu0 %v90
    %1636 = vmatpush.msra.mxu0 %v89
    %1637 = vmatpush.msra.mxu0 %v88
    %1638 = vmatpush.msra.mxu0 %v87
    %1639 = vmatpush.msra.mxu0 %v86
    %1640 = vmatpush.msra.mxu0 %v85
    %1641 = vmatpush.msra.mxu0 %v84
    %1642 = vmatpush.msra.mxu0 %v83
    %1643 = vmatmul.f32.gmra.mxu0 %v1623
    %v1644 = vpop.f32.mrf.mxu0
    %v1645 = vadd.f32 0.0, %v1644
    %1646 = vmatmul.f32.gmra.mxu0 %v1624
    %v1647 = vpop.f32.mrf.mxu0
    %v1648 = vadd.f32 0.0, %v1647
    %1649 = vmatmul.f32.gmra.mxu0 %v1625
    %v1650 = vpop.f32.mrf.mxu0
    %v1651 = vadd.f32 0.0, %v1650
    %1652 = vmatmul.f32.gmra.mxu0 %v1626
    %v1653 = vpop.f32.mrf.mxu0
    %v1654 = vadd.f32 0.0, %v1653
    %1655 = vdwg.mxu0
    %vm1656 = vcmp.gt.f32.partialorder %v1035, 0.1
    %vm1657 = vcmp.gt.f32.partialorder %v1038, 0.1
    %vm1658 = vcmp.gt.f32.partialorder %v1041, 0.1
    %vm1659 = vcmp.gt.f32.partialorder %v1044, 0.1
    %vm1660 = vcmp.gt.f32.partialorder %v1645, 0.1
    %vm1661 = vcmp.gt.f32.partialorder %v1648, 0.1
    %vm1662 = vcmp.gt.f32.partialorder %v1651, 0.1
    %vm1663 = vcmp.gt.f32.partialorder %v1654, 0.1
    %vm1664 = vmand %vm1656, %vm1660
    %vm1665 = vmand %vm1657, %vm1661
    %vm1666 = vmand %vm1658, %vm1662
    %vm1667 = vmand %vm1659, %vm1663
    %v1668 = vsel %vm1664, 1, 0
    %v1669 = vsel %vm1665, 1, 0
    %v1670 = vsel %vm1666, 1, 0
    %v1671 = vsel %vm1667, 1, 0
    %v1672 = vcvt.s32.f32 %v1668
    %v1673 = vcvt.s32.f32 %v1669
    %v1674 = vcvt.s32.f32 %v1670
    %v1675 = vcvt.s32.f32 %v1671
    %v1676 = vmul.f32 %v1543, %v1672
    %v1677 = vmul.f32 %v1544, %v1673
    %v1678 = vmul.f32 %v1545, %v1674
    %v1679 = vmul.f32 %v1546, %v1675
    %1680 = vst [vmem:[%s14] sm:$0xff] %v1676
    %1681 = vst [vmem:[%s14 + $0x8] sm:$0xff] %v1677
    %1682 = vst [vmem:[%s14 + $0x10] sm:$0xff] %v1678
    %1683 = vst [vmem:[%s14 + $0x18] sm:$0xff] %v1679
    %v1688 = vrot.slane %v1676, 1
    %v1689 = vrot.slane %v1677, 1
    %v1690 = vsel %vm838, %v1688, %v1689
    %v1691 = vrot.slane %v1678, 1
    %v1692 = vrot.slane %v1679, 1
    %v1693 = vsel %vm838, %v1691, %v1692
    %v1698 = vsel %vm838, %v1689, 0.0
    %v1699 = vsel %vm838, %v1692, 0.0
    %v1702 = vrot.slane %v1690, 1
    %v1703 = vrot.slane %v1698, 1
    %v1704 = vsel %vm838, %v1702, %v1703
    %v1705 = vrot.slane %v1693, 1
    %v1706 = vrot.slane %v1699, 1
    %v1707 = vsel %vm838, %v1705, %v1706
    %v1712 = vsel %vm838, %v1703, 0.0
    %v1713 = vsel %vm838, %v1706, 0.0
    %1714 = vrot.lane.b32.xlu0 %v1676, 120
    %v1715 = vpop.permute.xlu0 %1714
    %1716 = vrot.lane.b32.xlu0 %v1677, 120
    %v1717 = vpop.permute.xlu0 %1716
    %1718 = vrot.lane.b32.xlu0 %v1678, 120
    %v1719 = vpop.permute.xlu0 %1718
    %1720 = vrot.lane.b32.xlu0 %v1679, 120
    %v1721 = vpop.permute.xlu0 %1720
    %v1726 = vsel %vm883, %v1715, 0.0
    %v1727 = vsel %vm883, %v1717, 0.0
    %v1728 = vsel %vm883, %v1719, 0.0
    %v1729 = vsel %vm883, %v1721, 0.0
    %1730 = vrot.lane.b32.xlu0 %v1676, 112
    %v1731 = vpop.permute.xlu0 %1730
    %1732 = vrot.lane.b32.xlu0 %v1677, 112
    %v1733 = vpop.permute.xlu0 %1732
    %1734 = vrot.lane.b32.xlu0 %v1678, 112
    %v1735 = vpop.permute.xlu0 %1734
    %1736 = vrot.lane.b32.xlu0 %v1679, 112
    %v1737 = vpop.permute.xlu0 %1736
    %vm1742 = vcmask 916480
    %v1743 = vsel %vm1742, %v1731, 0.0
    %v1744 = vsel %vm1742, %v1733, 0.0
    %v1745 = vsel %vm1742, %v1735, 0.0
    %v1746 = vsel %vm1742, %v1737, 0.0
    %1747 = vrot.lane.b32.xlu0 %v1690, 120
    %v1748 = vpop.permute.xlu0 %1747
    %1749 = vrot.lane.b32.xlu0 %v1698, 120
    %v1750 = vpop.permute.xlu0 %1749
    %1751 = vrot.lane.b32.xlu0 %v1693, 120
    %v1752 = vpop.permute.xlu0 %1751
    %1753 = vrot.lane.b32.xlu0 %v1699, 120
    %v1754 = vpop.permute.xlu0 %1753
    %v1759 = vsel %vm883, %v1748, 0.0
    %v1760 = vsel %vm883, %v1750, 0.0
    %v1761 = vsel %vm883, %v1752, 0.0
    %v1762 = vsel %vm883, %v1754, 0.0
    %1763 = vrot.lane.b32.xlu0 %v1690, 112
    %v1764 = vpop.permute.xlu0 %1763
    %1765 = vrot.lane.b32.xlu0 %v1698, 112
    %v1766 = vpop.permute.xlu0 %1765
    %1767 = vrot.lane.b32.xlu0 %v1693, 112
    %v1768 = vpop.permute.xlu0 %1767
    %1769 = vrot.lane.b32.xlu0 %v1699, 112
    %v1770 = vpop.permute.xlu0 %1769
    %v1775 = vsel %vm1742, %v1764, 0.0
    %v1776 = vsel %vm1742, %v1766, 0.0
    %v1777 = vsel %vm1742, %v1768, 0.0
    %v1778 = vsel %vm1742, %v1770, 0.0
    %1781 = vrot.lane.b32.xlu0 %v1704, 120
    %v1782 = vpop.permute.xlu0 %1781
    %1783 = vrot.lane.b32.xlu0 %v1712, 120
    %v1784 = vpop.permute.xlu0 %1783
    %1785 = vrot.lane.b32.xlu0 %v1707, 120
    %v1786 = vpop.permute.xlu0 %1785
    %1787 = vrot.lane.b32.xlu0 %v1713, 120
    %v1788 = vpop.permute.xlu0 %1787
    %v1793 = vsel %vm883, %v1782, 0.0
    %v1794 = vsel %vm883, %v1784, 0.0
    %v1795 = vsel %vm883, %v1786, 0.0
    %v1796 = vsel %vm883, %v1788, 0.0
    %1797 = vrot.lane.b32.xlu0 %v1704, 112
    %v1798 = vpop.permute.xlu0 %1797
    %1799 = vrot.lane.b32.xlu0 %v1712, 112
    %v1800 = vpop.permute.xlu0 %1799
    %1801 = vrot.lane.b32.xlu0 %v1707, 112
    %v1802 = vpop.permute.xlu0 %1801
    %1803 = vrot.lane.b32.xlu0 %v1713, 112
    %v1804 = vpop.permute.xlu0 %1803
    %v1809 = vsel %vm1742, %v1798, 0.0
    %v1810 = vsel %vm1742, %v1800, 0.0
    %v1811 = vsel %vm1742, %v1802, 0.0
    %v1812 = vsel %vm1742, %v1804, 0.0
    %v1814 = vperm.slane %v644, 0
    %v1815 = vperm.slane %v644, 1
    %1818 = vmatpush.msra.mxu0 %v386
    %1819 = vmatpush.msra.mxu0 %v384
    %1820 = vmatpush.msra.mxu0 %v382
    %1821 = vmatpush.msra.mxu0 %v380
    %1822 = vmatpush.msra.mxu0 %v378
    %1823 = vmatpush.msra.mxu0 %v376
    %1824 = vmatpush.msra.mxu0 %v374
    %1825 = vmatpush.msra.mxu0 %v372
    %1826 = vmatpush.msra.mxu0 %v370
    %1827 = vmatpush.msra.mxu0 %v368
    %1828 = vmatpush.msra.mxu0 %v366
    %1829 = vmatpush.msra.mxu0 %v364
    %1830 = vmatpush.msra.mxu0 %v362
    %1831 = vmatpush.msra.mxu0 %v360
    %1832 = vmatpush.msra.mxu0 %v358
    %1833 = vmatpush.msra.mxu0 %v356
    %1834 = vmatmul.f32.gmra.mxu0 %v1676
    %v1835 = vpop.f32.mrf.mxu0
    %v1836 = vadd.f32 %v1814, %v1835
    %1837 = vmatmul.f32.gmra.mxu0 %v1677
    %v1838 = vpop.f32.mrf.mxu0
    %v1839 = vadd.f32 %v1814, %v1838
    %1840 = vmatmul.f32.gmra.mxu0 %v1678
    %v1841 = vpop.f32.mrf.mxu0
    %v1842 = vadd.f32 %v1814, %v1841
    %1843 = vmatmul.f32.gmra.mxu0 %v1679
    %v1844 = vpop.f32.mrf.mxu0
    %v1845 = vadd.f32 %v1814, %v1844
    %1846 = vdwg.mxu0
    %1847 = vmatpush.msra.mxu0 %v418
    %1848 = vmatpush.msra.mxu0 %v416
    %1849 = vmatpush.msra.mxu0 %v414
    %1850 = vmatpush.msra.mxu0 %v412
    %1851 = vmatpush.msra.mxu0 %v410
    %1852 = vmatpush.msra.mxu0 %v408
    %1853 = vmatpush.msra.mxu0 %v406
    %1854 = vmatpush.msra.mxu0 %v404
    %1855 = vmatpush.msra.mxu0 %v402
    %1856 = vmatpush.msra.mxu0 %v400
    %1857 = vmatpush.msra.mxu0 %v398
    %1858 = vmatpush.msra.mxu0 %v396
    %1859 = vmatpush.msra.mxu0 %v394
    %1860 = vmatpush.msra.mxu0 %v392
    %1861 = vmatpush.msra.mxu0 %v390
    %1862 = vmatpush.msra.mxu0 %v388
    %1863 = vmatmul.f32.gmra.mxu0 %v1726
    %v1864 = vpop.f32.mrf.mxu0
    %v1865 = vadd.f32 %v1836, %v1864
    %1866 = vmatmul.f32.gmra.mxu0 %v1727
    %v1867 = vpop.f32.mrf.mxu0
    %v1868 = vadd.f32 %v1839, %v1867
    %1869 = vmatmul.f32.gmra.mxu0 %v1728
    %v1870 = vpop.f32.mrf.mxu0
    %v1871 = vadd.f32 %v1842, %v1870
    %1872 = vmatmul.f32.gmra.mxu0 %v1729
    %v1873 = vpop.f32.mrf.mxu0
    %v1874 = vadd.f32 %v1845, %v1873
    %1875 = vdwg.mxu0
    %1876 = vmatpush.msra.mxu0 %v450
    %1877 = vmatpush.msra.mxu0 %v448
    %1878 = vmatpush.msra.mxu0 %v446
    %1879 = vmatpush.msra.mxu0 %v444
    %1880 = vmatpush.msra.mxu0 %v442
    %1881 = vmatpush.msra.mxu0 %v440
    %1882 = vmatpush.msra.mxu0 %v438
    %1883 = vmatpush.msra.mxu0 %v436
    %1884 = vmatpush.msra.mxu0 %v434
    %1885 = vmatpush.msra.mxu0 %v432
    %1886 = vmatpush.msra.mxu0 %v430
    %1887 = vmatpush.msra.mxu0 %v428
    %1888 = vmatpush.msra.mxu0 %v426
    %1889 = vmatpush.msra.mxu0 %v424
    %1890 = vmatpush.msra.mxu0 %v422
    %1891 = vmatpush.msra.mxu0 %v420
    %1892 = vmatmul.f32.gmra.mxu0 %v1743
    %v1893 = vpop.f32.mrf.mxu0
    %v1894 = vadd.f32 %v1865, %v1893
    %1895 = vmatmul.f32.gmra.mxu0 %v1744
    %v1896 = vpop.f32.mrf.mxu0
    %v1897 = vadd.f32 %v1868, %v1896
    %1898 = vmatmul.f32.gmra.mxu0 %v1745
    %v1899 = vpop.f32.mrf.mxu0
    %v1900 = vadd.f32 %v1871, %v1899
    %1901 = vmatmul.f32.gmra.mxu0 %v1746
    %v1902 = vpop.f32.mrf.mxu0
    %v1903 = vadd.f32 %v1874, %v1902
    %1904 = vdwg.mxu0
    %1905 = vmatpush.msra.mxu0 %v482
    %1906 = vmatpush.msra.mxu0 %v480
    %1907 = vmatpush.msra.mxu0 %v478
    %1908 = vmatpush.msra.mxu0 %v476
    %1909 = vmatpush.msra.mxu0 %v474
    %1910 = vmatpush.msra.mxu0 %v472
    %1911 = vmatpush.msra.mxu0 %v470
    %1912 = vmatpush.msra.mxu0 %v468
    %1913 = vmatpush.msra.mxu0 %v466
    %1914 = vmatpush.msra.mxu0 %v464
    %1915 = vmatpush.msra.mxu0 %v462
    %1916 = vmatpush.msra.mxu0 %v460
    %1917 = vmatpush.msra.mxu0 %v458
    %1918 = vmatpush.msra.mxu0 %v456
    %1919 = vmatpush.msra.mxu0 %v454
    %1920 = vmatpush.msra.mxu0 %v452
    %1921 = vmatmul.f32.gmra.mxu0 %v1690
    %v1922 = vpop.f32.mrf.mxu0
    %v1923 = vadd.f32 %v1894, %v1922
    %1924 = vmatmul.f32.gmra.mxu0 %v1698
    %v1925 = vpop.f32.mrf.mxu0
    %v1926 = vadd.f32 %v1897, %v1925
    %1927 = vmatmul.f32.gmra.mxu0 %v1693
    %v1928 = vpop.f32.mrf.mxu0
    %v1929 = vadd.f32 %v1900, %v1928
    %1930 = vmatmul.f32.gmra.mxu0 %v1699
    %v1931 = vpop.f32.mrf.mxu0
    %v1932 = vadd.f32 %v1903, %v1931
    %1933 = vdwg.mxu0
    %1934 = vmatpush.msra.mxu0 %v514
    %1935 = vmatpush.msra.mxu0 %v512
    %1936 = vmatpush.msra.mxu0 %v510
    %1937 = vmatpush.msra.mxu0 %v508
    %1938 = vmatpush.msra.mxu0 %v506
    %1939 = vmatpush.msra.mxu0 %v504
    %1940 = vmatpush.msra.mxu0 %v502
    %1941 = vmatpush.msra.mxu0 %v500
    %1942 = vmatpush.msra.mxu0 %v498
    %1943 = vmatpush.msra.mxu0 %v496
    %1944 = vmatpush.msra.mxu0 %v494
    %1945 = vmatpush.msra.mxu0 %v492
    %1946 = vmatpush.msra.mxu0 %v490
    %1947 = vmatpush.msra.mxu0 %v488
    %1948 = vmatpush.msra.mxu0 %v486
    %1949 = vmatpush.msra.mxu0 %v484
    %1950 = vmatmul.f32.gmra.mxu0 %v1759
    %v1951 = vpop.f32.mrf.mxu0
    %v1952 = vadd.f32 %v1923, %v1951
    %1953 = vmatmul.f32.gmra.mxu0 %v1760
    %v1954 = vpop.f32.mrf.mxu0
    %v1955 = vadd.f32 %v1926, %v1954
    %1956 = vmatmul.f32.gmra.mxu0 %v1761
    %v1957 = vpop.f32.mrf.mxu0
    %v1958 = vadd.f32 %v1929, %v1957
    %1959 = vmatmul.f32.gmra.mxu0 %v1762
    %v1960 = vpop.f32.mrf.mxu0
    %v1961 = vadd.f32 %v1932, %v1960
    %1962 = vdwg.mxu0
    %1963 = vmatpush.msra.mxu0 %v546
    %1964 = vmatpush.msra.mxu0 %v544
    %1965 = vmatpush.msra.mxu0 %v542
    %1966 = vmatpush.msra.mxu0 %v540
    %1967 = vmatpush.msra.mxu0 %v538
    %1968 = vmatpush.msra.mxu0 %v536
    %1969 = vmatpush.msra.mxu0 %v534
    %1970 = vmatpush.msra.mxu0 %v532
    %1971 = vmatpush.msra.mxu0 %v530
    %1972 = vmatpush.msra.mxu0 %v528
    %1973 = vmatpush.msra.mxu0 %v526
    %1974 = vmatpush.msra.mxu0 %v524
    %1975 = vmatpush.msra.mxu0 %v522
    %1976 = vmatpush.msra.mxu0 %v520
    %1977 = vmatpush.msra.mxu0 %v518
    %1978 = vmatpush.msra.mxu0 %v516
    %1979 = vmatmul.f32.gmra.mxu0 %v1775
    %v1980 = vpop.f32.mrf.mxu0
    %v1981 = vadd.f32 %v1952, %v1980
    %1982 = vmatmul.f32.gmra.mxu0 %v1776
    %v1983 = vpop.f32.mrf.mxu0
    %v1984 = vadd.f32 %v1955, %v1983
    %1985 = vmatmul.f32.gmra.mxu0 %v1777
    %v1986 = vpop.f32.mrf.mxu0
    %v1987 = vadd.f32 %v1958, %v1986
    %1988 = vmatmul.f32.gmra.mxu0 %v1778
    %v1989 = vpop.f32.mrf.mxu0
    %v1990 = vadd.f32 %v1961, %v1989
    %1991 = vdwg.mxu0
    %1992 = vmatpush.msra.mxu0 %v578
    %1993 = vmatpush.msra.mxu0 %v576
    %1994 = vmatpush.msra.mxu0 %v574
    %1995 = vmatpush.msra.mxu0 %v572
    %1996 = vmatpush.msra.mxu0 %v570
    %1997 = vmatpush.msra.mxu0 %v568
    %1998 = vmatpush.msra.mxu0 %v566
    %1999 = vmatpush.msra.mxu0 %v564
    %2000 = vmatpush.msra.mxu0 %v562
    %2001 = vmatpush.msra.mxu0 %v560
    %2002 = vmatpush.msra.mxu0 %v558
    %2003 = vmatpush.msra.mxu0 %v556
    %2004 = vmatpush.msra.mxu0 %v554
    %2005 = vmatpush.msra.mxu0 %v552
    %2006 = vmatpush.msra.mxu0 %v550
    %2007 = vmatpush.msra.mxu0 %v548
    %2008 = vmatmul.f32.gmra.mxu0 %v1704
    %v2009 = vpop.f32.mrf.mxu0
    %v2010 = vadd.f32 %v1981, %v2009
    %2011 = vmatmul.f32.gmra.mxu0 %v1712
    %v2012 = vpop.f32.mrf.mxu0
    %v2013 = vadd.f32 %v1984, %v2012
    %2014 = vmatmul.f32.gmra.mxu0 %v1707
    %v2015 = vpop.f32.mrf.mxu0
    %v2016 = vadd.f32 %v1987, %v2015
    %2017 = vmatmul.f32.gmra.mxu0 %v1713
    %v2018 = vpop.f32.mrf.mxu0
    %v2019 = vadd.f32 %v1990, %v2018
    %2020 = vdwg.mxu0
    %2021 = vmatpush.msra.mxu0 %v610
    %2022 = vmatpush.msra.mxu0 %v608
    %2023 = vmatpush.msra.mxu0 %v606
    %2024 = vmatpush.msra.mxu0 %v604
    %2025 = vmatpush.msra.mxu0 %v602
    %2026 = vmatpush.msra.mxu0 %v600
    %2027 = vmatpush.msra.mxu0 %v598
    %2028 = vmatpush.msra.mxu0 %v596
    %2029 = vmatpush.msra.mxu0 %v594
    %2030 = vmatpush.msra.mxu0 %v592
    %2031 = vmatpush.msra.mxu0 %v590
    %2032 = vmatpush.msra.mxu0 %v588
    %2033 = vmatpush.msra.mxu0 %v586
    %2034 = vmatpush.msra.mxu0 %v584
    %2035 = vmatpush.msra.mxu0 %v582
    %2036 = vmatpush.msra.mxu0 %v580
    %2037 = vmatmul.f32.gmra.mxu0 %v1793
    %v2038 = vpop.f32.mrf.mxu0
    %v2039 = vadd.f32 %v2010, %v2038
    %2040 = vmatmul.f32.gmra.mxu0 %v1794
    %v2041 = vpop.f32.mrf.mxu0
    %v2042 = vadd.f32 %v2013, %v2041
    %2043 = vmatmul.f32.gmra.mxu0 %v1795
    %v2044 = vpop.f32.mrf.mxu0
    %v2045 = vadd.f32 %v2016, %v2044
    %2046 = vmatmul.f32.gmra.mxu0 %v1796
    %v2047 = vpop.f32.mrf.mxu0
    %v2048 = vadd.f32 %v2019, %v2047
    %2049 = vdwg.mxu0
    %2050 = vmatpush.msra.mxu0 %v642
    %2051 = vmatpush.msra.mxu0 %v640
    %2052 = vmatpush.msra.mxu0 %v638
    %2053 = vmatpush.msra.mxu0 %v636
    %2054 = vmatpush.msra.mxu0 %v634
    %2055 = vmatpush.msra.mxu0 %v632
    %2056 = vmatpush.msra.mxu0 %v630
    %2057 = vmatpush.msra.mxu0 %v628
    %2058 = vmatpush.msra.mxu0 %v626
    %2059 = vmatpush.msra.mxu0 %v624
    %2060 = vmatpush.msra.mxu0 %v622
    %2061 = vmatpush.msra.mxu0 %v620
    %2062 = vmatpush.msra.mxu0 %v618
    %2063 = vmatpush.msra.mxu0 %v616
    %2064 = vmatpush.msra.mxu0 %v614
    %2065 = vmatpush.msra.mxu0 %v612
    %2066 = vmatmul.f32.gmra.mxu0 %v1809
    %v2067 = vpop.f32.mrf.mxu0
    %v2068 = vadd.f32 %v2039, %v2067
    %2069 = vmatmul.f32.gmra.mxu0 %v1810
    %v2070 = vpop.f32.mrf.mxu0
    %v2071 = vadd.f32 %v2042, %v2070
    %2072 = vmatmul.f32.gmra.mxu0 %v1811
    %v2073 = vpop.f32.mrf.mxu0
    %v2074 = vadd.f32 %v2045, %v2073
    %2075 = vmatmul.f32.gmra.mxu0 %v1812
    %v2076 = vpop.f32.mrf.mxu0
    %v2077 = vadd.f32 %v2048, %v2076
    %2078 = vdwg.mxu0
    %2079 = vmatpush.msra.mxu0 %v387
    %2080 = vmatpush.msra.mxu0 %v385
    %2081 = vmatpush.msra.mxu0 %v383
    %2082 = vmatpush.msra.mxu0 %v381
    %2083 = vmatpush.msra.mxu0 %v379
    %2084 = vmatpush.msra.mxu0 %v377
    %2085 = vmatpush.msra.mxu0 %v375
    %2086 = vmatpush.msra.mxu0 %v373
    %2087 = vmatpush.msra.mxu0 %v371
    %2088 = vmatpush.msra.mxu0 %v369
    %2089 = vmatpush.msra.mxu0 %v367
    %2090 = vmatpush.msra.mxu0 %v365
    %2091 = vmatpush.msra.mxu0 %v363
    %2092 = vmatpush.msra.mxu0 %v361
    %2093 = vmatpush.msra.mxu0 %v359
    %2094 = vmatpush.msra.mxu0 %v357
    %2095 = vmatmul.f32.gmra.mxu0 %v1676
    %v2096 = vpop.f32.mrf.mxu0
    %v2097 = vadd.f32 %v1815, %v2096
    %2098 = vmatmul.f32.gmra.mxu0 %v1677
    %v2099 = vpop.f32.mrf.mxu0
    %v2100 = vadd.f32 %v1815, %v2099
    %2101 = vmatmul.f32.gmra.mxu0 %v1678
    %v2102 = vpop.f32.mrf.mxu0
    %v2103 = vadd.f32 %v1815, %v2102
    %2104 = vmatmul.f32.gmra.mxu0 %v1679
    %v2105 = vpop.f32.mrf.mxu0
    %v2106 = vadd.f32 %v1815, %v2105
    %2107 = vdwg.mxu0
    %2108 = vmatpush.msra.mxu0 %v419
    %2109 = vmatpush.msra.mxu0 %v417
    %2110 = vmatpush.msra.mxu0 %v415
    %2111 = vmatpush.msra.mxu0 %v413
    %2112 = vmatpush.msra.mxu0 %v411
    %2113 = vmatpush.msra.mxu0 %v409
    %2114 = vmatpush.msra.mxu0 %v407
    %2115 = vmatpush.msra.mxu0 %v405
    %2116 = vmatpush.msra.mxu0 %v403
    %2117 = vmatpush.msra.mxu0 %v401
    %2118 = vmatpush.msra.mxu0 %v399
    %2119 = vmatpush.msra.mxu0 %v397
    %2120 = vmatpush.msra.mxu0 %v395
    %2121 = vmatpush.msra.mxu0 %v393
    %2122 = vmatpush.msra.mxu0 %v391
    %2123 = vmatpush.msra.mxu0 %v389
    %2124 = vmatmul.f32.gmra.mxu0 %v1726
    %v2125 = vpop.f32.mrf.mxu0
    %v2126 = vadd.f32 %v2097, %v2125
    %2127 = vmatmul.f32.gmra.mxu0 %v1727
    %v2128 = vpop.f32.mrf.mxu0
    %v2129 = vadd.f32 %v2100, %v2128
    %2130 = vmatmul.f32.gmra.mxu0 %v1728
    %v2131 = vpop.f32.mrf.mxu0
    %v2132 = vadd.f32 %v2103, %v2131
    %2133 = vmatmul.f32.gmra.mxu0 %v1729
    %v2134 = vpop.f32.mrf.mxu0
    %v2135 = vadd.f32 %v2106, %v2134
    %2136 = vdwg.mxu0
    %2137 = vmatpush.msra.mxu0 %v451
    %2138 = vmatpush.msra.mxu0 %v449
    %2139 = vmatpush.msra.mxu0 %v447
    %2140 = vmatpush.msra.mxu0 %v445
    %2141 = vmatpush.msra.mxu0 %v443
    %2142 = vmatpush.msra.mxu0 %v441
    %2143 = vmatpush.msra.mxu0 %v439
    %2144 = vmatpush.msra.mxu0 %v437
    %2145 = vmatpush.msra.mxu0 %v435
    %2146 = vmatpush.msra.mxu0 %v433
    %2147 = vmatpush.msra.mxu0 %v431
    %2148 = vmatpush.msra.mxu0 %v429
    %2149 = vmatpush.msra.mxu0 %v427
    %2150 = vmatpush.msra.mxu0 %v425
    %2151 = vmatpush.msra.mxu0 %v423
    %2152 = vmatpush.msra.mxu0 %v421
    %2153 = vmatmul.f32.gmra.mxu0 %v1743
    %v2154 = vpop.f32.mrf.mxu0
    %v2155 = vadd.f32 %v2126, %v2154
    %2156 = vmatmul.f32.gmra.mxu0 %v1744
    %v2157 = vpop.f32.mrf.mxu0
    %v2158 = vadd.f32 %v2129, %v2157
    %2159 = vmatmul.f32.gmra.mxu0 %v1745
    %v2160 = vpop.f32.mrf.mxu0
    %v2161 = vadd.f32 %v2132, %v2160
    %2162 = vmatmul.f32.gmra.mxu0 %v1746
    %v2163 = vpop.f32.mrf.mxu0
    %v2164 = vadd.f32 %v2135, %v2163
    %2165 = vdwg.mxu0
    %2166 = vmatpush.msra.mxu0 %v483
    %2167 = vmatpush.msra.mxu0 %v481
    %2168 = vmatpush.msra.mxu0 %v479
    %2169 = vmatpush.msra.mxu0 %v477
    %2170 = vmatpush.msra.mxu0 %v475
    %2171 = vmatpush.msra.mxu0 %v473
    %2172 = vmatpush.msra.mxu0 %v471
    %2173 = vmatpush.msra.mxu0 %v469
    %2174 = vmatpush.msra.mxu0 %v467
    %2175 = vmatpush.msra.mxu0 %v465
    %2176 = vmatpush.msra.mxu0 %v463
    %2177 = vmatpush.msra.mxu0 %v461
    %2178 = vmatpush.msra.mxu0 %v459
    %2179 = vmatpush.msra.mxu0 %v457
    %2180 = vmatpush.msra.mxu0 %v455
    %2181 = vmatpush.msra.mxu0 %v453
    %2182 = vmatmul.f32.gmra.mxu0 %v1690
    %v2183 = vpop.f32.mrf.mxu0
    %v2184 = vadd.f32 %v2155, %v2183
    %2185 = vmatmul.f32.gmra.mxu0 %v1698
    %v2186 = vpop.f32.mrf.mxu0
    %v2187 = vadd.f32 %v2158, %v2186
    %2188 = vmatmul.f32.gmra.mxu0 %v1693
    %v2189 = vpop.f32.mrf.mxu0
    %v2190 = vadd.f32 %v2161, %v2189
    %2191 = vmatmul.f32.gmra.mxu0 %v1699
    %v2192 = vpop.f32.mrf.mxu0
    %v2193 = vadd.f32 %v2164, %v2192
    %2194 = vdwg.mxu0
    %2195 = vmatpush.msra.mxu0 %v515
    %2196 = vmatpush.msra.mxu0 %v513
    %2197 = vmatpush.msra.mxu0 %v511
    %2198 = vmatpush.msra.mxu0 %v509
    %2199 = vmatpush.msra.mxu0 %v507
    %2200 = vmatpush.msra.mxu0 %v505
    %2201 = vmatpush.msra.mxu0 %v503
    %2202 = vmatpush.msra.mxu0 %v501
    %2203 = vmatpush.msra.mxu0 %v499
    %2204 = vmatpush.msra.mxu0 %v497
    %2205 = vmatpush.msra.mxu0 %v495
    %2206 = vmatpush.msra.mxu0 %v493
    %2207 = vmatpush.msra.mxu0 %v491
    %2208 = vmatpush.msra.mxu0 %v489
    %2209 = vmatpush.msra.mxu0 %v487
    %2210 = vmatpush.msra.mxu0 %v485
    %2211 = vmatmul.f32.gmra.mxu0 %v1759
    %v2212 = vpop.f32.mrf.mxu0
    %v2213 = vadd.f32 %v2184, %v2212
    %2214 = vmatmul.f32.gmra.mxu0 %v1760
    %v2215 = vpop.f32.mrf.mxu0
    %v2216 = vadd.f32 %v2187, %v2215
    %2217 = vmatmul.f32.gmra.mxu0 %v1761
    %v2218 = vpop.f32.mrf.mxu0
    %v2219 = vadd.f32 %v2190, %v2218
    %2220 = vmatmul.f32.gmra.mxu0 %v1762
    %v2221 = vpop.f32.mrf.mxu0
    %v2222 = vadd.f32 %v2193, %v2221
    %2223 = vdwg.mxu0
    %2224 = vmatpush.msra.mxu0 %v547
    %2225 = vmatpush.msra.mxu0 %v545
    %2226 = vmatpush.msra.mxu0 %v543
    %2227 = vmatpush.msra.mxu0 %v541
    %2228 = vmatpush.msra.mxu0 %v539
    %2229 = vmatpush.msra.mxu0 %v537
    %2230 = vmatpush.msra.mxu0 %v535
    %2231 = vmatpush.msra.mxu0 %v533
    %2232 = vmatpush.msra.mxu0 %v531
    %2233 = vmatpush.msra.mxu0 %v529
    %2234 = vmatpush.msra.mxu0 %v527
    %2235 = vmatpush.msra.mxu0 %v525
    %2236 = vmatpush.msra.mxu0 %v523
    %2237 = vmatpush.msra.mxu0 %v521
    %2238 = vmatpush.msra.mxu0 %v519
    %2239 = vmatpush.msra.mxu0 %v517
    %2240 = vmatmul.f32.gmra.mxu0 %v1775
    %v2241 = vpop.f32.mrf.mxu0
    %v2242 = vadd.f32 %v2213, %v2241
    %2243 = vmatmul.f32.gmra.mxu0 %v1776
    %v2244 = vpop.f32.mrf.mxu0
    %v2245 = vadd.f32 %v2216, %v2244
    %2246 = vmatmul.f32.gmra.mxu0 %v1777
    %v2247 = vpop.f32.mrf.mxu0
    %v2248 = vadd.f32 %v2219, %v2247
    %2249 = vmatmul.f32.gmra.mxu0 %v1778
    %v2250 = vpop.f32.mrf.mxu0
    %v2251 = vadd.f32 %v2222, %v2250
    %2252 = vdwg.mxu0
    %2253 = vmatpush.msra.mxu0 %v579
    %2254 = vmatpush.msra.mxu0 %v577
    %2255 = vmatpush.msra.mxu0 %v575
    %2256 = vmatpush.msra.mxu0 %v573
    %2257 = vmatpush.msra.mxu0 %v571
    %2258 = vmatpush.msra.mxu0 %v569
    %2259 = vmatpush.msra.mxu0 %v567
    %2260 = vmatpush.msra.mxu0 %v565
    %2261 = vmatpush.msra.mxu0 %v563
    %2262 = vmatpush.msra.mxu0 %v561
    %2263 = vmatpush.msra.mxu0 %v559
    %2264 = vmatpush.msra.mxu0 %v557
    %2265 = vmatpush.msra.mxu0 %v555
    %2266 = vmatpush.msra.mxu0 %v553
    %2267 = vmatpush.msra.mxu0 %v551
    %2268 = vmatpush.msra.mxu0 %v549
    %2269 = vmatmul.f32.gmra.mxu0 %v1704
    %v2270 = vpop.f32.mrf.mxu0
    %v2271 = vadd.f32 %v2242, %v2270
    %2272 = vmatmul.f32.gmra.mxu0 %v1712
    %v2273 = vpop.f32.mrf.mxu0
    %v2274 = vadd.f32 %v2245, %v2273
    %2275 = vmatmul.f32.gmra.mxu0 %v1707
    %v2276 = vpop.f32.mrf.mxu0
    %v2277 = vadd.f32 %v2248, %v2276
    %2278 = vmatmul.f32.gmra.mxu0 %v1713
    %v2279 = vpop.f32.mrf.mxu0
    %v2280 = vadd.f32 %v2251, %v2279
    %2281 = vdwg.mxu0
    %2282 = vmatpush.msra.mxu0 %v611
    %2283 = vmatpush.msra.mxu0 %v609
    %2284 = vmatpush.msra.mxu0 %v607
    %2285 = vmatpush.msra.mxu0 %v605
    %2286 = vmatpush.msra.mxu0 %v603
    %2287 = vmatpush.msra.mxu0 %v601
    %2288 = vmatpush.msra.mxu0 %v599
    %2289 = vmatpush.msra.mxu0 %v597
    %2290 = vmatpush.msra.mxu0 %v595
    %2291 = vmatpush.msra.mxu0 %v593
    %2292 = vmatpush.msra.mxu0 %v591
    %2293 = vmatpush.msra.mxu0 %v589
    %2294 = vmatpush.msra.mxu0 %v587
    %2295 = vmatpush.msra.mxu0 %v585
    %2296 = vmatpush.msra.mxu0 %v583
    %2297 = vmatpush.msra.mxu0 %v581
    %2298 = vmatmul.f32.gmra.mxu0 %v1793
    %v2299 = vpop.f32.mrf.mxu0
    %v2300 = vadd.f32 %v2271, %v2299
    %2301 = vmatmul.f32.gmra.mxu0 %v1794
    %v2302 = vpop.f32.mrf.mxu0
    %v2303 = vadd.f32 %v2274, %v2302
    %2304 = vmatmul.f32.gmra.mxu0 %v1795
    %v2305 = vpop.f32.mrf.mxu0
    %v2306 = vadd.f32 %v2277, %v2305
    %2307 = vmatmul.f32.gmra.mxu0 %v1796
    %v2308 = vpop.f32.mrf.mxu0
    %v2309 = vadd.f32 %v2280, %v2308
    %2310 = vdwg.mxu0
    %2311 = vmatpush.msra.mxu0 %v643
    %2312 = vmatpush.msra.mxu0 %v641
    %2313 = vmatpush.msra.mxu0 %v639
    %2314 = vmatpush.msra.mxu0 %v637
    %2315 = vmatpush.msra.mxu0 %v635
    %2316 = vmatpush.msra.mxu0 %v633
    %2317 = vmatpush.msra.mxu0 %v631
    %2318 = vmatpush.msra.mxu0 %v629
    %2319 = vmatpush.msra.mxu0 %v627
    %2320 = vmatpush.msra.mxu0 %v625
    %2321 = vmatpush.msra.mxu0 %v623
    %2322 = vmatpush.msra.mxu0 %v621
    %2323 = vmatpush.msra.mxu0 %v619
    %2324 = vmatpush.msra.mxu0 %v617
    %2325 = vmatpush.msra.mxu0 %v615
    %2326 = vmatpush.msra.mxu0 %v613
    %2327 = vmatmul.f32.gmra.mxu0 %v1809
    %v2328 = vpop.f32.mrf.mxu0
    %v2329 = vadd.f32 %v2300, %v2328
    %2330 = vmatmul.f32.gmra.mxu0 %v1810
    %v2331 = vpop.f32.mrf.mxu0
    %v2332 = vadd.f32 %v2303, %v2331
    %2333 = vmatmul.f32.gmra.mxu0 %v1811
    %v2334 = vpop.f32.mrf.mxu0
    %v2335 = vadd.f32 %v2306, %v2334
    %2336 = vmatmul.f32.gmra.mxu0 %v1812
    %v2337 = vpop.f32.mrf.mxu0
    %v2338 = vadd.f32 %v2309, %v2337
    %2339 = vdwg.mxu0
    %v2344 = vrot.slane %v2068, 1
    %v2345 = vrot.slane %v2329, 1
    %v2346 = vrot.slane %v2074, 1
    %v2347 = vrot.slane %v2335, 1
    %v2352 = vmax.f32 %v2068, %v2344
    %v2353 = vmax.f32 %v2329, %v2345
    %v2354 = vmax.f32 %v2074, %v2346
    %v2355 = vmax.f32 %v2335, %v2347
    %v2360 = vrot.slane %v2071, 1
    %v2361 = vrot.slane %v2332, 1
    %v2362 = vrot.slane %v2077, 1
    %v2363 = vrot.slane %v2338, 1
    %v2368 = vmax.f32 %v2071, %v2360
    %v2369 = vmax.f32 %v2332, %v2361
    %v2370 = vmax.f32 %v2077, %v2362
    %v2371 = vmax.f32 %v2338, %v2363
    %v2376 = vrot.slane %v2352, 1
    %v2377 = vrot.slane %v2353, 1
    %v2378 = vrot.slane %v2354, 1
    %v2379 = vrot.slane %v2355, 1
    %v2384 = vrot.slane %v2352, 2
    %v2385 = vrot.slane %v2353, 2
    %v2386 = vrot.slane %v2354, 2
    %v2387 = vrot.slane %v2355, 2
    %v2392 = vrot.slane %v2352, 3
    %v2393 = vrot.slane %v2353, 3
    %v2394 = vrot.slane %v2354, 3
    %v2395 = vrot.slane %v2355, 3
    %v2404 = vrot.slane %v2368, 4
    %v2405 = vrot.slane %v2369, 4
    %v2406 = vrot.slane %v2370, 4
    %v2407 = vrot.slane %v2371, 4
    %v2412 = vrot.slane %v2368, 5
    %v2413 = vrot.slane %v2369, 5
    %v2414 = vrot.slane %v2370, 5
    %v2415 = vrot.slane %v2371, 5
    %v2420 = vrot.slane %v2368, 6
    %v2421 = vrot.slane %v2369, 6
    %v2422 = vrot.slane %v2370, 6
    %v2423 = vrot.slane %v2371, 6
    %v2428 = vsel %vm825, %v2352, %v2376
    %v2429 = vsel %vm825, %v2353, %v2377
    %v2430 = vsel %vm825, %v2354, %v2378
    %v2431 = vsel %vm825, %v2355, %v2379
    %vm2432 = vcmask 1041408
    %v2433 = vsel %vm2432, %v2428, %v2384
    %v2434 = vsel %vm2432, %v2429, %v2385
    %v2435 = vsel %vm2432, %v2430, %v2386
    %v2436 = vsel %vm2432, %v2431, %v2387
    %vm2437 = vcmask 1042432
    %v2438 = vsel %vm2437, %v2433, %v2392
    %v2439 = vsel %vm2437, %v2434, %v2393
    %v2440 = vsel %vm2437, %v2435, %v2394
    %v2441 = vsel %vm2437, %v2436, %v2395
    %vm2442 = vcmask 1043456
    %v2443 = vsel %vm2442, %v2438, %v2404
    %v2444 = vsel %vm2442, %v2439, %v2405
    %v2445 = vsel %vm2442, %v2440, %v2406
    %v2446 = vsel %vm2442, %v2441, %v2407
    %vm2447 = vcmask 1044480
    %v2448 = vsel %vm2447, %v2443, %v2412
    %v2449 = vsel %vm2447, %v2444, %v2413
    %v2450 = vsel %vm2447, %v2445, %v2414
    %v2451 = vsel %vm2447, %v2446, %v2415
    %vm2452 = vcmask 1045504
    %v2453 = vsel %vm2452, %v2448, %v2420
    %v2454 = vsel %vm2452, %v2449, %v2421
    %v2455 = vsel %vm2452, %v2450, %v2422
    %v2456 = vsel %vm2452, %v2451, %v2423
    %2461 = vrot.lane.b32.xlu0 %v2453, 118
    %v2462 = vpop.permute.xlu0 %2461
    %2463 = vrot.lane.b32.xlu0 %v2454, 118
    %v2464 = vpop.permute.xlu0 %2463
    %2465 = vrot.lane.b32.xlu0 %v2455, 118
    %v2466 = vpop.permute.xlu0 %2465
    %2467 = vrot.lane.b32.xlu0 %v2456, 118
    %v2468 = vpop.permute.xlu0 %2467
    %vm2469 = vcmask 965632
    %v2470 = vsel %vm2469, %v2462, %v2464
    %v2471 = vsel %vm2469, %v2466, %v2468
    %vm2476 = vcmask 15360
    %v2477 = vsel %vm2476, %v2464, 0.0
    %v2478 = vsel %vm2476, %v2468, 0.0
    %v2479 = vmax.f32 %v2453, %v2470
    %v2480 = vmax.f32 %v2454, %v2477
    %v2481 = vmax.f32 %v2455, %v2471
    %v2482 = vmax.f32 %v2456, %v2478
    %v2483 = vmax.f32 %v2479, 0.0
    %v2484 = vmax.f32 %v2480, 0.0
    %v2485 = vmax.f32 %v2481, 0.0
    %v2486 = vmax.f32 %v2482, 0.0
    %v2487 = vsel %vm838, %v2483, 0.0
    %v2488 = vsel %vm838, %v2484, 0.0
    %v2489 = vsel %vm838, %v2485, 0.0
    %v2490 = vsel %vm838, %v2486, 0.0
    %2495 = vrot.lane.b32.xlu0 %v2487, 108
    %v2496 = vpop.permute.xlu0 %2495
    %2497 = vrot.lane.b32.xlu0 %v2488, 108
    %v2498 = vpop.permute.xlu0 %2497
    %2499 = vrot.lane.b32.xlu0 %v2489, 108
    %v2500 = vpop.permute.xlu0 %2499
    %2501 = vrot.lane.b32.xlu0 %v2490, 108
    %v2502 = vpop.permute.xlu0 %2501
    %vm2503 = vcmask 883712
    %v2504 = vsel %vm2503, %v2496, %v2498
    %v2505 = vsel %vm2503, %v2500, %v2502
    %v2508 = vsel %vm883, %v2504, 0.0
    %v2509 = vsel %vm883, %v2505, 0.0
    %2510 = vrot.lane.b32.xlu0 %v2487, 88
    %v2511 = vpop.permute.xlu0 %2510
    %2512 = vrot.lane.b32.xlu0 %v2488, 88
    %v2513 = vpop.permute.xlu0 %2512
    %2514 = vrot.lane.b32.xlu0 %v2489, 88
    %v2515 = vpop.permute.xlu0 %2514
    %2516 = vrot.lane.b32.xlu0 %v2490, 88
    %v2517 = vpop.permute.xlu0 %2516
    %vm2518 = vcmask 719872
    %v2519 = vsel %vm2518, %v2511, %v2513
    %v2520 = vsel %vm2518, %v2515, %v2517
    %vm2523 = vcmask 818176
    %v2524 = vsel %vm2523, %v2519, 0.0
    %v2525 = vsel %vm2523, %v2520, 0.0
    %2527 = vrot.lane.b32.xlu0 0.0, 108
    %v2528 = vpop.permute.xlu0 %2527
    %v2530 = vsel %vm883, %v2528, 0.0
    %2531 = vrot.lane.b32.xlu0 0.0, 88
    %v2532 = vpop.permute.xlu0 %2531
    %v2534 = vsel %vm2523, %v2532, 0.0
    %2537 = vrot.lane.b32.xlu0 %v2508, 12
    %v2538 = vpop.permute.xlu0 %2537
    %2539 = vrot.lane.b32.xlu0 0.0, 12
    %v2540 = vpop.permute.xlu0 %2539
    %2541 = vrot.lane.b32.xlu0 %v2509, 12
    %v2542 = vpop.permute.xlu0 %2541
    %vm2543 = vcmask 97280
    %v2544 = vsel %vm2543, %v2538, %v2540
    %v2545 = vsel %vm2543, %v2542, %v2540
    %2552 = vrot.lane.b32.xlu0 %v2524, 24
    %v2553 = vpop.permute.xlu0 %2552
    %2554 = vrot.lane.b32.xlu0 0.0, 24
    %v2555 = vpop.permute.xlu0 %2554
    %2556 = vrot.lane.b32.xlu0 %v2525, 24
    %v2557 = vpop.permute.xlu0 %2556
    %vm2558 = vcmask 195584
    %v2559 = vsel %vm2558, %v2553, %v2555
    %v2560 = vsel %vm2558, %v2557, %v2555
    %v2565 = vrot.slane %v2487, 1
    %v2566 = vrot.slane 0.0, 1
    %v2567 = vsel %vm838, %v2565, %v2566
    %v2568 = vrot.slane %v2488, 1
    %v2569 = vsel %vm838, %v2568, %v2566
    %v2570 = vrot.slane %v2489, 1
    %v2571 = vsel %vm838, %v2570, %v2566
    %v2572 = vrot.slane %v2490, 1
    %v2573 = vsel %vm838, %v2572, %v2566
    %2574 = vrot.lane.b32.xlu0 %v2567, 36
    %v2575 = vpop.permute.xlu0 %2574
    %2576 = vrot.lane.b32.xlu0 %v2569, 36
    %v2577 = vpop.permute.xlu0 %2576
    %2578 = vrot.lane.b32.xlu0 %v2571, 36
    %v2579 = vpop.permute.xlu0 %2578
    %2580 = vrot.lane.b32.xlu0 %v2573, 36
    %v2581 = vpop.permute.xlu0 %2580
    %vm2582 = vcmask 293888
    %v2583 = vsel %vm2582, %v2575, %v2577
    %v2584 = vsel %vm2582, %v2579, %v2581
    %v2590 = vrot.slane %v2508, 1
    %v2591 = vrot.slane %v2530, 1
    %v2592 = vsel %vm838, %v2590, %v2591
    %v2593 = vsel %vm838, %v2566, %v2566
    %v2594 = vrot.slane %v2509, 1
    %v2595 = vsel %vm838, %v2594, %v2591
    %2596 = vrot.lane.b32.xlu0 %v2592, 48
    %v2597 = vpop.permute.xlu0 %2596
    %2598 = vrot.lane.b32.xlu0 %v2593, 48
    %v2599 = vpop.permute.xlu0 %2598
    %2600 = vrot.lane.b32.xlu0 %v2595, 48
    %v2601 = vpop.permute.xlu0 %2600
    %vm2602 = vcmask 392192
    %v2603 = vsel %vm2602, %v2597, %v2599
    %v2604 = vsel %vm2602, %v2601, %v2599
    %v2610 = vrot.slane %v2524, 1
    %v2611 = vrot.slane %v2534, 1
    %v2612 = vsel %vm838, %v2610, %v2611
    %v2613 = vrot.slane %v2525, 1
    %v2614 = vsel %vm838, %v2613, %v2611
    %2615 = vrot.lane.b32.xlu0 %v2612, 60
    %v2616 = vpop.permute.xlu0 %2615
    %2617 = vrot.lane.b32.xlu0 %v2593, 60
    %v2618 = vpop.permute.xlu0 %2617
    %2619 = vrot.lane.b32.xlu0 %v2614, 60
    %v2620 = vpop.permute.xlu0 %2619
    %vm2621 = vcmask 490496
    %v2622 = vsel %vm2621, %v2616, %v2618
    %v2623 = vsel %vm2621, %v2620, %v2618
    %v2628 = vrot.slane %v2487, 2
    %v2629 = vrot.slane 0.0, 2
    %v2630 = vsel %vm2452, %v2628, %v2629
    %v2631 = vrot.slane %v2488, 2
    %v2632 = vsel %vm2452, %v2631, %v2629
    %v2633 = vrot.slane %v2489, 2
    %v2634 = vsel %vm2452, %v2633, %v2629
    %v2635 = vrot.slane %v2490, 2
    %v2636 = vsel %vm2452, %v2635, %v2629
    %2637 = vrot.lane.b32.xlu0 %v2630, 72
    %v2638 = vpop.permute.xlu0 %2637
    %2639 = vrot.lane.b32.xlu0 %v2632, 72
    %v2640 = vpop.permute.xlu0 %2639
    %2641 = vrot.lane.b32.xlu0 %v2634, 72
    %v2642 = vpop.permute.xlu0 %2641
    %2643 = vrot.lane.b32.xlu0 %v2636, 72
    %v2644 = vpop.permute.xlu0 %2643
    %vm2645 = vcmask 588800
    %v2646 = vsel %vm2645, %v2638, %v2640
    %v2647 = vsel %vm2645, %v2642, %v2644
    %v2652 = vrot.slane %v2508, 2
    %v2653 = vrot.slane %v2530, 2
    %v2654 = vsel %vm2452, %v2652, %v2653
    %v2655 = vsel %vm2452, %v2629, %v2629
    %v2656 = vrot.slane %v2509, 2
    %v2657 = vsel %vm2452, %v2656, %v2653
    %2658 = vrot.lane.b32.xlu0 %v2654, 84
    %v2659 = vpop.permute.xlu0 %2658
    %2660 = vrot.lane.b32.xlu0 %v2655, 84
    %v2661 = vpop.permute.xlu0 %2660
    %2662 = vrot.lane.b32.xlu0 %v2657, 84
    %v2663 = vpop.permute.xlu0 %2662
    %vm2664 = vcmask 687104
    %v2665 = vsel %vm2664, %v2659, %v2661
    %v2666 = vsel %vm2664, %v2663, %v2661
    %v2671 = vrot.slane %v2524, 2
    %v2672 = vrot.slane %v2534, 2
    %v2673 = vsel %vm2452, %v2671, %v2672
    %v2674 = vrot.slane %v2525, 2
    %v2675 = vsel %vm2452, %v2674, %v2672
    %2676 = vrot.lane.b32.xlu0 %v2673, 96
    %v2677 = vpop.permute.xlu0 %2676
    %2678 = vrot.lane.b32.xlu0 %v2655, 96
    %v2679 = vpop.permute.xlu0 %2678
    %2680 = vrot.lane.b32.xlu0 %v2675, 96
    %v2681 = vpop.permute.xlu0 %2680
    %vm2682 = vcmask 785408
    %v2683 = vsel %vm2682, %v2677, %v2679
    %v2684 = vsel %vm2682, %v2681, %v2679
    %v2687 = vsel %vm2543, %v2488, %v2538
    %v2688 = vsel %vm2543, %v2490, %v2542
    %v2689 = vsel %vm2558, %v2544, %v2553
    %v2690 = vsel %vm2558, %v2545, %v2557
    %v2691 = vsel %vm2582, %v2559, %v2575
    %v2692 = vsel %vm2582, %v2560, %v2579
    %v2693 = vsel %vm2602, %v2583, %v2597
    %v2694 = vsel %vm2602, %v2584, %v2601
    %v2695 = vsel %vm2621, %v2603, %v2616
    %v2696 = vsel %vm2621, %v2604, %v2620
    %v2697 = vsel %vm2645, %v2622, %v2638
    %v2698 = vsel %vm2645, %v2623, %v2642
    %v2699 = vsel %vm2664, %v2646, %v2659
    %v2700 = vsel %vm2664, %v2647, %v2663
    %v2701 = vsel %vm2682, %v2665, %v2677
    %v2702 = vsel %vm2682, %v2666, %v2681
    %v2704 = vperm.slane %v803, 0
    %v2706 = vsel %vm2503, %v2683, 0
    %v2708 = vsel %vm2503, %v2684, 0
    %v2711 = vsel %vm2442, %v802, 0
    %2713 = vmatpush.msra.mxu0 %v660
    %2714 = vmatpush.msra.mxu0 %v659
    %2715 = vmatpush.msra.mxu0 %v658
    %2716 = vmatpush.msra.mxu0 %v657
    %2717 = vmatpush.msra.mxu0 %v656
    %2718 = vmatpush.msra.mxu0 %v655
    %2719 = vmatpush.msra.mxu0 %v654
    %2720 = vmatpush.msra.mxu0 %v653
    %2721 = vmatpush.msra.mxu0 %v652
    %2722 = vmatpush.msra.mxu0 %v651
    %2723 = vmatpush.msra.mxu0 %v650
    %2724 = vmatpush.msra.mxu0 %v649
    %2725 = vmatpush.msra.mxu0 %v648
    %2726 = vmatpush.msra.mxu0 %v647
    %2727 = vmatpush.msra.mxu0 %v646
    %2728 = vmatpush.msra.mxu0 %v645
    %2729 = vmatmul.f32.gmra.mxu0 %v2487
    %v2730 = vpop.f32.mrf.mxu0
    %v2731 = vadd.f32 %v2704, %v2730
    %2732 = vmatmul.f32.gmra.mxu0 %v2489
    %v2733 = vpop.f32.mrf.mxu0
    %v2734 = vadd.f32 %v2704, %v2733
    %2735 = vdwg.mxu0
    %2736 = vmatpush.msra.mxu0 %v676
    %2737 = vmatpush.msra.mxu0 %v675
    %2738 = vmatpush.msra.mxu0 %v674
    %2739 = vmatpush.msra.mxu0 %v673
    %2740 = vmatpush.msra.mxu0 %v672
    %2741 = vmatpush.msra.mxu0 %v671
    %2742 = vmatpush.msra.mxu0 %v670
    %2743 = vmatpush.msra.mxu0 %v669
    %2744 = vmatpush.msra.mxu0 %v668
    %2745 = vmatpush.msra.mxu0 %v667
    %2746 = vmatpush.msra.mxu0 %v666
    %2747 = vmatpush.msra.mxu0 %v665
    %2748 = vmatpush.msra.mxu0 %v664
    %2749 = vmatpush.msra.mxu0 %v663
    %2750 = vmatpush.msra.mxu0 %v662
    %2751 = vmatpush.msra.mxu0 %v661
    %2752 = vmatmul.f32.gmra.mxu0 %v2687
    %v2753 = vpop.f32.mrf.mxu0
    %v2754 = vadd.f32 %v2731, %v2753
    %2755 = vmatmul.f32.gmra.mxu0 %v2688
    %v2756 = vpop.f32.mrf.mxu0
    %v2757 = vadd.f32 %v2734, %v2756
    %2758 = vdwg.mxu0
    %2759 = vmatpush.msra.mxu0 %v692
    %2760 = vmatpush.msra.mxu0 %v691
    %2761 = vmatpush.msra.mxu0 %v690
    %2762 = vmatpush.msra.mxu0 %v689
    %2763 = vmatpush.msra.mxu0 %v688
    %2764 = vmatpush.msra.mxu0 %v687
    %2765 = vmatpush.msra.mxu0 %v686
    %2766 = vmatpush.msra.mxu0 %v685
    %2767 = vmatpush.msra.mxu0 %v684
    %2768 = vmatpush.msra.mxu0 %v683
    %2769 = vmatpush.msra.mxu0 %v682
    %2770 = vmatpush.msra.mxu0 %v681
    %2771 = vmatpush.msra.mxu0 %v680
    %2772 = vmatpush.msra.mxu0 %v679
    %2773 = vmatpush.msra.mxu0 %v678
    %2774 = vmatpush.msra.mxu0 %v677
    %2775 = vmatmul.f32.gmra.mxu0 %v2689
    %v2776 = vpop.f32.mrf.mxu0
    %v2777 = vadd.f32 %v2754, %v2776
    %2778 = vmatmul.f32.gmra.mxu0 %v2690
    %v2779 = vpop.f32.mrf.mxu0
    %v2780 = vadd.f32 %v2757, %v2779
    %2781 = vdwg.mxu0
    %2782 = vmatpush.msra.mxu0 %v708
    %2783 = vmatpush.msra.mxu0 %v707
    %2784 = vmatpush.msra.mxu0 %v706
    %2785 = vmatpush.msra.mxu0 %v705
    %2786 = vmatpush.msra.mxu0 %v704
    %2787 = vmatpush.msra.mxu0 %v703
    %2788 = vmatpush.msra.mxu0 %v702
    %2789 = vmatpush.msra.mxu0 %v701
    %2790 = vmatpush.msra.mxu0 %v700
    %2791 = vmatpush.msra.mxu0 %v699
    %2792 = vmatpush.msra.mxu0 %v698
    %2793 = vmatpush.msra.mxu0 %v697
    %2794 = vmatpush.msra.mxu0 %v696
    %2795 = vmatpush.msra.mxu0 %v695
    %2796 = vmatpush.msra.mxu0 %v694
    %2797 = vmatpush.msra.mxu0 %v693
    %2798 = vmatmul.f32.gmra.mxu0 %v2691
    %v2799 = vpop.f32.mrf.mxu0
    %v2800 = vadd.f32 %v2777, %v2799
    %2801 = vmatmul.f32.gmra.mxu0 %v2692
    %v2802 = vpop.f32.mrf.mxu0
    %v2803 = vadd.f32 %v2780, %v2802
    %2804 = vdwg.mxu0
    %2805 = vmatpush.msra.mxu0 %v724
    %2806 = vmatpush.msra.mxu0 %v723
    %2807 = vmatpush.msra.mxu0 %v722
    %2808 = vmatpush.msra.mxu0 %v721
    %2809 = vmatpush.msra.mxu0 %v720
    %2810 = vmatpush.msra.mxu0 %v719
    %2811 = vmatpush.msra.mxu0 %v718
    %2812 = vmatpush.msra.mxu0 %v717
    %2813 = vmatpush.msra.mxu0 %v716
    %2814 = vmatpush.msra.mxu0 %v715
    %2815 = vmatpush.msra.mxu0 %v714
    %2816 = vmatpush.msra.mxu0 %v713
    %2817 = vmatpush.msra.mxu0 %v712
    %2818 = vmatpush.msra.mxu0 %v711
    %2819 = vmatpush.msra.mxu0 %v710
    %2820 = vmatpush.msra.mxu0 %v709
    %2821 = vmatmul.f32.gmra.mxu0 %v2693
    %v2822 = vpop.f32.mrf.mxu0
    %v2823 = vadd.f32 %v2800, %v2822
    %2824 = vmatmul.f32.gmra.mxu0 %v2694
    %v2825 = vpop.f32.mrf.mxu0
    %v2826 = vadd.f32 %v2803, %v2825
    %2827 = vdwg.mxu0
    %2828 = vmatpush.msra.mxu0 %v740
    %2829 = vmatpush.msra.mxu0 %v739
    %2830 = vmatpush.msra.mxu0 %v738
    %2831 = vmatpush.msra.mxu0 %v737
    %2832 = vmatpush.msra.mxu0 %v736
    %2833 = vmatpush.msra.mxu0 %v735
    %2834 = vmatpush.msra.mxu0 %v734
    %2835 = vmatpush.msra.mxu0 %v733
    %2836 = vmatpush.msra.mxu0 %v732
    %2837 = vmatpush.msra.mxu0 %v731
    %2838 = vmatpush.msra.mxu0 %v730
    %2839 = vmatpush.msra.mxu0 %v729
    %2840 = vmatpush.msra.mxu0 %v728
    %2841 = vmatpush.msra.mxu0 %v727
    %2842 = vmatpush.msra.mxu0 %v726
    %2843 = vmatpush.msra.mxu0 %v725
    %2844 = vmatmul.f32.gmra.mxu0 %v2695
    %v2845 = vpop.f32.mrf.mxu0
    %v2846 = vadd.f32 %v2823, %v2845
    %2847 = vmatmul.f32.gmra.mxu0 %v2696
    %v2848 = vpop.f32.mrf.mxu0
    %v2849 = vadd.f32 %v2826, %v2848
    %2850 = vdwg.mxu0
    %2851 = vmatpush.msra.mxu0 %v756
    %2852 = vmatpush.msra.mxu0 %v755
    %2853 = vmatpush.msra.mxu0 %v754
    %2854 = vmatpush.msra.mxu0 %v753
    %2855 = vmatpush.msra.mxu0 %v752
    %2856 = vmatpush.msra.mxu0 %v751
    %2857 = vmatpush.msra.mxu0 %v750
    %2858 = vmatpush.msra.mxu0 %v749
    %2859 = vmatpush.msra.mxu0 %v748
    %2860 = vmatpush.msra.mxu0 %v747
    %2861 = vmatpush.msra.mxu0 %v746
    %2862 = vmatpush.msra.mxu0 %v745
    %2863 = vmatpush.msra.mxu0 %v744
    %2864 = vmatpush.msra.mxu0 %v743
    %2865 = vmatpush.msra.mxu0 %v742
    %2866 = vmatpush.msra.mxu0 %v741
    %2867 = vmatmul.f32.gmra.mxu0 %v2697
    %v2868 = vpop.f32.mrf.mxu0
    %v2869 = vadd.f32 %v2846, %v2868
    %2870 = vmatmul.f32.gmra.mxu0 %v2698
    %v2871 = vpop.f32.mrf.mxu0
    %v2872 = vadd.f32 %v2849, %v2871
    %2873 = vdwg.mxu0
    %2874 = vmatpush.msra.mxu0 %v772
    %2875 = vmatpush.msra.mxu0 %v771
    %2876 = vmatpush.msra.mxu0 %v770
    %2877 = vmatpush.msra.mxu0 %v769
    %2878 = vmatpush.msra.mxu0 %v768
    %2879 = vmatpush.msra.mxu0 %v767
    %2880 = vmatpush.msra.mxu0 %v766
    %2881 = vmatpush.msra.mxu0 %v765
    %2882 = vmatpush.msra.mxu0 %v764
    %2883 = vmatpush.msra.mxu0 %v763
    %2884 = vmatpush.msra.mxu0 %v762
    %2885 = vmatpush.msra.mxu0 %v761
    %2886 = vmatpush.msra.mxu0 %v760
    %2887 = vmatpush.msra.mxu0 %v759
    %2888 = vmatpush.msra.mxu0 %v758
    %2889 = vmatpush.msra.mxu0 %v757
    %2890 = vmatmul.f32.gmra.mxu0 %v2699
    %v2891 = vpop.f32.mrf.mxu0
    %v2892 = vadd.f32 %v2869, %v2891
    %2893 = vmatmul.f32.gmra.mxu0 %v2700
    %v2894 = vpop.f32.mrf.mxu0
    %v2895 = vadd.f32 %v2872, %v2894
    %2896 = vdwg.mxu0
    %2897 = vmatpush.msra.mxu0 %v788
    %2898 = vmatpush.msra.mxu0 %v787
    %2899 = vmatpush.msra.mxu0 %v786
    %2900 = vmatpush.msra.mxu0 %v785
    %2901 = vmatpush.msra.mxu0 %v784
    %2902 = vmatpush.msra.mxu0 %v783
    %2903 = vmatpush.msra.mxu0 %v782
    %2904 = vmatpush.msra.mxu0 %v781
    %2905 = vmatpush.msra.mxu0 %v780
    %2906 = vmatpush.msra.mxu0 %v779
    %2907 = vmatpush.msra.mxu0 %v778
    %2908 = vmatpush.msra.mxu0 %v777
    %2909 = vmatpush.msra.mxu0 %v776
    %2910 = vmatpush.msra.mxu0 %v775
    %2911 = vmatpush.msra.mxu0 %v774
    %2912 = vmatpush.msra.mxu0 %v773
    %2913 = vmatmul.f32.gmra.mxu0 %v2701
    %v2914 = vpop.f32.mrf.mxu0
    %v2915 = vadd.f32 %v2892, %v2914
    %2916 = vmatmul.f32.gmra.mxu0 %v2702
    %v2917 = vpop.f32.mrf.mxu0
    %v2918 = vadd.f32 %v2895, %v2917
    %2919 = vdwg.mxu0
    %2920 = vmatpush.msra.mxu0 0.0
    %2921 = vmatpush.msra.mxu0 0.0
    %2922 = vmatpush.msra.mxu0 %v2711
    %2923 = vmatpush.msra.mxu0 %v801
    %2924 = vmatpush.msra.mxu0 %v800
    %2925 = vmatpush.msra.mxu0 %v799
    %2926 = vmatpush.msra.mxu0 %v798
    %2927 = vmatpush.msra.mxu0 %v797
    %2928 = vmatpush.msra.mxu0 %v796
    %2929 = vmatpush.msra.mxu0 %v795
    %2930 = vmatpush.msra.mxu0 %v794
    %2931 = vmatpush.msra.mxu0 %v793
    %2932 = vmatpush.msra.mxu0 %v792
    %2933 = vmatpush.msra.mxu0 %v791
    %2934 = vmatpush.msra.mxu0 %v790
    %2935 = vmatpush.msra.mxu0 %v789
    %2936 = vmatmul.f32.gmra.mxu0 %v2706
    %v2937 = vpop.f32.mrf.mxu0
    %v2938 = vadd.f32 %v2915, %v2937
    %2939 = vmatmul.f32.gmra.mxu0 %v2708
    %v2940 = vpop.f32.mrf.mxu0
    %v2941 = vadd.f32 %v2918, %v2940
    %2942 = vdwg.mxu0
    %v2945 = vrot.slane %v2938, 1
    %v2946 = vrot.slane %v2941, 1
    %v2949 = vmax.f32 %v2938, %v2945
    %v2950 = vmax.f32 %v2941, %v2946
    %v2953 = vrot.slane %v2949, 1
    %v2954 = vrot.slane %v2950, 1
    %v2957 = vsel %vm825, %v2949, %v2953
    %v2958 = vsel %vm825, %v2950, %v2954
    %2961 = vrot.lane.b32.xlu0 %v2957, 108
    %v2962 = vpop.permute.xlu0 %2961
    %2963 = vrot.lane.b32.xlu0 %v2958, 108
    %v2964 = vpop.permute.xlu0 %2963
    %vm2967 = vcmask 654336
    %v2968 = vsel %vm2967, %v2962, 0.0
    %v2969 = vsel %vm2967, %v2964, 0.0
    %v2970 = vmax.f32 %v2957, %v2968
    %v2971 = vmax.f32 %v2958, %v2969
    %v2972 = vmax.f32 %v2970, 0.0
    %v2973 = vmax.f32 %v2971, 0.0
    %v2976 = vrot.slane %v2973, 7
    %vm2977 = vcmask 1041409
    %v2978 = vsel %vm2977, %v2976, %v2972
    %2980 = vrot.lane.b32.xlu0 %v2978, 108
    %v2981 = vpop.permute.xlu0 %2980
    %v2983 = vrot.slane %v2972, 1
    %v2984 = vsel %vm2977, %v2973, %v2983
    %2985 = vrot.lane.b32.xlu0 %v2984, 40
    %v2986 = vpop.permute.xlu0 %2985
    %2988 = vrot.lane.b32.xlu0 %v2984, 20
    %v2989 = vpop.permute.xlu0 %2988
    %vm2991 = vcmask 162816
    %v2992 = vsel %vm2991, %v2978, %v2981
    %vm2993 = vcmask 326656
    %v2994 = vsel %vm2993, %v2992, %v2986
    %v2995 = vsel %vm2621, %v2994, %v2989
    %v2997 = vperm.slane %v814, 0
    %v3000 = vsel %vm2967, %v2995, 0
    %3002 = vmatpush.msra.mxu0 0.0
    %3003 = vmatpush.msra.mxu0 0.0
    %3004 = vmatpush.msra.mxu0 0.0
    %3005 = vmatpush.msra.mxu0 0.0
    %3006 = vmatpush.msra.mxu0 0.0
    %3007 = vmatpush.msra.mxu0 0.0
    %3008 = vmatpush.msra.mxu0 %v813
    %3009 = vmatpush.msra.mxu0 %v812
    %3010 = vmatpush.msra.mxu0 %v811
    %3011 = vmatpush.msra.mxu0 %v810
    %3012 = vmatpush.msra.mxu0 %v809
    %3013 = vmatpush.msra.mxu0 %v808
    %3014 = vmatpush.msra.mxu0 %v807
    %3015 = vmatpush.msra.mxu0 %v806
    %3016 = vmatpush.msra.mxu0 %v805
    %3017 = vmatpush.msra.mxu0 %v804
    %3018 = vmatmul.f32.gmra.mxu0 %v3000
    %v3019 = vpop.f32.mrf.mxu0
    %v3020 = vadd.f32 %v2997, %v3019
    %3021 = vdwg.mxu0
    %v3022 = vmax.f32 %v3020, 0.0
    %v3024 = vperm.slane %v815, 0
    %v3026 = vmul.f32 %v3022, %v3024
    %vm3027 = vcmask 123904
    %v3028 = vsel %vm3027, %v3026, 0.0
    %3029 = vadd.xlane.f32.xlu0 %v3028
    %v3030 = vpop.xlane.xlu0 %3029
    %v3032 = vperm.slane %v816, 0
    %v3034 = vadd.f32 %v3030, %v3032
    %v3035 = vxor.u32 %v3034, 2147483648
    %v3036 = vmul.f32 %v3035, 1.442695
    %v3037 = vpow.pop %v3036
    %v3038 = vadd.f32 %v3037, 1.0
    %v3039 = vrcp.pop %v3038
    %v3040 = vmul.f32 %v3038, %v3039
    %v3041 = vsub.f32 1.0, %v3040
    %v3042 = vmul.f32 %v3039, %v3041
    %v3043 = vadd.f32 %v3039, %v3042
    %vm3044 = vweird.f32 %v3038
    %vm3045 = vweird.f32 %v3039
    %vm3046 = vmor %vm3044, %vm3045
    %v3047 = vsel %vm3046, %v3039, %v3043
    %v3048 = vand.u32 2147483647, %v3038
    %vm3049 = vcmp.eq.f32.partialorder %v3048, 8.507059e+37
    %v3050 = vand.u32 %v3038, 2147483648
    %v3051 = vor.u32 1.1754944e-38, %v3050
    %v3052 = vsel %vm3049, %v3051, %v3047
    %v3053 = vmul.f32 1.0, %v3052
    %vm3054 = vcmask 1024
    %3055 = vst.msk [vmem:[%s15] sm:$0x3] %vm3054, %v3053
    %v3056 = vrot.slane %v1676, 7
    %v3057 = vrot.slane %v1677, 7
    %v3058 = vsel %vm825, %v3056, %v3057
    %v3059 = vrot.slane %v1678, 7
    %v3060 = vrot.slane %v1679, 7
    %v3061 = vsel %vm825, %v3059, %v3060
    %v3066 = vsel %vm825, 0.0, %v3056
    %v3067 = vsel %vm825, 0.0, %v3059
    %v3068 = vmul.f32 %v1676, 2.0
    %v3069 = vmul.f32 %v1677, 2.0
    %v3070 = vmul.f32 %v1678, 2.0
    %v3071 = vmul.f32 %v1679, 2.0
    %v3072 = vadd.f32 %v3066, %v3068
    %v3073 = vadd.f32 %v3058, %v3069
    %v3074 = vadd.f32 %v3067, %v3070
    %v3075 = vadd.f32 %v3061, %v3071
    %v3076 = vadd.f32 %v3072, %v1690
    %v3077 = vadd.f32 %v3073, %v1698
    %v3078 = vadd.f32 %v3074, %v1693
    %v3079 = vadd.f32 %v3075, %v1699
    %v3080 = vsub.f32 %v1690, %v3066
    %v3081 = vsub.f32 %v1698, %v3058
    %v3082 = vsub.f32 %v1693, %v3067
    %v3083 = vsub.f32 %v1699, %v3061
    %3088 = vrot.lane.b32.xlu0 %v3076, 120
    %v3089 = vpop.permute.xlu0 %3088
    %3090 = vrot.lane.b32.xlu0 %v3077, 120
    %v3091 = vpop.permute.xlu0 %3090
    %3092 = vrot.lane.b32.xlu0 %v3078, 120
    %v3093 = vpop.permute.xlu0 %3092
    %3094 = vrot.lane.b32.xlu0 %v3079, 120
    %v3095 = vpop.permute.xlu0 %3094
    %v3100 = vsel %vm883, %v3089, 0.0
    %v3101 = vsel %vm883, %v3091, 0.0
    %v3102 = vsel %vm883, %v3093, 0.0
    %v3103 = vsel %vm883, %v3095, 0.0
    %3104 = vrot.lane.b32.xlu0 %v3076, 8
    %v3105 = vpop.permute.xlu0 %3104
    %3106 = vrot.lane.b32.xlu0 %v3077, 8
    %v3107 = vpop.permute.xlu0 %3106
    %3108 = vrot.lane.b32.xlu0 %v3078, 8
    %v3109 = vpop.permute.xlu0 %3108
    %3110 = vrot.lane.b32.xlu0 %v3079, 8
    %v3111 = vpop.permute.xlu0 %3110
    %v3116 = vsel %vm900, 0.0, %v3105
    %v3117 = vsel %vm900, 0.0, %v3107
    %v3118 = vsel %vm900, 0.0, %v3109
    %v3119 = vsel %vm900, 0.0, %v3111
    %v3120 = vsub.f32 %v3100, %v3116
    %v3121 = vsub.f32 %v3101, %v3117
    %v3122 = vsub.f32 %v3102, %v3118
    %v3123 = vsub.f32 %v3103, %v3119
    %v3124 = vmul.f32 %v3120, 0.125
    %v3125 = vmul.f32 %v3121, 0.125
    %v3126 = vmul.f32 %v3122, 0.125
    %v3127 = vmul.f32 %v3123, 0.125
    %3132 = vrot.lane.b32.xlu0 %v3080, 8
    %v3133 = vpop.permute.xlu0 %3132
    %3134 = vrot.lane.b32.xlu0 %v3081, 8
    %v3135 = vpop.permute.xlu0 %3134
    %3136 = vrot.lane.b32.xlu0 %v3082, 8
    %v3137 = vpop.permute.xlu0 %3136
    %3138 = vrot.lane.b32.xlu0 %v3083, 8
    %v3139 = vpop.permute.xlu0 %3138
    %v3144 = vsel %vm900, 0.0, %v3133
    %v3145 = vsel %vm900, 0.0, %v3135
    %v3146 = vsel %vm900, 0.0, %v3137
    %v3147 = vsel %vm900, 0.0, %v3139
    %v3148 = vmul.f32 %v3080, 2.0
    %v3149 = vmul.f32 %v3081, 2.0
    %v3150 = vmul.f32 %v3082, 2.0
    %v3151 = vmul.f32 %v3083, 2.0
    %v3152 = vadd.f32 %v3144, %v3148
    %v3153 = vadd.f32 %v3145, %v3149
    %v3154 = vadd.f32 %v3146, %v3150
    %v3155 = vadd.f32 %v3147, %v3151
    %3156 = vrot.lane.b32.xlu0 %v3080, 120
    %v3157 = vpop.permute.xlu0 %3156
    %3158 = vrot.lane.b32.xlu0 %v3081, 120
    %v3159 = vpop.permute.xlu0 %3158
    %3160 = vrot.lane.b32.xlu0 %v3082, 120
    %v3161 = vpop.permute.xlu0 %3160
    %3162 = vrot.lane.b32.xlu0 %v3083, 120
    %v3163 = vpop.permute.xlu0 %3162
    %v3168 = vsel %vm883, %v3157, 0.0
    %v3169 = vsel %vm883, %v3159, 0.0
    %v3170 = vsel %vm883, %v3161, 0.0
    %v3171 = vsel %vm883, %v3163, 0.0
    %v3172 = vadd.f32 %v3152, %v3168
    %v3173 = vadd.f32 %v3153, %v3169
    %v3174 = vadd.f32 %v3154, %v3170
    %v3175 = vadd.f32 %v3155, %v3171
    %v3176 = vmul.f32 %v3172, 0.125
    %v3177 = vmul.f32 %v3173, 0.125
    %v3178 = vmul.f32 %v3174, 0.125
    %v3179 = vmul.f32 %v3175, 0.125
    %v3180 = vmax.f32 %v3066, %v1676
    %v3181 = vmax.f32 %v3058, %v1677
    %v3182 = vmax.f32 %v3067, %v1678
    %v3183 = vmax.f32 %v3061, %v1679
    %v3184 = vmax.f32 %v3180, %v1690
    %v3185 = vmax.f32 %v3181, %v1698
    %v3186 = vmax.f32 %v3182, %v1693
    %v3187 = vmax.f32 %v3183, %v1699
    %3192 = vrot.lane.b32.xlu0 %v3184, 120
    %v3193 = vpop.permute.xlu0 %3192
    %3194 = vrot.lane.b32.xlu0 %v3185, 120
    %v3195 = vpop.permute.xlu0 %3194
    %3196 = vrot.lane.b32.xlu0 %v3186, 120
    %v3197 = vpop.permute.xlu0 %3196
    %3198 = vrot.lane.b32.xlu0 %v3187, 120
    %v3199 = vpop.permute.xlu0 %3198
    %v3204 = vsel %vm883, %v3193, 0.0
    %v3205 = vsel %vm883, %v3195, 0.0
    %v3206 = vsel %vm883, %v3197, 0.0
    %v3207 = vsel %vm883, %v3199, 0.0
    %v3208 = vmax.f32 %v3204, %v3184
    %v3209 = vmax.f32 %v3205, %v3185
    %v3210 = vmax.f32 %v3206, %v3186
    %v3211 = vmax.f32 %v3207, %v3187
    %3212 = vrot.lane.b32.xlu0 %v3184, 8
    %v3213 = vpop.permute.xlu0 %3212
    %3214 = vrot.lane.b32.xlu0 %v3185, 8
    %v3215 = vpop.permute.xlu0 %3214
    %3216 = vrot.lane.b32.xlu0 %v3186, 8
    %v3217 = vpop.permute.xlu0 %3216
    %3218 = vrot.lane.b32.xlu0 %v3187, 8
    %v3219 = vpop.permute.xlu0 %3218
    %v3224 = vsel %vm900, 0.0, %v3213
    %v3225 = vsel %vm900, 0.0, %v3215
    %v3226 = vsel %vm900, 0.0, %v3217
    %v3227 = vsel %vm900, 0.0, %v3219
    %v3228 = vmax.f32 %v3208, %v3224
    %v3229 = vmax.f32 %v3209, %v3225
    %v3230 = vmax.f32 %v3210, %v3226
    %v3231 = vmax.f32 %v3211, %v3227
    %3232 = vmatpush.msra.mxu0 %v98
    %3233 = vmatpush.msra.mxu0 %v97
    %3234 = vmatpush.msra.mxu0 %v96
    %3235 = vmatpush.msra.mxu0 %v95
    %3236 = vmatpush.msra.mxu0 %v94
    %3237 = vmatpush.msra.mxu0 %v93
    %3238 = vmatpush.msra.mxu0 %v92
    %3239 = vmatpush.msra.mxu0 %v91
    %3240 = vmatpush.msra.mxu0 %v90
    %3241 = vmatpush.msra.mxu0 %v89
    %3242 = vmatpush.msra.mxu0 %v88
    %3243 = vmatpush.msra.mxu0 %v87
    %3244 = vmatpush.msra.mxu0 %v86
    %3245 = vmatpush.msra.mxu0 %v85
    %3246 = vmatpush.msra.mxu0 %v84
    %3247 = vmatpush.msra.mxu0 %v83
    %3248 = vmatmul.f32.gmra.mxu0 %v3228
    %v3249 = vpop.f32.mrf.mxu0
    %v3250 = vadd.f32 0.0, %v3249
    %3251 = vmatmul.f32.gmra.mxu0 %v3229
    %v3252 = vpop.f32.mrf.mxu0
    %v3253 = vadd.f32 0.0, %v3252
    %3254 = vmatmul.f32.gmra.mxu0 %v3230
    %v3255 = vpop.f32.mrf.mxu0
    %v3256 = vadd.f32 0.0, %v3255
    %3257 = vmatmul.f32.gmra.mxu0 %v3231
    %v3258 = vpop.f32.mrf.mxu0
    %v3259 = vadd.f32 0.0, %v3258
    %3260 = vdwg.mxu0
    %3261 = vmatpush.msra.mxu0 %v159
    %3262 = vmatpush.msra.mxu0 %v155
    %3263 = vmatpush.msra.mxu0 %v151
    %3264 = vmatpush.msra.mxu0 %v147
    %3265 = vmatpush.msra.mxu0 %v143
    %3266 = vmatpush.msra.mxu0 %v139
    %3267 = vmatpush.msra.mxu0 %v135
    %3268 = vmatpush.msra.mxu0 %v131
    %3269 = vmatpush.msra.mxu0 %v127
    %3270 = vmatpush.msra.mxu0 %v123
    %3271 = vmatpush.msra.mxu0 %v119
    %3272 = vmatpush.msra.mxu0 %v115
    %3273 = vmatpush.msra.mxu0 %v111
    %3274 = vmatpush.msra.mxu0 %v107
    %3275 = vmatpush.msra.mxu0 %v103
    %3276 = vmatpush.msra.mxu0 %v99
    %3277 = vmatmul.f32.gmra.mxu0 %v1676
    %v3278 = vpop.f32.mrf.mxu0
    %v3279 = vadd.f32 %v1047, %v3278
    %3280 = vmatmul.f32.gmra.mxu0 %v1677
    %v3281 = vpop.f32.mrf.mxu0
    %v3282 = vadd.f32 %v1047, %v3281
    %3283 = vmatmul.f32.gmra.mxu0 %v1678
    %v3284 = vpop.f32.mrf.mxu0
    %v3285 = vadd.f32 %v1047, %v3284
    %3286 = vmatmul.f32.gmra.mxu0 %v1679
    %v3287 = vpop.f32.mrf.mxu0
    %v3288 = vadd.f32 %v1047, %v3287
    %3289 = vdwg.mxu0
    %3290 = vmatpush.msra.mxu0 %v223
    %3291 = vmatpush.msra.mxu0 %v219
    %3292 = vmatpush.msra.mxu0 %v215
    %3293 = vmatpush.msra.mxu0 %v211
    %3294 = vmatpush.msra.mxu0 %v207
    %3295 = vmatpush.msra.mxu0 %v203
    %3296 = vmatpush.msra.mxu0 %v199
    %3297 = vmatpush.msra.mxu0 %v195
    %3298 = vmatpush.msra.mxu0 %v191
    %3299 = vmatpush.msra.mxu0 %v187
    %3300 = vmatpush.msra.mxu0 %v183
    %3301 = vmatpush.msra.mxu0 %v179
    %3302 = vmatpush.msra.mxu0 %v175
    %3303 = vmatpush.msra.mxu0 %v171
    %3304 = vmatpush.msra.mxu0 %v167
    %3305 = vmatpush.msra.mxu0 %v163
    %3306 = vmatmul.f32.gmra.mxu0 %v3124
    %v3307 = vpop.f32.mrf.mxu0
    %v3308 = vadd.f32 %v3279, %v3307
    %3309 = vmatmul.f32.gmra.mxu0 %v3125
    %v3310 = vpop.f32.mrf.mxu0
    %v3311 = vadd.f32 %v3282, %v3310
    %3312 = vmatmul.f32.gmra.mxu0 %v3126
    %v3313 = vpop.f32.mrf.mxu0
    %v3314 = vadd.f32 %v3285, %v3313
    %3315 = vmatmul.f32.gmra.mxu0 %v3127
    %v3316 = vpop.f32.mrf.mxu0
    %v3317 = vadd.f32 %v3288, %v3316
    %3318 = vdwg.mxu0
    %3319 = vmatpush.msra.mxu0 %v287
    %3320 = vmatpush.msra.mxu0 %v283
    %3321 = vmatpush.msra.mxu0 %v279
    %3322 = vmatpush.msra.mxu0 %v275
    %3323 = vmatpush.msra.mxu0 %v271
    %3324 = vmatpush.msra.mxu0 %v267
    %3325 = vmatpush.msra.mxu0 %v263
    %3326 = vmatpush.msra.mxu0 %v259
    %3327 = vmatpush.msra.mxu0 %v255
    %3328 = vmatpush.msra.mxu0 %v251
    %3329 = vmatpush.msra.mxu0 %v247
    %3330 = vmatpush.msra.mxu0 %v243
    %3331 = vmatpush.msra.mxu0 %v239
    %3332 = vmatpush.msra.mxu0 %v235
    %3333 = vmatpush.msra.mxu0 %v231
    %3334 = vmatpush.msra.mxu0 %v227
    %3335 = vmatmul.f32.gmra.mxu0 %v3176
    %v3336 = vpop.f32.mrf.mxu0
    %v3337 = vadd.f32 %v3308, %v3336
    %3338 = vmatmul.f32.gmra.mxu0 %v3177
    %v3339 = vpop.f32.mrf.mxu0
    %v3340 = vadd.f32 %v3311, %v3339
    %3341 = vmatmul.f32.gmra.mxu0 %v3178
    %v3342 = vpop.f32.mrf.mxu0
    %v3343 = vadd.f32 %v3314, %v3342
    %3344 = vmatmul.f32.gmra.mxu0 %v3179
    %v3345 = vpop.f32.mrf.mxu0
    %v3346 = vadd.f32 %v3317, %v3345
    %3347 = vdwg.mxu0
    %3348 = vmatpush.msra.mxu0 %v160
    %3349 = vmatpush.msra.mxu0 %v156
    %3350 = vmatpush.msra.mxu0 %v152
    %3351 = vmatpush.msra.mxu0 %v148
    %3352 = vmatpush.msra.mxu0 %v144
    %3353 = vmatpush.msra.mxu0 %v140
    %3354 = vmatpush.msra.mxu0 %v136
    %3355 = vmatpush.msra.mxu0 %v132
    %3356 = vmatpush.msra.mxu0 %v128
    %3357 = vmatpush.msra.mxu0 %v124
    %3358 = vmatpush.msra.mxu0 %v120
    %3359 = vmatpush.msra.mxu0 %v116
    %3360 = vmatpush.msra.mxu0 %v112
    %3361 = vmatpush.msra.mxu0 %v108
    %3362 = vmatpush.msra.mxu0 %v104
    %3363 = vmatpush.msra.mxu0 %v100
    %3364 = vmatmul.f32.gmra.mxu0 %v1676
    %v3365 = vpop.f32.mrf.mxu0
    %v3366 = vadd.f32 %v1048, %v3365
    %3367 = vmatmul.f32.gmra.mxu0 %v1677
    %v3368 = vpop.f32.mrf.mxu0
    %v3369 = vadd.f32 %v1048, %v3368
    %3370 = vmatmul.f32.gmra.mxu0 %v1678
    %v3371 = vpop.f32.mrf.mxu0
    %v3372 = vadd.f32 %v1048, %v3371
    %3373 = vmatmul.f32.gmra.mxu0 %v1679
    %v3374 = vpop.f32.mrf.mxu0
    %v3375 = vadd.f32 %v1048, %v3374
    %3376 = vdwg.mxu0
    %3377 = vmatpush.msra.mxu0 %v224
    %3378 = vmatpush.msra.mxu0 %v220
    %3379 = vmatpush.msra.mxu0 %v216
    %3380 = vmatpush.msra.mxu0 %v212
    %3381 = vmatpush.msra.mxu0 %v208
    %3382 = vmatpush.msra.mxu0 %v204
    %3383 = vmatpush.msra.mxu0 %v200
    %3384 = vmatpush.msra.mxu0 %v196
    %3385 = vmatpush.msra.mxu0 %v192
    %3386 = vmatpush.msra.mxu0 %v188
    %3387 = vmatpush.msra.mxu0 %v184
    %3388 = vmatpush.msra.mxu0 %v180
    %3389 = vmatpush.msra.mxu0 %v176
    %3390 = vmatpush.msra.mxu0 %v172
    %3391 = vmatpush.msra.mxu0 %v168
    %3392 = vmatpush.msra.mxu0 %v164
    %3393 = vmatmul.f32.gmra.mxu0 %v3124
    %v3394 = vpop.f32.mrf.mxu0
    %v3395 = vadd.f32 %v3366, %v3394
    %3396 = vmatmul.f32.gmra.mxu0 %v3125
    %v3397 = vpop.f32.mrf.mxu0
    %v3398 = vadd.f32 %v3369, %v3397
    %3399 = vmatmul.f32.gmra.mxu0 %v3126
    %v3400 = vpop.f32.mrf.mxu0
    %v3401 = vadd.f32 %v3372, %v3400
    %3402 = vmatmul.f32.gmra.mxu0 %v3127
    %v3403 = vpop.f32.mrf.mxu0
    %v3404 = vadd.f32 %v3375, %v3403
    %3405 = vdwg.mxu0
    %3406 = vmatpush.msra.mxu0 %v288
    %3407 = vmatpush.msra.mxu0 %v284
    %3408 = vmatpush.msra.mxu0 %v280
    %3409 = vmatpush.msra.mxu0 %v276
    %3410 = vmatpush.msra.mxu0 %v272
    %3411 = vmatpush.msra.mxu0 %v268
    %3412 = vmatpush.msra.mxu0 %v264
    %3413 = vmatpush.msra.mxu0 %v260
    %3414 = vmatpush.msra.mxu0 %v256
    %3415 = vmatpush.msra.mxu0 %v252
    %3416 = vmatpush.msra.mxu0 %v248
    %3417 = vmatpush.msra.mxu0 %v244
    %3418 = vmatpush.msra.mxu0 %v240
    %3419 = vmatpush.msra.mxu0 %v236
    %3420 = vmatpush.msra.mxu0 %v232
    %3421 = vmatpush.msra.mxu0 %v228
    %3422 = vmatmul.f32.gmra.mxu0 %v3176
    %v3423 = vpop.f32.mrf.mxu0
    %v3424 = vadd.f32 %v3395, %v3423
    %3425 = vmatmul.f32.gmra.mxu0 %v3177
    %v3426 = vpop.f32.mrf.mxu0
    %v3427 = vadd.f32 %v3398, %v3426
    %3428 = vmatmul.f32.gmra.mxu0 %v3178
    %v3429 = vpop.f32.mrf.mxu0
    %v3430 = vadd.f32 %v3401, %v3429
    %3431 = vmatmul.f32.gmra.mxu0 %v3179
    %v3432 = vpop.f32.mrf.mxu0
    %v3433 = vadd.f32 %v3404, %v3432
    %3434 = vdwg.mxu0
    %3435 = vmatpush.msra.mxu0 %v161
    %3436 = vmatpush.msra.mxu0 %v157
    %3437 = vmatpush.msra.mxu0 %v153
    %3438 = vmatpush.msra.mxu0 %v149
    %3439 = vmatpush.msra.mxu0 %v145
    %3440 = vmatpush.msra.mxu0 %v141
    %3441 = vmatpush.msra.mxu0 %v137
    %3442 = vmatpush.msra.mxu0 %v133
    %3443 = vmatpush.msra.mxu0 %v129
    %3444 = vmatpush.msra.mxu0 %v125
    %3445 = vmatpush.msra.mxu0 %v121
    %3446 = vmatpush.msra.mxu0 %v117
    %3447 = vmatpush.msra.mxu0 %v113
    %3448 = vmatpush.msra.mxu0 %v109
    %3449 = vmatpush.msra.mxu0 %v105
    %3450 = vmatpush.msra.mxu0 %v101
    %3451 = vmatmul.f32.gmra.mxu0 %v1676
    %v3452 = vpop.f32.mrf.mxu0
    %v3453 = vadd.f32 %v1049, %v3452
    %3454 = vmatmul.f32.gmra.mxu0 %v1677
    %v3455 = vpop.f32.mrf.mxu0
    %v3456 = vadd.f32 %v1049, %v3455
    %3457 = vmatmul.f32.gmra.mxu0 %v1678
    %v3458 = vpop.f32.mrf.mxu0
    %v3459 = vadd.f32 %v1049, %v3458
    %3460 = vmatmul.f32.gmra.mxu0 %v1679
    %v3461 = vpop.f32.mrf.mxu0
    %v3462 = vadd.f32 %v1049, %v3461
    %3463 = vdwg.mxu0
    %3464 = vmatpush.msra.mxu0 %v225
    %3465 = vmatpush.msra.mxu0 %v221
    %3466 = vmatpush.msra.mxu0 %v217
    %3467 = vmatpush.msra.mxu0 %v213
    %3468 = vmatpush.msra.mxu0 %v209
    %3469 = vmatpush.msra.mxu0 %v205
    %3470 = vmatpush.msra.mxu0 %v201
    %3471 = vmatpush.msra.mxu0 %v197
    %3472 = vmatpush.msra.mxu0 %v193
    %3473 = vmatpush.msra.mxu0 %v189
    %3474 = vmatpush.msra.mxu0 %v185
    %3475 = vmatpush.msra.mxu0 %v181
    %3476 = vmatpush.msra.mxu0 %v177
    %3477 = vmatpush.msra.mxu0 %v173
    %3478 = vmatpush.msra.mxu0 %v169
    %3479 = vmatpush.msra.mxu0 %v165
    %3480 = vmatmul.f32.gmra.mxu0 %v3124
    %v3481 = vpop.f32.mrf.mxu0
    %v3482 = vadd.f32 %v3453, %v3481
    %3483 = vmatmul.f32.gmra.mxu0 %v3125
    %v3484 = vpop.f32.mrf.mxu0
    %v3485 = vadd.f32 %v3456, %v3484
    %3486 = vmatmul.f32.gmra.mxu0 %v3126
    %v3487 = vpop.f32.mrf.mxu0
    %v3488 = vadd.f32 %v3459, %v3487
    %3489 = vmatmul.f32.gmra.mxu0 %v3127
    %v3490 = vpop.f32.mrf.mxu0
    %v3491 = vadd.f32 %v3462, %v3490
    %3492 = vdwg.mxu0
    %3493 = vmatpush.msra.mxu0 %v289
    %3494 = vmatpush.msra.mxu0 %v285
    %3495 = vmatpush.msra.mxu0 %v281
    %3496 = vmatpush.msra.mxu0 %v277
    %3497 = vmatpush.msra.mxu0 %v273
    %3498 = vmatpush.msra.mxu0 %v269
    %3499 = vmatpush.msra.mxu0 %v265
    %3500 = vmatpush.msra.mxu0 %v261
    %3501 = vmatpush.msra.mxu0 %v257
    %3502 = vmatpush.msra.mxu0 %v253
    %3503 = vmatpush.msra.mxu0 %v249
    %3504 = vmatpush.msra.mxu0 %v245
    %3505 = vmatpush.msra.mxu0 %v241
    %3506 = vmatpush.msra.mxu0 %v237
    %3507 = vmatpush.msra.mxu0 %v233
    %3508 = vmatpush.msra.mxu0 %v229
    %3509 = vmatmul.f32.gmra.mxu0 %v3176
    %v3510 = vpop.f32.mrf.mxu0
    %v3511 = vadd.f32 %v3482, %v3510
    %3512 = vmatmul.f32.gmra.mxu0 %v3177
    %v3513 = vpop.f32.mrf.mxu0
    %v3514 = vadd.f32 %v3485, %v3513
    %3515 = vmatmul.f32.gmra.mxu0 %v3178
    %v3516 = vpop.f32.mrf.mxu0
    %v3517 = vadd.f32 %v3488, %v3516
    %3518 = vmatmul.f32.gmra.mxu0 %v3179
    %v3519 = vpop.f32.mrf.mxu0
    %v3520 = vadd.f32 %v3491, %v3519
    %3521 = vdwg.mxu0
    %3522 = vmatpush.msra.mxu0 %v162
    %3523 = vmatpush.msra.mxu0 %v158
    %3524 = vmatpush.msra.mxu0 %v154
    %3525 = vmatpush.msra.mxu0 %v150
    %3526 = vmatpush.msra.mxu0 %v146
    %3527 = vmatpush.msra.mxu0 %v142
    %3528 = vmatpush.msra.mxu0 %v138
    %3529 = vmatpush.msra.mxu0 %v134
    %3530 = vmatpush.msra.mxu0 %v130
    %3531 = vmatpush.msra.mxu0 %v126
    %3532 = vmatpush.msra.mxu0 %v122
    %3533 = vmatpush.msra.mxu0 %v118
    %3534 = vmatpush.msra.mxu0 %v114
    %3535 = vmatpush.msra.mxu0 %v110
    %3536 = vmatpush.msra.mxu0 %v106
    %3537 = vmatpush.msra.mxu0 %v102
    %3538 = vmatmul.f32.gmra.mxu0 %v1676
    %v3539 = vpop.f32.mrf.mxu0
    %v3540 = vadd.f32 %v1050, %v3539
    %3541 = vmatmul.f32.gmra.mxu0 %v1677
    %v3542 = vpop.f32.mrf.mxu0
    %v3543 = vadd.f32 %v1050, %v3542
    %3544 = vmatmul.f32.gmra.mxu0 %v1678
    %v3545 = vpop.f32.mrf.mxu0
    %v3546 = vadd.f32 %v1050, %v3545
    %3547 = vmatmul.f32.gmra.mxu0 %v1679
    %v3548 = vpop.f32.mrf.mxu0
    %v3549 = vadd.f32 %v1050, %v3548
    %3550 = vdwg.mxu0
    %3551 = vmatpush.msra.mxu0 %v226
    %3552 = vmatpush.msra.mxu0 %v222
    %3553 = vmatpush.msra.mxu0 %v218
    %3554 = vmatpush.msra.mxu0 %v214
    %3555 = vmatpush.msra.mxu0 %v210
    %3556 = vmatpush.msra.mxu0 %v206
    %3557 = vmatpush.msra.mxu0 %v202
    %3558 = vmatpush.msra.mxu0 %v198
    %3559 = vmatpush.msra.mxu0 %v194
    %3560 = vmatpush.msra.mxu0 %v190
    %3561 = vmatpush.msra.mxu0 %v186
    %3562 = vmatpush.msra.mxu0 %v182
    %3563 = vmatpush.msra.mxu0 %v178
    %3564 = vmatpush.msra.mxu0 %v174
    %3565 = vmatpush.msra.mxu0 %v170
    %3566 = vmatpush.msra.mxu0 %v166
    %3567 = vmatmul.f32.gmra.mxu0 %v3124
    %v3568 = vpop.f32.mrf.mxu0
    %v3569 = vadd.f32 %v3540, %v3568
    %3570 = vmatmul.f32.gmra.mxu0 %v3125
    %v3571 = vpop.f32.mrf.mxu0
    %v3572 = vadd.f32 %v3543, %v3571
    %3573 = vmatmul.f32.gmra.mxu0 %v3126
    %v3574 = vpop.f32.mrf.mxu0
    %v3575 = vadd.f32 %v3546, %v3574
    %3576 = vmatmul.f32.gmra.mxu0 %v3127
    %v3577 = vpop.f32.mrf.mxu0
    %v3578 = vadd.f32 %v3549, %v3577
    %3579 = vdwg.mxu0
    %3580 = vmatpush.msra.mxu0 %v290
    %3581 = vmatpush.msra.mxu0 %v286
    %3582 = vmatpush.msra.mxu0 %v282
    %3583 = vmatpush.msra.mxu0 %v278
    %3584 = vmatpush.msra.mxu0 %v274
    %3585 = vmatpush.msra.mxu0 %v270
    %3586 = vmatpush.msra.mxu0 %v266
    %3587 = vmatpush.msra.mxu0 %v262
    %3588 = vmatpush.msra.mxu0 %v258
    %3589 = vmatpush.msra.mxu0 %v254
    %3590 = vmatpush.msra.mxu0 %v250
    %3591 = vmatpush.msra.mxu0 %v246
    %3592 = vmatpush.msra.mxu0 %v242
    %3593 = vmatpush.msra.mxu0 %v238
    %3594 = vmatpush.msra.mxu0 %v234
    %3595 = vmatpush.msra.mxu0 %v230
    %3596 = vmatmul.f32.gmra.mxu0 %v3176
    %v3597 = vpop.f32.mrf.mxu0
    %v3598 = vadd.f32 %v3569, %v3597
    %3599 = vmatmul.f32.gmra.mxu0 %v3177
    %v3600 = vpop.f32.mrf.mxu0
    %v3601 = vadd.f32 %v3572, %v3600
    %3602 = vmatmul.f32.gmra.mxu0 %v3178
    %v3603 = vpop.f32.mrf.mxu0
    %v3604 = vadd.f32 %v3575, %v3603
    %3605 = vmatmul.f32.gmra.mxu0 %v3179
    %v3606 = vpop.f32.mrf.mxu0
    %v3607 = vadd.f32 %v3578, %v3606
    %3608 = vdwg.mxu0
    %v3609 = vmax.f32 %v3337, 0.0
    %v3610 = vmax.f32 %v3424, 0.0
    %v3611 = vmax.f32 %v3511, 0.0
    %v3612 = vmax.f32 %v3598, 0.0
    %v3613 = vmax.f32 %v3340, 0.0
    %v3614 = vmax.f32 %v3427, 0.0
    %v3615 = vmax.f32 %v3514, 0.0
    %v3616 = vmax.f32 %v3601, 0.0
    %v3617 = vmax.f32 %v3343, 0.0
    %v3618 = vmax.f32 %v3430, 0.0
    %v3619 = vmax.f32 %v3517, 0.0
    %v3620 = vmax.f32 %v3604, 0.0
    %v3621 = vmax.f32 %v3346, 0.0
    %v3622 = vmax.f32 %v3433, 0.0
    %v3623 = vmax.f32 %v3520, 0.0
    %v3624 = vmax.f32 %v3607, 0.0
    %3625 = vmatpush.msra.mxu0 %v307
    %3626 = vmatpush.msra.mxu0 %v306
    %3627 = vmatpush.msra.mxu0 %v305
    %3628 = vmatpush.msra.mxu0 %v304
    %3629 = vmatpush.msra.mxu0 %v303
    %3630 = vmatpush.msra.mxu0 %v302
    %3631 = vmatpush.msra.mxu0 %v301
    %3632 = vmatpush.msra.mxu0 %v300
    %3633 = vmatpush.msra.mxu0 %v299
    %3634 = vmatpush.msra.mxu0 %v298
    %3635 = vmatpush.msra.mxu0 %v297
    %3636 = vmatpush.msra.mxu0 %v296
    %3637 = vmatpush.msra.mxu0 %v295
    %3638 = vmatpush.msra.mxu0 %v294
    %3639 = vmatpush.msra.mxu0 %v293
    %3640 = vmatpush.msra.mxu0 %v292
    %3641 = vmatmul.f32.gmra.mxu0 %v3609
    %v3642 = vpop.f32.mrf.mxu0
    %v3643 = vadd.f32 0.0, %v3642
    %3644 = vmatmul.f32.gmra.mxu0 %v3613
    %v3645 = vpop.f32.mrf.mxu0
    %v3646 = vadd.f32 0.0, %v3645
    %3647 = vmatmul.f32.gmra.mxu0 %v3617
    %v3648 = vpop.f32.mrf.mxu0
    %v3649 = vadd.f32 0.0, %v3648
    %3650 = vmatmul.f32.gmra.mxu0 %v3621
    %v3651 = vpop.f32.mrf.mxu0
    %v3652 = vadd.f32 0.0, %v3651
    %3653 = vdwg.mxu0
    %3654 = vmatpush.msra.mxu0 %v323
    %3655 = vmatpush.msra.mxu0 %v322
    %3656 = vmatpush.msra.mxu0 %v321
    %3657 = vmatpush.msra.mxu0 %v320
    %3658 = vmatpush.msra.mxu0 %v319
    %3659 = vmatpush.msra.mxu0 %v318
    %3660 = vmatpush.msra.mxu0 %v317
    %3661 = vmatpush.msra.mxu0 %v316
    %3662 = vmatpush.msra.mxu0 %v315
    %3663 = vmatpush.msra.mxu0 %v314
    %3664 = vmatpush.msra.mxu0 %v313
    %3665 = vmatpush.msra.mxu0 %v312
    %3666 = vmatpush.msra.mxu0 %v311
    %3667 = vmatpush.msra.mxu0 %v310
    %3668 = vmatpush.msra.mxu0 %v309
    %3669 = vmatpush.msra.mxu0 %v308
    %3670 = vmatmul.f32.gmra.mxu0 %v3610
    %v3671 = vpop.f32.mrf.mxu0
    %v3672 = vadd.f32 %v3643, %v3671
    %3673 = vmatmul.f32.gmra.mxu0 %v3614
    %v3674 = vpop.f32.mrf.mxu0
    %v3675 = vadd.f32 %v3646, %v3674
    %3676 = vmatmul.f32.gmra.mxu0 %v3618
    %v3677 = vpop.f32.mrf.mxu0
    %v3678 = vadd.f32 %v3649, %v3677
    %3679 = vmatmul.f32.gmra.mxu0 %v3622
    %v3680 = vpop.f32.mrf.mxu0
    %v3681 = vadd.f32 %v3652, %v3680
    %3682 = vdwg.mxu0
    %3683 = vmatpush.msra.mxu0 %v339
    %3684 = vmatpush.msra.mxu0 %v338
    %3685 = vmatpush.msra.mxu0 %v337
    %3686 = vmatpush.msra.mxu0 %v336
    %3687 = vmatpush.msra.mxu0 %v335
    %3688 = vmatpush.msra.mxu0 %v334
    %3689 = vmatpush.msra.mxu0 %v333
    %3690 = vmatpush.msra.mxu0 %v332
    %3691 = vmatpush.msra.mxu0 %v331
    %3692 = vmatpush.msra.mxu0 %v330
    %3693 = vmatpush.msra.mxu0 %v329
    %3694 = vmatpush.msra.mxu0 %v328
    %3695 = vmatpush.msra.mxu0 %v327
    %3696 = vmatpush.msra.mxu0 %v326
    %3697 = vmatpush.msra.mxu0 %v325
    %3698 = vmatpush.msra.mxu0 %v324
    %3699 = vmatmul.f32.gmra.mxu0 %v3611
    %v3700 = vpop.f32.mrf.mxu0
    %v3701 = vadd.f32 %v3672, %v3700
    %3702 = vmatmul.f32.gmra.mxu0 %v3615
    %v3703 = vpop.f32.mrf.mxu0
    %v3704 = vadd.f32 %v3675, %v3703
    %3705 = vmatmul.f32.gmra.mxu0 %v3619
    %v3706 = vpop.f32.mrf.mxu0
    %v3707 = vadd.f32 %v3678, %v3706
    %3708 = vmatmul.f32.gmra.mxu0 %v3623
    %v3709 = vpop.f32.mrf.mxu0
    %v3710 = vadd.f32 %v3681, %v3709
    %3711 = vdwg.mxu0
    %3712 = vmatpush.msra.mxu0 %v355
    %3713 = vmatpush.msra.mxu0 %v354
    %3714 = vmatpush.msra.mxu0 %v353
    %3715 = vmatpush.msra.mxu0 %v352
    %3716 = vmatpush.msra.mxu0 %v351
    %3717 = vmatpush.msra.mxu0 %v350
    %3718 = vmatpush.msra.mxu0 %v349
    %3719 = vmatpush.msra.mxu0 %v348
    %3720 = vmatpush.msra.mxu0 %v347
    %3721 = vmatpush.msra.mxu0 %v346
    %3722 = vmatpush.msra.mxu0 %v345
    %3723 = vmatpush.msra.mxu0 %v344
    %3724 = vmatpush.msra.mxu0 %v343
    %3725 = vmatpush.msra.mxu0 %v342
    %3726 = vmatpush.msra.mxu0 %v341
    %3727 = vmatpush.msra.mxu0 %v340
    %3728 = vmatmul.f32.gmra.mxu0 %v3612
    %v3729 = vpop.f32.mrf.mxu0
    %v3730 = vadd.f32 %v3701, %v3729
    %3731 = vmatmul.f32.gmra.mxu0 %v3616
    %v3732 = vpop.f32.mrf.mxu0
    %v3733 = vadd.f32 %v3704, %v3732
    %3734 = vmatmul.f32.gmra.mxu0 %v3620
    %v3735 = vpop.f32.mrf.mxu0
    %v3736 = vadd.f32 %v3707, %v3735
    %3737 = vmatmul.f32.gmra.mxu0 %v3624
    %v3738 = vpop.f32.mrf.mxu0
    %v3739 = vadd.f32 %v3710, %v3738
    %3740 = vdwg.mxu0
    %s3741 = scalar_lea.vmem %s1, 32
    %v3742 = vld [vmem:[%s3741] sm:$0xff]
    %v3743 = vld [vmem:[%s3741 + $0x8] sm:$0xff]
    %v3744 = vld [vmem:[%s3741 + $0x10] sm:$0xff]
    %v3745 = vld [vmem:[%s3741 + $0x18] sm:$0xff]
    %v3746 = vmul.f32 %v3730, %v3742
    %v3747 = vmul.f32 %v3733, %v3743
    %v3748 = vmul.f32 %v3736, %v3744
    %v3749 = vmul.f32 %v3739, %v3745
    %v3750 = vadd.f32 %v1676, %v3746
    %v3751 = vadd.f32 %v1677, %v3747
    %v3752 = vadd.f32 %v1678, %v3748
    %v3753 = vadd.f32 %v1679, %v3749
    %v3758 = vrot.slane %v3750, 7
    %v3759 = vrot.slane %v3751, 7
    %v3760 = vsel %vm825, %v3758, %v3759
    %v3761 = vrot.slane %v3752, 7
    %v3762 = vrot.slane %v3753, 7
    %v3763 = vsel %vm825, %v3761, %v3762
    %v3768 = vsel %vm825, 0.0, %v3758
    %v3769 = vsel %vm825, 0.0, %v3761
    %v3770 = vmax.f32 %v3768, %v3750
    %v3771 = vmax.f32 %v3760, %v3751
    %v3772 = vmax.f32 %v3769, %v3752
    %v3773 = vmax.f32 %v3763, %v3753
    %v3774 = vrot.slane %v3750, 1
    %v3775 = vrot.slane %v3751, 1
    %v3776 = vsel %vm838, %v3774, %v3775
    %v3777 = vrot.slane %v3752, 1
    %v3778 = vrot.slane %v3753, 1
    %v3779 = vsel %vm838, %v3777, %v3778
    %v3784 = vsel %vm838, %v3775, 0.0
    %v3785 = vsel %vm838, %v3778, 0.0
    %v3786 = vmax.f32 %v3770, %v3776
    %v3787 = vmax.f32 %v3771, %v3784
    %v3788 = vmax.f32 %v3772, %v3779
    %v3789 = vmax.f32 %v3773, %v3785
    %3794 = vrot.lane.b32.xlu0 %v3786, 120
    %v3795 = vpop.permute.xlu0 %3794
    %3796 = vrot.lane.b32.xlu0 %v3787, 120
    %v3797 = vpop.permute.xlu0 %3796
    %3798 = vrot.lane.b32.xlu0 %v3788, 120
    %v3799 = vpop.permute.xlu0 %3798
    %3800 = vrot.lane.b32.xlu0 %v3789, 120
    %v3801 = vpop.permute.xlu0 %3800
    %v3806 = vsel %vm883, %v3795, 0.0
    %v3807 = vsel %vm883, %v3797, 0.0
    %v3808 = vsel %vm883, %v3799, 0.0
    %v3809 = vsel %vm883, %v3801, 0.0
    %v3810 = vmax.f32 %v3806, %v3786
    %v3811 = vmax.f32 %v3807, %v3787
    %v3812 = vmax.f32 %v3808, %v3788
    %v3813 = vmax.f32 %v3809, %v3789
    %3814 = vrot.lane.b32.xlu0 %v3786, 8
    %v3815 = vpop.permute.xlu0 %3814
    %3816 = vrot.lane.b32.xlu0 %v3787, 8
    %v3817 = vpop.permute.xlu0 %3816
    %3818 = vrot.lane.b32.xlu0 %v3788, 8
    %v3819 = vpop.permute.xlu0 %3818
    %3820 = vrot.lane.b32.xlu0 %v3789, 8
    %v3821 = vpop.permute.xlu0 %3820
    %v3826 = vsel %vm900, 0.0, %v3815
    %v3827 = vsel %vm900, 0.0, %v3817
    %v3828 = vsel %vm900, 0.0, %v3819
    %v3829 = vsel %vm900, 0.0, %v3821
    %v3830 = vmax.f32 %v3810, %v3826
    %v3831 = vmax.f32 %v3811, %v3827
    %v3832 = vmax.f32 %v3812, %v3828
    %v3833 = vmax.f32 %v3813, %v3829
    %3834 = vmatpush.msra.mxu0 %v98
    %3835 = vmatpush.msra.mxu0 %v97
    %3836 = vmatpush.msra.mxu0 %v96
    %3837 = vmatpush.msra.mxu0 %v95
    %3838 = vmatpush.msra.mxu0 %v94
    %3839 = vmatpush.msra.mxu0 %v93
    %3840 = vmatpush.msra.mxu0 %v92
    %3841 = vmatpush.msra.mxu0 %v91
    %3842 = vmatpush.msra.mxu0 %v90
    %3843 = vmatpush.msra.mxu0 %v89
    %3844 = vmatpush.msra.mxu0 %v88
    %3845 = vmatpush.msra.mxu0 %v87
    %3846 = vmatpush.msra.mxu0 %v86
    %3847 = vmatpush.msra.mxu0 %v85
    %3848 = vmatpush.msra.mxu0 %v84
    %3849 = vmatpush.msra.mxu0 %v83
    %3850 = vmatmul.f32.gmra.mxu0 %v3830
    %v3851 = vpop.f32.mrf.mxu0
    %v3852 = vadd.f32 0.0, %v3851
    %3853 = vmatmul.f32.gmra.mxu0 %v3831
    %v3854 = vpop.f32.mrf.mxu0
    %v3855 = vadd.f32 0.0, %v3854
    %3856 = vmatmul.f32.gmra.mxu0 %v3832
    %v3857 = vpop.f32.mrf.mxu0
    %v3858 = vadd.f32 0.0, %v3857
    %3859 = vmatmul.f32.gmra.mxu0 %v3833
    %v3860 = vpop.f32.mrf.mxu0
    %v3861 = vadd.f32 0.0, %v3860
    %3862 = vdwg.mxu0
    %vm3863 = vcmp.gt.f32.partialorder %v3250, 0.1
    %vm3864 = vcmp.gt.f32.partialorder %v3253, 0.1
    %vm3865 = vcmp.gt.f32.partialorder %v3256, 0.1
    %vm3866 = vcmp.gt.f32.partialorder %v3259, 0.1
    %vm3867 = vcmp.gt.f32.partialorder %v3852, 0.1
    %vm3868 = vcmp.gt.f32.partialorder %v3855, 0.1
    %vm3869 = vcmp.gt.f32.partialorder %v3858, 0.1
    %vm3870 = vcmp.gt.f32.partialorder %v3861, 0.1
    %vm3871 = vmand %vm3863, %vm3867
    %vm3872 = vmand %vm3864, %vm3868
    %vm3873 = vmand %vm3865, %vm3869
    %vm3874 = vmand %vm3866, %vm3870
    %v3875 = vsel %vm3871, 1, 0
    %v3876 = vsel %vm3872, 1, 0
    %v3877 = vsel %vm3873, 1, 0
    %v3878 = vsel %vm3874, 1, 0
    %v3879 = vcvt.s32.f32 %v3875
    %v3880 = vcvt.s32.f32 %v3876
    %v3881 = vcvt.s32.f32 %v3877
    %v3882 = vcvt.s32.f32 %v3878
    %v3883 = vmul.f32 %v3750, %v3879
    %v3884 = vmul.f32 %v3751, %v3880
    %v3885 = vmul.f32 %v3752, %v3881
    %v3886 = vmul.f32 %v3753, %v3882
    %s3887 = scalar_lea.vmem %s14, 32
    %3888 = vst [vmem:[%s3887] sm:$0xff] %v3883
    %3889 = vst [vmem:[%s3887 + $0x8] sm:$0xff] %v3884
    %3890 = vst [vmem:[%s3887 + $0x10] sm:$0xff] %v3885
    %3891 = vst [vmem:[%s3887 + $0x18] sm:$0xff] %v3886
    %v3896 = vrot.slane %v3883, 1
    %v3897 = vrot.slane %v3884, 1
    %v3898 = vsel %vm838, %v3896, %v3897
    %v3899 = vrot.slane %v3885, 1
    %v3900 = vrot.slane %v3886, 1
    %v3901 = vsel %vm838, %v3899, %v3900
    %v3906 = vsel %vm838, %v3897, 0.0
    %v3907 = vsel %vm838, %v3900, 0.0
    %v3910 = vrot.slane %v3898, 1
    %v3911 = vrot.slane %v3906, 1
    %v3912 = vsel %vm838, %v3910, %v3911
    %v3913 = vrot.slane %v3901, 1
    %v3914 = vrot.slane %v3907, 1
    %v3915 = vsel %vm838, %v3913, %v3914
    %v3920 = vsel %vm838, %v3911, 0.0
    %v3921 = vsel %vm838, %v3914, 0.0
    %3922 = vrot.lane.b32.xlu0 %v3883, 120
    %v3923 = vpop.permute.xlu0 %3922
    %3924 = vrot.lane.b32.xlu0 %v3884, 120
    %v3925 = vpop.permute.xlu0 %3924
    %3926 = vrot.lane.b32.xlu0 %v3885, 120
    %v3927 = vpop.permute.xlu0 %3926
    %3928 = vrot.lane.b32.xlu0 %v3886, 120
    %v3929 = vpop.permute.xlu0 %3928
    %v3934 = vsel %vm883, %v3923, 0.0
    %v3935 = vsel %vm883, %v3925, 0.0
    %v3936 = vsel %vm883, %v3927, 0.0
    %v3937 = vsel %vm883, %v3929, 0.0
    %3938 = vrot.lane.b32.xlu0 %v3883, 112
    %v3939 = vpop.permute.xlu0 %3938
    %3940 = vrot.lane.b32.xlu0 %v3884, 112
    %v3941 = vpop.permute.xlu0 %3940
    %3942 = vrot.lane.b32.xlu0 %v3885, 112
    %v3943 = vpop.permute.xlu0 %3942
    %3944 = vrot.lane.b32.xlu0 %v3886, 112
    %v3945 = vpop.permute.xlu0 %3944
    %v3950 = vsel %vm1742, %v3939, 0.0
    %v3951 = vsel %vm1742, %v3941, 0.0
    %v3952 = vsel %vm1742, %v3943, 0.0
    %v3953 = vsel %vm1742, %v3945, 0.0
    %3954 = vrot.lane.b32.xlu0 %v3898, 120
    %v3955 = vpop.permute.xlu0 %3954
    %3956 = vrot.lane.b32.xlu0 %v3906, 120
    %v3957 = vpop.permute.xlu0 %3956
    %3958 = vrot.lane.b32.xlu0 %v3901, 120
    %v3959 = vpop.permute.xlu0 %3958
    %3960 = vrot.lane.b32.xlu0 %v3907, 120
    %v3961 = vpop.permute.xlu0 %3960
    %v3966 = vsel %vm883, %v3955, 0.0
    %v3967 = vsel %vm883, %v3957, 0.0
    %v3968 = vsel %vm883, %v3959, 0.0
    %v3969 = vsel %vm883, %v3961, 0.0
    %3970 = vrot.lane.b32.xlu0 %v3898, 112
    %v3971 = vpop.permute.xlu0 %3970
    %3972 = vrot.lane.b32.xlu0 %v3906, 112
    %v3973 = vpop.permute.xlu0 %3972
    %3974 = vrot.lane.b32.xlu0 %v3901, 112
    %v3975 = vpop.permute.xlu0 %3974
    %3976 = vrot.lane.b32.xlu0 %v3907, 112
    %v3977 = vpop.permute.xlu0 %3976
    %v3982 = vsel %vm1742, %v3971, 0.0
    %v3983 = vsel %vm1742, %v3973, 0.0
    %v3984 = vsel %vm1742, %v3975, 0.0
    %v3985 = vsel %vm1742, %v3977, 0.0
    %3988 = vrot.lane.b32.xlu0 %v3912, 120
    %v3989 = vpop.permute.xlu0 %3988
    %3990 = vrot.lane.b32.xlu0 %v3920, 120
    %v3991 = vpop.permute.xlu0 %3990
    %3992 = vrot.lane.b32.xlu0 %v3915, 120
    %v3993 = vpop.permute.xlu0 %3992
    %3994 = vrot.lane.b32.xlu0 %v3921, 120
    %v3995 = vpop.permute.xlu0 %3994
    %v4000 = vsel %vm883, %v3989, 0.0
    %v4001 = vsel %vm883, %v3991, 0.0
    %v4002 = vsel %vm883, %v3993, 0.0
    %v4003 = vsel %vm883, %v3995, 0.0
    %4004 = vrot.lane.b32.xlu0 %v3912, 112
    %v4005 = vpop.permute.xlu0 %4004
    %4006 = vrot.lane.b32.xlu0 %v3920, 112
    %v4007 = vpop.permute.xlu0 %4006
    %4008 = vrot.lane.b32.xlu0 %v3915, 112
    %v4009 = vpop.permute.xlu0 %4008
    %4010 = vrot.lane.b32.xlu0 %v3921, 112
    %v4011 = vpop.permute.xlu0 %4010
    %v4016 = vsel %vm1742, %v4005, 0.0
    %v4017 = vsel %vm1742, %v4007, 0.0
    %v4018 = vsel %vm1742, %v4009, 0.0
    %v4019 = vsel %vm1742, %v4011, 0.0
    %4020 = vmatpush.msra.mxu0 %v386
    %4021 = vmatpush.msra.mxu0 %v384
    %4022 = vmatpush.msra.mxu0 %v382
    %4023 = vmatpush.msra.mxu0 %v380
    %4024 = vmatpush.msra.mxu0 %v378
    %4025 = vmatpush.msra.mxu0 %v376
    %4026 = vmatpush.msra.mxu0 %v374
    %4027 = vmatpush.msra.mxu0 %v372
    %4028 = vmatpush.msra.mxu0 %v370
    %4029 = vmatpush.msra.mxu0 %v368
    %4030 = vmatpush.msra.mxu0 %v366
    %4031 = vmatpush.msra.mxu0 %v364
    %4032 = vmatpush.msra.mxu0 %v362
    %4033 = vmatpush.msra.mxu0 %v360
    %4034 = vmatpush.msra.mxu0 %v358
    %4035 = vmatpush.msra.mxu0 %v356
    %4036 = vmatmul.f32.gmra.mxu0 %v3883
    %v4037 = vpop.f32.mrf.mxu0
    %v4038 = vadd.f32 %v1814, %v4037
    %4039 = vmatmul.f32.gmra.mxu0 %v3884
    %v4040 = vpop.f32.mrf.mxu0
    %v4041 = vadd.f32 %v1814, %v4040
    %4042 = vmatmul.f32.gmra.mxu0 %v3885
    %v4043 = vpop.f32.mrf.mxu0
    %v4044 = vadd.f32 %v1814, %v4043
    %4045 = vmatmul.f32.gmra.mxu0 %v3886
    %v4046 = vpop.f32.mrf.mxu0
    %v4047 = vadd.f32 %v1814, %v4046
    %4048 = vdwg.mxu0
    %4049 = vmatpush.msra.mxu0 %v418
    %4050 = vmatpush.msra.mxu0 %v416
    %4051 = vmatpush.msra.mxu0 %v414
    %4052 = vmatpush.msra.mxu0 %v412
    %4053 = vmatpush.msra.mxu0 %v410
    %4054 = vmatpush.msra.mxu0 %v408
    %4055 = vmatpush.msra.mxu0 %v406
    %4056 = vmatpush.msra.mxu0 %v404
    %4057 = vmatpush.msra.mxu0 %v402
    %4058 = vmatpush.msra.mxu0 %v400
    %4059 = vmatpush.msra.mxu0 %v398
    %4060 = vmatpush.msra.mxu0 %v396
    %4061 = vmatpush.msra.mxu0 %v394
    %4062 = vmatpush.msra.mxu0 %v392
    %4063 = vmatpush.msra.mxu0 %v390
    %4064 = vmatpush.msra.mxu0 %v388
    %4065 = vmatmul.f32.gmra.mxu0 %v3934
    %v4066 = vpop.f32.mrf.mxu0
    %v4067 = vadd.f32 %v4038, %v4066
    %4068 = vmatmul.f32.gmra.mxu0 %v3935
    %v4069 = vpop.f32.mrf.mxu0
    %v4070 = vadd.f32 %v4041, %v4069
    %4071 = vmatmul.f32.gmra.mxu0 %v3936
    %v4072 = vpop.f32.mrf.mxu0
    %v4073 = vadd.f32 %v4044, %v4072
    %4074 = vmatmul.f32.gmra.mxu0 %v3937
    %v4075 = vpop.f32.mrf.mxu0
    %v4076 = vadd.f32 %v4047, %v4075
    %4077 = vdwg.mxu0
    %4078 = vmatpush.msra.mxu0 %v450
    %4079 = vmatpush.msra.mxu0 %v448
    %4080 = vmatpush.msra.mxu0 %v446
    %4081 = vmatpush.msra.mxu0 %v444
    %4082 = vmatpush.msra.mxu0 %v442
    %4083 = vmatpush.msra.mxu0 %v440
    %4084 = vmatpush.msra.mxu0 %v438
    %4085 = vmatpush.msra.mxu0 %v436
    %4086 = vmatpush.msra.mxu0 %v434
    %4087 = vmatpush.msra.mxu0 %v432
    %4088 = vmatpush.msra.mxu0 %v430
    %4089 = vmatpush.msra.mxu0 %v428
    %4090 = vmatpush.msra.mxu0 %v426
    %4091 = vmatpush.msra.mxu0 %v424
    %4092 = vmatpush.msra.mxu0 %v422
    %4093 = vmatpush.msra.mxu0 %v420
    %4094 = vmatmul.f32.gmra.mxu0 %v3950
    %v4095 = vpop.f32.mrf.mxu0
    %v4096 = vadd.f32 %v4067, %v4095
    %4097 = vmatmul.f32.gmra.mxu0 %v3951
    %v4098 = vpop.f32.mrf.mxu0
    %v4099 = vadd.f32 %v4070, %v4098
    %4100 = vmatmul.f32.gmra.mxu0 %v3952
    %v4101 = vpop.f32.mrf.mxu0
    %v4102 = vadd.f32 %v4073, %v4101
    %4103 = vmatmul.f32.gmra.mxu0 %v3953
    %v4104 = vpop.f32.mrf.mxu0
    %v4105 = vadd.f32 %v4076, %v4104
    %4106 = vdwg.mxu0
    %4107 = vmatpush.msra.mxu0 %v482
    %4108 = vmatpush.msra.mxu0 %v480
    %4109 = vmatpush.msra.mxu0 %v478
    %4110 = vmatpush.msra.mxu0 %v476
    %4111 = vmatpush.msra.mxu0 %v474
    %4112 = vmatpush.msra.mxu0 %v472
    %4113 = vmatpush.msra.mxu0 %v470
    %4114 = vmatpush.msra.mxu0 %v468
    %4115 = vmatpush.msra.mxu0 %v466
    %4116 = vmatpush.msra.mxu0 %v464
    %4117 = vmatpush.msra.mxu0 %v462
    %4118 = vmatpush.msra.mxu0 %v460
    %4119 = vmatpush.msra.mxu0 %v458
    %4120 = vmatpush.msra.mxu0 %v456
    %4121 = vmatpush.msra.mxu0 %v454
    %4122 = vmatpush.msra.mxu0 %v452
    %4123 = vmatmul.f32.gmra.mxu0 %v3898
    %v4124 = vpop.f32.mrf.mxu0
    %v4125 = vadd.f32 %v4096, %v4124
    %4126 = vmatmul.f32.gmra.mxu0 %v3906
    %v4127 = vpop.f32.mrf.mxu0
    %v4128 = vadd.f32 %v4099, %v4127
    %4129 = vmatmul.f32.gmra.mxu0 %v3901
    %v4130 = vpop.f32.mrf.mxu0
    %v4131 = vadd.f32 %v4102, %v4130
    %4132 = vmatmul.f32.gmra.mxu0 %v3907
    %v4133 = vpop.f32.mrf.mxu0
    %v4134 = vadd.f32 %v4105, %v4133
    %4135 = vdwg.mxu0
    %4136 = vmatpush.msra.mxu0 %v514
    %4137 = vmatpush.msra.mxu0 %v512
    %4138 = vmatpush.msra.mxu0 %v510
    %4139 = vmatpush.msra.mxu0 %v508
    %4140 = vmatpush.msra.mxu0 %v506
    %4141 = vmatpush.msra.mxu0 %v504
    %4142 = vmatpush.msra.mxu0 %v502
    %4143 = vmatpush.msra.mxu0 %v500
    %4144 = vmatpush.msra.mxu0 %v498
    %4145 = vmatpush.msra.mxu0 %v496
    %4146 = vmatpush.msra.mxu0 %v494
    %4147 = vmatpush.msra.mxu0 %v492
    %4148 = vmatpush.msra.mxu0 %v490
    %4149 = vmatpush.msra.mxu0 %v488
    %4150 = vmatpush.msra.mxu0 %v486
    %4151 = vmatpush.msra.mxu0 %v484
    %4152 = vmatmul.f32.gmra.mxu0 %v3966
    %v4153 = vpop.f32.mrf.mxu0
    %v4154 = vadd.f32 %v4125, %v4153
    %4155 = vmatmul.f32.gmra.mxu0 %v3967
    %v4156 = vpop.f32.mrf.mxu0
    %v4157 = vadd.f32 %v4128, %v4156
    %4158 = vmatmul.f32.gmra.mxu0 %v3968
    %v4159 = vpop.f32.mrf.mxu0
    %v4160 = vadd.f32 %v4131, %v4159
    %4161 = vmatmul.f32.gmra.mxu0 %v3969
    %v4162 = vpop.f32.mrf.mxu0
    %v4163 = vadd.f32 %v4134, %v4162
    %4164 = vdwg.mxu0
    %4165 = vmatpush.msra.mxu0 %v546
    %4166 = vmatpush.msra.mxu0 %v544
    %4167 = vmatpush.msra.mxu0 %v542
    %4168 = vmatpush.msra.mxu0 %v540
    %4169 = vmatpush.msra.mxu0 %v538
    %4170 = vmatpush.msra.mxu0 %v536
    %4171 = vmatpush.msra.mxu0 %v534
    %4172 = vmatpush.msra.mxu0 %v532
    %4173 = vmatpush.msra.mxu0 %v530
    %4174 = vmatpush.msra.mxu0 %v528
    %4175 = vmatpush.msra.mxu0 %v526
    %4176 = vmatpush.msra.mxu0 %v524
    %4177 = vmatpush.msra.mxu0 %v522
    %4178 = vmatpush.msra.mxu0 %v520
    %4179 = vmatpush.msra.mxu0 %v518
    %4180 = vmatpush.msra.mxu0 %v516
    %4181 = vmatmul.f32.gmra.mxu0 %v3982
    %v4182 = vpop.f32.mrf.mxu0
    %v4183 = vadd.f32 %v4154, %v4182
    %4184 = vmatmul.f32.gmra.mxu0 %v3983
    %v4185 = vpop.f32.mrf.mxu0
    %v4186 = vadd.f32 %v4157, %v4185
    %4187 = vmatmul.f32.gmra.mxu0 %v3984
    %v4188 = vpop.f32.mrf.mxu0
    %v4189 = vadd.f32 %v4160, %v4188
    %4190 = vmatmul.f32.gmra.mxu0 %v3985
    %v4191 = vpop.f32.mrf.mxu0
    %v4192 = vadd.f32 %v4163, %v4191
    %4193 = vdwg.mxu0
    %4194 = vmatpush.msra.mxu0 %v578
    %4195 = vmatpush.msra.mxu0 %v576
    %4196 = vmatpush.msra.mxu0 %v574
    %4197 = vmatpush.msra.mxu0 %v572
    %4198 = vmatpush.msra.mxu0 %v570
    %4199 = vmatpush.msra.mxu0 %v568
    %4200 = vmatpush.msra.mxu0 %v566
    %4201 = vmatpush.msra.mxu0 %v564
    %4202 = vmatpush.msra.mxu0 %v562
    %4203 = vmatpush.msra.mxu0 %v560
    %4204 = vmatpush.msra.mxu0 %v558
    %4205 = vmatpush.msra.mxu0 %v556
    %4206 = vmatpush.msra.mxu0 %v554
    %4207 = vmatpush.msra.mxu0 %v552
    %4208 = vmatpush.msra.mxu0 %v550
    %4209 = vmatpush.msra.mxu0 %v548
    %4210 = vmatmul.f32.gmra.mxu0 %v3912
    %v4211 = vpop.f32.mrf.mxu0
    %v4212 = vadd.f32 %v4183, %v4211
    %4213 = vmatmul.f32.gmra.mxu0 %v3920
    %v4214 = vpop.f32.mrf.mxu0
    %v4215 = vadd.f32 %v4186, %v4214
    %4216 = vmatmul.f32.gmra.mxu0 %v3915
    %v4217 = vpop.f32.mrf.mxu0
    %v4218 = vadd.f32 %v4189, %v4217
    %4219 = vmatmul.f32.gmra.mxu0 %v3921
    %v4220 = vpop.f32.mrf.mxu0
    %v4221 = vadd.f32 %v4192, %v4220
    %4222 = vdwg.mxu0
    %4223 = vmatpush.msra.mxu0 %v610
    %4224 = vmatpush.msra.mxu0 %v608
    %4225 = vmatpush.msra.mxu0 %v606
    %4226 = vmatpush.msra.mxu0 %v604
    %4227 = vmatpush.msra.mxu0 %v602
    %4228 = vmatpush.msra.mxu0 %v600
    %4229 = vmatpush.msra.mxu0 %v598
    %4230 = vmatpush.msra.mxu0 %v596
    %4231 = vmatpush.msra.mxu0 %v594
    %4232 = vmatpush.msra.mxu0 %v592
    %4233 = vmatpush.msra.mxu0 %v590
    %4234 = vmatpush.msra.mxu0 %v588
    %4235 = vmatpush.msra.mxu0 %v586
    %4236 = vmatpush.msra.mxu0 %v584
    %4237 = vmatpush.msra.mxu0 %v582
    %4238 = vmatpush.msra.mxu0 %v580
    %4239 = vmatmul.f32.gmra.mxu0 %v4000
    %v4240 = vpop.f32.mrf.mxu0
    %v4241 = vadd.f32 %v4212, %v4240
    %4242 = vmatmul.f32.gmra.mxu0 %v4001
    %v4243 = vpop.f32.mrf.mxu0
    %v4244 = vadd.f32 %v4215, %v4243
    %4245 = vmatmul.f32.gmra.mxu0 %v4002
    %v4246 = vpop.f32.mrf.mxu0
    %v4247 = vadd.f32 %v4218, %v4246
    %4248 = vmatmul.f32.gmra.mxu0 %v4003
    %v4249 = vpop.f32.mrf.mxu0
    %v4250 = vadd.f32 %v4221, %v4249
    %4251 = vdwg.mxu0
    %4252 = vmatpush.msra.mxu0 %v642
    %4253 = vmatpush.msra.mxu0 %v640
    %4254 = vmatpush.msra.mxu0 %v638
    %4255 = vmatpush.msra.mxu0 %v636
    %4256 = vmatpush.msra.mxu0 %v634
    %4257 = vmatpush.msra.mxu0 %v632
    %4258 = vmatpush.msra.mxu0 %v630
    %4259 = vmatpush.msra.mxu0 %v628
    %4260 = vmatpush.msra.mxu0 %v626
    %4261 = vmatpush.msra.mxu0 %v624
    %4262 = vmatpush.msra.mxu0 %v622
    %4263 = vmatpush.msra.mxu0 %v620
    %4264 = vmatpush.msra.mxu0 %v618
    %4265 = vmatpush.msra.mxu0 %v616
    %4266 = vmatpush.msra.mxu0 %v614
    %4267 = vmatpush.msra.mxu0 %v612
    %4268 = vmatmul.f32.gmra.mxu0 %v4016
    %v4269 = vpop.f32.mrf.mxu0
    %v4270 = vadd.f32 %v4241, %v4269
    %4271 = vmatmul.f32.gmra.mxu0 %v4017
    %v4272 = vpop.f32.mrf.mxu0
    %v4273 = vadd.f32 %v4244, %v4272
    %4274 = vmatmul.f32.gmra.mxu0 %v4018
    %v4275 = vpop.f32.mrf.mxu0
    %v4276 = vadd.f32 %v4247, %v4275
    %4277 = vmatmul.f32.gmra.mxu0 %v4019
    %v4278 = vpop.f32.mrf.mxu0
    %v4279 = vadd.f32 %v4250, %v4278
    %4280 = vdwg.mxu0
    %4281 = vmatpush.msra.mxu0 %v387
    %4282 = vmatpush.msra.mxu0 %v385
    %4283 = vmatpush.msra.mxu0 %v383
    %4284 = vmatpush.msra.mxu0 %v381
    %4285 = vmatpush.msra.mxu0 %v379
    %4286 = vmatpush.msra.mxu0 %v377
    %4287 = vmatpush.msra.mxu0 %v375
    %4288 = vmatpush.msra.mxu0 %v373
    %4289 = vmatpush.msra.mxu0 %v371
    %4290 = vmatpush.msra.mxu0 %v369
    %4291 = vmatpush.msra.mxu0 %v367
    %4292 = vmatpush.msra.mxu0 %v365
    %4293 = vmatpush.msra.mxu0 %v363
    %4294 = vmatpush.msra.mxu0 %v361
    %4295 = vmatpush.msra.mxu0 %v359
    %4296 = vmatpush.msra.mxu0 %v357
    %4297 = vmatmul.f32.gmra.mxu0 %v3883
    %v4298 = vpop.f32.mrf.mxu0
    %v4299 = vadd.f32 %v1815, %v4298
    %4300 = vmatmul.f32.gmra.mxu0 %v3884
    %v4301 = vpop.f32.mrf.mxu0
    %v4302 = vadd.f32 %v1815, %v4301
    %4303 = vmatmul.f32.gmra.mxu0 %v3885
    %v4304 = vpop.f32.mrf.mxu0
    %v4305 = vadd.f32 %v1815, %v4304
    %4306 = vmatmul.f32.gmra.mxu0 %v3886
    %v4307 = vpop.f32.mrf.mxu0
    %v4308 = vadd.f32 %v1815, %v4307
    %4309 = vdwg.mxu0
    %4310 = vmatpush.msra.mxu0 %v419
    %4311 = vmatpush.msra.mxu0 %v417
    %4312 = vmatpush.msra.mxu0 %v415
    %4313 = vmatpush.msra.mxu0 %v413
    %4314 = vmatpush.msra.mxu0 %v411
    %4315 = vmatpush.msra.mxu0 %v409
    %4316 = vmatpush.msra.mxu0 %v407
    %4317 = vmatpush.msra.mxu0 %v405
    %4318 = vmatpush.msra.mxu0 %v403
    %4319 = vmatpush.msra.mxu0 %v401
    %4320 = vmatpush.msra.mxu0 %v399
    %4321 = vmatpush.msra.mxu0 %v397
    %4322 = vmatpush.msra.mxu0 %v395
    %4323 = vmatpush.msra.mxu0 %v393
    %4324 = vmatpush.msra.mxu0 %v391
    %4325 = vmatpush.msra.mxu0 %v389
    %4326 = vmatmul.f32.gmra.mxu0 %v3934
    %v4327 = vpop.f32.mrf.mxu0
    %v4328 = vadd.f32 %v4299, %v4327
    %4329 = vmatmul.f32.gmra.mxu0 %v3935
    %v4330 = vpop.f32.mrf.mxu0
    %v4331 = vadd.f32 %v4302, %v4330
    %4332 = vmatmul.f32.gmra.mxu0 %v3936
    %v4333 = vpop.f32.mrf.mxu0
    %v4334 = vadd.f32 %v4305, %v4333
    %4335 = vmatmul.f32.gmra.mxu0 %v3937
    %v4336 = vpop.f32.mrf.mxu0
    %v4337 = vadd.f32 %v4308, %v4336
    %4338 = vdwg.mxu0
    %4339 = vmatpush.msra.mxu0 %v451
    %4340 = vmatpush.msra.mxu0 %v449
    %4341 = vmatpush.msra.mxu0 %v447
    %4342 = vmatpush.msra.mxu0 %v445
    %4343 = vmatpush.msra.mxu0 %v443
    %4344 = vmatpush.msra.mxu0 %v441
    %4345 = vmatpush.msra.mxu0 %v439
    %4346 = vmatpush.msra.mxu0 %v437
    %4347 = vmatpush.msra.mxu0 %v435
    %4348 = vmatpush.msra.mxu0 %v433
    %4349 = vmatpush.msra.mxu0 %v431
    %4350 = vmatpush.msra.mxu0 %v429
    %4351 = vmatpush.msra.mxu0 %v427
    %4352 = vmatpush.msra.mxu0 %v425
    %4353 = vmatpush.msra.mxu0 %v423
    %4354 = vmatpush.msra.mxu0 %v421
    %4355 = vmatmul.f32.gmra.mxu0 %v3950
    %v4356 = vpop.f32.mrf.mxu0
    %v4357 = vadd.f32 %v4328, %v4356
    %4358 = vmatmul.f32.gmra.mxu0 %v3951
    %v4359 = vpop.f32.mrf.mxu0
    %v4360 = vadd.f32 %v4331, %v4359
    %4361 = vmatmul.f32.gmra.mxu0 %v3952
    %v4362 = vpop.f32.mrf.mxu0
    %v4363 = vadd.f32 %v4334, %v4362
    %4364 = vmatmul.f32.gmra.mxu0 %v3953
    %v4365 = vpop.f32.mrf.mxu0
    %v4366 = vadd.f32 %v4337, %v4365
    %4367 = vdwg.mxu0
    %4368 = vmatpush.msra.mxu0 %v483
    %4369 = vmatpush.msra.mxu0 %v481
    %4370 = vmatpush.msra.mxu0 %v479
    %4371 = vmatpush.msra.mxu0 %v477
    %4372 = vmatpush.msra.mxu0 %v475
    %4373 = vmatpush.msra.mxu0 %v473
    %4374 = vmatpush.msra.mxu0 %v471
    %4375 = vmatpush.msra.mxu0 %v469
    %4376 = vmatpush.msra.mxu0 %v467
    %4377 = vmatpush.msra.mxu0 %v465
    %4378 = vmatpush.msra.mxu0 %v463
    %4379 = vmatpush.msra.mxu0 %v461
    %4380 = vmatpush.msra.mxu0 %v459
    %4381 = vmatpush.msra.mxu0 %v457
    %4382 = vmatpush.msra.mxu0 %v455
    %4383 = vmatpush.msra.mxu0 %v453
    %4384 = vmatmul.f32.gmra.mxu0 %v3898
    %v4385 = vpop.f32.mrf.mxu0
    %v4386 = vadd.f32 %v4357, %v4385
    %4387 = vmatmul.f32.gmra.mxu0 %v3906
    %v4388 = vpop.f32.mrf.mxu0
    %v4389 = vadd.f32 %v4360, %v4388
    %4390 = vmatmul.f32.gmra.mxu0 %v3901
    %v4391 = vpop.f32.mrf.mxu0
    %v4392 = vadd.f32 %v4363, %v4391
    %4393 = vmatmul.f32.gmra.mxu0 %v3907
    %v4394 = vpop.f32.mrf.mxu0
    %v4395 = vadd.f32 %v4366, %v4394
    %4396 = vdwg.mxu0
    %4397 = vmatpush.msra.mxu0 %v515
    %4398 = vmatpush.msra.mxu0 %v513
    %4399 = vmatpush.msra.mxu0 %v511
    %4400 = vmatpush.msra.mxu0 %v509
    %4401 = vmatpush.msra.mxu0 %v507
    %4402 = vmatpush.msra.mxu0 %v505
    %4403 = vmatpush.msra.mxu0 %v503
    %4404 = vmatpush.msra.mxu0 %v501
    %4405 = vmatpush.msra.mxu0 %v499
    %4406 = vmatpush.msra.mxu0 %v497
    %4407 = vmatpush.msra.mxu0 %v495
    %4408 = vmatpush.msra.mxu0 %v493
    %4409 = vmatpush.msra.mxu0 %v491
    %4410 = vmatpush.msra.mxu0 %v489
    %4411 = vmatpush.msra.mxu0 %v487
    %4412 = vmatpush.msra.mxu0 %v485
    %4413 = vmatmul.f32.gmra.mxu0 %v3966
    %v4414 = vpop.f32.mrf.mxu0
    %v4415 = vadd.f32 %v4386, %v4414
    %4416 = vmatmul.f32.gmra.mxu0 %v3967
    %v4417 = vpop.f32.mrf.mxu0
    %v4418 = vadd.f32 %v4389, %v4417
    %4419 = vmatmul.f32.gmra.mxu0 %v3968
    %v4420 = vpop.f32.mrf.mxu0
    %v4421 = vadd.f32 %v4392, %v4420
    %4422 = vmatmul.f32.gmra.mxu0 %v3969
    %v4423 = vpop.f32.mrf.mxu0
    %v4424 = vadd.f32 %v4395, %v4423
    %4425 = vdwg.mxu0
    %4426 = vmatpush.msra.mxu0 %v547
    %4427 = vmatpush.msra.mxu0 %v545
    %4428 = vmatpush.msra.mxu0 %v543
    %4429 = vmatpush.msra.mxu0 %v541
    %4430 = vmatpush.msra.mxu0 %v539
    %4431 = vmatpush.msra.mxu0 %v537
    %4432 = vmatpush.msra.mxu0 %v535
    %4433 = vmatpush.msra.mxu0 %v533
    %4434 = vmatpush.msra.mxu0 %v531
    %4435 = vmatpush.msra.mxu0 %v529
    %4436 = vmatpush.msra.mxu0 %v527
    %4437 = vmatpush.msra.mxu0 %v525
    %4438 = vmatpush.msra.mxu0 %v523
    %4439 = vmatpush.msra.mxu0 %v521
    %4440 = vmatpush.msra.mxu0 %v519
    %4441 = vmatpush.msra.mxu0 %v517
    %4442 = vmatmul.f32.gmra.mxu0 %v3982
    %v4443 = vpop.f32.mrf.mxu0
    %v4444 = vadd.f32 %v4415, %v4443
    %4445 = vmatmul.f32.gmra.mxu0 %v3983
    %v4446 = vpop.f32.mrf.mxu0
    %v4447 = vadd.f32 %v4418, %v4446
    %4448 = vmatmul.f32.gmra.mxu0 %v3984
    %v4449 = vpop.f32.mrf.mxu0
    %v4450 = vadd.f32 %v4421, %v4449
    %4451 = vmatmul.f32.gmra.mxu0 %v3985
    %v4452 = vpop.f32.mrf.mxu0
    %v4453 = vadd.f32 %v4424, %v4452
    %4454 = vdwg.mxu0
    %4455 = vmatpush.msra.mxu0 %v579
    %4456 = vmatpush.msra.mxu0 %v577
    %4457 = vmatpush.msra.mxu0 %v575
    %4458 = vmatpush.msra.mxu0 %v573
    %4459 = vmatpush.msra.mxu0 %v571
    %4460 = vmatpush.msra.mxu0 %v569
    %4461 = vmatpush.msra.mxu0 %v567
    %4462 = vmatpush.msra.mxu0 %v565
    %4463 = vmatpush.msra.mxu0 %v563
    %4464 = vmatpush.msra.mxu0 %v561
    %4465 = vmatpush.msra.mxu0 %v559
    %4466 = vmatpush.msra.mxu0 %v557
    %4467 = vmatpush.msra.mxu0 %v555
    %4468 = vmatpush.msra.mxu0 %v553
    %4469 = vmatpush.msra.mxu0 %v551
    %4470 = vmatpush.msra.mxu0 %v549
    %4471 = vmatmul.f32.gmra.mxu0 %v3912
    %v4472 = vpop.f32.mrf.mxu0
    %v4473 = vadd.f32 %v4444, %v4472
    %4474 = vmatmul.f32.gmra.mxu0 %v3920
    %v4475 = vpop.f32.mrf.mxu0
    %v4476 = vadd.f32 %v4447, %v4475
    %4477 = vmatmul.f32.gmra.mxu0 %v3915
    %v4478 = vpop.f32.mrf.mxu0
    %v4479 = vadd.f32 %v4450, %v4478
    %4480 = vmatmul.f32.gmra.mxu0 %v3921
    %v4481 = vpop.f32.mrf.mxu0
    %v4482 = vadd.f32 %v4453, %v4481
    %4483 = vdwg.mxu0
    %4484 = vmatpush.msra.mxu0 %v611
    %4485 = vmatpush.msra.mxu0 %v609
    %4486 = vmatpush.msra.mxu0 %v607
    %4487 = vmatpush.msra.mxu0 %v605
    %4488 = vmatpush.msra.mxu0 %v603
    %4489 = vmatpush.msra.mxu0 %v601
    %4490 = vmatpush.msra.mxu0 %v599
    %4491 = vmatpush.msra.mxu0 %v597
    %4492 = vmatpush.msra.mxu0 %v595
    %4493 = vmatpush.msra.mxu0 %v593
    %4494 = vmatpush.msra.mxu0 %v591
    %4495 = vmatpush.msra.mxu0 %v589
    %4496 = vmatpush.msra.mxu0 %v587
    %4497 = vmatpush.msra.mxu0 %v585
    %4498 = vmatpush.msra.mxu0 %v583
    %4499 = vmatpush.msra.mxu0 %v581
    %4500 = vmatmul.f32.gmra.mxu0 %v4000
    %v4501 = vpop.f32.mrf.mxu0
    %v4502 = vadd.f32 %v4473, %v4501
    %4503 = vmatmul.f32.gmra.mxu0 %v4001
    %v4504 = vpop.f32.mrf.mxu0
    %v4505 = vadd.f32 %v4476, %v4504
    %4506 = vmatmul.f32.gmra.mxu0 %v4002
    %v4507 = vpop.f32.mrf.mxu0
    %v4508 = vadd.f32 %v4479, %v4507
    %4509 = vmatmul.f32.gmra.mxu0 %v4003
    %v4510 = vpop.f32.mrf.mxu0
    %v4511 = vadd.f32 %v4482, %v4510
    %4512 = vdwg.mxu0
    %4513 = vmatpush.msra.mxu0 %v643
    %4514 = vmatpush.msra.mxu0 %v641
    %4515 = vmatpush.msra.mxu0 %v639
    %4516 = vmatpush.msra.mxu0 %v637
    %4517 = vmatpush.msra.mxu0 %v635
    %4518 = vmatpush.msra.mxu0 %v633
    %4519 = vmatpush.msra.mxu0 %v631
    %4520 = vmatpush.msra.mxu0 %v629
    %4521 = vmatpush.msra.mxu0 %v627
    %4522 = vmatpush.msra.mxu0 %v625
    %4523 = vmatpush.msra.mxu0 %v623
    %4524 = vmatpush.msra.mxu0 %v621
    %4525 = vmatpush.msra.mxu0 %v619
    %4526 = vmatpush.msra.mxu0 %v617
    %4527 = vmatpush.msra.mxu0 %v615
    %4528 = vmatpush.msra.mxu0 %v613
    %4529 = vmatmul.f32.gmra.mxu0 %v4016
    %v4530 = vpop.f32.mrf.mxu0
    %v4531 = vadd.f32 %v4502, %v4530
    %4532 = vmatmul.f32.gmra.mxu0 %v4017
    %v4533 = vpop.f32.mrf.mxu0
    %v4534 = vadd.f32 %v4505, %v4533
    %4535 = vmatmul.f32.gmra.mxu0 %v4018
    %v4536 = vpop.f32.mrf.mxu0
    %v4537 = vadd.f32 %v4508, %v4536
    %4538 = vmatmul.f32.gmra.mxu0 %v4019
    %v4539 = vpop.f32.mrf.mxu0
    %v4540 = vadd.f32 %v4511, %v4539
    %4541 = vdwg.mxu0
    %v4546 = vrot.slane %v4270, 1
    %v4547 = vrot.slane %v4531, 1
    %v4548 = vrot.slane %v4276, 1
    %v4549 = vrot.slane %v4537, 1
    %v4554 = vmax.f32 %v4270, %v4546
    %v4555 = vmax.f32 %v4531, %v4547
    %v4556 = vmax.f32 %v4276, %v4548
    %v4557 = vmax.f32 %v4537, %v4549
    %v4562 = vrot.slane %v4273, 1
    %v4563 = vrot.slane %v4534, 1
    %v4564 = vrot.slane %v4279, 1
    %v4565 = vrot.slane %v4540, 1
    %v4570 = vmax.f32 %v4273, %v4562
    %v4571 = vmax.f32 %v4534, %v4563
    %v4572 = vmax.f32 %v4279, %v4564
    %v4573 = vmax.f32 %v4540, %v4565
    %v4578 = vrot.slane %v4554, 1
    %v4579 = vrot.slane %v4555, 1
    %v4580 = vrot.slane %v4556, 1
    %v4581 = vrot.slane %v4557, 1
    %v4586 = vrot.slane %v4554, 2
    %v4587 = vrot.slane %v4555, 2
    %v4588 = vrot.slane %v4556, 2
    %v4589 = vrot.slane %v4557, 2
    %v4594 = vrot.slane %v4554, 3
    %v4595 = vrot.slane %v4555, 3
    %v4596 = vrot.slane %v4556, 3
    %v4597 = vrot.slane %v4557, 3
    %v4606 = vrot.slane %v4570, 4
    %v4607 = vrot.slane %v4571, 4
    %v4608 = vrot.slane %v4572, 4
    %v4609 = vrot.slane %v4573, 4
    %v4614 = vrot.slane %v4570, 5
    %v4615 = vrot.slane %v4571, 5
    %v4616 = vrot.slane %v4572, 5
    %v4617 = vrot.slane %v4573, 5
    %v4622 = vrot.slane %v4570, 6
    %v4623 = vrot.slane %v4571, 6
    %v4624 = vrot.slane %v4572, 6
    %v4625 = vrot.slane %v4573, 6
    %v4630 = vsel %vm825, %v4554, %v4578
    %v4631 = vsel %vm825, %v4555, %v4579
    %v4632 = vsel %vm825, %v4556, %v4580
    %v4633 = vsel %vm825, %v4557, %v4581
    %v4634 = vsel %vm2432, %v4630, %v4586
    %v4635 = vsel %vm2432, %v4631, %v4587
    %v4636 = vsel %vm2432, %v4632, %v4588
    %v4637 = vsel %vm2432, %v4633, %v4589
    %v4638 = vsel %vm2437, %v4634, %v4594
    %v4639 = vsel %vm2437, %v4635, %v4595
    %v4640 = vsel %vm2437, %v4636, %v4596
    %v4641 = vsel %vm2437, %v4637, %v4597
    %v4642 = vsel %vm2442, %v4638, %v4606
    %v4643 = vsel %vm2442, %v4639, %v4607
    %v4644 = vsel %vm2442, %v4640, %v4608
    %v4645 = vsel %vm2442, %v4641, %v4609
    %v4646 = vsel %vm2447, %v4642, %v4614
    %v4647 = vsel %vm2447, %v4643, %v4615
    %v4648 = vsel %vm2447, %v4644, %v4616
    %v4649 = vsel %vm2447, %v4645, %v4617
    %v4650 = vsel %vm2452, %v4646, %v4622
    %v4651 = vsel %vm2452, %v4647, %v4623
    %v4652 = vsel %vm2452, %v4648, %v4624
    %v4653 = vsel %vm2452, %v4649, %v4625
    %4658 = vrot.lane.b32.xlu0 %v4650, 118
    %v4659 = vpop.permute.xlu0 %4658
    %4660 = vrot.lane.b32.xlu0 %v4651, 118
    %v4661 = vpop.permute.xlu0 %4660
    %4662 = vrot.lane.b32.xlu0 %v4652, 118
    %v4663 = vpop.permute.xlu0 %4662
    %4664 = vrot.lane.b32.xlu0 %v4653, 118
    %v4665 = vpop.permute.xlu0 %4664
    %v4666 = vsel %vm2469, %v4659, %v4661
    %v4667 = vsel %vm2469, %v4663, %v4665
    %v4672 = vsel %vm2476, %v4661, 0.0
    %v4673 = vsel %vm2476, %v4665, 0.0
    %v4674 = vmax.f32 %v4650, %v4666
    %v4675 = vmax.f32 %v4651, %v4672
    %v4676 = vmax.f32 %v4652, %v4667
    %v4677 = vmax.f32 %v4653, %v4673
    %v4678 = vmax.f32 %v4674, 0.0
    %v4679 = vmax.f32 %v4675, 0.0
    %v4680 = vmax.f32 %v4676, 0.0
    %v4681 = vmax.f32 %v4677, 0.0
    %v4682 = vsel %vm838, %v4678, 0.0
    %v4683 = vsel %vm838, %v4679, 0.0
    %v4684 = vsel %vm838, %v4680, 0.0
    %v4685 = vsel %vm838, %v4681, 0.0
    %4690 = vrot.lane.b32.xlu0 %v4682, 108
    %v4691 = vpop.permute.xlu0 %4690
    %4692 = vrot.lane.b32.xlu0 %v4683, 108
    %v4693 = vpop.permute.xlu0 %4692
    %4694 = vrot.lane.b32.xlu0 %v4684, 108
    %v4695 = vpop.permute.xlu0 %4694
    %4696 = vrot.lane.b32.xlu0 %v4685, 108
    %v4697 = vpop.permute.xlu0 %4696
    %v4698 = vsel %vm2503, %v4691, %v4693
    %v4699 = vsel %vm2503, %v4695, %v4697
    %v4702 = vsel %vm883, %v4698, 0.0
    %v4703 = vsel %vm883, %v4699, 0.0
    %4704 = vrot.lane.b32.xlu0 %v4682, 88
    %v4705 = vpop.permute.xlu0 %4704
    %4706 = vrot.lane.b32.xlu0 %v4683, 88
    %v4707 = vpop.permute.xlu0 %4706
    %4708 = vrot.lane.b32.xlu0 %v4684, 88
    %v4709 = vpop.permute.xlu0 %4708
    %4710 = vrot.lane.b32.xlu0 %v4685, 88
    %v4711 = vpop.permute.xlu0 %4710
    %v4712 = vsel %vm2518, %v4705, %v4707
    %v4713 = vsel %vm2518, %v4709, %v4711
    %v4716 = vsel %vm2523, %v4712, 0.0
    %v4717 = vsel %vm2523, %v4713, 0.0
    %4720 = vrot.lane.b32.xlu0 %v4702, 12
    %v4721 = vpop.permute.xlu0 %4720
    %4722 = vrot.lane.b32.xlu0 %v4703, 12
    %v4723 = vpop.permute.xlu0 %4722
    %v4724 = vsel %vm2543, %v4721, %v2540
    %v4725 = vsel %vm2543, %v4723, %v2540
    %4732 = vrot.lane.b32.xlu0 %v4716, 24
    %v4733 = vpop.permute.xlu0 %4732
    %4734 = vrot.lane.b32.xlu0 %v4717, 24
    %v4735 = vpop.permute.xlu0 %4734
    %v4736 = vsel %vm2558, %v4733, %v2555
    %v4737 = vsel %vm2558, %v4735, %v2555
    %v4742 = vrot.slane %v4682, 1
    %v4743 = vsel %vm838, %v4742, %v2566
    %v4744 = vrot.slane %v4683, 1
    %v4745 = vsel %vm838, %v4744, %v2566
    %v4746 = vrot.slane %v4684, 1
    %v4747 = vsel %vm838, %v4746, %v2566
    %v4748 = vrot.slane %v4685, 1
    %v4749 = vsel %vm838, %v4748, %v2566
    %4750 = vrot.lane.b32.xlu0 %v4743, 36
    %v4751 = vpop.permute.xlu0 %4750
    %4752 = vrot.lane.b32.xlu0 %v4745, 36
    %v4753 = vpop.permute.xlu0 %4752
    %4754 = vrot.lane.b32.xlu0 %v4747, 36
    %v4755 = vpop.permute.xlu0 %4754
    %4756 = vrot.lane.b32.xlu0 %v4749, 36
    %v4757 = vpop.permute.xlu0 %4756
    %v4758 = vsel %vm2582, %v4751, %v4753
    %v4759 = vsel %vm2582, %v4755, %v4757
    %v4764 = vrot.slane %v4702, 1
    %v4765 = vsel %vm838, %v4764, %v2591
    %v4766 = vrot.slane %v4703, 1
    %v4767 = vsel %vm838, %v4766, %v2591
    %4768 = vrot.lane.b32.xlu0 %v4765, 48
    %v4769 = vpop.permute.xlu0 %4768
    %4770 = vrot.lane.b32.xlu0 %v4767, 48
    %v4771 = vpop.permute.xlu0 %4770
    %v4772 = vsel %vm2602, %v4769, %v2599
    %v4773 = vsel %vm2602, %v4771, %v2599
    %v4778 = vrot.slane %v4716, 1
    %v4779 = vsel %vm838, %v4778, %v2611
    %v4780 = vrot.slane %v4717, 1
    %v4781 = vsel %vm838, %v4780, %v2611
    %4782 = vrot.lane.b32.xlu0 %v4779, 60
    %v4783 = vpop.permute.xlu0 %4782
    %4784 = vrot.lane.b32.xlu0 %v4781, 60
    %v4785 = vpop.permute.xlu0 %4784
    %v4786 = vsel %vm2621, %v4783, %v2618
    %v4787 = vsel %vm2621, %v4785, %v2618
    %v4792 = vrot.slane %v4682, 2
    %v4793 = vsel %vm2452, %v4792, %v2629
    %v4794 = vrot.slane %v4683, 2
    %v4795 = vsel %vm2452, %v4794, %v2629
    %v4796 = vrot.slane %v4684, 2
    %v4797 = vsel %vm2452, %v4796, %v2629
    %v4798 = vrot.slane %v4685, 2
    %v4799 = vsel %vm2452, %v4798, %v2629
    %4800 = vrot.lane.b32.xlu0 %v4793, 72
    %v4801 = vpop.permute.xlu0 %4800
    %4802 = vrot.lane.b32.xlu0 %v4795, 72
    %v4803 = vpop.permute.xlu0 %4802
    %4804 = vrot.lane.b32.xlu0 %v4797, 72
    %v4805 = vpop.permute.xlu0 %4804
    %4806 = vrot.lane.b32.xlu0 %v4799, 72
    %v4807 = vpop.permute.xlu0 %4806
    %v4808 = vsel %vm2645, %v4801, %v4803
    %v4809 = vsel %vm2645, %v4805, %v4807
    %v4814 = vrot.slane %v4702, 2
    %v4815 = vsel %vm2452, %v4814, %v2653
    %v4816 = vrot.slane %v4703, 2
    %v4817 = vsel %vm2452, %v4816, %v2653
    %4818 = vrot.lane.b32.xlu0 %v4815, 84
    %v4819 = vpop.permute.xlu0 %4818
    %4820 = vrot.lane.b32.xlu0 %v4817, 84
    %v4821 = vpop.permute.xlu0 %4820
    %v4822 = vsel %vm2664, %v4819, %v2661
    %v4823 = vsel %vm2664, %v4821, %v2661
    %v4828 = vrot.slane %v4716, 2
    %v4829 = vsel %vm2452, %v4828, %v2672
    %v4830 = vrot.slane %v4717, 2
    %v4831 = vsel %vm2452, %v4830, %v2672
    %4832 = vrot.lane.b32.xlu0 %v4829, 96
    %v4833 = vpop.permute.xlu0 %4832
    %4834 = vrot.lane.b32.xlu0 %v4831, 96
    %v4835 = vpop.permute.xlu0 %4834
    %v4836 = vsel %vm2682, %v4833, %v2679
    %v4837 = vsel %vm2682, %v4835, %v2679
    %v4840 = vsel %vm2543, %v4683, %v4721
    %v4841 = vsel %vm2543, %v4685, %v4723
    %v4842 = vsel %vm2558, %v4724, %v4733
    %v4843 = vsel %vm2558, %v4725, %v4735
    %v4844 = vsel %vm2582, %v4736, %v4751
    %v4845 = vsel %vm2582, %v4737, %v4755
    %v4846 = vsel %vm2602, %v4758, %v4769
    %v4847 = vsel %vm2602, %v4759, %v4771
    %v4848 = vsel %vm2621, %v4772, %v4783
    %v4849 = vsel %vm2621, %v4773, %v4785
    %v4850 = vsel %vm2645, %v4786, %v4801
    %v4851 = vsel %vm2645, %v4787, %v4805
    %v4852 = vsel %vm2664, %v4808, %v4819
    %v4853 = vsel %vm2664, %v4809, %v4821
    %v4854 = vsel %vm2682, %v4822, %v4833
    %v4855 = vsel %vm2682, %v4823, %v4835
    %v4856 = vsel %vm2503, %v4836, 0
    %v4858 = vsel %vm2503, %v4837, 0
    %4860 = vmatpush.msra.mxu0 %v660
    %4861 = vmatpush.msra.mxu0 %v659
    %4862 = vmatpush.msra.mxu0 %v658
    %4863 = vmatpush.msra.mxu0 %v657
    %4864 = vmatpush.msra.mxu0 %v656
    %4865 = vmatpush.msra.mxu0 %v655
    %4866 = vmatpush.msra.mxu0 %v654
    %4867 = vmatpush.msra.mxu0 %v653
    %4868 = vmatpush.msra.mxu0 %v652
    %4869 = vmatpush.msra.mxu0 %v651
    %4870 = vmatpush.msra.mxu0 %v650
    %4871 = vmatpush.msra.mxu0 %v649
    %4872 = vmatpush.msra.mxu0 %v648
    %4873 = vmatpush.msra.mxu0 %v647
    %4874 = vmatpush.msra.mxu0 %v646
    %4875 = vmatpush.msra.mxu0 %v645
    %4876 = vmatmul.f32.gmra.mxu0 %v4682
    %v4877 = vpop.f32.mrf.mxu0
    %v4878 = vadd.f32 %v2704, %v4877
    %4879 = vmatmul.f32.gmra.mxu0 %v4684
    %v4880 = vpop.f32.mrf.mxu0
    %v4881 = vadd.f32 %v2704, %v4880
    %4882 = vdwg.mxu0
    %4883 = vmatpush.msra.mxu0 %v676
    %4884 = vmatpush.msra.mxu0 %v675
    %4885 = vmatpush.msra.mxu0 %v674
    %4886 = vmatpush.msra.mxu0 %v673
    %4887 = vmatpush.msra.mxu0 %v672
    %4888 = vmatpush.msra.mxu0 %v671
    %4889 = vmatpush.msra.mxu0 %v670
    %4890 = vmatpush.msra.mxu0 %v669
    %4891 = vmatpush.msra.mxu0 %v668
    %4892 = vmatpush.msra.mxu0 %v667
    %4893 = vmatpush.msra.mxu0 %v666
    %4894 = vmatpush.msra.mxu0 %v665
    %4895 = vmatpush.msra.mxu0 %v664
    %4896 = vmatpush.msra.mxu0 %v663
    %4897 = vmatpush.msra.mxu0 %v662
    %4898 = vmatpush.msra.mxu0 %v661
    %4899 = vmatmul.f32.gmra.mxu0 %v4840
    %v4900 = vpop.f32.mrf.mxu0
    %v4901 = vadd.f32 %v4878, %v4900
    %4902 = vmatmul.f32.gmra.mxu0 %v4841
    %v4903 = vpop.f32.mrf.mxu0
    %v4904 = vadd.f32 %v4881, %v4903
    %4905 = vdwg.mxu0
    %4906 = vmatpush.msra.mxu0 %v692
    %4907 = vmatpush.msra.mxu0 %v691
    %4908 = vmatpush.msra.mxu0 %v690
    %4909 = vmatpush.msra.mxu0 %v689
    %4910 = vmatpush.msra.mxu0 %v688
    %4911 = vmatpush.msra.mxu0 %v687
    %4912 = vmatpush.msra.mxu0 %v686
    %4913 = vmatpush.msra.mxu0 %v685
    %4914 = vmatpush.msra.mxu0 %v684
    %4915 = vmatpush.msra.mxu0 %v683
    %4916 = vmatpush.msra.mxu0 %v682
    %4917 = vmatpush.msra.mxu0 %v681
    %4918 = vmatpush.msra.mxu0 %v680
    %4919 = vmatpush.msra.mxu0 %v679
    %4920 = vmatpush.msra.mxu0 %v678
    %4921 = vmatpush.msra.mxu0 %v677
    %4922 = vmatmul.f32.gmra.mxu0 %v4842
    %v4923 = vpop.f32.mrf.mxu0
    %v4924 = vadd.f32 %v4901, %v4923
    %4925 = vmatmul.f32.gmra.mxu0 %v4843
    %v4926 = vpop.f32.mrf.mxu0
    %v4927 = vadd.f32 %v4904, %v4926
    %4928 = vdwg.mxu0
    %4929 = vmatpush.msra.mxu0 %v708
    %4930 = vmatpush.msra.mxu0 %v707
    %4931 = vmatpush.msra.mxu0 %v706
    %4932 = vmatpush.msra.mxu0 %v705
    %4933 = vmatpush.msra.mxu0 %v704
    %4934 = vmatpush.msra.mxu0 %v703
    %4935 = vmatpush.msra.mxu0 %v702
    %4936 = vmatpush.msra.mxu0 %v701
    %4937 = vmatpush.msra.mxu0 %v700
    %4938 = vmatpush.msra.mxu0 %v699
    %4939 = vmatpush.msra.mxu0 %v698
    %4940 = vmatpush.msra.mxu0 %v697
    %4941 = vmatpush.msra.mxu0 %v696
    %4942 = vmatpush.msra.mxu0 %v695
    %4943 = vmatpush.msra.mxu0 %v694
    %4944 = vmatpush.msra.mxu0 %v693
    %4945 = vmatmul.f32.gmra.mxu0 %v4844
    %v4946 = vpop.f32.mrf.mxu0
    %v4947 = vadd.f32 %v4924, %v4946
    %4948 = vmatmul.f32.gmra.mxu0 %v4845
    %v4949 = vpop.f32.mrf.mxu0
    %v4950 = vadd.f32 %v4927, %v4949
    %4951 = vdwg.mxu0
    %4952 = vmatpush.msra.mxu0 %v724
    %4953 = vmatpush.msra.mxu0 %v723
    %4954 = vmatpush.msra.mxu0 %v722
    %4955 = vmatpush.msra.mxu0 %v721
    %4956 = vmatpush.msra.mxu0 %v720
    %4957 = vmatpush.msra.mxu0 %v719
    %4958 = vmatpush.msra.mxu0 %v718
    %4959 = vmatpush.msra.mxu0 %v717
    %4960 = vmatpush.msra.mxu0 %v716
    %4961 = vmatpush.msra.mxu0 %v715
    %4962 = vmatpush.msra.mxu0 %v714
    %4963 = vmatpush.msra.mxu0 %v713
    %4964 = vmatpush.msra.mxu0 %v712
    %4965 = vmatpush.msra.mxu0 %v711
    %4966 = vmatpush.msra.mxu0 %v710
    %4967 = vmatpush.msra.mxu0 %v709
    %4968 = vmatmul.f32.gmra.mxu0 %v4846
    %v4969 = vpop.f32.mrf.mxu0
    %v4970 = vadd.f32 %v4947, %v4969
    %4971 = vmatmul.f32.gmra.mxu0 %v4847
    %v4972 = vpop.f32.mrf.mxu0
    %v4973 = vadd.f32 %v4950, %v4972
    %4974 = vdwg.mxu0
    %4975 = vmatpush.msra.mxu0 %v740
    %4976 = vmatpush.msra.mxu0 %v739
    %4977 = vmatpush.msra.mxu0 %v738
    %4978 = vmatpush.msra.mxu0 %v737
    %4979 = vmatpush.msra.mxu0 %v736
    %4980 = vmatpush.msra.mxu0 %v735
    %4981 = vmatpush.msra.mxu0 %v734
    %4982 = vmatpush.msra.mxu0 %v733
    %4983 = vmatpush.msra.mxu0 %v732
    %4984 = vmatpush.msra.mxu0 %v731
    %4985 = vmatpush.msra.mxu0 %v730
    %4986 = vmatpush.msra.mxu0 %v729
    %4987 = vmatpush.msra.mxu0 %v728
    %4988 = vmatpush.msra.mxu0 %v727
    %4989 = vmatpush.msra.mxu0 %v726
    %4990 = vmatpush.msra.mxu0 %v725
    %4991 = vmatmul.f32.gmra.mxu0 %v4848
    %v4992 = vpop.f32.mrf.mxu0
    %v4993 = vadd.f32 %v4970, %v4992
    %4994 = vmatmul.f32.gmra.mxu0 %v4849
    %v4995 = vpop.f32.mrf.mxu0
    %v4996 = vadd.f32 %v4973, %v4995
    %4997 = vdwg.mxu0
    %4998 = vmatpush.msra.mxu0 %v756
    %4999 = vmatpush.msra.mxu0 %v755
    %5000 = vmatpush.msra.mxu0 %v754
    %5001 = vmatpush.msra.mxu0 %v753
    %5002 = vmatpush.msra.mxu0 %v752
    %5003 = vmatpush.msra.mxu0 %v751
    %5004 = vmatpush.msra.mxu0 %v750
    %5005 = vmatpush.msra.mxu0 %v749
    %5006 = vmatpush.msra.mxu0 %v748
    %5007 = vmatpush.msra.mxu0 %v747
    %5008 = vmatpush.msra.mxu0 %v746
    %5009 = vmatpush.msra.mxu0 %v745
    %5010 = vmatpush.msra.mxu0 %v744
    %5011 = vmatpush.msra.mxu0 %v743
    %5012 = vmatpush.msra.mxu0 %v742
    %5013 = vmatpush.msra.mxu0 %v741
    %5014 = vmatmul.f32.gmra.mxu0 %v4850
    %v5015 = vpop.f32.mrf.mxu0
    %v5016 = vadd.f32 %v4993, %v5015
    %5017 = vmatmul.f32.gmra.mxu0 %v4851
    %v5018 = vpop.f32.mrf.mxu0
    %v5019 = vadd.f32 %v4996, %v5018
    %5020 = vdwg.mxu0
    %5021 = vmatpush.msra.mxu0 %v772
    %5022 = vmatpush.msra.mxu0 %v771
    %5023 = vmatpush.msra.mxu0 %v770
    %5024 = vmatpush.msra.mxu0 %v769
    %5025 = vmatpush.msra.mxu0 %v768
    %5026 = vmatpush.msra.mxu0 %v767
    %5027 = vmatpush.msra.mxu0 %v766
    %5028 = vmatpush.msra.mxu0 %v765
    %5029 = vmatpush.msra.mxu0 %v764
    %5030 = vmatpush.msra.mxu0 %v763
    %5031 = vmatpush.msra.mxu0 %v762
    %5032 = vmatpush.msra.mxu0 %v761
    %5033 = vmatpush.msra.mxu0 %v760
    %5034 = vmatpush.msra.mxu0 %v759
    %5035 = vmatpush.msra.mxu0 %v758
    %5036 = vmatpush.msra.mxu0 %v757
    %5037 = vmatmul.f32.gmra.mxu0 %v4852
    %v5038 = vpop.f32.mrf.mxu0
    %v5039 = vadd.f32 %v5016, %v5038
    %5040 = vmatmul.f32.gmra.mxu0 %v4853
    %v5041 = vpop.f32.mrf.mxu0
    %v5042 = vadd.f32 %v5019, %v5041
    %5043 = vdwg.mxu0
    %5044 = vmatpush.msra.mxu0 %v788
    %5045 = vmatpush.msra.mxu0 %v787
    %5046 = vmatpush.msra.mxu0 %v786
    %5047 = vmatpush.msra.mxu0 %v785
    %5048 = vmatpush.msra.mxu0 %v784
    %5049 = vmatpush.msra.mxu0 %v783
    %5050 = vmatpush.msra.mxu0 %v782
    %5051 = vmatpush.msra.mxu0 %v781
    %5052 = vmatpush.msra.mxu0 %v780
    %5053 = vmatpush.msra.mxu0 %v779
    %5054 = vmatpush.msra.mxu0 %v778
    %5055 = vmatpush.msra.mxu0 %v777
    %5056 = vmatpush.msra.mxu0 %v776
    %5057 = vmatpush.msra.mxu0 %v775
    %5058 = vmatpush.msra.mxu0 %v774
    %5059 = vmatpush.msra.mxu0 %v773
    %5060 = vmatmul.f32.gmra.mxu0 %v4854
    %v5061 = vpop.f32.mrf.mxu0
    %v5062 = vadd.f32 %v5039, %v5061
    %5063 = vmatmul.f32.gmra.mxu0 %v4855
    %v5064 = vpop.f32.mrf.mxu0
    %v5065 = vadd.f32 %v5042, %v5064
    %5066 = vdwg.mxu0
    %5067 = vmatpush.msra.mxu0 0.0
    %5068 = vmatpush.msra.mxu0 0.0
    %5069 = vmatpush.msra.mxu0 %v2711
    %5070 = vmatpush.msra.mxu0 %v801
    %5071 = vmatpush.msra.mxu0 %v800
    %5072 = vmatpush.msra.mxu0 %v799
    %5073 = vmatpush.msra.mxu0 %v798
    %5074 = vmatpush.msra.mxu0 %v797
    %5075 = vmatpush.msra.mxu0 %v796
    %5076 = vmatpush.msra.mxu0 %v795
    %5077 = vmatpush.msra.mxu0 %v794
    %5078 = vmatpush.msra.mxu0 %v793
    %5079 = vmatpush.msra.mxu0 %v792
    %5080 = vmatpush.msra.mxu0 %v791
    %5081 = vmatpush.msra.mxu0 %v790
    %5082 = vmatpush.msra.mxu0 %v789
    %5083 = vmatmul.f32.gmra.mxu0 %v4856
    %v5084 = vpop.f32.mrf.mxu0
    %v5085 = vadd.f32 %v5062, %v5084
    %5086 = vmatmul.f32.gmra.mxu0 %v4858
    %v5087 = vpop.f32.mrf.mxu0
    %v5088 = vadd.f32 %v5065, %v5087
    %5089 = vdwg.mxu0
    %v5092 = vrot.slane %v5085, 1
    %v5093 = vrot.slane %v5088, 1
    %v5096 = vmax.f32 %v5085, %v5092
    %v5097 = vmax.f32 %v5088, %v5093
    %v5100 = vrot.slane %v5096, 1
    %v5101 = vrot.slane %v5097, 1
    %v5104 = vsel %vm825, %v5096, %v5100
    %v5105 = vsel %vm825, %v5097, %v5101
    %5108 = vrot.lane.b32.xlu0 %v5104, 108
    %v5109 = vpop.permute.xlu0 %5108
    %5110 = vrot.lane.b32.xlu0 %v5105, 108
    %v5111 = vpop.permute.xlu0 %5110
    %v5114 = vsel %vm2967, %v5109, 0.0
    %v5115 = vsel %vm2967, %v5111, 0.0
    %v5116 = vmax.f32 %v5104, %v5114
    %v5117 = vmax.f32 %v5105, %v5115
    %v5118 = vmax.f32 %v5116, 0.0
    %v5119 = vmax.f32 %v5117, 0.0
    %v5122 = vrot.slane %v5119, 7
    %v5123 = vsel %vm2977, %v5122, %v5118
    %5125 = vrot.lane.b32.xlu0 %v5123, 108
    %v5126 = vpop.permute.xlu0 %5125
    %v5128 = vrot.slane %v5118, 1
    %v5129 = vsel %vm2977, %v5119, %v5128
    %5130 = vrot.lane.b32.xlu0 %v5129, 40
    %v5131 = vpop.permute.xlu0 %5130
    %5133 = vrot.lane.b32.xlu0 %v5129, 20
    %v5134 = vpop.permute.xlu0 %5133
    %v5136 = vsel %vm2991, %v5123, %v5126
    %v5137 = vsel %vm2993, %v5136, %v5131
    %v5138 = vsel %vm2621, %v5137, %v5134
    %v5140 = vsel %vm2967, %v5138, 0
    %5142 = vmatpush.msra.mxu0 0.0
    %5143 = vmatpush.msra.mxu0 0.0
    %5144 = vmatpush.msra.mxu0 0.0
    %5145 = vmatpush.msra.mxu0 0.0
    %5146 = vmatpush.msra.mxu0 0.0
    %5147 = vmatpush.msra.mxu0 0.0
    %5148 = vmatpush.msra.mxu0 %v813
    %5149 = vmatpush.msra.mxu0 %v812
    %5150 = vmatpush.msra.mxu0 %v811
    %5151 = vmatpush.msra.mxu0 %v810
    %5152 = vmatpush.msra.mxu0 %v809
    %5153 = vmatpush.msra.mxu0 %v808
    %5154 = vmatpush.msra.mxu0 %v807
    %5155 = vmatpush.msra.mxu0 %v806
    %5156 = vmatpush.msra.mxu0 %v805
    %5157 = vmatpush.msra.mxu0 %v804
    %5158 = vmatmul.f32.gmra.mxu0 %v5140
    %v5159 = vpop.f32.mrf.mxu0
    %v5160 = vadd.f32 %v2997, %v5159
    %5161 = vdwg.mxu0
    %v5162 = vmax.f32 %v5160, 0.0
    %v5163 = vmul.f32 %v5162, %v3024
    %v5164 = vsel %vm3027, %v5163, 0.0
    %5165 = vadd.xlane.f32.xlu0 %v5164
    %v5166 = vpop.xlane.xlu0 %5165
    %v5167 = vadd.f32 %v5166, %v3032
    %v5168 = vxor.u32 %v5167, 2147483648
    %v5169 = vmul.f32 %v5168, 1.442695
    %v5170 = vpow.pop %v5169
    %v5171 = vadd.f32 %v5170, 1.0
    %v5172 = vrcp.pop %v5171
    %v5173 = vmul.f32 %v5171, %v5172
    %v5174 = vsub.f32 1.0, %v5173
    %v5175 = vmul.f32 %v5172, %v5174
    %v5176 = vadd.f32 %v5172, %v5175
    %vm5177 = vweird.f32 %v5171
    %vm5178 = vweird.f32 %v5172
    %vm5179 = vmor %vm5177, %vm5178
    %v5180 = vsel %vm5179, %v5172, %v5176
    %v5181 = vand.u32 2147483647, %v5171
    %vm5182 = vcmp.eq.f32.partialorder %v5181, 8.507059e+37
    %v5183 = vand.u32 %v5171, 2147483648
    %v5184 = vor.u32 1.1754944e-38, %v5183
    %v5185 = vsel %vm5182, %v5184, %v5180
    %v5186 = vmul.f32 1.0, %v5185
    %s5187 = scalar_lea.vmem %s15, 2
    %5188 = vst.msk [vmem:[%s5187] sm:$0x3] %vm3054, %v5186
    %v5189 = vrot.slane %v3883, 7
    %v5190 = vrot.slane %v3884, 7
    %v5191 = vsel %vm825, %v5189, %v5190
    %v5192 = vrot.slane %v3885, 7
    %v5193 = vrot.slane %v3886, 7
    %v5194 = vsel %vm825, %v5192, %v5193
    %v5199 = vsel %vm825, 0.0, %v5189
    %v5200 = vsel %vm825, 0.0, %v5192
    %v5201 = vmul.f32 %v3883, 2.0
    %v5202 = vmul.f32 %v3884, 2.0
    %v5203 = vmul.f32 %v3885, 2.0
    %v5204 = vmul.f32 %v3886, 2.0
    %v5205 = vadd.f32 %v5199, %v5201
    %v5206 = vadd.f32 %v5191, %v5202
    %v5207 = vadd.f32 %v5200, %v5203
    %v5208 = vadd.f32 %v5194, %v5204
    %v5209 = vadd.f32 %v5205, %v3898
    %v5210 = vadd.f32 %v5206, %v3906
    %v5211 = vadd.f32 %v5207, %v3901
    %v5212 = vadd.f32 %v5208, %v3907
    %v5213 = vsub.f32 %v3898, %v5199
    %v5214 = vsub.f32 %v3906, %v5191
    %v5215 = vsub.f32 %v3901, %v5200
    %v5216 = vsub.f32 %v3907, %v5194
    %5221 = vrot.lane.b32.xlu0 %v5209, 120
    %v5222 = vpop.permute.xlu0 %5221
    %5223 = vrot.lane.b32.xlu0 %v5210, 120
    %v5224 = vpop.permute.xlu0 %5223
    %5225 = vrot.lane.b32.xlu0 %v5211, 120
    %v5226 = vpop.permute.xlu0 %5225
    %5227 = vrot.lane.b32.xlu0 %v5212, 120
    %v5228 = vpop.permute.xlu0 %5227
    %v5233 = vsel %vm883, %v5222, 0.0
    %v5234 = vsel %vm883, %v5224, 0.0
    %v5235 = vsel %vm883, %v5226, 0.0
    %v5236 = vsel %vm883, %v5228, 0.0
    %5237 = vrot.lane.b32.xlu0 %v5209, 8
    %v5238 = vpop.permute.xlu0 %5237
    %5239 = vrot.lane.b32.xlu0 %v5210, 8
    %v5240 = vpop.permute.xlu0 %5239
    %5241 = vrot.lane.b32.xlu0 %v5211, 8
    %v5242 = vpop.permute.xlu0 %5241
    %5243 = vrot.lane.b32.xlu0 %v5212, 8
    %v5244 = vpop.permute.xlu0 %5243
    %v5249 = vsel %vm900, 0.0, %v5238
    %v5250 = vsel %vm900, 0.0, %v5240
    %v5251 = vsel %vm900, 0.0, %v5242
    %v5252 = vsel %vm900, 0.0, %v5244
    %v5253 = vsub.f32 %v5233, %v5249
    %v5254 = vsub.f32 %v5234, %v5250
    %v5255 = vsub.f32 %v5235, %v5251
    %v5256 = vsub.f32 %v5236, %v5252
    %v5257 = vmul.f32 %v5253, 0.125
    %v5258 = vmul.f32 %v5254, 0.125
    %v5259 = vmul.f32 %v5255, 0.125
    %v5260 = vmul.f32 %v5256, 0.125
    %5265 = vrot.lane.b32.xlu0 %v5213, 8
    %v5266 = vpop.permute.xlu0 %5265
    %5267 = vrot.lane.b32.xlu0 %v5214, 8
    %v5268 = vpop.permute.xlu0 %5267
    %5269 = vrot.lane.b32.xlu0 %v5215, 8
    %v5270 = vpop.permute.xlu0 %5269
    %5271 = vrot.lane.b32.xlu0 %v5216, 8
    %v5272 = vpop.permute.xlu0 %5271
    %v5277 = vsel %vm900, 0.0, %v5266
    %v5278 = vsel %vm900, 0.0, %v5268
    %v5279 = vsel %vm900, 0.0, %v5270
    %v5280 = vsel %vm900, 0.0, %v5272
    %v5281 = vmul.f32 %v5213, 2.0
    %v5282 = vmul.f32 %v5214, 2.0
    %v5283 = vmul.f32 %v5215, 2.0
    %v5284 = vmul.f32 %v5216, 2.0
    %v5285 = vadd.f32 %v5277, %v5281
    %v5286 = vadd.f32 %v5278, %v5282
    %v5287 = vadd.f32 %v5279, %v5283
    %v5288 = vadd.f32 %v5280, %v5284
    %5289 = vrot.lane.b32.xlu0 %v5213, 120
    %v5290 = vpop.permute.xlu0 %5289
    %5291 = vrot.lane.b32.xlu0 %v5214, 120
    %v5292 = vpop.permute.xlu0 %5291
    %5293 = vrot.lane.b32.xlu0 %v5215, 120
    %v5294 = vpop.permute.xlu0 %5293
    %5295 = vrot.lane.b32.xlu0 %v5216, 120
    %v5296 = vpop.permute.xlu0 %5295
    %v5301 = vsel %vm883, %v5290, 0.0
    %v5302 = vsel %vm883, %v5292, 0.0
    %v5303 = vsel %vm883, %v5294, 0.0
    %v5304 = vsel %vm883, %v5296, 0.0
    %v5305 = vadd.f32 %v5285, %v5301
    %v5306 = vadd.f32 %v5286, %v5302
    %v5307 = vadd.f32 %v5287, %v5303
    %v5308 = vadd.f32 %v5288, %v5304
    %v5309 = vmul.f32 %v5305, 0.125
    %v5310 = vmul.f32 %v5306, 0.125
    %v5311 = vmul.f32 %v5307, 0.125
    %v5312 = vmul.f32 %v5308, 0.125
    %v5313 = vmax.f32 %v5199, %v3883
    %v5314 = vmax.f32 %v5191, %v3884
    %v5315 = vmax.f32 %v5200, %v3885
    %v5316 = vmax.f32 %v5194, %v3886
    %v5317 = vmax.f32 %v5313, %v3898
    %v5318 = vmax.f32 %v5314, %v3906
    %v5319 = vmax.f32 %v5315, %v3901
    %v5320 = vmax.f32 %v5316, %v3907
    %5325 = vrot.lane.b32.xlu0 %v5317, 120
    %v5326 = vpop.permute.xlu0 %5325
    %5327 = vrot.lane.b32.xlu0 %v5318, 120
    %v5328 = vpop.permute.xlu0 %5327
    %5329 = vrot.lane.b32.xlu0 %v5319, 120
    %v5330 = vpop.permute.xlu0 %5329
    %5331 = vrot.lane.b32.xlu0 %v5320, 120
    %v5332 = vpop.permute.xlu0 %5331
    %v5337 = vsel %vm883, %v5326, 0.0
    %v5338 = vsel %vm883, %v5328, 0.0
    %v5339 = vsel %vm883, %v5330, 0.0
    %v5340 = vsel %vm883, %v5332, 0.0
    %v5341 = vmax.f32 %v5337, %v5317
    %v5342 = vmax.f32 %v5338, %v5318
    %v5343 = vmax.f32 %v5339, %v5319
    %v5344 = vmax.f32 %v5340, %v5320
    %5345 = vrot.lane.b32.xlu0 %v5317, 8
    %v5346 = vpop.permute.xlu0 %5345
    %5347 = vrot.lane.b32.xlu0 %v5318, 8
    %v5348 = vpop.permute.xlu0 %5347
    %5349 = vrot.lane.b32.xlu0 %v5319, 8
    %v5350 = vpop.permute.xlu0 %5349
    %5351 = vrot.lane.b32.xlu0 %v5320, 8
    %v5352 = vpop.permute.xlu0 %5351
    %v5357 = vsel %vm900, 0.0, %v5346
    %v5358 = vsel %vm900, 0.0, %v5348
    %v5359 = vsel %vm900, 0.0, %v5350
    %v5360 = vsel %vm900, 0.0, %v5352
    %v5361 = vmax.f32 %v5341, %v5357
    %v5362 = vmax.f32 %v5342, %v5358
    %v5363 = vmax.f32 %v5343, %v5359
    %v5364 = vmax.f32 %v5344, %v5360
    %5365 = vmatpush.msra.mxu0 %v98
    %5366 = vmatpush.msra.mxu0 %v97
    %5367 = vmatpush.msra.mxu0 %v96
    %5368 = vmatpush.msra.mxu0 %v95
    %5369 = vmatpush.msra.mxu0 %v94
    %5370 = vmatpush.msra.mxu0 %v93
    %5371 = vmatpush.msra.mxu0 %v92
    %5372 = vmatpush.msra.mxu0 %v91
    %5373 = vmatpush.msra.mxu0 %v90
    %5374 = vmatpush.msra.mxu0 %v89
    %5375 = vmatpush.msra.mxu0 %v88
    %5376 = vmatpush.msra.mxu0 %v87
    %5377 = vmatpush.msra.mxu0 %v86
    %5378 = vmatpush.msra.mxu0 %v85
    %5379 = vmatpush.msra.mxu0 %v84
    %5380 = vmatpush.msra.mxu0 %v83
    %5381 = vmatmul.f32.gmra.mxu0 %v5361
    %v5382 = vpop.f32.mrf.mxu0
    %v5383 = vadd.f32 0.0, %v5382
    %5384 = vmatmul.f32.gmra.mxu0 %v5362
    %v5385 = vpop.f32.mrf.mxu0
    %v5386 = vadd.f32 0.0, %v5385
    %5387 = vmatmul.f32.gmra.mxu0 %v5363
    %v5388 = vpop.f32.mrf.mxu0
    %v5389 = vadd.f32 0.0, %v5388
    %5390 = vmatmul.f32.gmra.mxu0 %v5364
    %v5391 = vpop.f32.mrf.mxu0
    %v5392 = vadd.f32 0.0, %v5391
    %5393 = vdwg.mxu0
    %5394 = vmatpush.msra.mxu0 %v159
    %5395 = vmatpush.msra.mxu0 %v155
    %5396 = vmatpush.msra.mxu0 %v151
    %5397 = vmatpush.msra.mxu0 %v147
    %5398 = vmatpush.msra.mxu0 %v143
    %5399 = vmatpush.msra.mxu0 %v139
    %5400 = vmatpush.msra.mxu0 %v135
    %5401 = vmatpush.msra.mxu0 %v131
    %5402 = vmatpush.msra.mxu0 %v127
    %5403 = vmatpush.msra.mxu0 %v123
    %5404 = vmatpush.msra.mxu0 %v119
    %5405 = vmatpush.msra.mxu0 %v115
    %5406 = vmatpush.msra.mxu0 %v111
    %5407 = vmatpush.msra.mxu0 %v107
    %5408 = vmatpush.msra.mxu0 %v103
    %5409 = vmatpush.msra.mxu0 %v99
    %5410 = vmatmul.f32.gmra.mxu0 %v3883
    %v5411 = vpop.f32.mrf.mxu0
    %v5412 = vadd.f32 %v1047, %v5411
    %5413 = vmatmul.f32.gmra.mxu0 %v3884
    %v5414 = vpop.f32.mrf.mxu0
    %v5415 = vadd.f32 %v1047, %v5414
    %5416 = vmatmul.f32.gmra.mxu0 %v3885
    %v5417 = vpop.f32.mrf.mxu0
    %v5418 = vadd.f32 %v1047, %v5417
    %5419 = vmatmul.f32.gmra.mxu0 %v3886
    %v5420 = vpop.f32.mrf.mxu0
    %v5421 = vadd.f32 %v1047, %v5420
    %5422 = vdwg.mxu0
    %5423 = vmatpush.msra.mxu0 %v223
    %5424 = vmatpush.msra.mxu0 %v219
    %5425 = vmatpush.msra.mxu0 %v215
    %5426 = vmatpush.msra.mxu0 %v211
    %5427 = vmatpush.msra.mxu0 %v207
    %5428 = vmatpush.msra.mxu0 %v203
    %5429 = vmatpush.msra.mxu0 %v199
    %5430 = vmatpush.msra.mxu0 %v195
    %5431 = vmatpush.msra.mxu0 %v191
    %5432 = vmatpush.msra.mxu0 %v187
    %5433 = vmatpush.msra.mxu0 %v183
    %5434 = vmatpush.msra.mxu0 %v179
    %5435 = vmatpush.msra.mxu0 %v175
    %5436 = vmatpush.msra.mxu0 %v171
    %5437 = vmatpush.msra.mxu0 %v167
    %5438 = vmatpush.msra.mxu0 %v163
    %5439 = vmatmul.f32.gmra.mxu0 %v5257
    %v5440 = vpop.f32.mrf.mxu0
    %v5441 = vadd.f32 %v5412, %v5440
    %5442 = vmatmul.f32.gmra.mxu0 %v5258
    %v5443 = vpop.f32.mrf.mxu0
    %v5444 = vadd.f32 %v5415, %v5443
    %5445 = vmatmul.f32.gmra.mxu0 %v5259
    %v5446 = vpop.f32.mrf.mxu0
    %v5447 = vadd.f32 %v5418, %v5446
    %5448 = vmatmul.f32.gmra.mxu0 %v5260
    %v5449 = vpop.f32.mrf.mxu0
    %v5450 = vadd.f32 %v5421, %v5449
    %5451 = vdwg.mxu0
    %5452 = vmatpush.msra.mxu0 %v287
    %5453 = vmatpush.msra.mxu0 %v283
    %5454 = vmatpush.msra.mxu0 %v279
    %5455 = vmatpush.msra.mxu0 %v275
    %5456 = vmatpush.msra.mxu0 %v271
    %5457 = vmatpush.msra.mxu0 %v267
    %5458 = vmatpush.msra.mxu0 %v263
    %5459 = vmatpush.msra.mxu0 %v259
    %5460 = vmatpush.msra.mxu0 %v255
    %5461 = vmatpush.msra.mxu0 %v251
    %5462 = vmatpush.msra.mxu0 %v247
    %5463 = vmatpush.msra.mxu0 %v243
    %5464 = vmatpush.msra.mxu0 %v239
    %5465 = vmatpush.msra.mxu0 %v235
    %5466 = vmatpush.msra.mxu0 %v231
    %5467 = vmatpush.msra.mxu0 %v227
    %5468 = vmatmul.f32.gmra.mxu0 %v5309
    %v5469 = vpop.f32.mrf.mxu0
    %v5470 = vadd.f32 %v5441, %v5469
    %5471 = vmatmul.f32.gmra.mxu0 %v5310
    %v5472 = vpop.f32.mrf.mxu0
    %v5473 = vadd.f32 %v5444, %v5472
    %5474 = vmatmul.f32.gmra.mxu0 %v5311
    %v5475 = vpop.f32.mrf.mxu0
    %v5476 = vadd.f32 %v5447, %v5475
    %5477 = vmatmul.f32.gmra.mxu0 %v5312
    %v5478 = vpop.f32.mrf.mxu0
    %v5479 = vadd.f32 %v5450, %v5478
    %5480 = vdwg.mxu0
    %5481 = vmatpush.msra.mxu0 %v160
    %5482 = vmatpush.msra.mxu0 %v156
    %5483 = vmatpush.msra.mxu0 %v152
    %5484 = vmatpush.msra.mxu0 %v148
    %5485 = vmatpush.msra.mxu0 %v144
    %5486 = vmatpush.msra.mxu0 %v140
    %5487 = vmatpush.msra.mxu0 %v136
    %5488 = vmatpush.msra.mxu0 %v132
    %5489 = vmatpush.msra.mxu0 %v128
    %5490 = vmatpush.msra.mxu0 %v124
    %5491 = vmatpush.msra.mxu0 %v120
    %5492 = vmatpush.msra.mxu0 %v116
    %5493 = vmatpush.msra.mxu0 %v112
    %5494 = vmatpush.msra.mxu0 %v108
    %5495 = vmatpush.msra.mxu0 %v104
    %5496 = vmatpush.msra.mxu0 %v100
    %5497 = vmatmul.f32.gmra.mxu0 %v3883
    %v5498 = vpop.f32.mrf.mxu0
    %v5499 = vadd.f32 %v1048, %v5498
    %5500 = vmatmul.f32.gmra.mxu0 %v3884
    %v5501 = vpop.f32.mrf.mxu0
    %v5502 = vadd.f32 %v1048, %v5501
    %5503 = vmatmul.f32.gmra.mxu0 %v3885
    %v5504 = vpop.f32.mrf.mxu0
    %v5505 = vadd.f32 %v1048, %v5504
    %5506 = vmatmul.f32.gmra.mxu0 %v3886
    %v5507 = vpop.f32.mrf.mxu0
    %v5508 = vadd.f32 %v1048, %v5507
    %5509 = vdwg.mxu0
    %5510 = vmatpush.msra.mxu0 %v224
    %5511 = vmatpush.msra.mxu0 %v220
    %5512 = vmatpush.msra.mxu0 %v216
    %5513 = vmatpush.msra.mxu0 %v212
    %5514 = vmatpush.msra.mxu0 %v208
    %5515 = vmatpush.msra.mxu0 %v204
    %5516 = vmatpush.msra.mxu0 %v200
    %5517 = vmatpush.msra.mxu0 %v196
    %5518 = vmatpush.msra.mxu0 %v192
    %5519 = vmatpush.msra.mxu0 %v188
    %5520 = vmatpush.msra.mxu0 %v184
    %5521 = vmatpush.msra.mxu0 %v180
    %5522 = vmatpush.msra.mxu0 %v176
    %5523 = vmatpush.msra.mxu0 %v172
    %5524 = vmatpush.msra.mxu0 %v168
    %5525 = vmatpush.msra.mxu0 %v164
    %5526 = vmatmul.f32.gmra.mxu0 %v5257
    %v5527 = vpop.f32.mrf.mxu0
    %v5528 = vadd.f32 %v5499, %v5527
    %5529 = vmatmul.f32.gmra.mxu0 %v5258
    %v5530 = vpop.f32.mrf.mxu0
    %v5531 = vadd.f32 %v5502, %v5530
    %5532 = vmatmul.f32.gmra.mxu0 %v5259
    %v5533 = vpop.f32.mrf.mxu0
    %v5534 = vadd.f32 %v5505, %v5533
    %5535 = vmatmul.f32.gmra.mxu0 %v5260
    %v5536 = vpop.f32.mrf.mxu0
    %v5537 = vadd.f32 %v5508, %v5536
    %5538 = vdwg.mxu0
    %5539 = vmatpush.msra.mxu0 %v288
    %5540 = vmatpush.msra.mxu0 %v284
    %5541 = vmatpush.msra.mxu0 %v280
    %5542 = vmatpush.msra.mxu0 %v276
    %5543 = vmatpush.msra.mxu0 %v272
    %5544 = vmatpush.msra.mxu0 %v268
    %5545 = vmatpush.msra.mxu0 %v264
    %5546 = vmatpush.msra.mxu0 %v260
    %5547 = vmatpush.msra.mxu0 %v256
    %5548 = vmatpush.msra.mxu0 %v252
    %5549 = vmatpush.msra.mxu0 %v248
    %5550 = vmatpush.msra.mxu0 %v244
    %5551 = vmatpush.msra.mxu0 %v240
    %5552 = vmatpush.msra.mxu0 %v236
    %5553 = vmatpush.msra.mxu0 %v232
    %5554 = vmatpush.msra.mxu0 %v228
    %5555 = vmatmul.f32.gmra.mxu0 %v5309
    %v5556 = vpop.f32.mrf.mxu0
    %v5557 = vadd.f32 %v5528, %v5556
    %5558 = vmatmul.f32.gmra.mxu0 %v5310
    %v5559 = vpop.f32.mrf.mxu0
    %v5560 = vadd.f32 %v5531, %v5559
    %5561 = vmatmul.f32.gmra.mxu0 %v5311
    %v5562 = vpop.f32.mrf.mxu0
    %v5563 = vadd.f32 %v5534, %v5562
    %5564 = vmatmul.f32.gmra.mxu0 %v5312
    %v5565 = vpop.f32.mrf.mxu0
    %v5566 = vadd.f32 %v5537, %v5565
    %5567 = vdwg.mxu0
    %5568 = vmatpush.msra.mxu0 %v161
    %5569 = vmatpush.msra.mxu0 %v157
    %5570 = vmatpush.msra.mxu0 %v153
    %5571 = vmatpush.msra.mxu0 %v149
    %5572 = vmatpush.msra.mxu0 %v145
    %5573 = vmatpush.msra.mxu0 %v141
    %5574 = vmatpush.msra.mxu0 %v137
    %5575 = vmatpush.msra.mxu0 %v133
    %5576 = vmatpush.msra.mxu0 %v129
    %5577 = vmatpush.msra.mxu0 %v125
    %5578 = vmatpush.msra.mxu0 %v121
    %5579 = vmatpush.msra.mxu0 %v117
    %5580 = vmatpush.msra.mxu0 %v113
    %5581 = vmatpush.msra.mxu0 %v109
    %5582 = vmatpush.msra.mxu0 %v105
    %5583 = vmatpush.msra.mxu0 %v101
    %5584 = vmatmul.f32.gmra.mxu0 %v3883
    %v5585 = vpop.f32.mrf.mxu0
    %v5586 = vadd.f32 %v1049, %v5585
    %5587 = vmatmul.f32.gmra.mxu0 %v3884
    %v5588 = vpop.f32.mrf.mxu0
    %v5589 = vadd.f32 %v1049, %v5588
    %5590 = vmatmul.f32.gmra.mxu0 %v3885
    %v5591 = vpop.f32.mrf.mxu0
    %v5592 = vadd.f32 %v1049, %v5591
    %5593 = vmatmul.f32.gmra.mxu0 %v3886
    %v5594 = vpop.f32.mrf.mxu0
    %v5595 = vadd.f32 %v1049, %v5594
    %5596 = vdwg.mxu0
    %5597 = vmatpush.msra.mxu0 %v225
    %5598 = vmatpush.msra.mxu0 %v221
    %5599 = vmatpush.msra.mxu0 %v217
    %5600 = vmatpush.msra.mxu0 %v213
    %5601 = vmatpush.msra.mxu0 %v209
    %5602 = vmatpush.msra.mxu0 %v205
    %5603 = vmatpush.msra.mxu0 %v201
    %5604 = vmatpush.msra.mxu0 %v197
    %5605 = vmatpush.msra.mxu0 %v193
    %5606 = vmatpush.msra.mxu0 %v189
    %5607 = vmatpush.msra.mxu0 %v185
    %5608 = vmatpush.msra.mxu0 %v181
    %5609 = vmatpush.msra.mxu0 %v177
    %5610 = vmatpush.msra.mxu0 %v173
    %5611 = vmatpush.msra.mxu0 %v169
    %5612 = vmatpush.msra.mxu0 %v165
    %5613 = vmatmul.f32.gmra.mxu0 %v5257
    %v5614 = vpop.f32.mrf.mxu0
    %v5615 = vadd.f32 %v5586, %v5614
    %5616 = vmatmul.f32.gmra.mxu0 %v5258
    %v5617 = vpop.f32.mrf.mxu0
    %v5618 = vadd.f32 %v5589, %v5617
    %5619 = vmatmul.f32.gmra.mxu0 %v5259
    %v5620 = vpop.f32.mrf.mxu0
    %v5621 = vadd.f32 %v5592, %v5620
    %5622 = vmatmul.f32.gmra.mxu0 %v5260
    %v5623 = vpop.f32.mrf.mxu0
    %v5624 = vadd.f32 %v5595, %v5623
    %5625 = vdwg.mxu0
    %5626 = vmatpush.msra.mxu0 %v289
    %5627 = vmatpush.msra.mxu0 %v285
    %5628 = vmatpush.msra.mxu0 %v281
    %5629 = vmatpush.msra.mxu0 %v277
    %5630 = vmatpush.msra.mxu0 %v273
    %5631 = vmatpush.msra.mxu0 %v269
    %5632 = vmatpush.msra.mxu0 %v265
    %5633 = vmatpush.msra.mxu0 %v261
    %5634 = vmatpush.msra.mxu0 %v257
    %5635 = vmatpush.msra.mxu0 %v253
    %5636 = vmatpush.msra.mxu0 %v249
    %5637 = vmatpush.msra.mxu0 %v245
    %5638 = vmatpush.msra.mxu0 %v241
    %5639 = vmatpush.msra.mxu0 %v237
    %5640 = vmatpush.msra.mxu0 %v233
    %5641 = vmatpush.msra.mxu0 %v229
    %5642 = vmatmul.f32.gmra.mxu0 %v5309
    %v5643 = vpop.f32.mrf.mxu0
    %v5644 = vadd.f32 %v5615, %v5643
    %5645 = vmatmul.f32.gmra.mxu0 %v5310
    %v5646 = vpop.f32.mrf.mxu0
    %v5647 = vadd.f32 %v5618, %v5646
    %5648 = vmatmul.f32.gmra.mxu0 %v5311
    %v5649 = vpop.f32.mrf.mxu0
    %v5650 = vadd.f32 %v5621, %v5649
    %5651 = vmatmul.f32.gmra.mxu0 %v5312
    %v5652 = vpop.f32.mrf.mxu0
    %v5653 = vadd.f32 %v5624, %v5652
    %5654 = vdwg.mxu0
    %5655 = vmatpush.msra.mxu0 %v162
    %5656 = vmatpush.msra.mxu0 %v158
    %5657 = vmatpush.msra.mxu0 %v154
    %5658 = vmatpush.msra.mxu0 %v150
    %5659 = vmatpush.msra.mxu0 %v146
    %5660 = vmatpush.msra.mxu0 %v142
    %5661 = vmatpush.msra.mxu0 %v138
    %5662 = vmatpush.msra.mxu0 %v134
    %5663 = vmatpush.msra.mxu0 %v130
    %5664 = vmatpush.msra.mxu0 %v126
    %5665 = vmatpush.msra.mxu0 %v122
    %5666 = vmatpush.msra.mxu0 %v118
    %5667 = vmatpush.msra.mxu0 %v114
    %5668 = vmatpush.msra.mxu0 %v110
    %5669 = vmatpush.msra.mxu0 %v106
    %5670 = vmatpush.msra.mxu0 %v102
    %5671 = vmatmul.f32.gmra.mxu0 %v3883
    %v5672 = vpop.f32.mrf.mxu0
    %v5673 = vadd.f32 %v1050, %v5672
    %5674 = vmatmul.f32.gmra.mxu0 %v3884
    %v5675 = vpop.f32.mrf.mxu0
    %v5676 = vadd.f32 %v1050, %v5675
    %5677 = vmatmul.f32.gmra.mxu0 %v3885
    %v5678 = vpop.f32.mrf.mxu0
    %v5679 = vadd.f32 %v1050, %v5678
    %5680 = vmatmul.f32.gmra.mxu0 %v3886
    %v5681 = vpop.f32.mrf.mxu0
    %v5682 = vadd.f32 %v1050, %v5681
    %5683 = vdwg.mxu0
    %5684 = vmatpush.msra.mxu0 %v226
    %5685 = vmatpush.msra.mxu0 %v222
    %5686 = vmatpush.msra.mxu0 %v218
    %5687 = vmatpush.msra.mxu0 %v214
    %5688 = vmatpush.msra.mxu0 %v210
    %5689 = vmatpush.msra.mxu0 %v206
    %5690 = vmatpush.msra.mxu0 %v202
    %5691 = vmatpush.msra.mxu0 %v198
    %5692 = vmatpush.msra.mxu0 %v194
    %5693 = vmatpush.msra.mxu0 %v190
    %5694 = vmatpush.msra.mxu0 %v186
    %5695 = vmatpush.msra.mxu0 %v182
    %5696 = vmatpush.msra.mxu0 %v178
    %5697 = vmatpush.msra.mxu0 %v174
    %5698 = vmatpush.msra.mxu0 %v170
    %5699 = vmatpush.msra.mxu0 %v166
    %5700 = vmatmul.f32.gmra.mxu0 %v5257
    %v5701 = vpop.f32.mrf.mxu0
    %v5702 = vadd.f32 %v5673, %v5701
    %5703 = vmatmul.f32.gmra.mxu0 %v5258
    %v5704 = vpop.f32.mrf.mxu0
    %v5705 = vadd.f32 %v5676, %v5704
    %5706 = vmatmul.f32.gmra.mxu0 %v5259
    %v5707 = vpop.f32.mrf.mxu0
    %v5708 = vadd.f32 %v5679, %v5707
    %5709 = vmatmul.f32.gmra.mxu0 %v5260
    %v5710 = vpop.f32.mrf.mxu0
    %v5711 = vadd.f32 %v5682, %v5710
    %5712 = vdwg.mxu0
    %5713 = vmatpush.msra.mxu0 %v290
    %5714 = vmatpush.msra.mxu0 %v286
    %5715 = vmatpush.msra.mxu0 %v282
    %5716 = vmatpush.msra.mxu0 %v278
    %5717 = vmatpush.msra.mxu0 %v274
    %5718 = vmatpush.msra.mxu0 %v270
    %5719 = vmatpush.msra.mxu0 %v266
    %5720 = vmatpush.msra.mxu0 %v262
    %5721 = vmatpush.msra.mxu0 %v258
    %5722 = vmatpush.msra.mxu0 %v254
    %5723 = vmatpush.msra.mxu0 %v250
    %5724 = vmatpush.msra.mxu0 %v246
    %5725 = vmatpush.msra.mxu0 %v242
    %5726 = vmatpush.msra.mxu0 %v238
    %5727 = vmatpush.msra.mxu0 %v234
    %5728 = vmatpush.msra.mxu0 %v230
    %5729 = vmatmul.f32.gmra.mxu0 %v5309
    %v5730 = vpop.f32.mrf.mxu0
    %v5731 = vadd.f32 %v5702, %v5730
    %5732 = vmatmul.f32.gmra.mxu0 %v5310
    %v5733 = vpop.f32.mrf.mxu0
    %v5734 = vadd.f32 %v5705, %v5733
    %5735 = vmatmul.f32.gmra.mxu0 %v5311
    %v5736 = vpop.f32.mrf.mxu0
    %v5737 = vadd.f32 %v5708, %v5736
    %5738 = vmatmul.f32.gmra.mxu0 %v5312
    %v5739 = vpop.f32.mrf.mxu0
    %v5740 = vadd.f32 %v5711, %v5739
    %5741 = vdwg.mxu0
    %v5742 = vmax.f32 %v5470, 0.0
    %v5743 = vmax.f32 %v5557, 0.0
    %v5744 = vmax.f32 %v5644, 0.0
    %v5745 = vmax.f32 %v5731, 0.0
    %v5746 = vmax.f32 %v5473, 0.0
    %v5747 = vmax.f32 %v5560, 0.0
    %v5748 = vmax.f32 %v5647, 0.0
    %v5749 = vmax.f32 %v5734, 0.0
    %v5750 = vmax.f32 %v5476, 0.0
    %v5751 = vmax.f32 %v5563, 0.0
    %v5752 = vmax.f32 %v5650, 0.0
    %v5753 = vmax.f32 %v5737, 0.0
    %v5754 = vmax.f32 %v5479, 0.0
    %v5755 = vmax.f32 %v5566, 0.0
    %v5756 = vmax.f32 %v5653, 0.0
    %v5757 = vmax.f32 %v5740, 0.0
    %5758 = vmatpush.msra.mxu0 %v307
    %5759 = vmatpush.msra.mxu0 %v306
    %5760 = vmatpush.msra.mxu0 %v305
    %5761 = vmatpush.msra.mxu0 %v304
    %5762 = vmatpush.msra.mxu0 %v303
    %5763 = vmatpush.msra.mxu0 %v302
    %5764 = vmatpush.msra.mxu0 %v301
    %5765 = vmatpush.msra.mxu0 %v300
    %5766 = vmatpush.msra.mxu0 %v299
    %5767 = vmatpush.msra.mxu0 %v298
    %5768 = vmatpush.msra.mxu0 %v297
    %5769 = vmatpush.msra.mxu0 %v296
    %5770 = vmatpush.msra.mxu0 %v295
    %5771 = vmatpush.msra.mxu0 %v294
    %5772 = vmatpush.msra.mxu0 %v293
    %5773 = vmatpush.msra.mxu0 %v292
    %5774 = vmatmul.f32.gmra.mxu0 %v5742
    %v5775 = vpop.f32.mrf.mxu0
    %v5776 = vadd.f32 0.0, %v5775
    %5777 = vmatmul.f32.gmra.mxu0 %v5746
    %v5778 = vpop.f32.mrf.mxu0
    %v5779 = vadd.f32 0.0, %v5778
    %5780 = vmatmul.f32.gmra.mxu0 %v5750
    %v5781 = vpop.f32.mrf.mxu0
    %v5782 = vadd.f32 0.0, %v5781
    %5783 = vmatmul.f32.gmra.mxu0 %v5754
    %v5784 = vpop.f32.mrf.mxu0
    %v5785 = vadd.f32 0.0, %v5784
    %5786 = vdwg.mxu0
    %5787 = vmatpush.msra.mxu0 %v323
    %5788 = vmatpush.msra.mxu0 %v322
    %5789 = vmatpush.msra.mxu0 %v321
    %5790 = vmatpush.msra.mxu0 %v320
    %5791 = vmatpush.msra.mxu0 %v319
    %5792 = vmatpush.msra.mxu0 %v318
    %5793 = vmatpush.msra.mxu0 %v317
    %5794 = vmatpush.msra.mxu0 %v316
    %5795 = vmatpush.msra.mxu0 %v315
    %5796 = vmatpush.msra.mxu0 %v314
    %5797 = vmatpush.msra.mxu0 %v313
    %5798 = vmatpush.msra.mxu0 %v312
    %5799 = vmatpush.msra.mxu0 %v311
    %5800 = vmatpush.msra.mxu0 %v310
    %5801 = vmatpush.msra.mxu0 %v309
    %5802 = vmatpush.msra.mxu0 %v308
    %5803 = vmatmul.f32.gmra.mxu0 %v5743
    %v5804 = vpop.f32.mrf.mxu0
    %v5805 = vadd.f32 %v5776, %v5804
    %5806 = vmatmul.f32.gmra.mxu0 %v5747
    %v5807 = vpop.f32.mrf.mxu0
    %v5808 = vadd.f32 %v5779, %v5807
    %5809 = vmatmul.f32.gmra.mxu0 %v5751
    %v5810 = vpop.f32.mrf.mxu0
    %v5811 = vadd.f32 %v5782, %v5810
    %5812 = vmatmul.f32.gmra.mxu0 %v5755
    %v5813 = vpop.f32.mrf.mxu0
    %v5814 = vadd.f32 %v5785, %v5813
    %5815 = vdwg.mxu0
    %5816 = vmatpush.msra.mxu0 %v339
    %5817 = vmatpush.msra.mxu0 %v338
    %5818 = vmatpush.msra.mxu0 %v337
    %5819 = vmatpush.msra.mxu0 %v336
    %5820 = vmatpush.msra.mxu0 %v335
    %5821 = vmatpush.msra.mxu0 %v334
    %5822 = vmatpush.msra.mxu0 %v333
    %5823 = vmatpush.msra.mxu0 %v332
    %5824 = vmatpush.msra.mxu0 %v331
    %5825 = vmatpush.msra.mxu0 %v330
    %5826 = vmatpush.msra.mxu0 %v329
    %5827 = vmatpush.msra.mxu0 %v328
    %5828 = vmatpush.msra.mxu0 %v327
    %5829 = vmatpush.msra.mxu0 %v326
    %5830 = vmatpush.msra.mxu0 %v325
    %5831 = vmatpush.msra.mxu0 %v324
    %5832 = vmatmul.f32.gmra.mxu0 %v5744
    %v5833 = vpop.f32.mrf.mxu0
    %v5834 = vadd.f32 %v5805, %v5833
    %5835 = vmatmul.f32.gmra.mxu0 %v5748
    %v5836 = vpop.f32.mrf.mxu0
    %v5837 = vadd.f32 %v5808, %v5836
    %5838 = vmatmul.f32.gmra.mxu0 %v5752
    %v5839 = vpop.f32.mrf.mxu0
    %v5840 = vadd.f32 %v5811, %v5839
    %5841 = vmatmul.f32.gmra.mxu0 %v5756
    %v5842 = vpop.f32.mrf.mxu0
    %v5843 = vadd.f32 %v5814, %v5842
    %5844 = vdwg.mxu0
    %5845 = vmatpush.msra.mxu0 %v355
    %5846 = vmatpush.msra.mxu0 %v354
    %5847 = vmatpush.msra.mxu0 %v353
    %5848 = vmatpush.msra.mxu0 %v352
    %5849 = vmatpush.msra.mxu0 %v351
    %5850 = vmatpush.msra.mxu0 %v350
    %5851 = vmatpush.msra.mxu0 %v349
    %5852 = vmatpush.msra.mxu0 %v348
    %5853 = vmatpush.msra.mxu0 %v347
    %5854 = vmatpush.msra.mxu0 %v346
    %5855 = vmatpush.msra.mxu0 %v345
    %5856 = vmatpush.msra.mxu0 %v344
    %5857 = vmatpush.msra.mxu0 %v343
    %5858 = vmatpush.msra.mxu0 %v342
    %5859 = vmatpush.msra.mxu0 %v341
    %5860 = vmatpush.msra.mxu0 %v340
    %5861 = vmatmul.f32.gmra.mxu0 %v5745
    %v5862 = vpop.f32.mrf.mxu0
    %v5863 = vadd.f32 %v5834, %v5862
    %5864 = vmatmul.f32.gmra.mxu0 %v5749
    %v5865 = vpop.f32.mrf.mxu0
    %v5866 = vadd.f32 %v5837, %v5865
    %5867 = vmatmul.f32.gmra.mxu0 %v5753
    %v5868 = vpop.f32.mrf.mxu0
    %v5869 = vadd.f32 %v5840, %v5868
    %5870 = vmatmul.f32.gmra.mxu0 %v5757
    %v5871 = vpop.f32.mrf.mxu0
    %v5872 = vadd.f32 %v5843, %v5871
    %5873 = vdwg.mxu0
    %s5874 = scalar_lea.vmem %s1, 64
    %v5875 = vld [vmem:[%s5874] sm:$0xff]
    %v5876 = vld [vmem:[%s5874 + $0x8] sm:$0xff]
    %v5877 = vld [vmem:[%s5874 + $0x10] sm:$0xff]
    %v5878 = vld [vmem:[%s5874 + $0x18] sm:$0xff]
    %v5879 = vmul.f32 %v5863, %v5875
    %v5880 = vmul.f32 %v5866, %v5876
    %v5881 = vmul.f32 %v5869, %v5877
    %v5882 = vmul.f32 %v5872, %v5878
    %v5883 = vadd.f32 %v3883, %v5879
    %v5884 = vadd.f32 %v3884, %v5880
    %v5885 = vadd.f32 %v3885, %v5881
    %v5886 = vadd.f32 %v3886, %v5882
    %v5891 = vrot.slane %v5883, 7
    %v5892 = vrot.slane %v5884, 7
    %v5893 = vsel %vm825, %v5891, %v5892
    %v5894 = vrot.slane %v5885, 7
    %v5895 = vrot.slane %v5886, 7
    %v5896 = vsel %vm825, %v5894, %v5895
    %v5901 = vsel %vm825, 0.0, %v5891
    %v5902 = vsel %vm825, 0.0, %v5894
    %v5903 = vmax.f32 %v5901, %v5883
    %v5904 = vmax.f32 %v5893, %v5884
    %v5905 = vmax.f32 %v5902, %v5885
    %v5906 = vmax.f32 %v5896, %v5886
    %v5907 = vrot.slane %v5883, 1
    %v5908 = vrot.slane %v5884, 1
    %v5909 = vsel %vm838, %v5907, %v5908
    %v5910 = vrot.slane %v5885, 1
    %v5911 = vrot.slane %v5886, 1
    %v5912 = vsel %vm838, %v5910, %v5911
    %v5917 = vsel %vm838, %v5908, 0.0
    %v5918 = vsel %vm838, %v5911, 0.0
    %v5919 = vmax.f32 %v5903, %v5909
    %v5920 = vmax.f32 %v5904, %v5917
    %v5921 = vmax.f32 %v5905, %v5912
    %v5922 = vmax.f32 %v5906, %v5918
    %5927 = vrot.lane.b32.xlu0 %v5919, 120
    %v5928 = vpop.permute.xlu0 %5927
    %5929 = vrot.lane.b32.xlu0 %v5920, 120
    %v5930 = vpop.permute.xlu0 %5929
    %5931 = vrot.lane.b32.xlu0 %v5921, 120
    %v5932 = vpop.permute.xlu0 %5931
    %5933 = vrot.lane.b32.xlu0 %v5922, 120
    %v5934 = vpop.permute.xlu0 %5933
    %v5939 = vsel %vm883, %v5928, 0.0
    %v5940 = vsel %vm883, %v5930, 0.0
    %v5941 = vsel %vm883, %v5932, 0.0
    %v5942 = vsel %vm883, %v5934, 0.0
    %v5943 = vmax.f32 %v5939, %v5919
    %v5944 = vmax.f32 %v5940, %v5920
    %v5945 = vmax.f32 %v5941, %v5921
    %v5946 = vmax.f32 %v5942, %v5922
    %5947 = vrot.lane.b32.xlu0 %v5919, 8
    %v5948 = vpop.permute.xlu0 %5947
    %5949 = vrot.lane.b32.xlu0 %v5920, 8
    %v5950 = vpop.permute.xlu0 %5949
    %5951 = vrot.lane.b32.xlu0 %v5921, 8
    %v5952 = vpop.permute.xlu0 %5951
    %5953 = vrot.lane.b32.xlu0 %v5922, 8
    %v5954 = vpop.permute.xlu0 %5953
    %v5959 = vsel %vm900, 0.0, %v5948
    %v5960 = vsel %vm900, 0.0, %v5950
    %v5961 = vsel %vm900, 0.0, %v5952
    %v5962 = vsel %vm900, 0.0, %v5954
    %v5963 = vmax.f32 %v5943, %v5959
    %v5964 = vmax.f32 %v5944, %v5960
    %v5965 = vmax.f32 %v5945, %v5961
    %v5966 = vmax.f32 %v5946, %v5962
    %5967 = vmatpush.msra.mxu0 %v98
    %5968 = vmatpush.msra.mxu0 %v97
    %5969 = vmatpush.msra.mxu0 %v96
    %5970 = vmatpush.msra.mxu0 %v95
    %5971 = vmatpush.msra.mxu0 %v94
    %5972 = vmatpush.msra.mxu0 %v93
    %5973 = vmatpush.msra.mxu0 %v92
    %5974 = vmatpush.msra.mxu0 %v91
    %5975 = vmatpush.msra.mxu0 %v90
    %5976 = vmatpush.msra.mxu0 %v89
    %5977 = vmatpush.msra.mxu0 %v88
    %5978 = vmatpush.msra.mxu0 %v87
    %5979 = vmatpush.msra.mxu0 %v86
    %5980 = vmatpush.msra.mxu0 %v85
    %5981 = vmatpush.msra.mxu0 %v84
    %5982 = vmatpush.msra.mxu0 %v83
    %5983 = vmatmul.f32.gmra.mxu0 %v5963
    %v5984 = vpop.f32.mrf.mxu0
    %v5985 = vadd.f32 0.0, %v5984
    %5986 = vmatmul.f32.gmra.mxu0 %v5964
    %v5987 = vpop.f32.mrf.mxu0
    %v5988 = vadd.f32 0.0, %v5987
    %5989 = vmatmul.f32.gmra.mxu0 %v5965
    %v5990 = vpop.f32.mrf.mxu0
    %v5991 = vadd.f32 0.0, %v5990
    %5992 = vmatmul.f32.gmra.mxu0 %v5966
    %v5993 = vpop.f32.mrf.mxu0
    %v5994 = vadd.f32 0.0, %v5993
    %5995 = vdwg.mxu0
    %vm5996 = vcmp.gt.f32.partialorder %v5383, 0.1
    %vm5997 = vcmp.gt.f32.partialorder %v5386, 0.1
    %vm5998 = vcmp.gt.f32.partialorder %v5389, 0.1
    %vm5999 = vcmp.gt.f32.partialorder %v5392, 0.1
    %vm6000 = vcmp.gt.f32.partialorder %v5985, 0.1
    %vm6001 = vcmp.gt.f32.partialorder %v5988, 0.1
    %vm6002 = vcmp.gt.f32.partialorder %v5991, 0.1
    %vm6003 = vcmp.gt.f32.partialorder %v5994, 0.1
    %vm6004 = vmand %vm5996, %vm6000
    %vm6005 = vmand %vm5997, %vm6001
    %vm6006 = vmand %vm5998, %vm6002
    %vm6007 = vmand %vm5999, %vm6003
    %v6008 = vsel %vm6004, 1, 0
    %v6009 = vsel %vm6005, 1, 0
    %v6010 = vsel %vm6006, 1, 0
    %v6011 = vsel %vm6007, 1, 0
    %v6012 = vcvt.s32.f32 %v6008
    %v6013 = vcvt.s32.f32 %v6009
    %v6014 = vcvt.s32.f32 %v6010
    %v6015 = vcvt.s32.f32 %v6011
    %v6016 = vmul.f32 %v5883, %v6012
    %v6017 = vmul.f32 %v5884, %v6013
    %v6018 = vmul.f32 %v5885, %v6014
    %v6019 = vmul.f32 %v5886, %v6015
    %s6020 = scalar_lea.vmem %s14, 64
    %6021 = vst [vmem:[%s6020] sm:$0xff] %v6016
    %6022 = vst [vmem:[%s6020 + $0x8] sm:$0xff] %v6017
    %6023 = vst [vmem:[%s6020 + $0x10] sm:$0xff] %v6018
    %6024 = vst [vmem:[%s6020 + $0x18] sm:$0xff] %v6019
    %v6029 = vrot.slane %v6016, 1
    %v6030 = vrot.slane %v6017, 1
    %v6031 = vsel %vm838, %v6029, %v6030
    %v6032 = vrot.slane %v6018, 1
    %v6033 = vrot.slane %v6019, 1
    %v6034 = vsel %vm838, %v6032, %v6033
    %v6039 = vsel %vm838, %v6030, 0.0
    %v6040 = vsel %vm838, %v6033, 0.0
    %v6043 = vrot.slane %v6031, 1
    %v6044 = vrot.slane %v6039, 1
    %v6045 = vsel %vm838, %v6043, %v6044
    %v6046 = vrot.slane %v6034, 1
    %v6047 = vrot.slane %v6040, 1
    %v6048 = vsel %vm838, %v6046, %v6047
    %v6053 = vsel %vm838, %v6044, 0.0
    %v6054 = vsel %vm838, %v6047, 0.0
    %6055 = vrot.lane.b32.xlu0 %v6016, 120
    %v6056 = vpop.permute.xlu0 %6055
    %6057 = vrot.lane.b32.xlu0 %v6017, 120
    %v6058 = vpop.permute.xlu0 %6057
    %6059 = vrot.lane.b32.xlu0 %v6018, 120
    %v6060 = vpop.permute.xlu0 %6059
    %6061 = vrot.lane.b32.xlu0 %v6019, 120
    %v6062 = vpop.permute.xlu0 %6061
    %v6067 = vsel %vm883, %v6056, 0.0
    %v6068 = vsel %vm883, %v6058, 0.0
    %v6069 = vsel %vm883, %v6060, 0.0
    %v6070 = vsel %vm883, %v6062, 0.0
    %6071 = vrot.lane.b32.xlu0 %v6016, 112
    %v6072 = vpop.permute.xlu0 %6071
    %6073 = vrot.lane.b32.xlu0 %v6017, 112
    %v6074 = vpop.permute.xlu0 %6073
    %6075 = vrot.lane.b32.xlu0 %v6018, 112
    %v6076 = vpop.permute.xlu0 %6075
    %6077 = vrot.lane.b32.xlu0 %v6019, 112
    %v6078 = vpop.permute.xlu0 %6077
    %v6083 = vsel %vm1742, %v6072, 0.0
    %v6084 = vsel %vm1742, %v6074, 0.0
    %v6085 = vsel %vm1742, %v6076, 0.0
    %v6086 = vsel %vm1742, %v6078, 0.0
    %6087 = vrot.lane.b32.xlu0 %v6031, 120
    %v6088 = vpop.permute.xlu0 %6087
    %6089 = vrot.lane.b32.xlu0 %v6039, 120
    %v6090 = vpop.permute.xlu0 %6089
    %6091 = vrot.lane.b32.xlu0 %v6034, 120
    %v6092 = vpop.permute.xlu0 %6091
    %6093 = vrot.lane.b32.xlu0 %v6040, 120
    %v6094 = vpop.permute.xlu0 %6093
    %v6099 = vsel %vm883, %v6088, 0.0
    %v6100 = vsel %vm883, %v6090, 0.0
    %v6101 = vsel %vm883, %v6092, 0.0
    %v6102 = vsel %vm883, %v6094, 0.0
    %6103 = vrot.lane.b32.xlu0 %v6031, 112
    %v6104 = vpop.permute.xlu0 %6103
    %6105 = vrot.lane.b32.xlu0 %v6039, 112
    %v6106 = vpop.permute.xlu0 %6105
    %6107 = vrot.lane.b32.xlu0 %v6034, 112
    %v6108 = vpop.permute.xlu0 %6107
    %6109 = vrot.lane.b32.xlu0 %v6040, 112
    %v6110 = vpop.permute.xlu0 %6109
    %v6115 = vsel %vm1742, %v6104, 0.0
    %v6116 = vsel %vm1742, %v6106, 0.0
    %v6117 = vsel %vm1742, %v6108, 0.0
    %v6118 = vsel %vm1742, %v6110, 0.0
    %6121 = vrot.lane.b32.xlu0 %v6045, 120
    %v6122 = vpop.permute.xlu0 %6121
    %6123 = vrot.lane.b32.xlu0 %v6053, 120
    %v6124 = vpop.permute.xlu0 %6123
    %6125 = vrot.lane.b32.xlu0 %v6048, 120
    %v6126 = vpop.permute.xlu0 %6125
    %6127 = vrot.lane.b32.xlu0 %v6054, 120
    %v6128 = vpop.permute.xlu0 %6127
    %v6133 = vsel %vm883, %v6122, 0.0
    %v6134 = vsel %vm883, %v6124, 0.0
    %v6135 = vsel %vm883, %v6126, 0.0
    %v6136 = vsel %vm883, %v6128, 0.0
    %6137 = vrot.lane.b32.xlu0 %v6045, 112
    %v6138 = vpop.permute.xlu0 %6137
    %6139 = vrot.lane.b32.xlu0 %v6053, 112
    %v6140 = vpop.permute.xlu0 %6139
    %6141 = vrot.lane.b32.xlu0 %v6048, 112
    %v6142 = vpop.permute.xlu0 %6141
    %6143 = vrot.lane.b32.xlu0 %v6054, 112
    %v6144 = vpop.permute.xlu0 %6143
    %v6149 = vsel %vm1742, %v6138, 0.0
    %v6150 = vsel %vm1742, %v6140, 0.0
    %v6151 = vsel %vm1742, %v6142, 0.0
    %v6152 = vsel %vm1742, %v6144, 0.0
    %6153 = vmatpush.msra.mxu0 %v386
    %6154 = vmatpush.msra.mxu0 %v384
    %6155 = vmatpush.msra.mxu0 %v382
    %6156 = vmatpush.msra.mxu0 %v380
    %6157 = vmatpush.msra.mxu0 %v378
    %6158 = vmatpush.msra.mxu0 %v376
    %6159 = vmatpush.msra.mxu0 %v374
    %6160 = vmatpush.msra.mxu0 %v372
    %6161 = vmatpush.msra.mxu0 %v370
    %6162 = vmatpush.msra.mxu0 %v368
    %6163 = vmatpush.msra.mxu0 %v366
    %6164 = vmatpush.msra.mxu0 %v364
    %6165 = vmatpush.msra.mxu0 %v362
    %6166 = vmatpush.msra.mxu0 %v360
    %6167 = vmatpush.msra.mxu0 %v358
    %6168 = vmatpush.msra.mxu0 %v356
    %6169 = vmatmul.f32.gmra.mxu0 %v6016
    %v6170 = vpop.f32.mrf.mxu0
    %v6171 = vadd.f32 %v1814, %v6170
    %6172 = vmatmul.f32.gmra.mxu0 %v6017
    %v6173 = vpop.f32.mrf.mxu0
    %v6174 = vadd.f32 %v1814, %v6173
    %6175 = vmatmul.f32.gmra.mxu0 %v6018
    %v6176 = vpop.f32.mrf.mxu0
    %v6177 = vadd.f32 %v1814, %v6176
    %6178 = vmatmul.f32.gmra.mxu0 %v6019
    %v6179 = vpop.f32.mrf.mxu0
    %v6180 = vadd.f32 %v1814, %v6179
    %6181 = vdwg.mxu0
    %6182 = vmatpush.msra.mxu0 %v418
    %6183 = vmatpush.msra.mxu0 %v416
    %6184 = vmatpush.msra.mxu0 %v414
    %6185 = vmatpush.msra.mxu0 %v412
    %6186 = vmatpush.msra.mxu0 %v410
    %6187 = vmatpush.msra.mxu0 %v408
    %6188 = vmatpush.msra.mxu0 %v406
    %6189 = vmatpush.msra.mxu0 %v404
    %6190 = vmatpush.msra.mxu0 %v402
    %6191 = vmatpush.msra.mxu0 %v400
    %6192 = vmatpush.msra.mxu0 %v398
    %6193 = vmatpush.msra.mxu0 %v396
    %6194 = vmatpush.msra.mxu0 %v394
    %6195 = vmatpush.msra.mxu0 %v392
    %6196 = vmatpush.msra.mxu0 %v390
    %6197 = vmatpush.msra.mxu0 %v388
    %6198 = vmatmul.f32.gmra.mxu0 %v6067
    %v6199 = vpop.f32.mrf.mxu0
    %v6200 = vadd.f32 %v6171, %v6199
    %6201 = vmatmul.f32.gmra.mxu0 %v6068
    %v6202 = vpop.f32.mrf.mxu0
    %v6203 = vadd.f32 %v6174, %v6202
    %6204 = vmatmul.f32.gmra.mxu0 %v6069
    %v6205 = vpop.f32.mrf.mxu0
    %v6206 = vadd.f32 %v6177, %v6205
    %6207 = vmatmul.f32.gmra.mxu0 %v6070
    %v6208 = vpop.f32.mrf.mxu0
    %v6209 = vadd.f32 %v6180, %v6208
    %6210 = vdwg.mxu0
    %6211 = vmatpush.msra.mxu0 %v450
    %6212 = vmatpush.msra.mxu0 %v448
    %6213 = vmatpush.msra.mxu0 %v446
    %6214 = vmatpush.msra.mxu0 %v444
    %6215 = vmatpush.msra.mxu0 %v442
    %6216 = vmatpush.msra.mxu0 %v440
    %6217 = vmatpush.msra.mxu0 %v438
    %6218 = vmatpush.msra.mxu0 %v436
    %6219 = vmatpush.msra.mxu0 %v434
    %6220 = vmatpush.msra.mxu0 %v432
    %6221 = vmatpush.msra.mxu0 %v430
    %6222 = vmatpush.msra.mxu0 %v428
    %6223 = vmatpush.msra.mxu0 %v426
    %6224 = vmatpush.msra.mxu0 %v424
    %6225 = vmatpush.msra.mxu0 %v422
    %6226 = vmatpush.msra.mxu0 %v420
    %6227 = vmatmul.f32.gmra.mxu0 %v6083
    %v6228 = vpop.f32.mrf.mxu0
    %v6229 = vadd.f32 %v6200, %v6228
    %6230 = vmatmul.f32.gmra.mxu0 %v6084
    %v6231 = vpop.f32.mrf.mxu0
    %v6232 = vadd.f32 %v6203, %v6231
    %6233 = vmatmul.f32.gmra.mxu0 %v6085
    %v6234 = vpop.f32.mrf.mxu0
    %v6235 = vadd.f32 %v6206, %v6234
    %6236 = vmatmul.f32.gmra.mxu0 %v6086
    %v6237 = vpop.f32.mrf.mxu0
    %v6238 = vadd.f32 %v6209, %v6237
    %6239 = vdwg.mxu0
    %6240 = vmatpush.msra.mxu0 %v482
    %6241 = vmatpush.msra.mxu0 %v480
    %6242 = vmatpush.msra.mxu0 %v478
    %6243 = vmatpush.msra.mxu0 %v476
    %6244 = vmatpush.msra.mxu0 %v474
    %6245 = vmatpush.msra.mxu0 %v472
    %6246 = vmatpush.msra.mxu0 %v470
    %6247 = vmatpush.msra.mxu0 %v468
    %6248 = vmatpush.msra.mxu0 %v466
    %6249 = vmatpush.msra.mxu0 %v464
    %6250 = vmatpush.msra.mxu0 %v462
    %6251 = vmatpush.msra.mxu0 %v460
    %6252 = vmatpush.msra.mxu0 %v458
    %6253 = vmatpush.msra.mxu0 %v456
    %6254 = vmatpush.msra.mxu0 %v454
    %6255 = vmatpush.msra.mxu0 %v452
    %6256 = vmatmul.f32.gmra.mxu0 %v6031
    %v6257 = vpop.f32.mrf.mxu0
    %v6258 = vadd.f32 %v6229, %v6257
    %6259 = vmatmul.f32.gmra.mxu0 %v6039
    %v6260 = vpop.f32.mrf.mxu0
    %v6261 = vadd.f32 %v6232, %v6260
    %6262 = vmatmul.f32.gmra.mxu0 %v6034
    %v6263 = vpop.f32.mrf.mxu0
    %v6264 = vadd.f32 %v6235, %v6263
    %6265 = vmatmul.f32.gmra.mxu0 %v6040
    %v6266 = vpop.f32.mrf.mxu0
    %v6267 = vadd.f32 %v6238, %v6266
    %6268 = vdwg.mxu0
    %6269 = vmatpush.msra.mxu0 %v514
    %6270 = vmatpush.msra.mxu0 %v512
    %6271 = vmatpush.msra.mxu0 %v510
    %6272 = vmatpush.msra.mxu0 %v508
    %6273 = vmatpush.msra.mxu0 %v506
    %6274 = vmatpush.msra.mxu0 %v504
    %6275 = vmatpush.msra.mxu0 %v502
    %6276 = vmatpush.msra.mxu0 %v500
    %6277 = vmatpush.msra.mxu0 %v498
    %6278 = vmatpush.msra.mxu0 %v496
    %6279 = vmatpush.msra.mxu0 %v494
    %6280 = vmatpush.msra.mxu0 %v492
    %6281 = vmatpush.msra.mxu0 %v490
    %6282 = vmatpush.msra.mxu0 %v488
    %6283 = vmatpush.msra.mxu0 %v486
    %6284 = vmatpush.msra.mxu0 %v484
    %6285 = vmatmul.f32.gmra.mxu0 %v6099
    %v6286 = vpop.f32.mrf.mxu0
    %v6287 = vadd.f32 %v6258, %v6286
    %6288 = vmatmul.f32.gmra.mxu0 %v6100
    %v6289 = vpop.f32.mrf.mxu0
    %v6290 = vadd.f32 %v6261, %v6289
    %6291 = vmatmul.f32.gmra.mxu0 %v6101
    %v6292 = vpop.f32.mrf.mxu0
    %v6293 = vadd.f32 %v6264, %v6292
    %6294 = vmatmul.f32.gmra.mxu0 %v6102
    %v6295 = vpop.f32.mrf.mxu0
    %v6296 = vadd.f32 %v6267, %v6295
    %6297 = vdwg.mxu0
    %6298 = vmatpush.msra.mxu0 %v546
    %6299 = vmatpush.msra.mxu0 %v544
    %6300 = vmatpush.msra.mxu0 %v542
    %6301 = vmatpush.msra.mxu0 %v540
    %6302 = vmatpush.msra.mxu0 %v538
    %6303 = vmatpush.msra.mxu0 %v536
    %6304 = vmatpush.msra.mxu0 %v534
    %6305 = vmatpush.msra.mxu0 %v532
    %6306 = vmatpush.msra.mxu0 %v530
    %6307 = vmatpush.msra.mxu0 %v528
    %6308 = vmatpush.msra.mxu0 %v526
    %6309 = vmatpush.msra.mxu0 %v524
    %6310 = vmatpush.msra.mxu0 %v522
    %6311 = vmatpush.msra.mxu0 %v520
    %6312 = vmatpush.msra.mxu0 %v518
    %6313 = vmatpush.msra.mxu0 %v516
    %6314 = vmatmul.f32.gmra.mxu0 %v6115
    %v6315 = vpop.f32.mrf.mxu0
    %v6316 = vadd.f32 %v6287, %v6315
    %6317 = vmatmul.f32.gmra.mxu0 %v6116
    %v6318 = vpop.f32.mrf.mxu0
    %v6319 = vadd.f32 %v6290, %v6318
    %6320 = vmatmul.f32.gmra.mxu0 %v6117
    %v6321 = vpop.f32.mrf.mxu0
    %v6322 = vadd.f32 %v6293, %v6321
    %6323 = vmatmul.f32.gmra.mxu0 %v6118
    %v6324 = vpop.f32.mrf.mxu0
    %v6325 = vadd.f32 %v6296, %v6324
    %6326 = vdwg.mxu0
    %6327 = vmatpush.msra.mxu0 %v578
    %6328 = vmatpush.msra.mxu0 %v576
    %6329 = vmatpush.msra.mxu0 %v574
    %6330 = vmatpush.msra.mxu0 %v572
    %6331 = vmatpush.msra.mxu0 %v570
    %6332 = vmatpush.msra.mxu0 %v568
    %6333 = vmatpush.msra.mxu0 %v566
    %6334 = vmatpush.msra.mxu0 %v564
    %6335 = vmatpush.msra.mxu0 %v562
    %6336 = vmatpush.msra.mxu0 %v560
    %6337 = vmatpush.msra.mxu0 %v558
    %6338 = vmatpush.msra.mxu0 %v556
    %6339 = vmatpush.msra.mxu0 %v554
    %6340 = vmatpush.msra.mxu0 %v552
    %6341 = vmatpush.msra.mxu0 %v550
    %6342 = vmatpush.msra.mxu0 %v548
    %6343 = vmatmul.f32.gmra.mxu0 %v6045
    %v6344 = vpop.f32.mrf.mxu0
    %v6345 = vadd.f32 %v6316, %v6344
    %6346 = vmatmul.f32.gmra.mxu0 %v6053
    %v6347 = vpop.f32.mrf.mxu0
    %v6348 = vadd.f32 %v6319, %v6347
    %6349 = vmatmul.f32.gmra.mxu0 %v6048
    %v6350 = vpop.f32.mrf.mxu0
    %v6351 = vadd.f32 %v6322, %v6350
    %6352 = vmatmul.f32.gmra.mxu0 %v6054
    %v6353 = vpop.f32.mrf.mxu0
    %v6354 = vadd.f32 %v6325, %v6353
    %6355 = vdwg.mxu0
    %6356 = vmatpush.msra.mxu0 %v610
    %6357 = vmatpush.msra.mxu0 %v608
    %6358 = vmatpush.msra.mxu0 %v606
    %6359 = vmatpush.msra.mxu0 %v604
    %6360 = vmatpush.msra.mxu0 %v602
    %6361 = vmatpush.msra.mxu0 %v600
    %6362 = vmatpush.msra.mxu0 %v598
    %6363 = vmatpush.msra.mxu0 %v596
    %6364 = vmatpush.msra.mxu0 %v594
    %6365 = vmatpush.msra.mxu0 %v592
    %6366 = vmatpush.msra.mxu0 %v590
    %6367 = vmatpush.msra.mxu0 %v588
    %6368 = vmatpush.msra.mxu0 %v586
    %6369 = vmatpush.msra.mxu0 %v584
    %6370 = vmatpush.msra.mxu0 %v582
    %6371 = vmatpush.msra.mxu0 %v580
    %6372 = vmatmul.f32.gmra.mxu0 %v6133
    %v6373 = vpop.f32.mrf.mxu0
    %v6374 = vadd.f32 %v6345, %v6373
    %6375 = vmatmul.f32.gmra.mxu0 %v6134
    %v6376 = vpop.f32.mrf.mxu0
    %v6377 = vadd.f32 %v6348, %v6376
    %6378 = vmatmul.f32.gmra.mxu0 %v6135
    %v6379 = vpop.f32.mrf.mxu0
    %v6380 = vadd.f32 %v6351, %v6379
    %6381 = vmatmul.f32.gmra.mxu0 %v6136
    %v6382 = vpop.f32.mrf.mxu0
    %v6383 = vadd.f32 %v6354, %v6382
    %6384 = vdwg.mxu0
    %6385 = vmatpush.msra.mxu0 %v642
    %6386 = vmatpush.msra.mxu0 %v640
    %6387 = vmatpush.msra.mxu0 %v638
    %6388 = vmatpush.msra.mxu0 %v636
    %6389 = vmatpush.msra.mxu0 %v634
    %6390 = vmatpush.msra.mxu0 %v632
    %6391 = vmatpush.msra.mxu0 %v630
    %6392 = vmatpush.msra.mxu0 %v628
    %6393 = vmatpush.msra.mxu0 %v626
    %6394 = vmatpush.msra.mxu0 %v624
    %6395 = vmatpush.msra.mxu0 %v622
    %6396 = vmatpush.msra.mxu0 %v620
    %6397 = vmatpush.msra.mxu0 %v618
    %6398 = vmatpush.msra.mxu0 %v616
    %6399 = vmatpush.msra.mxu0 %v614
    %6400 = vmatpush.msra.mxu0 %v612
    %6401 = vmatmul.f32.gmra.mxu0 %v6149
    %v6402 = vpop.f32.mrf.mxu0
    %v6403 = vadd.f32 %v6374, %v6402
    %6404 = vmatmul.f32.gmra.mxu0 %v6150
    %v6405 = vpop.f32.mrf.mxu0
    %v6406 = vadd.f32 %v6377, %v6405
    %6407 = vmatmul.f32.gmra.mxu0 %v6151
    %v6408 = vpop.f32.mrf.mxu0
    %v6409 = vadd.f32 %v6380, %v6408
    %6410 = vmatmul.f32.gmra.mxu0 %v6152
    %v6411 = vpop.f32.mrf.mxu0
    %v6412 = vadd.f32 %v6383, %v6411
    %6413 = vdwg.mxu0
    %6414 = vmatpush.msra.mxu0 %v387
    %6415 = vmatpush.msra.mxu0 %v385
    %6416 = vmatpush.msra.mxu0 %v383
    %6417 = vmatpush.msra.mxu0 %v381
    %6418 = vmatpush.msra.mxu0 %v379
    %6419 = vmatpush.msra.mxu0 %v377
    %6420 = vmatpush.msra.mxu0 %v375
    %6421 = vmatpush.msra.mxu0 %v373
    %6422 = vmatpush.msra.mxu0 %v371
    %6423 = vmatpush.msra.mxu0 %v369
    %6424 = vmatpush.msra.mxu0 %v367
    %6425 = vmatpush.msra.mxu0 %v365
    %6426 = vmatpush.msra.mxu0 %v363
    %6427 = vmatpush.msra.mxu0 %v361
    %6428 = vmatpush.msra.mxu0 %v359
    %6429 = vmatpush.msra.mxu0 %v357
    %6430 = vmatmul.f32.gmra.mxu0 %v6016
    %v6431 = vpop.f32.mrf.mxu0
    %v6432 = vadd.f32 %v1815, %v6431
    %6433 = vmatmul.f32.gmra.mxu0 %v6017
    %v6434 = vpop.f32.mrf.mxu0
    %v6435 = vadd.f32 %v1815, %v6434
    %6436 = vmatmul.f32.gmra.mxu0 %v6018
    %v6437 = vpop.f32.mrf.mxu0
    %v6438 = vadd.f32 %v1815, %v6437
    %6439 = vmatmul.f32.gmra.mxu0 %v6019
    %v6440 = vpop.f32.mrf.mxu0
    %v6441 = vadd.f32 %v1815, %v6440
    %6442 = vdwg.mxu0
    %6443 = vmatpush.msra.mxu0 %v419
    %6444 = vmatpush.msra.mxu0 %v417
    %6445 = vmatpush.msra.mxu0 %v415
    %6446 = vmatpush.msra.mxu0 %v413
    %6447 = vmatpush.msra.mxu0 %v411
    %6448 = vmatpush.msra.mxu0 %v409
    %6449 = vmatpush.msra.mxu0 %v407
    %6450 = vmatpush.msra.mxu0 %v405
    %6451 = vmatpush.msra.mxu0 %v403
    %6452 = vmatpush.msra.mxu0 %v401
    %6453 = vmatpush.msra.mxu0 %v399
    %6454 = vmatpush.msra.mxu0 %v397
    %6455 = vmatpush.msra.mxu0 %v395
    %6456 = vmatpush.msra.mxu0 %v393
    %6457 = vmatpush.msra.mxu0 %v391
    %6458 = vmatpush.msra.mxu0 %v389
    %6459 = vmatmul.f32.gmra.mxu0 %v6067
    %v6460 = vpop.f32.mrf.mxu0
    %v6461 = vadd.f32 %v6432, %v6460
    %6462 = vmatmul.f32.gmra.mxu0 %v6068
    %v6463 = vpop.f32.mrf.mxu0
    %v6464 = vadd.f32 %v6435, %v6463
    %6465 = vmatmul.f32.gmra.mxu0 %v6069
    %v6466 = vpop.f32.mrf.mxu0
    %v6467 = vadd.f32 %v6438, %v6466
    %6468 = vmatmul.f32.gmra.mxu0 %v6070
    %v6469 = vpop.f32.mrf.mxu0
    %v6470 = vadd.f32 %v6441, %v6469
    %6471 = vdwg.mxu0
    %6472 = vmatpush.msra.mxu0 %v451
    %6473 = vmatpush.msra.mxu0 %v449
    %6474 = vmatpush.msra.mxu0 %v447
    %6475 = vmatpush.msra.mxu0 %v445
    %6476 = vmatpush.msra.mxu0 %v443
    %6477 = vmatpush.msra.mxu0 %v441
    %6478 = vmatpush.msra.mxu0 %v439
    %6479 = vmatpush.msra.mxu0 %v437
    %6480 = vmatpush.msra.mxu0 %v435
    %6481 = vmatpush.msra.mxu0 %v433
    %6482 = vmatpush.msra.mxu0 %v431
    %6483 = vmatpush.msra.mxu0 %v429
    %6484 = vmatpush.msra.mxu0 %v427
    %6485 = vmatpush.msra.mxu0 %v425
    %6486 = vmatpush.msra.mxu0 %v423
    %6487 = vmatpush.msra.mxu0 %v421
    %6488 = vmatmul.f32.gmra.mxu0 %v6083
    %v6489 = vpop.f32.mrf.mxu0
    %v6490 = vadd.f32 %v6461, %v6489
    %6491 = vmatmul.f32.gmra.mxu0 %v6084
    %v6492 = vpop.f32.mrf.mxu0
    %v6493 = vadd.f32 %v6464, %v6492
    %6494 = vmatmul.f32.gmra.mxu0 %v6085
    %v6495 = vpop.f32.mrf.mxu0
    %v6496 = vadd.f32 %v6467, %v6495
    %6497 = vmatmul.f32.gmra.mxu0 %v6086
    %v6498 = vpop.f32.mrf.mxu0
    %v6499 = vadd.f32 %v6470, %v6498
    %6500 = vdwg.mxu0
    %6501 = vmatpush.msra.mxu0 %v483
    %6502 = vmatpush.msra.mxu0 %v481
    %6503 = vmatpush.msra.mxu0 %v479
    %6504 = vmatpush.msra.mxu0 %v477
    %6505 = vmatpush.msra.mxu0 %v475
    %6506 = vmatpush.msra.mxu0 %v473
    %6507 = vmatpush.msra.mxu0 %v471
    %6508 = vmatpush.msra.mxu0 %v469
    %6509 = vmatpush.msra.mxu0 %v467
    %6510 = vmatpush.msra.mxu0 %v465
    %6511 = vmatpush.msra.mxu0 %v463
    %6512 = vmatpush.msra.mxu0 %v461
    %6513 = vmatpush.msra.mxu0 %v459
    %6514 = vmatpush.msra.mxu0 %v457
    %6515 = vmatpush.msra.mxu0 %v455
    %6516 = vmatpush.msra.mxu0 %v453
    %6517 = vmatmul.f32.gmra.mxu0 %v6031
    %v6518 = vpop.f32.mrf.mxu0
    %v6519 = vadd.f32 %v6490, %v6518
    %6520 = vmatmul.f32.gmra.mxu0 %v6039
    %v6521 = vpop.f32.mrf.mxu0
    %v6522 = vadd.f32 %v6493, %v6521
    %6523 = vmatmul.f32.gmra.mxu0 %v6034
    %v6524 = vpop.f32.mrf.mxu0
    %v6525 = vadd.f32 %v6496, %v6524
    %6526 = vmatmul.f32.gmra.mxu0 %v6040
    %v6527 = vpop.f32.mrf.mxu0
    %v6528 = vadd.f32 %v6499, %v6527
    %6529 = vdwg.mxu0
    %6530 = vmatpush.msra.mxu0 %v515
    %6531 = vmatpush.msra.mxu0 %v513
    %6532 = vmatpush.msra.mxu0 %v511
    %6533 = vmatpush.msra.mxu0 %v509
    %6534 = vmatpush.msra.mxu0 %v507
    %6535 = vmatpush.msra.mxu0 %v505
    %6536 = vmatpush.msra.mxu0 %v503
    %6537 = vmatpush.msra.mxu0 %v501
    %6538 = vmatpush.msra.mxu0 %v499
    %6539 = vmatpush.msra.mxu0 %v497
    %6540 = vmatpush.msra.mxu0 %v495
    %6541 = vmatpush.msra.mxu0 %v493
    %6542 = vmatpush.msra.mxu0 %v491
    %6543 = vmatpush.msra.mxu0 %v489
    %6544 = vmatpush.msra.mxu0 %v487
    %6545 = vmatpush.msra.mxu0 %v485
    %6546 = vmatmul.f32.gmra.mxu0 %v6099
    %v6547 = vpop.f32.mrf.mxu0
    %v6548 = vadd.f32 %v6519, %v6547
    %6549 = vmatmul.f32.gmra.mxu0 %v6100
    %v6550 = vpop.f32.mrf.mxu0
    %v6551 = vadd.f32 %v6522, %v6550
    %6552 = vmatmul.f32.gmra.mxu0 %v6101
    %v6553 = vpop.f32.mrf.mxu0
    %v6554 = vadd.f32 %v6525, %v6553
    %6555 = vmatmul.f32.gmra.mxu0 %v6102
    %v6556 = vpop.f32.mrf.mxu0
    %v6557 = vadd.f32 %v6528, %v6556
    %6558 = vdwg.mxu0
    %6559 = vmatpush.msra.mxu0 %v547
    %6560 = vmatpush.msra.mxu0 %v545
    %6561 = vmatpush.msra.mxu0 %v543
    %6562 = vmatpush.msra.mxu0 %v541
    %6563 = vmatpush.msra.mxu0 %v539
    %6564 = vmatpush.msra.mxu0 %v537
    %6565 = vmatpush.msra.mxu0 %v535
    %6566 = vmatpush.msra.mxu0 %v533
    %6567 = vmatpush.msra.mxu0 %v531
    %6568 = vmatpush.msra.mxu0 %v529
    %6569 = vmatpush.msra.mxu0 %v527
    %6570 = vmatpush.msra.mxu0 %v525
    %6571 = vmatpush.msra.mxu0 %v523
    %6572 = vmatpush.msra.mxu0 %v521
    %6573 = vmatpush.msra.mxu0 %v519
    %6574 = vmatpush.msra.mxu0 %v517
    %6575 = vmatmul.f32.gmra.mxu0 %v6115
    %v6576 = vpop.f32.mrf.mxu0
    %v6577 = vadd.f32 %v6548, %v6576
    %6578 = vmatmul.f32.gmra.mxu0 %v6116
    %v6579 = vpop.f32.mrf.mxu0
    %v6580 = vadd.f32 %v6551, %v6579
    %6581 = vmatmul.f32.gmra.mxu0 %v6117
    %v6582 = vpop.f32.mrf.mxu0
    %v6583 = vadd.f32 %v6554, %v6582
    %6584 = vmatmul.f32.gmra.mxu0 %v6118
    %v6585 = vpop.f32.mrf.mxu0
    %v6586 = vadd.f32 %v6557, %v6585
    %6587 = vdwg.mxu0
    %6588 = vmatpush.msra.mxu0 %v579
    %6589 = vmatpush.msra.mxu0 %v577
    %6590 = vmatpush.msra.mxu0 %v575
    %6591 = vmatpush.msra.mxu0 %v573
    %6592 = vmatpush.msra.mxu0 %v571
    %6593 = vmatpush.msra.mxu0 %v569
    %6594 = vmatpush.msra.mxu0 %v567
    %6595 = vmatpush.msra.mxu0 %v565
    %6596 = vmatpush.msra.mxu0 %v563
    %6597 = vmatpush.msra.mxu0 %v561
    %6598 = vmatpush.msra.mxu0 %v559
    %6599 = vmatpush.msra.mxu0 %v557
    %6600 = vmatpush.msra.mxu0 %v555
    %6601 = vmatpush.msra.mxu0 %v553
    %6602 = vmatpush.msra.mxu0 %v551
    %6603 = vmatpush.msra.mxu0 %v549
    %6604 = vmatmul.f32.gmra.mxu0 %v6045
    %v6605 = vpop.f32.mrf.mxu0
    %v6606 = vadd.f32 %v6577, %v6605
    %6607 = vmatmul.f32.gmra.mxu0 %v6053
    %v6608 = vpop.f32.mrf.mxu0
    %v6609 = vadd.f32 %v6580, %v6608
    %6610 = vmatmul.f32.gmra.mxu0 %v6048
    %v6611 = vpop.f32.mrf.mxu0
    %v6612 = vadd.f32 %v6583, %v6611
    %6613 = vmatmul.f32.gmra.mxu0 %v6054
    %v6614 = vpop.f32.mrf.mxu0
    %v6615 = vadd.f32 %v6586, %v6614
    %6616 = vdwg.mxu0
    %6617 = vmatpush.msra.mxu0 %v611
    %6618 = vmatpush.msra.mxu0 %v609
    %6619 = vmatpush.msra.mxu0 %v607
    %6620 = vmatpush.msra.mxu0 %v605
    %6621 = vmatpush.msra.mxu0 %v603
    %6622 = vmatpush.msra.mxu0 %v601
    %6623 = vmatpush.msra.mxu0 %v599
    %6624 = vmatpush.msra.mxu0 %v597
    %6625 = vmatpush.msra.mxu0 %v595
    %6626 = vmatpush.msra.mxu0 %v593
    %6627 = vmatpush.msra.mxu0 %v591
    %6628 = vmatpush.msra.mxu0 %v589
    %6629 = vmatpush.msra.mxu0 %v587
    %6630 = vmatpush.msra.mxu0 %v585
    %6631 = vmatpush.msra.mxu0 %v583
    %6632 = vmatpush.msra.mxu0 %v581
    %6633 = vmatmul.f32.gmra.mxu0 %v6133
    %v6634 = vpop.f32.mrf.mxu0
    %v6635 = vadd.f32 %v6606, %v6634
    %6636 = vmatmul.f32.gmra.mxu0 %v6134
    %v6637 = vpop.f32.mrf.mxu0
    %v6638 = vadd.f32 %v6609, %v6637
    %6639 = vmatmul.f32.gmra.mxu0 %v6135
    %v6640 = vpop.f32.mrf.mxu0
    %v6641 = vadd.f32 %v6612, %v6640
    %6642 = vmatmul.f32.gmra.mxu0 %v6136
    %v6643 = vpop.f32.mrf.mxu0
    %v6644 = vadd.f32 %v6615, %v6643
    %6645 = vdwg.mxu0
    %6646 = vmatpush.msra.mxu0 %v643
    %6647 = vmatpush.msra.mxu0 %v641
    %6648 = vmatpush.msra.mxu0 %v639
    %6649 = vmatpush.msra.mxu0 %v637
    %6650 = vmatpush.msra.mxu0 %v635
    %6651 = vmatpush.msra.mxu0 %v633
    %6652 = vmatpush.msra.mxu0 %v631
    %6653 = vmatpush.msra.mxu0 %v629
    %6654 = vmatpush.msra.mxu0 %v627
    %6655 = vmatpush.msra.mxu0 %v625
    %6656 = vmatpush.msra.mxu0 %v623
    %6657 = vmatpush.msra.mxu0 %v621
    %6658 = vmatpush.msra.mxu0 %v619
    %6659 = vmatpush.msra.mxu0 %v617
    %6660 = vmatpush.msra.mxu0 %v615
    %6661 = vmatpush.msra.mxu0 %v613
    %6662 = vmatmul.f32.gmra.mxu0 %v6149
    %v6663 = vpop.f32.mrf.mxu0
    %v6664 = vadd.f32 %v6635, %v6663
    %6665 = vmatmul.f32.gmra.mxu0 %v6150
    %v6666 = vpop.f32.mrf.mxu0
    %v6667 = vadd.f32 %v6638, %v6666
    %6668 = vmatmul.f32.gmra.mxu0 %v6151
    %v6669 = vpop.f32.mrf.mxu0
    %v6670 = vadd.f32 %v6641, %v6669
    %6671 = vmatmul.f32.gmra.mxu0 %v6152
    %v6672 = vpop.f32.mrf.mxu0
    %v6673 = vadd.f32 %v6644, %v6672
    %6674 = vdwg.mxu0
    %v6679 = vrot.slane %v6403, 1
    %v6680 = vrot.slane %v6664, 1
    %v6681 = vrot.slane %v6409, 1
    %v6682 = vrot.slane %v6670, 1
    %v6687 = vmax.f32 %v6403, %v6679
    %v6688 = vmax.f32 %v6664, %v6680
    %v6689 = vmax.f32 %v6409, %v6681
    %v6690 = vmax.f32 %v6670, %v6682
    %v6695 = vrot.slane %v6406, 1
    %v6696 = vrot.slane %v6667, 1
    %v6697 = vrot.slane %v6412, 1
    %v6698 = vrot.slane %v6673, 1
    %v6703 = vmax.f32 %v6406, %v6695
    %v6704 = vmax.f32 %v6667, %v6696
    %v6705 = vmax.f32 %v6412, %v6697
    %v6706 = vmax.f32 %v6673, %v6698
    %v6711 = vrot.slane %v6687, 1
    %v6712 = vrot.slane %v6688, 1
    %v6713 = vrot.slane %v6689, 1
    %v6714 = vrot.slane %v6690, 1
    %v6719 = vrot.slane %v6687, 2
    %v6720 = vrot.slane %v6688, 2
    %v6721 = vrot.slane %v6689, 2
    %v6722 = vrot.slane %v6690, 2
    %v6727 = vrot.slane %v6687, 3
    %v6728 = vrot.slane %v6688, 3
    %v6729 = vrot.slane %v6689, 3
    %v6730 = vrot.slane %v6690, 3
    %v6739 = vrot.slane %v6703, 4
    %v6740 = vrot.slane %v6704, 4
    %v6741 = vrot.slane %v6705, 4
    %v6742 = vrot.slane %v6706, 4
    %v6747 = vrot.slane %v6703, 5
    %v6748 = vrot.slane %v6704, 5
    %v6749 = vrot.slane %v6705, 5
    %v6750 = vrot.slane %v6706, 5
    %v6755 = vrot.slane %v6703, 6
    %v6756 = vrot.slane %v6704, 6
    %v6757 = vrot.slane %v6705, 6
    %v6758 = vrot.slane %v6706, 6
    %v6763 = vsel %vm825, %v6687, %v6711
    %v6764 = vsel %vm825, %v6688, %v6712
    %v6765 = vsel %vm825, %v6689, %v6713
    %v6766 = vsel %vm825, %v6690, %v6714
    %v6767 = vsel %vm2432, %v6763, %v6719
    %v6768 = vsel %vm2432, %v6764, %v6720
    %v6769 = vsel %vm2432, %v6765, %v6721
    %v6770 = vsel %vm2432, %v6766, %v6722
    %v6771 = vsel %vm2437, %v6767, %v6727
    %v6772 = vsel %vm2437, %v6768, %v6728
    %v6773 = vsel %vm2437, %v6769, %v6729
    %v6774 = vsel %vm2437, %v6770, %v6730
    %v6775 = vsel %vm2442, %v6771, %v6739
    %v6776 = vsel %vm2442, %v6772, %v6740
    %v6777 = vsel %vm2442, %v6773, %v6741
    %v6778 = vsel %vm2442, %v6774, %v6742
    %v6779 = vsel %vm2447, %v6775, %v6747
    %v6780 = vsel %vm2447, %v6776, %v6748
    %v6781 = vsel %vm2447, %v6777, %v6749
    %v6782 = vsel %vm2447, %v6778, %v6750
    %v6783 = vsel %vm2452, %v6779, %v6755
    %v6784 = vsel %vm2452, %v6780, %v6756
    %v6785 = vsel %vm2452, %v6781, %v6757
    %v6786 = vsel %vm2452, %v6782, %v6758
    %6791 = vrot.lane.b32.xlu0 %v6783, 118
    %v6792 = vpop.permute.xlu0 %6791
    %6793 = vrot.lane.b32.xlu0 %v6784, 118
    %v6794 = vpop.permute.xlu0 %6793
    %6795 = vrot.lane.b32.xlu0 %v6785, 118
    %v6796 = vpop.permute.xlu0 %6795
    %6797 = vrot.lane.b32.xlu0 %v6786, 118
    %v6798 = vpop.permute.xlu0 %6797
    %v6799 = vsel %vm2469, %v6792, %v6794
    %v6800 = vsel %vm2469, %v6796, %v6798
    %v6805 = vsel %vm2476, %v6794, 0.0
    %v6806 = vsel %vm2476, %v6798, 0.0
    %v6807 = vmax.f32 %v6783, %v6799
    %v6808 = vmax.f32 %v6784, %v6805
    %v6809 = vmax.f32 %v6785, %v6800
    %v6810 = vmax.f32 %v6786, %v6806
    %v6811 = vmax.f32 %v6807, 0.0
    %v6812 = vmax.f32 %v6808, 0.0
    %v6813 = vmax.f32 %v6809, 0.0
    %v6814 = vmax.f32 %v6810, 0.0
    %v6815 = vsel %vm838, %v6811, 0.0
    %v6816 = vsel %vm838, %v6812, 0.0
    %v6817 = vsel %vm838, %v6813, 0.0
    %v6818 = vsel %vm838, %v6814, 0.0
    %6823 = vrot.lane.b32.xlu0 %v6815, 108
    %v6824 = vpop.permute.xlu0 %6823
    %6825 = vrot.lane.b32.xlu0 %v6816, 108
    %v6826 = vpop.permute.xlu0 %6825
    %6827 = vrot.lane.b32.xlu0 %v6817, 108
    %v6828 = vpop.permute.xlu0 %6827
    %6829 = vrot.lane.b32.xlu0 %v6818, 108
    %v6830 = vpop.permute.xlu0 %6829
    %v6831 = vsel %vm2503, %v6824, %v6826
    %v6832 = vsel %vm2503, %v6828, %v6830
    %v6835 = vsel %vm883, %v6831, 0.0
    %v6836 = vsel %vm883, %v6832, 0.0
    %6837 = vrot.lane.b32.xlu0 %v6815, 88
    %v6838 = vpop.permute.xlu0 %6837
    %6839 = vrot.lane.b32.xlu0 %v6816, 88
    %v6840 = vpop.permute.xlu0 %6839
    %6841 = vrot.lane.b32.xlu0 %v6817, 88
    %v6842 = vpop.permute.xlu0 %6841
    %6843 = vrot.lane.b32.xlu0 %v6818, 88
    %v6844 = vpop.permute.xlu0 %6843
    %v6845 = vsel %vm2518, %v6838, %v6840
    %v6846 = vsel %vm2518, %v6842, %v6844
    %v6849 = vsel %vm2523, %v6845, 0.0
    %v6850 = vsel %vm2523, %v6846, 0.0
    %6853 = vrot.lane.b32.xlu0 %v6835, 12
    %v6854 = vpop.permute.xlu0 %6853
    %6855 = vrot.lane.b32.xlu0 %v6836, 12
    %v6856 = vpop.permute.xlu0 %6855
    %v6857 = vsel %vm2543, %v6854, %v2540
    %v6858 = vsel %vm2543, %v6856, %v2540
    %6865 = vrot.lane.b32.xlu0 %v6849, 24
    %v6866 = vpop.permute.xlu0 %6865
    %6867 = vrot.lane.b32.xlu0 %v6850, 24
    %v6868 = vpop.permute.xlu0 %6867
    %v6869 = vsel %vm2558, %v6866, %v2555
    %v6870 = vsel %vm2558, %v6868, %v2555
    %v6875 = vrot.slane %v6815, 1
    %v6876 = vsel %vm838, %v6875, %v2566
    %v6877 = vrot.slane %v6816, 1
    %v6878 = vsel %vm838, %v6877, %v2566
    %v6879 = vrot.slane %v6817, 1
    %v6880 = vsel %vm838, %v6879, %v2566
    %v6881 = vrot.slane %v6818, 1
    %v6882 = vsel %vm838, %v6881, %v2566
    %6883 = vrot.lane.b32.xlu0 %v6876, 36
    %v6884 = vpop.permute.xlu0 %6883
    %6885 = vrot.lane.b32.xlu0 %v6878, 36
    %v6886 = vpop.permute.xlu0 %6885
    %6887 = vrot.lane.b32.xlu0 %v6880, 36
    %v6888 = vpop.permute.xlu0 %6887
    %6889 = vrot.lane.b32.xlu0 %v6882, 36
    %v6890 = vpop.permute.xlu0 %6889
    %v6891 = vsel %vm2582, %v6884, %v6886
    %v6892 = vsel %vm2582, %v6888, %v6890
    %v6897 = vrot.slane %v6835, 1
    %v6898 = vsel %vm838, %v6897, %v2591
    %v6899 = vrot.slane %v6836, 1
    %v6900 = vsel %vm838, %v6899, %v2591
    %6901 = vrot.lane.b32.xlu0 %v6898, 48
    %v6902 = vpop.permute.xlu0 %6901
    %6903 = vrot.lane.b32.xlu0 %v6900, 48
    %v6904 = vpop.permute.xlu0 %6903
    %v6905 = vsel %vm2602, %v6902, %v2599
    %v6906 = vsel %vm2602, %v6904, %v2599
    %v6911 = vrot.slane %v6849, 1
    %v6912 = vsel %vm838, %v6911, %v2611
    %v6913 = vrot.slane %v6850, 1
    %v6914 = vsel %vm838, %v6913, %v2611
    %6915 = vrot.lane.b32.xlu0 %v6912, 60
    %v6916 = vpop.permute.xlu0 %6915
    %6917 = vrot.lane.b32.xlu0 %v6914, 60
    %v6918 = vpop.permute.xlu0 %6917
    %v6919 = vsel %vm2621, %v6916, %v2618
    %v6920 = vsel %vm2621, %v6918, %v2618
    %v6925 = vrot.slane %v6815, 2
    %v6926 = vsel %vm2452, %v6925, %v2629
    %v6927 = vrot.slane %v6816, 2
    %v6928 = vsel %vm2452, %v6927, %v2629
    %v6929 = vrot.slane %v6817, 2
    %v6930 = vsel %vm2452, %v6929, %v2629
    %v6931 = vrot.slane %v6818, 2
    %v6932 = vsel %vm2452, %v6931, %v2629
    %6933 = vrot.lane.b32.xlu0 %v6926, 72
    %v6934 = vpop.permute.xlu0 %6933
    %6935 = vrot.lane.b32.xlu0 %v6928, 72
    %v6936 = vpop.permute.xlu0 %6935
    %6937 = vrot.lane.b32.xlu0 %v6930, 72
    %v6938 = vpop.permute.xlu0 %6937
    %6939 = vrot.lane.b32.xlu0 %v6932, 72
    %v6940 = vpop.permute.xlu0 %6939
    %v6941 = vsel %vm2645, %v6934, %v6936
    %v6942 = vsel %vm2645, %v6938, %v6940
    %v6947 = vrot.slane %v6835, 2
    %v6948 = vsel %vm2452, %v6947, %v2653
    %v6949 = vrot.slane %v6836, 2
    %v6950 = vsel %vm2452, %v6949, %v2653
    %6951 = vrot.lane.b32.xlu0 %v6948, 84
    %v6952 = vpop.permute.xlu0 %6951
    %6953 = vrot.lane.b32.xlu0 %v6950, 84
    %v6954 = vpop.permute.xlu0 %6953
    %v6955 = vsel %vm2664, %v6952, %v2661
    %v6956 = vsel %vm2664, %v6954, %v2661
    %v6961 = vrot.slane %v6849, 2
    %v6962 = vsel %vm2452, %v6961, %v2672
    %v6963 = vrot.slane %v6850, 2
    %v6964 = vsel %vm2452, %v6963, %v2672
    %6965 = vrot.lane.b32.xlu0 %v6962, 96
    %v6966 = vpop.permute.xlu0 %6965
    %6967 = vrot.lane.b32.xlu0 %v6964, 96
    %v6968 = vpop.permute.xlu0 %6967
    %v6969 = vsel %vm2682, %v6966, %v2679
    %v6970 = vsel %vm2682, %v6968, %v2679
    %v6973 = vsel %vm2543, %v6816, %v6854
    %v6974 = vsel %vm2543, %v6818, %v6856
    %v6975 = vsel %vm2558, %v6857, %v6866
    %v6976 = vsel %vm2558, %v6858, %v6868
    %v6977 = vsel %vm2582, %v6869, %v6884
    %v6978 = vsel %vm2582, %v6870, %v6888
    %v6979 = vsel %vm2602, %v6891, %v6902
    %v6980 = vsel %vm2602, %v6892, %v6904
    %v6981 = vsel %vm2621, %v6905, %v6916
    %v6982 = vsel %vm2621, %v6906, %v6918
    %v6983 = vsel %vm2645, %v6919, %v6934
    %v6984 = vsel %vm2645, %v6920, %v6938
    %v6985 = vsel %vm2664, %v6941, %v6952
    %v6986 = vsel %vm2664, %v6942, %v6954
    %v6987 = vsel %vm2682, %v6955, %v6966
    %v6988 = vsel %vm2682, %v6956, %v6968
    %v6989 = vsel %vm2503, %v6969, 0
    %v6991 = vsel %vm2503, %v6970, 0
    %6993 = vmatpush.msra.mxu0 %v660
    %6994 = vmatpush.msra.mxu0 %v659
    %6995 = vmatpush.msra.mxu0 %v658
    %6996 = vmatpush.msra.mxu0 %v657
    %6997 = vmatpush.msra.mxu0 %v656
    %6998 = vmatpush.msra.mxu0 %v655
    %6999 = vmatpush.msra.mxu0 %v654
    %7000 = vmatpush.msra.mxu0 %v653
    %7001 = vmatpush.msra.mxu0 %v652
    %7002 = vmatpush.msra.mxu0 %v651
    %7003 = vmatpush.msra.mxu0 %v650
    %7004 = vmatpush.msra.mxu0 %v649
    %7005 = vmatpush.msra.mxu0 %v648
    %7006 = vmatpush.msra.mxu0 %v647
    %7007 = vmatpush.msra.mxu0 %v646
    %7008 = vmatpush.msra.mxu0 %v645
    %7009 = vmatmul.f32.gmra.mxu0 %v6815
    %v7010 = vpop.f32.mrf.mxu0
    %v7011 = vadd.f32 %v2704, %v7010
    %7012 = vmatmul.f32.gmra.mxu0 %v6817
    %v7013 = vpop.f32.mrf.mxu0
    %v7014 = vadd.f32 %v2704, %v7013
    %7015 = vdwg.mxu0
    %7016 = vmatpush.msra.mxu0 %v676
    %7017 = vmatpush.msra.mxu0 %v675
    %7018 = vmatpush.msra.mxu0 %v674
    %7019 = vmatpush.msra.mxu0 %v673
    %7020 = vmatpush.msra.mxu0 %v672
    %7021 = vmatpush.msra.mxu0 %v671
    %7022 = vmatpush.msra.mxu0 %v670
    %7023 = vmatpush.msra.mxu0 %v669
    %7024 = vmatpush.msra.mxu0 %v668
    %7025 = vmatpush.msra.mxu0 %v667
    %7026 = vmatpush.msra.mxu0 %v666
    %7027 = vmatpush.msra.mxu0 %v665
    %7028 = vmatpush.msra.mxu0 %v664
    %7029 = vmatpush.msra.mxu0 %v663
    %7030 = vmatpush.msra.mxu0 %v662
    %7031 = vmatpush.msra.mxu0 %v661
    %7032 = vmatmul.f32.gmra.mxu0 %v6973
    %v7033 = vpop.f32.mrf.mxu0
    %v7034 = vadd.f32 %v7011, %v7033
    %7035 = vmatmul.f32.gmra.mxu0 %v6974
    %v7036 = vpop.f32.mrf.mxu0
    %v7037 = vadd.f32 %v7014, %v7036
    %7038 = vdwg.mxu0
    %7039 = vmatpush.msra.mxu0 %v692
    %7040 = vmatpush.msra.mxu0 %v691
    %7041 = vmatpush.msra.mxu0 %v690
    %7042 = vmatpush.msra.mxu0 %v689
    %7043 = vmatpush.msra.mxu0 %v688
    %7044 = vmatpush.msra.mxu0 %v687
    %7045 = vmatpush.msra.mxu0 %v686
    %7046 = vmatpush.msra.mxu0 %v685
    %7047 = vmatpush.msra.mxu0 %v684
    %7048 = vmatpush.msra.mxu0 %v683
    %7049 = vmatpush.msra.mxu0 %v682
    %7050 = vmatpush.msra.mxu0 %v681
    %7051 = vmatpush.msra.mxu0 %v680
    %7052 = vmatpush.msra.mxu0 %v679
    %7053 = vmatpush.msra.mxu0 %v678
    %7054 = vmatpush.msra.mxu0 %v677
    %7055 = vmatmul.f32.gmra.mxu0 %v6975
    %v7056 = vpop.f32.mrf.mxu0
    %v7057 = vadd.f32 %v7034, %v7056
    %7058 = vmatmul.f32.gmra.mxu0 %v6976
    %v7059 = vpop.f32.mrf.mxu0
    %v7060 = vadd.f32 %v7037, %v7059
    %7061 = vdwg.mxu0
    %7062 = vmatpush.msra.mxu0 %v708
    %7063 = vmatpush.msra.mxu0 %v707
    %7064 = vmatpush.msra.mxu0 %v706
    %7065 = vmatpush.msra.mxu0 %v705
    %7066 = vmatpush.msra.mxu0 %v704
    %7067 = vmatpush.msra.mxu0 %v703
    %7068 = vmatpush.msra.mxu0 %v702
    %7069 = vmatpush.msra.mxu0 %v701
    %7070 = vmatpush.msra.mxu0 %v700
    %7071 = vmatpush.msra.mxu0 %v699
    %7072 = vmatpush.msra.mxu0 %v698
    %7073 = vmatpush.msra.mxu0 %v697
    %7074 = vmatpush.msra.mxu0 %v696
    %7075 = vmatpush.msra.mxu0 %v695
    %7076 = vmatpush.msra.mxu0 %v694
    %7077 = vmatpush.msra.mxu0 %v693
    %7078 = vmatmul.f32.gmra.mxu0 %v6977
    %v7079 = vpop.f32.mrf.mxu0
    %v7080 = vadd.f32 %v7057, %v7079
    %7081 = vmatmul.f32.gmra.mxu0 %v6978
    %v7082 = vpop.f32.mrf.mxu0
    %v7083 = vadd.f32 %v7060, %v7082
    %7084 = vdwg.mxu0
    %7085 = vmatpush.msra.mxu0 %v724
    %7086 = vmatpush.msra.mxu0 %v723
    %7087 = vmatpush.msra.mxu0 %v722
    %7088 = vmatpush.msra.mxu0 %v721
    %7089 = vmatpush.msra.mxu0 %v720
    %7090 = vmatpush.msra.mxu0 %v719
    %7091 = vmatpush.msra.mxu0 %v718
    %7092 = vmatpush.msra.mxu0 %v717
    %7093 = vmatpush.msra.mxu0 %v716
    %7094 = vmatpush.msra.mxu0 %v715
    %7095 = vmatpush.msra.mxu0 %v714
    %7096 = vmatpush.msra.mxu0 %v713
    %7097 = vmatpush.msra.mxu0 %v712
    %7098 = vmatpush.msra.mxu0 %v711
    %7099 = vmatpush.msra.mxu0 %v710
    %7100 = vmatpush.msra.mxu0 %v709
    %7101 = vmatmul.f32.gmra.mxu0 %v6979
    %v7102 = vpop.f32.mrf.mxu0
    %v7103 = vadd.f32 %v7080, %v7102
    %7104 = vmatmul.f32.gmra.mxu0 %v6980
    %v7105 = vpop.f32.mrf.mxu0
    %v7106 = vadd.f32 %v7083, %v7105
    %7107 = vdwg.mxu0
    %7108 = vmatpush.msra.mxu0 %v740
    %7109 = vmatpush.msra.mxu0 %v739
    %7110 = vmatpush.msra.mxu0 %v738
    %7111 = vmatpush.msra.mxu0 %v737
    %7112 = vmatpush.msra.mxu0 %v736
    %7113 = vmatpush.msra.mxu0 %v735
    %7114 = vmatpush.msra.mxu0 %v734
    %7115 = vmatpush.msra.mxu0 %v733
    %7116 = vmatpush.msra.mxu0 %v732
    %7117 = vmatpush.msra.mxu0 %v731
    %7118 = vmatpush.msra.mxu0 %v730
    %7119 = vmatpush.msra.mxu0 %v729
    %7120 = vmatpush.msra.mxu0 %v728
    %7121 = vmatpush.msra.mxu0 %v727
    %7122 = vmatpush.msra.mxu0 %v726
    %7123 = vmatpush.msra.mxu0 %v725
    %7124 = vmatmul.f32.gmra.mxu0 %v6981
    %v7125 = vpop.f32.mrf.mxu0
    %v7126 = vadd.f32 %v7103, %v7125
    %7127 = vmatmul.f32.gmra.mxu0 %v6982
    %v7128 = vpop.f32.mrf.mxu0
    %v7129 = vadd.f32 %v7106, %v7128
    %7130 = vdwg.mxu0
    %7131 = vmatpush.msra.mxu0 %v756
    %7132 = vmatpush.msra.mxu0 %v755
    %7133 = vmatpush.msra.mxu0 %v754
    %7134 = vmatpush.msra.mxu0 %v753
    %7135 = vmatpush.msra.mxu0 %v752
    %7136 = vmatpush.msra.mxu0 %v751
    %7137 = vmatpush.msra.mxu0 %v750
    %7138 = vmatpush.msra.mxu0 %v749
    %7139 = vmatpush.msra.mxu0 %v748
    %7140 = vmatpush.msra.mxu0 %v747
    %7141 = vmatpush.msra.mxu0 %v746
    %7142 = vmatpush.msra.mxu0 %v745
    %7143 = vmatpush.msra.mxu0 %v744
    %7144 = vmatpush.msra.mxu0 %v743
    %7145 = vmatpush.msra.mxu0 %v742
    %7146 = vmatpush.msra.mxu0 %v741
    %7147 = vmatmul.f32.gmra.mxu0 %v6983
    %v7148 = vpop.f32.mrf.mxu0
    %v7149 = vadd.f32 %v7126, %v7148
    %7150 = vmatmul.f32.gmra.mxu0 %v6984
    %v7151 = vpop.f32.mrf.mxu0
    %v7152 = vadd.f32 %v7129, %v7151
    %7153 = vdwg.mxu0
    %7154 = vmatpush.msra.mxu0 %v772
    %7155 = vmatpush.msra.mxu0 %v771
    %7156 = vmatpush.msra.mxu0 %v770
    %7157 = vmatpush.msra.mxu0 %v769
    %7158 = vmatpush.msra.mxu0 %v768
    %7159 = vmatpush.msra.mxu0 %v767
    %7160 = vmatpush.msra.mxu0 %v766
    %7161 = vmatpush.msra.mxu0 %v765
    %7162 = vmatpush.msra.mxu0 %v764
    %7163 = vmatpush.msra.mxu0 %v763
    %7164 = vmatpush.msra.mxu0 %v762
    %7165 = vmatpush.msra.mxu0 %v761
    %7166 = vmatpush.msra.mxu0 %v760
    %7167 = vmatpush.msra.mxu0 %v759
    %7168 = vmatpush.msra.mxu0 %v758
    %7169 = vmatpush.msra.mxu0 %v757
    %7170 = vmatmul.f32.gmra.mxu0 %v6985
    %v7171 = vpop.f32.mrf.mxu0
    %v7172 = vadd.f32 %v7149, %v7171
    %7173 = vmatmul.f32.gmra.mxu0 %v6986
    %v7174 = vpop.f32.mrf.mxu0
    %v7175 = vadd.f32 %v7152, %v7174
    %7176 = vdwg.mxu0
    %7177 = vmatpush.msra.mxu0 %v788
    %7178 = vmatpush.msra.mxu0 %v787
    %7179 = vmatpush.msra.mxu0 %v786
    %7180 = vmatpush.msra.mxu0 %v785
    %7181 = vmatpush.msra.mxu0 %v784
    %7182 = vmatpush.msra.mxu0 %v783
    %7183 = vmatpush.msra.mxu0 %v782
    %7184 = vmatpush.msra.mxu0 %v781
    %7185 = vmatpush.msra.mxu0 %v780
    %7186 = vmatpush.msra.mxu0 %v779
    %7187 = vmatpush.msra.mxu0 %v778
    %7188 = vmatpush.msra.mxu0 %v777
    %7189 = vmatpush.msra.mxu0 %v776
    %7190 = vmatpush.msra.mxu0 %v775
    %7191 = vmatpush.msra.mxu0 %v774
    %7192 = vmatpush.msra.mxu0 %v773
    %7193 = vmatmul.f32.gmra.mxu0 %v6987
    %v7194 = vpop.f32.mrf.mxu0
    %v7195 = vadd.f32 %v7172, %v7194
    %7196 = vmatmul.f32.gmra.mxu0 %v6988
    %v7197 = vpop.f32.mrf.mxu0
    %v7198 = vadd.f32 %v7175, %v7197
    %7199 = vdwg.mxu0
    %7200 = vmatpush.msra.mxu0 0.0
    %7201 = vmatpush.msra.mxu0 0.0
    %7202 = vmatpush.msra.mxu0 %v2711
    %7203 = vmatpush.msra.mxu0 %v801
    %7204 = vmatpush.msra.mxu0 %v800
    %7205 = vmatpush.msra.mxu0 %v799
    %7206 = vmatpush.msra.mxu0 %v798
    %7207 = vmatpush.msra.mxu0 %v797
    %7208 = vmatpush.msra.mxu0 %v796
    %7209 = vmatpush.msra.mxu0 %v795
    %7210 = vmatpush.msra.mxu0 %v794
    %7211 = vmatpush.msra.mxu0 %v793
    %7212 = vmatpush.msra.mxu0 %v792
    %7213 = vmatpush.msra.mxu0 %v791
    %7214 = vmatpush.msra.mxu0 %v790
    %7215 = vmatpush.msra.mxu0 %v789
    %7216 = vmatmul.f32.gmra.mxu0 %v6989
    %v7217 = vpop.f32.mrf.mxu0
    %v7218 = vadd.f32 %v7195, %v7217
    %7219 = vmatmul.f32.gmra.mxu0 %v6991
    %v7220 = vpop.f32.mrf.mxu0
    %v7221 = vadd.f32 %v7198, %v7220
    %7222 = vdwg.mxu0
    %v7225 = vrot.slane %v7218, 1
    %v7226 = vrot.slane %v7221, 1
    %v7229 = vmax.f32 %v7218, %v7225
    %v7230 = vmax.f32 %v7221, %v7226
    %v7233 = vrot.slane %v7229, 1
    %v7234 = vrot.slane %v7230, 1
    %v7237 = vsel %vm825, %v7229, %v7233
    %v7238 = vsel %vm825, %v7230, %v7234
    %7241 = vrot.lane.b32.xlu0 %v7237, 108
    %v7242 = vpop.permute.xlu0 %7241
    %7243 = vrot.lane.b32.xlu0 %v7238, 108
    %v7244 = vpop.permute.xlu0 %7243
    %v7247 = vsel %vm2967, %v7242, 0.0
    %v7248 = vsel %vm2967, %v7244, 0.0
    %v7249 = vmax.f32 %v7237, %v7247
    %v7250 = vmax.f32 %v7238, %v7248
    %v7251 = vmax.f32 %v7249, 0.0
    %v7252 = vmax.f32 %v7250, 0.0
    %v7255 = vrot.slane %v7252, 7
    %v7256 = vsel %vm2977, %v7255, %v7251
    %7258 = vrot.lane.b32.xlu0 %v7256, 108
    %v7259 = vpop.permute.xlu0 %7258
    %v7261 = vrot.slane %v7251, 1
    %v7262 = vsel %vm2977, %v7252, %v7261
    %7263 = vrot.lane.b32.xlu0 %v7262, 40
    %v7264 = vpop.permute.xlu0 %7263
    %7266 = vrot.lane.b32.xlu0 %v7262, 20
    %v7267 = vpop.permute.xlu0 %7266
    %v7269 = vsel %vm2991, %v7256, %v7259
    %v7270 = vsel %vm2993, %v7269, %v7264
    %v7271 = vsel %vm2621, %v7270, %v7267
    %v7273 = vsel %vm2967, %v7271, 0
    %7275 = vmatpush.msra.mxu0 0.0
    %7276 = vmatpush.msra.mxu0 0.0
    %7277 = vmatpush.msra.mxu0 0.0
    %7278 = vmatpush.msra.mxu0 0.0
    %7279 = vmatpush.msra.mxu0 0.0
    %7280 = vmatpush.msra.mxu0 0.0
    %7281 = vmatpush.msra.mxu0 %v813
    %7282 = vmatpush.msra.mxu0 %v812
    %7283 = vmatpush.msra.mxu0 %v811
    %7284 = vmatpush.msra.mxu0 %v810
    %7285 = vmatpush.msra.mxu0 %v809
    %7286 = vmatpush.msra.mxu0 %v808
    %7287 = vmatpush.msra.mxu0 %v807
    %7288 = vmatpush.msra.mxu0 %v806
    %7289 = vmatpush.msra.mxu0 %v805
    %7290 = vmatpush.msra.mxu0 %v804
    %7291 = vmatmul.f32.gmra.mxu0 %v7273
    %v7292 = vpop.f32.mrf.mxu0
    %v7293 = vadd.f32 %v2997, %v7292
    %7294 = vdwg.mxu0
    %v7295 = vmax.f32 %v7293, 0.0
    %v7296 = vmul.f32 %v7295, %v3024
    %v7297 = vsel %vm3027, %v7296, 0.0
    %7298 = vadd.xlane.f32.xlu0 %v7297
    %v7299 = vpop.xlane.xlu0 %7298
    %v7300 = vadd.f32 %v7299, %v3032
    %v7301 = vxor.u32 %v7300, 2147483648
    %v7302 = vmul.f32 %v7301, 1.442695
    %v7303 = vpow.pop %v7302
    %v7304 = vadd.f32 %v7303, 1.0
    %v7305 = vrcp.pop %v7304
    %v7306 = vmul.f32 %v7304, %v7305
    %v7307 = vsub.f32 1.0, %v7306
    %v7308 = vmul.f32 %v7305, %v7307
    %v7309 = vadd.f32 %v7305, %v7308
    %vm7310 = vweird.f32 %v7304
    %vm7311 = vweird.f32 %v7305
    %vm7312 = vmor %vm7310, %vm7311
    %v7313 = vsel %vm7312, %v7305, %v7309
    %v7314 = vand.u32 2147483647, %v7304
    %vm7315 = vcmp.eq.f32.partialorder %v7314, 8.507059e+37
    %v7316 = vand.u32 %v7304, 2147483648
    %v7317 = vor.u32 1.1754944e-38, %v7316
    %v7318 = vsel %vm7315, %v7317, %v7313
    %v7319 = vmul.f32 1.0, %v7318
    %s7320 = scalar_lea.vmem %s15, 4
    %7321 = vst.msk [vmem:[%s7320] sm:$0x3] %vm3054, %v7319
    %v7322 = vrot.slane %v6016, 7
    %v7323 = vrot.slane %v6017, 7
    %v7324 = vsel %vm825, %v7322, %v7323
    %v7325 = vrot.slane %v6018, 7
    %v7326 = vrot.slane %v6019, 7
    %v7327 = vsel %vm825, %v7325, %v7326
    %v7332 = vsel %vm825, 0.0, %v7322
    %v7333 = vsel %vm825, 0.0, %v7325
    %v7334 = vmul.f32 %v6016, 2.0
    %v7335 = vmul.f32 %v6017, 2.0
    %v7336 = vmul.f32 %v6018, 2.0
    %v7337 = vmul.f32 %v6019, 2.0
    %v7338 = vadd.f32 %v7332, %v7334
    %v7339 = vadd.f32 %v7324, %v7335
    %v7340 = vadd.f32 %v7333, %v7336
    %v7341 = vadd.f32 %v7327, %v7337
    %v7342 = vadd.f32 %v7338, %v6031
    %v7343 = vadd.f32 %v7339, %v6039
    %v7344 = vadd.f32 %v7340, %v6034
    %v7345 = vadd.f32 %v7341, %v6040
    %v7346 = vsub.f32 %v6031, %v7332
    %v7347 = vsub.f32 %v6039, %v7324
    %v7348 = vsub.f32 %v6034, %v7333
    %v7349 = vsub.f32 %v6040, %v7327
    %7354 = vrot.lane.b32.xlu0 %v7342, 120
    %v7355 = vpop.permute.xlu0 %7354
    %7356 = vrot.lane.b32.xlu0 %v7343, 120
    %v7357 = vpop.permute.xlu0 %7356
    %7358 = vrot.lane.b32.xlu0 %v7344, 120
    %v7359 = vpop.permute.xlu0 %7358
    %7360 = vrot.lane.b32.xlu0 %v7345, 120
    %v7361 = vpop.permute.xlu0 %7360
    %v7366 = vsel %vm883, %v7355, 0.0
    %v7367 = vsel %vm883, %v7357, 0.0
    %v7368 = vsel %vm883, %v7359, 0.0
    %v7369 = vsel %vm883, %v7361, 0.0
    %7370 = vrot.lane.b32.xlu0 %v7342, 8
    %v7371 = vpop.permute.xlu0 %7370
    %7372 = vrot.lane.b32.xlu0 %v7343, 8
    %v7373 = vpop.permute.xlu0 %7372
    %7374 = vrot.lane.b32.xlu0 %v7344, 8
    %v7375 = vpop.permute.xlu0 %7374
    %7376 = vrot.lane.b32.xlu0 %v7345, 8
    %v7377 = vpop.permute.xlu0 %7376
    %v7382 = vsel %vm900, 0.0, %v7371
    %v7383 = vsel %vm900, 0.0, %v7373
    %v7384 = vsel %vm900, 0.0, %v7375
    %v7385 = vsel %vm900, 0.0, %v7377
    %v7386 = vsub.f32 %v7366, %v7382
    %v7387 = vsub.f32 %v7367, %v7383
    %v7388 = vsub.f32 %v7368, %v7384
    %v7389 = vsub.f32 %v7369, %v7385
    %v7390 = vmul.f32 %v7386, 0.125
    %v7391 = vmul.f32 %v7387, 0.125
    %v7392 = vmul.f32 %v7388, 0.125
    %v7393 = vmul.f32 %v7389, 0.125
    %7398 = vrot.lane.b32.xlu0 %v7346, 8
    %v7399 = vpop.permute.xlu0 %7398
    %7400 = vrot.lane.b32.xlu0 %v7347, 8
    %v7401 = vpop.permute.xlu0 %7400
    %7402 = vrot.lane.b32.xlu0 %v7348, 8
    %v7403 = vpop.permute.xlu0 %7402
    %7404 = vrot.lane.b32.xlu0 %v7349, 8
    %v7405 = vpop.permute.xlu0 %7404
    %v7410 = vsel %vm900, 0.0, %v7399
    %v7411 = vsel %vm900, 0.0, %v7401
    %v7412 = vsel %vm900, 0.0, %v7403
    %v7413 = vsel %vm900, 0.0, %v7405
    %v7414 = vmul.f32 %v7346, 2.0
    %v7415 = vmul.f32 %v7347, 2.0
    %v7416 = vmul.f32 %v7348, 2.0
    %v7417 = vmul.f32 %v7349, 2.0
    %v7418 = vadd.f32 %v7410, %v7414
    %v7419 = vadd.f32 %v7411, %v7415
    %v7420 = vadd.f32 %v7412, %v7416
    %v7421 = vadd.f32 %v7413, %v7417
    %7422 = vrot.lane.b32.xlu0 %v7346, 120
    %v7423 = vpop.permute.xlu0 %7422
    %7424 = vrot.lane.b32.xlu0 %v7347, 120
    %v7425 = vpop.permute.xlu0 %7424
    %7426 = vrot.lane.b32.xlu0 %v7348, 120
    %v7427 = vpop.permute.xlu0 %7426
    %7428 = vrot.lane.b32.xlu0 %v7349, 120
    %v7429 = vpop.permute.xlu0 %7428
    %v7434 = vsel %vm883, %v7423, 0.0
    %v7435 = vsel %vm883, %v7425, 0.0
    %v7436 = vsel %vm883, %v7427, 0.0
    %v7437 = vsel %vm883, %v7429, 0.0
    %v7438 = vadd.f32 %v7418, %v7434
    %v7439 = vadd.f32 %v7419, %v7435
    %v7440 = vadd.f32 %v7420, %v7436
    %v7441 = vadd.f32 %v7421, %v7437
    %v7442 = vmul.f32 %v7438, 0.125
    %v7443 = vmul.f32 %v7439, 0.125
    %v7444 = vmul.f32 %v7440, 0.125
    %v7445 = vmul.f32 %v7441, 0.125
    %v7446 = vmax.f32 %v7332, %v6016
    %v7447 = vmax.f32 %v7324, %v6017
    %v7448 = vmax.f32 %v7333, %v6018
    %v7449 = vmax.f32 %v7327, %v6019
    %v7450 = vmax.f32 %v7446, %v6031
    %v7451 = vmax.f32 %v7447, %v6039
    %v7452 = vmax.f32 %v7448, %v6034
    %v7453 = vmax.f32 %v7449, %v6040
    %7458 = vrot.lane.b32.xlu0 %v7450, 120
    %v7459 = vpop.permute.xlu0 %7458
    %7460 = vrot.lane.b32.xlu0 %v7451, 120
    %v7461 = vpop.permute.xlu0 %7460
    %7462 = vrot.lane.b32.xlu0 %v7452, 120
    %v7463 = vpop.permute.xlu0 %7462
    %7464 = vrot.lane.b32.xlu0 %v7453, 120
    %v7465 = vpop.permute.xlu0 %7464
    %v7470 = vsel %vm883, %v7459, 0.0
    %v7471 = vsel %vm883, %v7461, 0.0
    %v7472 = vsel %vm883, %v7463, 0.0
    %v7473 = vsel %vm883, %v7465, 0.0
    %v7474 = vmax.f32 %v7470, %v7450
    %v7475 = vmax.f32 %v7471, %v7451
    %v7476 = vmax.f32 %v7472, %v7452
    %v7477 = vmax.f32 %v7473, %v7453
    %7478 = vrot.lane.b32.xlu0 %v7450, 8
    %v7479 = vpop.permute.xlu0 %7478
    %7480 = vrot.lane.b32.xlu0 %v7451, 8
    %v7481 = vpop.permute.xlu0 %7480
    %7482 = vrot.lane.b32.xlu0 %v7452, 8
    %v7483 = vpop.permute.xlu0 %7482
    %7484 = vrot.lane.b32.xlu0 %v7453, 8
    %v7485 = vpop.permute.xlu0 %7484
    %v7490 = vsel %vm900, 0.0, %v7479
    %v7491 = vsel %vm900, 0.0, %v7481
    %v7492 = vsel %vm900, 0.0, %v7483
    %v7493 = vsel %vm900, 0.0, %v7485
    %v7494 = vmax.f32 %v7474, %v7490
    %v7495 = vmax.f32 %v7475, %v7491
    %v7496 = vmax.f32 %v7476, %v7492
    %v7497 = vmax.f32 %v7477, %v7493
    %7498 = vmatpush.msra.mxu0 %v98
    %7499 = vmatpush.msra.mxu0 %v97
    %7500 = vmatpush.msra.mxu0 %v96
    %7501 = vmatpush.msra.mxu0 %v95
    %7502 = vmatpush.msra.mxu0 %v94
    %7503 = vmatpush.msra.mxu0 %v93
    %7504 = vmatpush.msra.mxu0 %v92
    %7505 = vmatpush.msra.mxu0 %v91
    %7506 = vmatpush.msra.mxu0 %v90
    %7507 = vmatpush.msra.mxu0 %v89
    %7508 = vmatpush.msra.mxu0 %v88
    %7509 = vmatpush.msra.mxu0 %v87
    %7510 = vmatpush.msra.mxu0 %v86
    %7511 = vmatpush.msra.mxu0 %v85
    %7512 = vmatpush.msra.mxu0 %v84
    %7513 = vmatpush.msra.mxu0 %v83
    %7514 = vmatmul.f32.gmra.mxu0 %v7494
    %v7515 = vpop.f32.mrf.mxu0
    %v7516 = vadd.f32 0.0, %v7515
    %7517 = vmatmul.f32.gmra.mxu0 %v7495
    %v7518 = vpop.f32.mrf.mxu0
    %v7519 = vadd.f32 0.0, %v7518
    %7520 = vmatmul.f32.gmra.mxu0 %v7496
    %v7521 = vpop.f32.mrf.mxu0
    %v7522 = vadd.f32 0.0, %v7521
    %7523 = vmatmul.f32.gmra.mxu0 %v7497
    %v7524 = vpop.f32.mrf.mxu0
    %v7525 = vadd.f32 0.0, %v7524
    %7526 = vdwg.mxu0
    %7527 = vmatpush.msra.mxu0 %v159
    %7528 = vmatpush.msra.mxu0 %v155
    %7529 = vmatpush.msra.mxu0 %v151
    %7530 = vmatpush.msra.mxu0 %v147
    %7531 = vmatpush.msra.mxu0 %v143
    %7532 = vmatpush.msra.mxu0 %v139
    %7533 = vmatpush.msra.mxu0 %v135
    %7534 = vmatpush.msra.mxu0 %v131
    %7535 = vmatpush.msra.mxu0 %v127
    %7536 = vmatpush.msra.mxu0 %v123
    %7537 = vmatpush.msra.mxu0 %v119
    %7538 = vmatpush.msra.mxu0 %v115
    %7539 = vmatpush.msra.mxu0 %v111
    %7540 = vmatpush.msra.mxu0 %v107
    %7541 = vmatpush.msra.mxu0 %v103
    %7542 = vmatpush.msra.mxu0 %v99
    %7543 = vmatmul.f32.gmra.mxu0 %v6016
    %v7544 = vpop.f32.mrf.mxu0
    %v7545 = vadd.f32 %v1047, %v7544
    %7546 = vmatmul.f32.gmra.mxu0 %v6017
    %v7547 = vpop.f32.mrf.mxu0
    %v7548 = vadd.f32 %v1047, %v7547
    %7549 = vmatmul.f32.gmra.mxu0 %v6018
    %v7550 = vpop.f32.mrf.mxu0
    %v7551 = vadd.f32 %v1047, %v7550
    %7552 = vmatmul.f32.gmra.mxu0 %v6019
    %v7553 = vpop.f32.mrf.mxu0
    %v7554 = vadd.f32 %v1047, %v7553
    %7555 = vdwg.mxu0
    %7556 = vmatpush.msra.mxu0 %v223
    %7557 = vmatpush.msra.mxu0 %v219
    %7558 = vmatpush.msra.mxu0 %v215
    %7559 = vmatpush.msra.mxu0 %v211
    %7560 = vmatpush.msra.mxu0 %v207
    %7561 = vmatpush.msra.mxu0 %v203
    %7562 = vmatpush.msra.mxu0 %v199
    %7563 = vmatpush.msra.mxu0 %v195
    %7564 = vmatpush.msra.mxu0 %v191
    %7565 = vmatpush.msra.mxu0 %v187
    %7566 = vmatpush.msra.mxu0 %v183
    %7567 = vmatpush.msra.mxu0 %v179
    %7568 = vmatpush.msra.mxu0 %v175
    %7569 = vmatpush.msra.mxu0 %v171
    %7570 = vmatpush.msra.mxu0 %v167
    %7571 = vmatpush.msra.mxu0 %v163
    %7572 = vmatmul.f32.gmra.mxu0 %v7390
    %v7573 = vpop.f32.mrf.mxu0
    %v7574 = vadd.f32 %v7545, %v7573
    %7575 = vmatmul.f32.gmra.mxu0 %v7391
    %v7576 = vpop.f32.mrf.mxu0
    %v7577 = vadd.f32 %v7548, %v7576
    %7578 = vmatmul.f32.gmra.mxu0 %v7392
    %v7579 = vpop.f32.mrf.mxu0
    %v7580 = vadd.f32 %v7551, %v7579
    %7581 = vmatmul.f32.gmra.mxu0 %v7393
    %v7582 = vpop.f32.mrf.mxu0
    %v7583 = vadd.f32 %v7554, %v7582
    %7584 = vdwg.mxu0
    %7585 = vmatpush.msra.mxu0 %v287
    %7586 = vmatpush.msra.mxu0 %v283
    %7587 = vmatpush.msra.mxu0 %v279
    %7588 = vmatpush.msra.mxu0 %v275
    %7589 = vmatpush.msra.mxu0 %v271
    %7590 = vmatpush.msra.mxu0 %v267
    %7591 = vmatpush.msra.mxu0 %v263
    %7592 = vmatpush.msra.mxu0 %v259
    %7593 = vmatpush.msra.mxu0 %v255
    %7594 = vmatpush.msra.mxu0 %v251
    %7595 = vmatpush.msra.mxu0 %v247
    %7596 = vmatpush.msra.mxu0 %v243
    %7597 = vmatpush.msra.mxu0 %v239
    %7598 = vmatpush.msra.mxu0 %v235
    %7599 = vmatpush.msra.mxu0 %v231
    %7600 = vmatpush.msra.mxu0 %v227
    %7601 = vmatmul.f32.gmra.mxu0 %v7442
    %v7602 = vpop.f32.mrf.mxu0
    %v7603 = vadd.f32 %v7574, %v7602
    %7604 = vmatmul.f32.gmra.mxu0 %v7443
    %v7605 = vpop.f32.mrf.mxu0
    %v7606 = vadd.f32 %v7577, %v7605
    %7607 = vmatmul.f32.gmra.mxu0 %v7444
    %v7608 = vpop.f32.mrf.mxu0
    %v7609 = vadd.f32 %v7580, %v7608
    %7610 = vmatmul.f32.gmra.mxu0 %v7445
    %v7611 = vpop.f32.mrf.mxu0
    %v7612 = vadd.f32 %v7583, %v7611
    %7613 = vdwg.mxu0
    %7614 = vmatpush.msra.mxu0 %v160
    %7615 = vmatpush.msra.mxu0 %v156
    %7616 = vmatpush.msra.mxu0 %v152
    %7617 = vmatpush.msra.mxu0 %v148
    %7618 = vmatpush.msra.mxu0 %v144
    %7619 = vmatpush.msra.mxu0 %v140
    %7620 = vmatpush.msra.mxu0 %v136
    %7621 = vmatpush.msra.mxu0 %v132
    %7622 = vmatpush.msra.mxu0 %v128
    %7623 = vmatpush.msra.mxu0 %v124
    %7624 = vmatpush.msra.mxu0 %v120
    %7625 = vmatpush.msra.mxu0 %v116
    %7626 = vmatpush.msra.mxu0 %v112
    %7627 = vmatpush.msra.mxu0 %v108
    %7628 = vmatpush.msra.mxu0 %v104
    %7629 = vmatpush.msra.mxu0 %v100
    %7630 = vmatmul.f32.gmra.mxu0 %v6016
    %v7631 = vpop.f32.mrf.mxu0
    %v7632 = vadd.f32 %v1048, %v7631
    %7633 = vmatmul.f32.gmra.mxu0 %v6017
    %v7634 = vpop.f32.mrf.mxu0
    %v7635 = vadd.f32 %v1048, %v7634
    %7636 = vmatmul.f32.gmra.mxu0 %v6018
    %v7637 = vpop.f32.mrf.mxu0
    %v7638 = vadd.f32 %v1048, %v7637
    %7639 = vmatmul.f32.gmra.mxu0 %v6019
    %v7640 = vpop.f32.mrf.mxu0
    %v7641 = vadd.f32 %v1048, %v7640
    %7642 = vdwg.mxu0
    %7643 = vmatpush.msra.mxu0 %v224
    %7644 = vmatpush.msra.mxu0 %v220
    %7645 = vmatpush.msra.mxu0 %v216
    %7646 = vmatpush.msra.mxu0 %v212
    %7647 = vmatpush.msra.mxu0 %v208
    %7648 = vmatpush.msra.mxu0 %v204
    %7649 = vmatpush.msra.mxu0 %v200
    %7650 = vmatpush.msra.mxu0 %v196
    %7651 = vmatpush.msra.mxu0 %v192
    %7652 = vmatpush.msra.mxu0 %v188
    %7653 = vmatpush.msra.mxu0 %v184
    %7654 = vmatpush.msra.mxu0 %v180
    %7655 = vmatpush.msra.mxu0 %v176
    %7656 = vmatpush.msra.mxu0 %v172
    %7657 = vmatpush.msra.mxu0 %v168
    %7658 = vmatpush.msra.mxu0 %v164
    %7659 = vmatmul.f32.gmra.mxu0 %v7390
    %v7660 = vpop.f32.mrf.mxu0
    %v7661 = vadd.f32 %v7632, %v7660
    %7662 = vmatmul.f32.gmra.mxu0 %v7391
    %v7663 = vpop.f32.mrf.mxu0
    %v7664 = vadd.f32 %v7635, %v7663
    %7665 = vmatmul.f32.gmra.mxu0 %v7392
    %v7666 = vpop.f32.mrf.mxu0
    %v7667 = vadd.f32 %v7638, %v7666
    %7668 = vmatmul.f32.gmra.mxu0 %v7393
    %v7669 = vpop.f32.mrf.mxu0
    %v7670 = vadd.f32 %v7641, %v7669
    %7671 = vdwg.mxu0
    %7672 = vmatpush.msra.mxu0 %v288
    %7673 = vmatpush.msra.mxu0 %v284
    %7674 = vmatpush.msra.mxu0 %v280
    %7675 = vmatpush.msra.mxu0 %v276
    %7676 = vmatpush.msra.mxu0 %v272
    %7677 = vmatpush.msra.mxu0 %v268
    %7678 = vmatpush.msra.mxu0 %v264
    %7679 = vmatpush.msra.mxu0 %v260
    %7680 = vmatpush.msra.mxu0 %v256
    %7681 = vmatpush.msra.mxu0 %v252
    %7682 = vmatpush.msra.mxu0 %v248
    %7683 = vmatpush.msra.mxu0 %v244
    %7684 = vmatpush.msra.mxu0 %v240
    %7685 = vmatpush.msra.mxu0 %v236
    %7686 = vmatpush.msra.mxu0 %v232
    %7687 = vmatpush.msra.mxu0 %v228
    %7688 = vmatmul.f32.gmra.mxu0 %v7442
    %v7689 = vpop.f32.mrf.mxu0
    %v7690 = vadd.f32 %v7661, %v7689
    %7691 = vmatmul.f32.gmra.mxu0 %v7443
    %v7692 = vpop.f32.mrf.mxu0
    %v7693 = vadd.f32 %v7664, %v7692
    %7694 = vmatmul.f32.gmra.mxu0 %v7444
    %v7695 = vpop.f32.mrf.mxu0
    %v7696 = vadd.f32 %v7667, %v7695
    %7697 = vmatmul.f32.gmra.mxu0 %v7445
    %v7698 = vpop.f32.mrf.mxu0
    %v7699 = vadd.f32 %v7670, %v7698
    %7700 = vdwg.mxu0
    %7701 = vmatpush.msra.mxu0 %v161
    %7702 = vmatpush.msra.mxu0 %v157
    %7703 = vmatpush.msra.mxu0 %v153
    %7704 = vmatpush.msra.mxu0 %v149
    %7705 = vmatpush.msra.mxu0 %v145
    %7706 = vmatpush.msra.mxu0 %v141
    %7707 = vmatpush.msra.mxu0 %v137
    %7708 = vmatpush.msra.mxu0 %v133
    %7709 = vmatpush.msra.mxu0 %v129
    %7710 = vmatpush.msra.mxu0 %v125
    %7711 = vmatpush.msra.mxu0 %v121
    %7712 = vmatpush.msra.mxu0 %v117
    %7713 = vmatpush.msra.mxu0 %v113
    %7714 = vmatpush.msra.mxu0 %v109
    %7715 = vmatpush.msra.mxu0 %v105
    %7716 = vmatpush.msra.mxu0 %v101
    %7717 = vmatmul.f32.gmra.mxu0 %v6016
    %v7718 = vpop.f32.mrf.mxu0
    %v7719 = vadd.f32 %v1049, %v7718
    %7720 = vmatmul.f32.gmra.mxu0 %v6017
    %v7721 = vpop.f32.mrf.mxu0
    %v7722 = vadd.f32 %v1049, %v7721
    %7723 = vmatmul.f32.gmra.mxu0 %v6018
    %v7724 = vpop.f32.mrf.mxu0
    %v7725 = vadd.f32 %v1049, %v7724
    %7726 = vmatmul.f32.gmra.mxu0 %v6019
    %v7727 = vpop.f32.mrf.mxu0
    %v7728 = vadd.f32 %v1049, %v7727
    %7729 = vdwg.mxu0
    %7730 = vmatpush.msra.mxu0 %v225
    %7731 = vmatpush.msra.mxu0 %v221
    %7732 = vmatpush.msra.mxu0 %v217
    %7733 = vmatpush.msra.mxu0 %v213
    %7734 = vmatpush.msra.mxu0 %v209
    %7735 = vmatpush.msra.mxu0 %v205
    %7736 = vmatpush.msra.mxu0 %v201
    %7737 = vmatpush.msra.mxu0 %v197
    %7738 = vmatpush.msra.mxu0 %v193
    %7739 = vmatpush.msra.mxu0 %v189
    %7740 = vmatpush.msra.mxu0 %v185
    %7741 = vmatpush.msra.mxu0 %v181
    %7742 = vmatpush.msra.mxu0 %v177
    %7743 = vmatpush.msra.mxu0 %v173
    %7744 = vmatpush.msra.mxu0 %v169
    %7745 = vmatpush.msra.mxu0 %v165
    %7746 = vmatmul.f32.gmra.mxu0 %v7390
    %v7747 = vpop.f32.mrf.mxu0
    %v7748 = vadd.f32 %v7719, %v7747
    %7749 = vmatmul.f32.gmra.mxu0 %v7391
    %v7750 = vpop.f32.mrf.mxu0
    %v7751 = vadd.f32 %v7722, %v7750
    %7752 = vmatmul.f32.gmra.mxu0 %v7392
    %v7753 = vpop.f32.mrf.mxu0
    %v7754 = vadd.f32 %v7725, %v7753
    %7755 = vmatmul.f32.gmra.mxu0 %v7393
    %v7756 = vpop.f32.mrf.mxu0
    %v7757 = vadd.f32 %v7728, %v7756
    %7758 = vdwg.mxu0
    %7759 = vmatpush.msra.mxu0 %v289
    %7760 = vmatpush.msra.mxu0 %v285
    %7761 = vmatpush.msra.mxu0 %v281
    %7762 = vmatpush.msra.mxu0 %v277
    %7763 = vmatpush.msra.mxu0 %v273
    %7764 = vmatpush.msra.mxu0 %v269
    %7765 = vmatpush.msra.mxu0 %v265
    %7766 = vmatpush.msra.mxu0 %v261
    %7767 = vmatpush.msra.mxu0 %v257
    %7768 = vmatpush.msra.mxu0 %v253
    %7769 = vmatpush.msra.mxu0 %v249
    %7770 = vmatpush.msra.mxu0 %v245
    %7771 = vmatpush.msra.mxu0 %v241
    %7772 = vmatpush.msra.mxu0 %v237
    %7773 = vmatpush.msra.mxu0 %v233
    %7774 = vmatpush.msra.mxu0 %v229
    %7775 = vmatmul.f32.gmra.mxu0 %v7442
    %v7776 = vpop.f32.mrf.mxu0
    %v7777 = vadd.f32 %v7748, %v7776
    %7778 = vmatmul.f32.gmra.mxu0 %v7443
    %v7779 = vpop.f32.mrf.mxu0
    %v7780 = vadd.f32 %v7751, %v7779
    %7781 = vmatmul.f32.gmra.mxu0 %v7444
    %v7782 = vpop.f32.mrf.mxu0
    %v7783 = vadd.f32 %v7754, %v7782
    %7784 = vmatmul.f32.gmra.mxu0 %v7445
    %v7785 = vpop.f32.mrf.mxu0
    %v7786 = vadd.f32 %v7757, %v7785
    %7787 = vdwg.mxu0
    %7788 = vmatpush.msra.mxu0 %v162
    %7789 = vmatpush.msra.mxu0 %v158
    %7790 = vmatpush.msra.mxu0 %v154
    %7791 = vmatpush.msra.mxu0 %v150
    %7792 = vmatpush.msra.mxu0 %v146
    %7793 = vmatpush.msra.mxu0 %v142
    %7794 = vmatpush.msra.mxu0 %v138
    %7795 = vmatpush.msra.mxu0 %v134
    %7796 = vmatpush.msra.mxu0 %v130
    %7797 = vmatpush.msra.mxu0 %v126
    %7798 = vmatpush.msra.mxu0 %v122
    %7799 = vmatpush.msra.mxu0 %v118
    %7800 = vmatpush.msra.mxu0 %v114
    %7801 = vmatpush.msra.mxu0 %v110
    %7802 = vmatpush.msra.mxu0 %v106
    %7803 = vmatpush.msra.mxu0 %v102
    %7804 = vmatmul.f32.gmra.mxu0 %v6016
    %v7805 = vpop.f32.mrf.mxu0
    %v7806 = vadd.f32 %v1050, %v7805
    %7807 = vmatmul.f32.gmra.mxu0 %v6017
    %v7808 = vpop.f32.mrf.mxu0
    %v7809 = vadd.f32 %v1050, %v7808
    %7810 = vmatmul.f32.gmra.mxu0 %v6018
    %v7811 = vpop.f32.mrf.mxu0
    %v7812 = vadd.f32 %v1050, %v7811
    %7813 = vmatmul.f32.gmra.mxu0 %v6019
    %v7814 = vpop.f32.mrf.mxu0
    %v7815 = vadd.f32 %v1050, %v7814
    %7816 = vdwg.mxu0
    %7817 = vmatpush.msra.mxu0 %v226
    %7818 = vmatpush.msra.mxu0 %v222
    %7819 = vmatpush.msra.mxu0 %v218
    %7820 = vmatpush.msra.mxu0 %v214
    %7821 = vmatpush.msra.mxu0 %v210
    %7822 = vmatpush.msra.mxu0 %v206
    %7823 = vmatpush.msra.mxu0 %v202
    %7824 = vmatpush.msra.mxu0 %v198
    %7825 = vmatpush.msra.mxu0 %v194
    %7826 = vmatpush.msra.mxu0 %v190
    %7827 = vmatpush.msra.mxu0 %v186
    %7828 = vmatpush.msra.mxu0 %v182
    %7829 = vmatpush.msra.mxu0 %v178
    %7830 = vmatpush.msra.mxu0 %v174
    %7831 = vmatpush.msra.mxu0 %v170
    %7832 = vmatpush.msra.mxu0 %v166
    %7833 = vmatmul.f32.gmra.mxu0 %v7390
    %v7834 = vpop.f32.mrf.mxu0
    %v7835 = vadd.f32 %v7806, %v7834
    %7836 = vmatmul.f32.gmra.mxu0 %v7391
    %v7837 = vpop.f32.mrf.mxu0
    %v7838 = vadd.f32 %v7809, %v7837
    %7839 = vmatmul.f32.gmra.mxu0 %v7392
    %v7840 = vpop.f32.mrf.mxu0
    %v7841 = vadd.f32 %v7812, %v7840
    %7842 = vmatmul.f32.gmra.mxu0 %v7393
    %v7843 = vpop.f32.mrf.mxu0
    %v7844 = vadd.f32 %v7815, %v7843
    %7845 = vdwg.mxu0
    %7846 = vmatpush.msra.mxu0 %v290
    %7847 = vmatpush.msra.mxu0 %v286
    %7848 = vmatpush.msra.mxu0 %v282
    %7849 = vmatpush.msra.mxu0 %v278
    %7850 = vmatpush.msra.mxu0 %v274
    %7851 = vmatpush.msra.mxu0 %v270
    %7852 = vmatpush.msra.mxu0 %v266
    %7853 = vmatpush.msra.mxu0 %v262
    %7854 = vmatpush.msra.mxu0 %v258
    %7855 = vmatpush.msra.mxu0 %v254
    %7856 = vmatpush.msra.mxu0 %v250
    %7857 = vmatpush.msra.mxu0 %v246
    %7858 = vmatpush.msra.mxu0 %v242
    %7859 = vmatpush.msra.mxu0 %v238
    %7860 = vmatpush.msra.mxu0 %v234
    %7861 = vmatpush.msra.mxu0 %v230
    %7862 = vmatmul.f32.gmra.mxu0 %v7442
    %v7863 = vpop.f32.mrf.mxu0
    %v7864 = vadd.f32 %v7835, %v7863
    %7865 = vmatmul.f32.gmra.mxu0 %v7443
    %v7866 = vpop.f32.mrf.mxu0
    %v7867 = vadd.f32 %v7838, %v7866
    %7868 = vmatmul.f32.gmra.mxu0 %v7444
    %v7869 = vpop.f32.mrf.mxu0
    %v7870 = vadd.f32 %v7841, %v7869
    %7871 = vmatmul.f32.gmra.mxu0 %v7445
    %v7872 = vpop.f32.mrf.mxu0
    %v7873 = vadd.f32 %v7844, %v7872
    %7874 = vdwg.mxu0
    %v7875 = vmax.f32 %v7603, 0.0
    %v7876 = vmax.f32 %v7690, 0.0
    %v7877 = vmax.f32 %v7777, 0.0
    %v7878 = vmax.f32 %v7864, 0.0
    %v7879 = vmax.f32 %v7606, 0.0
    %v7880 = vmax.f32 %v7693, 0.0
    %v7881 = vmax.f32 %v7780, 0.0
    %v7882 = vmax.f32 %v7867, 0.0
    %v7883 = vmax.f32 %v7609, 0.0
    %v7884 = vmax.f32 %v7696, 0.0
    %v7885 = vmax.f32 %v7783, 0.0
    %v7886 = vmax.f32 %v7870, 0.0
    %v7887 = vmax.f32 %v7612, 0.0
    %v7888 = vmax.f32 %v7699, 0.0
    %v7889 = vmax.f32 %v7786, 0.0
    %v7890 = vmax.f32 %v7873, 0.0
    %7891 = vmatpush.msra.mxu0 %v307
    %7892 = vmatpush.msra.mxu0 %v306
    %7893 = vmatpush.msra.mxu0 %v305
    %7894 = vmatpush.msra.mxu0 %v304
    %7895 = vmatpush.msra.mxu0 %v303
    %7896 = vmatpush.msra.mxu0 %v302
    %7897 = vmatpush.msra.mxu0 %v301
    %7898 = vmatpush.msra.mxu0 %v300
    %7899 = vmatpush.msra.mxu0 %v299
    %7900 = vmatpush.msra.mxu0 %v298
    %7901 = vmatpush.msra.mxu0 %v297
    %7902 = vmatpush.msra.mxu0 %v296
    %7903 = vmatpush.msra.mxu0 %v295
    %7904 = vmatpush.msra.mxu0 %v294
    %7905 = vmatpush.msra.mxu0 %v293
    %7906 = vmatpush.msra.mxu0 %v292
    %7907 = vmatmul.f32.gmra.mxu0 %v7875
    %v7908 = vpop.f32.mrf.mxu0
    %v7909 = vadd.f32 0.0, %v7908
    %7910 = vmatmul.f32.gmra.mxu0 %v7879
    %v7911 = vpop.f32.mrf.mxu0
    %v7912 = vadd.f32 0.0, %v7911
    %7913 = vmatmul.f32.gmra.mxu0 %v7883
    %v7914 = vpop.f32.mrf.mxu0
    %v7915 = vadd.f32 0.0, %v7914
    %7916 = vmatmul.f32.gmra.mxu0 %v7887
    %v7917 = vpop.f32.mrf.mxu0
    %v7918 = vadd.f32 0.0, %v7917
    %7919 = vdwg.mxu0
    %7920 = vmatpush.msra.mxu0 %v323
    %7921 = vmatpush.msra.mxu0 %v322
    %7922 = vmatpush.msra.mxu0 %v321
    %7923 = vmatpush.msra.mxu0 %v320
    %7924 = vmatpush.msra.mxu0 %v319
    %7925 = vmatpush.msra.mxu0 %v318
    %7926 = vmatpush.msra.mxu0 %v317
    %7927 = vmatpush.msra.mxu0 %v316
    %7928 = vmatpush.msra.mxu0 %v315
    %7929 = vmatpush.msra.mxu0 %v314
    %7930 = vmatpush.msra.mxu0 %v313
    %7931 = vmatpush.msra.mxu0 %v312
    %7932 = vmatpush.msra.mxu0 %v311
    %7933 = vmatpush.msra.mxu0 %v310
    %7934 = vmatpush.msra.mxu0 %v309
    %7935 = vmatpush.msra.mxu0 %v308
    %7936 = vmatmul.f32.gmra.mxu0 %v7876
    %v7937 = vpop.f32.mrf.mxu0
    %v7938 = vadd.f32 %v7909, %v7937
    %7939 = vmatmul.f32.gmra.mxu0 %v7880
    %v7940 = vpop.f32.mrf.mxu0
    %v7941 = vadd.f32 %v7912, %v7940
    %7942 = vmatmul.f32.gmra.mxu0 %v7884
    %v7943 = vpop.f32.mrf.mxu0
    %v7944 = vadd.f32 %v7915, %v7943
    %7945 = vmatmul.f32.gmra.mxu0 %v7888
    %v7946 = vpop.f32.mrf.mxu0
    %v7947 = vadd.f32 %v7918, %v7946
    %7948 = vdwg.mxu0
    %7949 = vmatpush.msra.mxu0 %v339
    %7950 = vmatpush.msra.mxu0 %v338
    %7951 = vmatpush.msra.mxu0 %v337
    %7952 = vmatpush.msra.mxu0 %v336
    %7953 = vmatpush.msra.mxu0 %v335
    %7954 = vmatpush.msra.mxu0 %v334
    %7955 = vmatpush.msra.mxu0 %v333
    %7956 = vmatpush.msra.mxu0 %v332
    %7957 = vmatpush.msra.mxu0 %v331
    %7958 = vmatpush.msra.mxu0 %v330
    %7959 = vmatpush.msra.mxu0 %v329
    %7960 = vmatpush.msra.mxu0 %v328
    %7961 = vmatpush.msra.mxu0 %v327
    %7962 = vmatpush.msra.mxu0 %v326
    %7963 = vmatpush.msra.mxu0 %v325
    %7964 = vmatpush.msra.mxu0 %v324
    %7965 = vmatmul.f32.gmra.mxu0 %v7877
    %v7966 = vpop.f32.mrf.mxu0
    %v7967 = vadd.f32 %v7938, %v7966
    %7968 = vmatmul.f32.gmra.mxu0 %v7881
    %v7969 = vpop.f32.mrf.mxu0
    %v7970 = vadd.f32 %v7941, %v7969
    %7971 = vmatmul.f32.gmra.mxu0 %v7885
    %v7972 = vpop.f32.mrf.mxu0
    %v7973 = vadd.f32 %v7944, %v7972
    %7974 = vmatmul.f32.gmra.mxu0 %v7889
    %v7975 = vpop.f32.mrf.mxu0
    %v7976 = vadd.f32 %v7947, %v7975
    %7977 = vdwg.mxu0
    %7978 = vmatpush.msra.mxu0 %v355
    %7979 = vmatpush.msra.mxu0 %v354
    %7980 = vmatpush.msra.mxu0 %v353
    %7981 = vmatpush.msra.mxu0 %v352
    %7982 = vmatpush.msra.mxu0 %v351
    %7983 = vmatpush.msra.mxu0 %v350
    %7984 = vmatpush.msra.mxu0 %v349
    %7985 = vmatpush.msra.mxu0 %v348
    %7986 = vmatpush.msra.mxu0 %v347
    %7987 = vmatpush.msra.mxu0 %v346
    %7988 = vmatpush.msra.mxu0 %v345
    %7989 = vmatpush.msra.mxu0 %v344
    %7990 = vmatpush.msra.mxu0 %v343
    %7991 = vmatpush.msra.mxu0 %v342
    %7992 = vmatpush.msra.mxu0 %v341
    %7993 = vmatpush.msra.mxu0 %v340
    %7994 = vmatmul.f32.gmra.mxu0 %v7878
    %v7995 = vpop.f32.mrf.mxu0
    %v7996 = vadd.f32 %v7967, %v7995
    %7997 = vmatmul.f32.gmra.mxu0 %v7882
    %v7998 = vpop.f32.mrf.mxu0
    %v7999 = vadd.f32 %v7970, %v7998
    %8000 = vmatmul.f32.gmra.mxu0 %v7886
    %v8001 = vpop.f32.mrf.mxu0
    %v8002 = vadd.f32 %v7973, %v8001
    %8003 = vmatmul.f32.gmra.mxu0 %v7890
    %v8004 = vpop.f32.mrf.mxu0
    %v8005 = vadd.f32 %v7976, %v8004
    %8006 = vdwg.mxu0
    %s8007 = scalar_lea.vmem %s1, 96
    %v8008 = vld [vmem:[%s8007] sm:$0xff]
    %v8009 = vld [vmem:[%s8007 + $0x8] sm:$0xff]
    %v8010 = vld [vmem:[%s8007 + $0x10] sm:$0xff]
    %v8011 = vld [vmem:[%s8007 + $0x18] sm:$0xff]
    %v8012 = vmul.f32 %v7996, %v8008
    %v8013 = vmul.f32 %v7999, %v8009
    %v8014 = vmul.f32 %v8002, %v8010
    %v8015 = vmul.f32 %v8005, %v8011
    %v8016 = vadd.f32 %v6016, %v8012
    %v8017 = vadd.f32 %v6017, %v8013
    %v8018 = vadd.f32 %v6018, %v8014
    %v8019 = vadd.f32 %v6019, %v8015
    %v8024 = vrot.slane %v8016, 7
    %v8025 = vrot.slane %v8017, 7
    %v8026 = vsel %vm825, %v8024, %v8025
    %v8027 = vrot.slane %v8018, 7
    %v8028 = vrot.slane %v8019, 7
    %v8029 = vsel %vm825, %v8027, %v8028
    %v8034 = vsel %vm825, 0.0, %v8024
    %v8035 = vsel %vm825, 0.0, %v8027
    %v8036 = vmax.f32 %v8034, %v8016
    %v8037 = vmax.f32 %v8026, %v8017
    %v8038 = vmax.f32 %v8035, %v8018
    %v8039 = vmax.f32 %v8029, %v8019
    %v8040 = vrot.slane %v8016, 1
    %v8041 = vrot.slane %v8017, 1
    %v8042 = vsel %vm838, %v8040, %v8041
    %v8043 = vrot.slane %v8018, 1
    %v8044 = vrot.slane %v8019, 1
    %v8045 = vsel %vm838, %v8043, %v8044
    %v8050 = vsel %vm838, %v8041, 0.0
    %v8051 = vsel %vm838, %v8044, 0.0
    %v8052 = vmax.f32 %v8036, %v8042
    %v8053 = vmax.f32 %v8037, %v8050
    %v8054 = vmax.f32 %v8038, %v8045
    %v8055 = vmax.f32 %v8039, %v8051
    %8060 = vrot.lane.b32.xlu0 %v8052, 120
    %v8061 = vpop.permute.xlu0 %8060
    %8062 = vrot.lane.b32.xlu0 %v8053, 120
    %v8063 = vpop.permute.xlu0 %8062
    %8064 = vrot.lane.b32.xlu0 %v8054, 120
    %v8065 = vpop.permute.xlu0 %8064
    %8066 = vrot.lane.b32.xlu0 %v8055, 120
    %v8067 = vpop.permute.xlu0 %8066
    %v8072 = vsel %vm883, %v8061, 0.0
    %v8073 = vsel %vm883, %v8063, 0.0
    %v8074 = vsel %vm883, %v8065, 0.0
    %v8075 = vsel %vm883, %v8067, 0.0
    %v8076 = vmax.f32 %v8072, %v8052
    %v8077 = vmax.f32 %v8073, %v8053
    %v8078 = vmax.f32 %v8074, %v8054
    %v8079 = vmax.f32 %v8075, %v8055
    %8080 = vrot.lane.b32.xlu0 %v8052, 8
    %v8081 = vpop.permute.xlu0 %8080
    %8082 = vrot.lane.b32.xlu0 %v8053, 8
    %v8083 = vpop.permute.xlu0 %8082
    %8084 = vrot.lane.b32.xlu0 %v8054, 8
    %v8085 = vpop.permute.xlu0 %8084
    %8086 = vrot.lane.b32.xlu0 %v8055, 8
    %v8087 = vpop.permute.xlu0 %8086
    %v8092 = vsel %vm900, 0.0, %v8081
    %v8093 = vsel %vm900, 0.0, %v8083
    %v8094 = vsel %vm900, 0.0, %v8085
    %v8095 = vsel %vm900, 0.0, %v8087
    %v8096 = vmax.f32 %v8076, %v8092
    %v8097 = vmax.f32 %v8077, %v8093
    %v8098 = vmax.f32 %v8078, %v8094
    %v8099 = vmax.f32 %v8079, %v8095
    %8100 = vmatpush.msra.mxu0 %v98
    %8101 = vmatpush.msra.mxu0 %v97
    %8102 = vmatpush.msra.mxu0 %v96
    %8103 = vmatpush.msra.mxu0 %v95
    %8104 = vmatpush.msra.mxu0 %v94
    %8105 = vmatpush.msra.mxu0 %v93
    %8106 = vmatpush.msra.mxu0 %v92
    %8107 = vmatpush.msra.mxu0 %v91
    %8108 = vmatpush.msra.mxu0 %v90
    %8109 = vmatpush.msra.mxu0 %v89
    %8110 = vmatpush.msra.mxu0 %v88
    %8111 = vmatpush.msra.mxu0 %v87
    %8112 = vmatpush.msra.mxu0 %v86
    %8113 = vmatpush.msra.mxu0 %v85
    %8114 = vmatpush.msra.mxu0 %v84
    %8115 = vmatpush.msra.mxu0 %v83
    %8116 = vmatmul.f32.gmra.mxu0 %v8096
    %v8117 = vpop.f32.mrf.mxu0
    %v8118 = vadd.f32 0.0, %v8117
    %8119 = vmatmul.f32.gmra.mxu0 %v8097
    %v8120 = vpop.f32.mrf.mxu0
    %v8121 = vadd.f32 0.0, %v8120
    %8122 = vmatmul.f32.gmra.mxu0 %v8098
    %v8123 = vpop.f32.mrf.mxu0
    %v8124 = vadd.f32 0.0, %v8123
    %8125 = vmatmul.f32.gmra.mxu0 %v8099
    %v8126 = vpop.f32.mrf.mxu0
    %v8127 = vadd.f32 0.0, %v8126
    %8128 = vdwg.mxu0
    %vm8129 = vcmp.gt.f32.partialorder %v7516, 0.1
    %vm8130 = vcmp.gt.f32.partialorder %v7519, 0.1
    %vm8131 = vcmp.gt.f32.partialorder %v7522, 0.1
    %vm8132 = vcmp.gt.f32.partialorder %v7525, 0.1
    %vm8133 = vcmp.gt.f32.partialorder %v8118, 0.1
    %vm8134 = vcmp.gt.f32.partialorder %v8121, 0.1
    %vm8135 = vcmp.gt.f32.partialorder %v8124, 0.1
    %vm8136 = vcmp.gt.f32.partialorder %v8127, 0.1
    %vm8137 = vmand %vm8129, %vm8133
    %vm8138 = vmand %vm8130, %vm8134
    %vm8139 = vmand %vm8131, %vm8135
    %vm8140 = vmand %vm8132, %vm8136
    %v8141 = vsel %vm8137, 1, 0
    %v8142 = vsel %vm8138, 1, 0
    %v8143 = vsel %vm8139, 1, 0
    %v8144 = vsel %vm8140, 1, 0
    %v8145 = vcvt.s32.f32 %v8141
    %v8146 = vcvt.s32.f32 %v8142
    %v8147 = vcvt.s32.f32 %v8143
    %v8148 = vcvt.s32.f32 %v8144
    %v8149 = vmul.f32 %v8016, %v8145
    %v8150 = vmul.f32 %v8017, %v8146
    %v8151 = vmul.f32 %v8018, %v8147
    %v8152 = vmul.f32 %v8019, %v8148
    %s8153 = scalar_lea.vmem %s14, 96
    %8154 = vst [vmem:[%s8153] sm:$0xff] %v8149
    %8155 = vst [vmem:[%s8153 + $0x8] sm:$0xff] %v8150
    %8156 = vst [vmem:[%s8153 + $0x10] sm:$0xff] %v8151
    %8157 = vst [vmem:[%s8153 + $0x18] sm:$0xff] %v8152
    %s8158 = scalar_lea.vmem %s15, 6
    %8159 = vst.msk [vmem:[%s8158] sm:$0x3] %vm3054, 0.0
    // Predicated region
    $region66: #{fwd.1} parent=1 // pred_check
      _
    $region67: #{fwd.1} parent=1 // pred_check_branch
      %8161 = sbr.rel (0) target = $region69
    $region68: #{fwd.1} parent=1 // pred_region
      _
    $region69: #{fwd.1} parent=1 // pred_fallthru
      _
    // Predicated region
    $region70: #{fwd.1} parent=1 // pred_check
      _
    $region71: #{fwd.1} parent=1 // pred_check_branch
      %8163 = sbr.rel (0) target = $region73
    $region72: #{fwd.1} parent=1 // pred_region
      _
    $region73: #{fwd.1} parent=1 // pred_fallthru
      _
    // Predicated region
    $region74: #{fwd.1} parent=1 // pred_check
      _
    $region75: #{fwd.1} parent=1 // pred_check_branch
      %8165 = sbr.rel (0) target = $region77
    $region76: #{fwd.1} parent=1 // pred_region
      _
    $region77: #{fwd.1} parent=1 // pred_fallthru
      _
    // Predicated region
    $region78: #{fwd.1} parent=1 // pred_check
      _
    $region79: #{fwd.1} parent=1 // pred_check_branch
      %8167 = sbr.rel (0) target = $region81
    $region80: #{fwd.1} parent=1 // pred_region
      _
    $region81: #{fwd.1} parent=1 // pred_fallthru
      _
    %8168 = vsyncpa [#allocation4], 1
    %8169 = vsyncpa [#allocation6], 1

</llo_original>
